<compile_context>
chip_gen: v5e
topology: v5e:2x2
jax: 0.10.0
libtpu: 0.0.40
codegen_flags: <defaults>
</compile_context>

<pallas_src>
import functools

import jax
import jax.numpy as jnp
from jax import lax
from jax.experimental import pallas as pl
from jax.experimental.pallas import tpu as pltpu


_VMEM = pl.BlockSpec(memory_space=pltpu.MemorySpace.VMEM)


def _round_up(v, a):
    return (v + a - 1) // a * a


# -----------------------------------------------------------------------------
# Single fused kernel: conv1+relu+pool -> conv2+relu+pool -> flatten -> classifier head
#
# Flat activation convention: a zero-padded NHWC activation of spatial size (Hp, Wp) is
# stored as rows [(b, i, j), c].  For anchor row r = b*Hp*Wp + h*Wp + w, the 3x3/pad-1
# conv output at pixel (b, h, w) is  sum_tap  x[r + di*Wp + dj] @ W[tap]  (stacked into one
# matmul), and the 2x2/stride-2 pooled output at (b, ho, wo) is the max of the conv values
# at rows base + {0, 1, Wp, Wp+1},  base = b*Hp*Wp + 2*ho*Wp + 2*wo.
# -----------------------------------------------------------------------------
def _encoder_kernel(img_ref, w1_ref, b1_ref, w2_ref, b2_ref,
                    c1w_ref, c1b_ref, c2w_ref, c2b_ref, fcw_ref, fcb_ref,
                    o_ref,
                    x1p_ref, patch1_ref, acc1_ref, x2p_ref, patch2_ref, acc2_ref, feats_ref,
                    *, n, h, w, cin, c1, c2, imgnorm, use_abs):
    hp1, wp1 = h + 2, w + 2
    hm, wm = h // 2, w // 2          # spatial after pool 1
    hp2, wp2 = hm + 2, wm + 2
    hq, wq = h // 4, w // 4          # spatial after pool 2
    m1 = n * hp1 * wp1
    m2 = n * hp2 * wp2

    # ---- stage 0: zero-pad the flat NHWC input into VMEM (replaces wrapper-side jnp.pad) ----
    x1p_ref[...] = jnp.zeros_like(x1p_ref)
    for b in range(n):
        for i in range(h):
            src = (b * h + i) * w
            dst = b * hp1 * wp1 + (i + 1) * wp1 + 1
            x1p_ref[dst:dst + w, :] = img_ref[src:src + w, :]

    # ---- stage 1: conv1 (3x3, pad 1) + bias + ReLU as ONE stacked-K matmul ----
    for idx in range(9):
        di, dj = divmod(idx, 3)
        patch1_ref[:, idx * cin:(idx + 1) * cin] = x1p_ref[pl.ds(di * wp1 + dj, m1), :]
    acc1_ref[...] = jnp.maximum(
        jnp.dot(patch1_ref[...], w1_ref[...], preferred_element_type=jnp.float32)
        + b1_ref[...], 0.0)

    # ---- stage 2: 2x2/2 max-pool of conv1, compact-scattered into zero-padded conv2 input ----
    x2p_ref[...] = jnp.zeros_like(x2p_ref)
    for b in range(n):
        for ho in range(hm):
            src = b * hp1 * wp1 + 2 * ho * wp1
            p = jnp.maximum(
                jnp.maximum(acc1_ref[pl.ds(src, wm, stride=2), :],
                            acc1_ref[pl.ds(src + 1, wm, stride=2), :]),
                jnp.maximum(acc1_ref[pl.ds(src + wp1, wm, stride=2), :],
                            acc1_ref[pl.ds(src + wp1 + 1, wm, stride=2), :]))
            dst = b * hp2 * wp2 + (ho + 1) * wp2 + 1
            x2p_ref[dst:dst + wm, :] = p

    # ---- stage 3: conv2 (3x3, pad 1) + bias + ReLU, same stacked-K matmul ----
    for idx in range(9):
        di, dj = divmod(idx, 3)
        patch2_ref[:, idx * c1:(idx + 1) * c1] = x2p_ref[pl.ds(di * wp2 + dj, m2), :]
    acc2_ref[...] = jnp.maximum(
        jnp.dot(patch2_ref[...], w2_ref[...], preferred_element_type=jnp.float32)
        + b2_ref[...], 0.0)

    # ---- stage 4: 2x2/2 max-pool of conv2, written directly as lane-dense NHWC feats (N, flat) ----
    for b in range(n):
        for ho in range(hq):
            src = b * hp2 * wp2 + 2 * ho * wp2
            v = jnp.maximum(acc2_ref[src:src + 2 * wq, :],
                            acc2_ref[src + wp2:src + wp2 + 2 * wq, :])   # vertical max, (2*wq, c2)
            for wo in range(wq):
                pv = jnp.maximum(v[2 * wo:2 * wo + 1, :], v[2 * wo + 1:2 * wo + 2, :])  # (1, c2)
                f0 = (ho * wq + wo) * c2
                feats_ref[b:b + 1, f0:f0 + c2] = pv

    # ---- stage 5: classifier + embedding head (all f32; dropout is a no-op in eval) ----
    feats = feats_ref[...]                                                   # (N, flat)
    hcls = jnp.maximum(jnp.dot(feats, c1w_ref[...],
                               preferred_element_type=jnp.float32) + c1b_ref[...], 0.0)
    hcls = jnp.maximum(jnp.dot(hcls, c2w_ref[...],
                               preferred_element_type=jnp.float32) + c2b_ref[...], 0.0)
    # l2norm (no eps, matching torch l2norm): a zero row would NaN in both implementations.
    hcls = hcls * lax.rsqrt(jnp.sum(hcls * hcls, axis=1, keepdims=True))
    y = jnp.dot(hcls, fcw_ref[...], preferred_element_type=jnp.float32) + fcb_ref[...]
    if imgnorm:
        y = y * lax.rsqrt(jnp.sum(y * y, axis=1, keepdims=True))
    if use_abs:
        y = jnp.abs(y)
    o_ref[...] = y.astype(o_ref.dtype)


# -----------------------------------------------------------------------------
# EncoderImageFull.forward — one pallas_call
# -----------------------------------------------------------------------------
def encoder_image_full_forward(images_nchw, params, *, no_imgnorm=False, use_abs=False):
    n, cin, h, w = images_nchw.shape
    assert h % 4 == 0 and w % 4 == 0
    c1 = params["conv1_w"].shape[1]
    c2 = params["conv2_w"].shape[1]
    embed = params["fc_w"].shape[1]

    # One-time input layout conversion (the only XLA op outside the fused kernel).
    img2d = jnp.transpose(images_nchw, (0, 2, 3, 1)).astype(jnp.float32).reshape(n * h * w, cin)

    hp1, wp1 = h + 2, w + 2
    m1 = n * hp1 * wp1
    r1 = _round_up(m1 + 2 * wp1 + 2, 8)          # flat rows incl. conv-tap reach
    hm, wm = h // 2, w // 2
    hp2, wp2 = hm + 2, wm + 2
    m2 = n * hp2 * wp2
    r2 = _round_up(m2 + 2 * wp2 + 2, 8)
    flat = (h // 4) * (w // 4) * c2
    assert params["cls1_w"].shape[0] == flat

    kernel = functools.partial(
        _encoder_kernel, n=n, h=h, w=w, cin=cin, c1=c1, c2=c2,
        imgnorm=not no_imgnorm, use_abs=use_abs)

    return pl.pallas_call(
        kernel,
        out_shape=jax.ShapeDtypeStruct((n, embed), jnp.float32),
        in_specs=[_VMEM] * 11,
        out_specs=_VMEM,
        scratch_shapes=[
            pltpu.VMEM((r1, cin), jnp.float32),       # x1p   : zero-padded conv1 input (flat)
            pltpu.VMEM((m1, 9 * cin), jnp.float32),   # patch1: stacked-K conv1 patches
            pltpu.VMEM((m1, c1), jnp.float32),        # acc1  : conv1 + bias + relu
            pltpu.VMEM((r2, c1), jnp.float32),        # x2p   : zero-padded conv2 input (flat)
            pltpu.VMEM((m2, 9 * c1), jnp.float32),    # patch2: stacked-K conv2 patches
            pltpu.VMEM((m2, c2), jnp.float32),        # acc2  : conv2 + bias + relu
            pltpu.VMEM((n, flat), jnp.float32),       # feats : lane-dense NHWC-flattened features
        ],
    )(img2d,
      params["conv1_w"], params["conv1_b"],
      params["conv2_w"], params["conv2_b"],
      params["cls1_w"], params["cls1_b"],
      params["cls2_w"], params["cls2_b"],
      params["fc_w"], params["fc_b"])


def init_params(key, *, cin=4, c1=8, c2=16, feat_dim=64, embed_size=32, spatial=16):
    ks = jax.random.split(key, 6)
    flat_dim = c2 * (spatial // 4) * (spatial // 4)
    p = {
        # Conv weights pre-flattened to (9*Cin, Cout), row index = (3*di+dj)*Cin + c.
        # Real pretrained (Cout, Cin, 3, 3) VGG weights get a one-time permute to this layout.
        "conv1_w": 0.1 * jax.random.normal(ks[0], (9 * cin, c1), jnp.float32),
        "conv1_b": jnp.zeros((1, c1), jnp.float32),
        "conv2_w": 0.1 * jax.random.normal(ks[1], (9 * c1, c2), jnp.float32),
        "conv2_b": jnp.zeros((1, c2), jnp.float32),
        # cls1_w rows are in NHWC (h, w, c) flatten order; a real PyTorch checkpoint
        # (NCHW flatten) would get a one-time row permute at load time.
        "cls1_w": 0.1 * jax.random.normal(ks[2], (flat_dim, feat_dim), jnp.float32),
        "cls1_b": jnp.zeros((1, feat_dim), jnp.float32),
        "cls2_w": 0.1 * jax.random.normal(ks[3], (feat_dim, feat_dim), jnp.float32),
        "cls2_b": jnp.zeros((1, feat_dim), jnp.float32),
    }
    # init_weights(): Xavier-uniform on fc, zero bias.
    r = jnp.sqrt(6.0) / jnp.sqrt(feat_dim + embed_size)
    p["fc_w"] = jax.random.uniform(ks[4], (feat_dim, embed_size), jnp.float32, -r, r)
    p["fc_b"] = jnp.zeros((1, embed_size), jnp.float32)
    return p


if __name__ == "__main__":
    key = jax.random.PRNGKey(0)
    k_img, k_par = jax.random.split(key)

    # PyTorch-style input: NCHW, batch=2, channels=4, spatial=16
    images = jax.random.normal(k_img, (2, 4, 16, 16), jnp.float32)
    params = init_params(k_par, cin=4, embed_size=32, spatial=16)

    fwd = jax.jit(lambda imgs, p: encoder_image_full_forward(
        imgs, p, no_imgnorm=False, use_abs=False))
    out = jax.block_until_ready(fwd(images, params))

    assert out.shape == (2, 32)
    # final l2norm: rows should be (approximately) unit-norm
    assert jnp.allclose(jnp.sum(out * out, axis=1), 1.0, atol=1e-3)
    assert bool(jnp.all(jnp.isfinite(out)))
    print("KERNEL_OK")
</pallas_src>

<mosaic_0001>
module attributes {stable_mosaic.version = 11 : i64} {
  func.func @_encoder_kernel(%arg0: memref<512x4xf32, #tpu.memory_space<vmem>>, %arg1: memref<36x8xf32, #tpu.memory_space<vmem>>, %arg2: memref<1x8xf32, #tpu.memory_space<vmem>>, %arg3: memref<72x16xf32, #tpu.memory_space<vmem>>, %arg4: memref<1x16xf32, #tpu.memory_space<vmem>>, %arg5: memref<256x64xf32, #tpu.memory_space<vmem>>, %arg6: memref<1x64xf32, #tpu.memory_space<vmem>>, %arg7: memref<64x64xf32, #tpu.memory_space<vmem>>, %arg8: memref<1x64xf32, #tpu.memory_space<vmem>>, %arg9: memref<64x32xf32, #tpu.memory_space<vmem>>, %arg10: memref<1x32xf32, #tpu.memory_space<vmem>>, %arg11: memref<2x32xf32, #tpu.memory_space<vmem>>, %arg12: memref<688x4xf32, #tpu.memory_space<vmem>>, %arg13: memref<648x36xf32, #tpu.memory_space<vmem>>, %arg14: memref<648x8xf32, #tpu.memory_space<vmem>>, %arg15: memref<224x8xf32, #tpu.memory_space<vmem>>, %arg16: memref<200x72xf32, #tpu.memory_space<vmem>>, %arg17: memref<200x16xf32, #tpu.memory_space<vmem>>, %arg18: memref<2x256xf32, #tpu.memory_space<vmem>>) attributes {dimension_semantics = [], scalar_prefetch = 0 : i64, scratch_operands = 7 : i64, tpu.core_type = #tpu.core_type<tc>} {
    %cst = arith.constant 0.000000e+00 : f32
    %0 = vector.broadcast %cst : f32 to vector<688x4xf32>
    %c0 = arith.constant 0 : index
    %c0_0 = arith.constant 0 : index
    %1 = vector.load %arg12[%c0, %c0_0] : memref<688x4xf32, #tpu.memory_space<vmem>>, vector<688x4xf32>
    tpu.vector_store %arg12[%c0, %c0_0], %0 {strides = array<i32>} : memref<688x4xf32, #tpu.memory_space<vmem>>, vector<688x4xf32>,
    %c0_1 = arith.constant 0 : index
    %c0_2 = arith.constant 0 : index
    %2 = vector.load %arg0[%c0_1, %c0_2] : memref<512x4xf32, #tpu.memory_space<vmem>>, vector<16x4xf32>
    %c19 = arith.constant 19 : index
    %c0_3 = arith.constant 0 : index
    %3 = vector.load %arg12[%c19, %c0_3] : memref<688x4xf32, #tpu.memory_space<vmem>>, vector<16x4xf32>
    tpu.vector_store %arg12[%c19, %c0_3], %2 {strides = array<i32>} : memref<688x4xf32, #tpu.memory_space<vmem>>, vector<16x4xf32>,
    %c16 = arith.constant 16 : index
    %c0_4 = arith.constant 0 : index
    %4 = vector.load %arg0[%c16, %c0_4] : memref<512x4xf32, #tpu.memory_space<vmem>>, vector<16x4xf32>
    %c37 = arith.constant 37 : index
    %c0_5 = arith.constant 0 : index
    %5 = vector.load %arg12[%c37, %c0_5] : memref<688x4xf32, #tpu.memory_space<vmem>>, vector<16x4xf32>
    tpu.vector_store %arg12[%c37, %c0_5], %4 {strides = array<i32>} : memref<688x4xf32, #tpu.memory_space<vmem>>, vector<16x4xf32>,
    %c32 = arith.constant 32 : index
    %c0_6 = arith.constant 0 : index
    %6 = vector.load %arg0[%c32, %c0_6] : memref<512x4xf32, #tpu.memory_space<vmem>>, vector<16x4xf32>
    %c55 = arith.constant 55 : index
    %c0_7 = arith.constant 0 : index
    %7 = vector.load %arg12[%c55, %c0_7] : memref<688x4xf32, #tpu.memory_space<vmem>>, vector<16x4xf32>
    tpu.vector_store %arg12[%c55, %c0_7], %6 {strides = array<i32>} : memref<688x4xf32, #tpu.memory_space<vmem>>, vector<16x4xf32>,
    %c48 = arith.constant 48 : index
    %c0_8 = arith.constant 0 : index
    %8 = vector.load %arg0[%c48, %c0_8] : memref<512x4xf32, #tpu.memory_space<vmem>>, vector<16x4xf32>
    %c73 = arith.constant 73 : index
    %c0_9 = arith.constant 0 : index
    %9 = vector.load %arg12[%c73, %c0_9] : memref<688x4xf32, #tpu.memory_space<vmem>>, vector<16x4xf32>
    tpu.vector_store %arg12[%c73, %c0_9], %8 {strides = array<i32>} : memref<688x4xf32, #tpu.memory_space<vmem>>, vector<16x4xf32>,
    %c64 = arith.constant 64 : index
    %c0_10 = arith.constant 0 : index
    %10 = vector.load %arg0[%c64, %c0_10] : memref<512x4xf32, #tpu.memory_space<vmem>>, vector<16x4xf32>
    %c91 = arith.constant 91 : index
    %c0_11 = arith.constant 0 : index
    %11 = vector.load %arg12[%c91, %c0_11] : memref<688x4xf32, #tpu.memory_space<vmem>>, vector<16x4xf32>
    tpu.vector_store %arg12[%c91, %c0_11], %10 {strides = array<i32>} : memref<688x4xf32, #tpu.memory_space<vmem>>, vector<16x4xf32>,
    %c80 = arith.constant 80 : index
    %c0_12 = arith.constant 0 : index
    %12 = vector.load %arg0[%c80, %c0_12] : memref<512x4xf32, #tpu.memory_space<vmem>>, vector<16x4xf32>
    %c109 = arith.constant 109 : index
    %c0_13 = arith.constant 0 : index
    %13 = vector.load %arg12[%c109, %c0_13] : memref<688x4xf32, #tpu.memory_space<vmem>>, vector<16x4xf32>
    tpu.vector_store %arg12[%c109, %c0_13], %12 {strides = array<i32>} : memref<688x4xf32, #tpu.memory_space<vmem>>, vector<16x4xf32>,
    %c96 = arith.constant 96 : index
    %c0_14 = arith.constant 0 : index
    %14 = vector.load %arg0[%c96, %c0_14] : memref<512x4xf32, #tpu.memory_space<vmem>>, vector<16x4xf32>
    %c127 = arith.constant 127 : index
    %c0_15 = arith.constant 0 : index
    %15 = vector.load %arg12[%c127, %c0_15] : memref<688x4xf32, #tpu.memory_space<vmem>>, vector<16x4xf32>
    tpu.vector_store %arg12[%c127, %c0_15], %14 {strides = array<i32>} : memref<688x4xf32, #tpu.memory_space<vmem>>, vector<16x4xf32>,
    %c112 = arith.constant 112 : index
    %c0_16 = arith.constant 0 : index
    %16 = vector.load %arg0[%c112, %c0_16] : memref<512x4xf32, #tpu.memory_space<vmem>>, vector<16x4xf32>
    %c145 = arith.constant 145 : index
    %c0_17 = arith.constant 0 : index
    %17 = vector.load %arg12[%c145, %c0_17] : memref<688x4xf32, #tpu.memory_space<vmem>>, vector<16x4xf32>
    tpu.vector_store %arg12[%c145, %c0_17], %16 {strides = array<i32>} : memref<688x4xf32, #tpu.memory_space<vmem>>, vector<16x4xf32>,
    %c128 = arith.constant 128 : index
    %c0_18 = arith.constant 0 : index
    %18 = vector.load %arg0[%c128, %c0_18] : memref<512x4xf32, #tpu.memory_space<vmem>>, vector<16x4xf32>
    %c163 = arith.constant 163 : index
    %c0_19 = arith.constant 0 : index
    %19 = vector.load %arg12[%c163, %c0_19] : memref<688x4xf32, #tpu.memory_space<vmem>>, vector<16x4xf32>
    tpu.vector_store %arg12[%c163, %c0_19], %18 {strides = array<i32>} : memref<688x4xf32, #tpu.memory_space<vmem>>, vector<16x4xf32>,
    %c144 = arith.constant 144 : index
    %c0_20 = arith.constant 0 : index
    %20 = vector.load %arg0[%c144, %c0_20] : memref<512x4xf32, #tpu.memory_space<vmem>>, vector<16x4xf32>
    %c181 = arith.constant 181 : index
    %c0_21 = arith.constant 0 : index
    %21 = vector.load %arg12[%c181, %c0_21] : memref<688x4xf32, #tpu.memory_space<vmem>>, vector<16x4xf32>
    tpu.vector_store %arg12[%c181, %c0_21], %20 {strides = array<i32>} : memref<688x4xf32, #tpu.memory_space<vmem>>, vector<16x4xf32>,
    %c160 = arith.constant 160 : index
    %c0_22 = arith.constant 0 : index
    %22 = vector.load %arg0[%c160, %c0_22] : memref<512x4xf32, #tpu.memory_space<vmem>>, vector<16x4xf32>
    %c199 = arith.constant 199 : index
    %c0_23 = arith.constant 0 : index
    %23 = vector.load %arg12[%c199, %c0_23] : memref<688x4xf32, #tpu.memory_space<vmem>>, vector<16x4xf32>
    tpu.vector_store %arg12[%c199, %c0_23], %22 {strides = array<i32>} : memref<688x4xf32, #tpu.memory_space<vmem>>, vector<16x4xf32>,
    %c176 = arith.constant 176 : index
    %c0_24 = arith.constant 0 : index
    %24 = vector.load %arg0[%c176, %c0_24] : memref<512x4xf32, #tpu.memory_space<vmem>>, vector<16x4xf32>
    %c217 = arith.constant 217 : index
    %c0_25 = arith.constant 0 : index
    %25 = vector.load %arg12[%c217, %c0_25] : memref<688x4xf32, #tpu.memory_space<vmem>>, vector<16x4xf32>
    tpu.vector_store %arg12[%c217, %c0_25], %24 {strides = array<i32>} : memref<688x4xf32, #tpu.memory_space<vmem>>, vector<16x4xf32>,
    %c192 = arith.constant 192 : index
    %c0_26 = arith.constant 0 : index
    %26 = vector.load %arg0[%c192, %c0_26] : memref<512x4xf32, #tpu.memory_space<vmem>>, vector<16x4xf32>
    %c235 = arith.constant 235 : index
    %c0_27 = arith.constant 0 : index
    %27 = vector.load %arg12[%c235, %c0_27] : memref<688x4xf32, #tpu.memory_space<vmem>>, vector<16x4xf32>
    tpu.vector_store %arg12[%c235, %c0_27], %26 {strides = array<i32>} : memref<688x4xf32, #tpu.memory_space<vmem>>, vector<16x4xf32>,
    %c208 = arith.constant 208 : index
    %c0_28 = arith.constant 0 : index
    %28 = vector.load %arg0[%c208, %c0_28] : memref<512x4xf32, #tpu.memory_space<vmem>>, vector<16x4xf32>
    %c253 = arith.constant 253 : index
    %c0_29 = arith.constant 0 : index
    %29 = vector.load %arg12[%c253, %c0_29] : memref<688x4xf32, #tpu.memory_space<vmem>>, vector<16x4xf32>
    tpu.vector_store %arg12[%c253, %c0_29], %28 {strides = array<i32>} : memref<688x4xf32, #tpu.memory_space<vmem>>, vector<16x4xf32>,
    %c224 = arith.constant 224 : index
    %c0_30 = arith.constant 0 : index
    %30 = vector.load %arg0[%c224, %c0_30] : memref<512x4xf32, #tpu.memory_space<vmem>>, vector<16x4xf32>
    %c271 = arith.constant 271 : index
    %c0_31 = arith.constant 0 : index
    %31 = vector.load %arg12[%c271, %c0_31] : memref<688x4xf32, #tpu.memory_space<vmem>>, vector<16x4xf32>
    tpu.vector_store %arg12[%c271, %c0_31], %30 {strides = array<i32>} : memref<688x4xf32, #tpu.memory_space<vmem>>, vector<16x4xf32>,
    %c240 = arith.constant 240 : index
    %c0_32 = arith.constant 0 : index
    %32 = vector.load %arg0[%c240, %c0_32] : memref<512x4xf32, #tpu.memory_space<vmem>>, vector<16x4xf32>
    %c289 = arith.constant 289 : index
    %c0_33 = arith.constant 0 : index
    %33 = vector.load %arg12[%c289, %c0_33] : memref<688x4xf32, #tpu.memory_space<vmem>>, vector<16x4xf32>
    tpu.vector_store %arg12[%c289, %c0_33], %32 {strides = array<i32>} : memref<688x4xf32, #tpu.memory_space<vmem>>, vector<16x4xf32>,
    %c256 = arith.constant 256 : index
    %c0_34 = arith.constant 0 : index
    %34 = vector.load %arg0[%c256, %c0_34] : memref<512x4xf32, #tpu.memory_space<vmem>>, vector<16x4xf32>
    %c343 = arith.constant 343 : index
    %c0_35 = arith.constant 0 : index
    %35 = vector.load %arg12[%c343, %c0_35] : memref<688x4xf32, #tpu.memory_space<vmem>>, vector<16x4xf32>
    tpu.vector_store %arg12[%c343, %c0_35], %34 {strides = array<i32>} : memref<688x4xf32, #tpu.memory_space<vmem>>, vector<16x4xf32>,
    %c272 = arith.constant 272 : index
    %c0_36 = arith.constant 0 : index
    %36 = vector.load %arg0[%c272, %c0_36] : memref<512x4xf32, #tpu.memory_space<vmem>>, vector<16x4xf32>
    %c361 = arith.constant 361 : index
    %c0_37 = arith.constant 0 : index
    %37 = vector.load %arg12[%c361, %c0_37] : memref<688x4xf32, #tpu.memory_space<vmem>>, vector<16x4xf32>
    tpu.vector_store %arg12[%c361, %c0_37], %36 {strides = array<i32>} : memref<688x4xf32, #tpu.memory_space<vmem>>, vector<16x4xf32>,
    %c288 = arith.constant 288 : index
    %c0_38 = arith.constant 0 : index
    %38 = vector.load %arg0[%c288, %c0_38] : memref<512x4xf32, #tpu.memory_space<vmem>>, vector<16x4xf32>
    %c379 = arith.constant 379 : index
    %c0_39 = arith.constant 0 : index
    %39 = vector.load %arg12[%c379, %c0_39] : memref<688x4xf32, #tpu.memory_space<vmem>>, vector<16x4xf32>
    tpu.vector_store %arg12[%c379, %c0_39], %38 {strides = array<i32>} : memref<688x4xf32, #tpu.memory_space<vmem>>, vector<16x4xf32>,
    %c304 = arith.constant 304 : index
    %c0_40 = arith.constant 0 : index
    %40 = vector.load %arg0[%c304, %c0_40] : memref<512x4xf32, #tpu.memory_space<vmem>>, vector<16x4xf32>
    %c397 = arith.constant 397 : index
    %c0_41 = arith.constant 0 : index
    %41 = vector.load %arg12[%c397, %c0_41] : memref<688x4xf32, #tpu.memory_space<vmem>>, vector<16x4xf32>
    tpu.vector_store %arg12[%c397, %c0_41], %40 {strides = array<i32>} : memref<688x4xf32, #tpu.memory_space<vmem>>, vector<16x4xf32>,
    %c320 = arith.constant 320 : index
    %c0_42 = arith.constant 0 : index
    %42 = vector.load %arg0[%c320, %c0_42] : memref<512x4xf32, #tpu.memory_space<vmem>>, vector<16x4xf32>
    %c415 = arith.constant 415 : index
    %c0_43 = arith.constant 0 : index
    %43 = vector.load %arg12[%c415, %c0_43] : memref<688x4xf32, #tpu.memory_space<vmem>>, vector<16x4xf32>
    tpu.vector_store %arg12[%c415, %c0_43], %42 {strides = array<i32>} : memref<688x4xf32, #tpu.memory_space<vmem>>, vector<16x4xf32>,
    %c336 = arith.constant 336 : index
    %c0_44 = arith.constant 0 : index
    %44 = vector.load %arg0[%c336, %c0_44] : memref<512x4xf32, #tpu.memory_space<vmem>>, vector<16x4xf32>
    %c433 = arith.constant 433 : index
    %c0_45 = arith.constant 0 : index
    %45 = vector.load %arg12[%c433, %c0_45] : memref<688x4xf32, #tpu.memory_space<vmem>>, vector<16x4xf32>
    tpu.vector_store %arg12[%c433, %c0_45], %44 {strides = array<i32>} : memref<688x4xf32, #tpu.memory_space<vmem>>, vector<16x4xf32>,
    %c352 = arith.constant 352 : index
    %c0_46 = arith.constant 0 : index
    %46 = vector.load %arg0[%c352, %c0_46] : memref<512x4xf32, #tpu.memory_space<vmem>>, vector<16x4xf32>
    %c451 = arith.constant 451 : index
    %c0_47 = arith.constant 0 : index
    %47 = vector.load %arg12[%c451, %c0_47] : memref<688x4xf32, #tpu.memory_space<vmem>>, vector<16x4xf32>
    tpu.vector_store %arg12[%c451, %c0_47], %46 {strides = array<i32>} : memref<688x4xf32, #tpu.memory_space<vmem>>, vector<16x4xf32>,
    %c368 = arith.constant 368 : index
    %c0_48 = arith.constant 0 : index
    %48 = vector.load %arg0[%c368, %c0_48] : memref<512x4xf32, #tpu.memory_space<vmem>>, vector<16x4xf32>
    %c469 = arith.constant 469 : index
    %c0_49 = arith.constant 0 : index
    %49 = vector.load %arg12[%c469, %c0_49] : memref<688x4xf32, #tpu.memory_space<vmem>>, vector<16x4xf32>
    tpu.vector_store %arg12[%c469, %c0_49], %48 {strides = array<i32>} : memref<688x4xf32, #tpu.memory_space<vmem>>, vector<16x4xf32>,
    %c384 = arith.constant 384 : index
    %c0_50 = arith.constant 0 : index
    %50 = vector.load %arg0[%c384, %c0_50] : memref<512x4xf32, #tpu.memory_space<vmem>>, vector<16x4xf32>
    %c487 = arith.constant 487 : index
    %c0_51 = arith.constant 0 : index
    %51 = vector.load %arg12[%c487, %c0_51] : memref<688x4xf32, #tpu.memory_space<vmem>>, vector<16x4xf32>
    tpu.vector_store %arg12[%c487, %c0_51], %50 {strides = array<i32>} : memref<688x4xf32, #tpu.memory_space<vmem>>, vector<16x4xf32>,
    %c400 = arith.constant 400 : index
    %c0_52 = arith.constant 0 : index
    %52 = vector.load %arg0[%c400, %c0_52] : memref<512x4xf32, #tpu.memory_space<vmem>>, vector<16x4xf32>
    %c505 = arith.constant 505 : index
    %c0_53 = arith.constant 0 : index
    %53 = vector.load %arg12[%c505, %c0_53] : memref<688x4xf32, #tpu.memory_space<vmem>>, vector<16x4xf32>
    tpu.vector_store %arg12[%c505, %c0_53], %52 {strides = array<i32>} : memref<688x4xf32, #tpu.memory_space<vmem>>, vector<16x4xf32>,
    %c416 = arith.constant 416 : index
    %c0_54 = arith.constant 0 : index
    %54 = vector.load %arg0[%c416, %c0_54] : memref<512x4xf32, #tpu.memory_space<vmem>>, vector<16x4xf32>
    %c523 = arith.constant 523 : index
    %c0_55 = arith.constant 0 : index
    %55 = vector.load %arg12[%c523, %c0_55] : memref<688x4xf32, #tpu.memory_space<vmem>>, vector<16x4xf32>
    tpu.vector_store %arg12[%c523, %c0_55], %54 {strides = array<i32>} : memref<688x4xf32, #tpu.memory_space<vmem>>, vector<16x4xf32>,
    %c432 = arith.constant 432 : index
    %c0_56 = arith.constant 0 : index
    %56 = vector.load %arg0[%c432, %c0_56] : memref<512x4xf32, #tpu.memory_space<vmem>>, vector<16x4xf32>
    %c541 = arith.constant 541 : index
    %c0_57 = arith.constant 0 : index
    %57 = vector.load %arg12[%c541, %c0_57] : memref<688x4xf32, #tpu.memory_space<vmem>>, vector<16x4xf32>
    tpu.vector_store %arg12[%c541, %c0_57], %56 {strides = array<i32>} : memref<688x4xf32, #tpu.memory_space<vmem>>, vector<16x4xf32>,
    %c448 = arith.constant 448 : index
    %c0_58 = arith.constant 0 : index
    %58 = vector.load %arg0[%c448, %c0_58] : memref<512x4xf32, #tpu.memory_space<vmem>>, vector<16x4xf32>
    %c559 = arith.constant 559 : index
    %c0_59 = arith.constant 0 : index
    %59 = vector.load %arg12[%c559, %c0_59] : memref<688x4xf32, #tpu.memory_space<vmem>>, vector<16x4xf32>
    tpu.vector_store %arg12[%c559, %c0_59], %58 {strides = array<i32>} : memref<688x4xf32, #tpu.memory_space<vmem>>, vector<16x4xf32>,
    %c464 = arith.constant 464 : index
    %c0_60 = arith.constant 0 : index
    %60 = vector.load %arg0[%c464, %c0_60] : memref<512x4xf32, #tpu.memory_space<vmem>>, vector<16x4xf32>
    %c577 = arith.constant 577 : index
    %c0_61 = arith.constant 0 : index
    %61 = vector.load %arg12[%c577, %c0_61] : memref<688x4xf32, #tpu.memory_space<vmem>>, vector<16x4xf32>
    tpu.vector_store %arg12[%c577, %c0_61], %60 {strides = array<i32>} : memref<688x4xf32, #tpu.memory_space<vmem>>, vector<16x4xf32>,
    %c480 = arith.constant 480 : index
    %c0_62 = arith.constant 0 : index
    %62 = vector.load %arg0[%c480, %c0_62] : memref<512x4xf32, #tpu.memory_space<vmem>>, vector<16x4xf32>
    %c595 = arith.constant 595 : index
    %c0_63 = arith.constant 0 : index
    %63 = vector.load %arg12[%c595, %c0_63] : memref<688x4xf32, #tpu.memory_space<vmem>>, vector<16x4xf32>
    tpu.vector_store %arg12[%c595, %c0_63], %62 {strides = array<i32>} : memref<688x4xf32, #tpu.memory_space<vmem>>, vector<16x4xf32>,
    %c496 = arith.constant 496 : index
    %c0_64 = arith.constant 0 : index
    %64 = vector.load %arg0[%c496, %c0_64] : memref<512x4xf32, #tpu.memory_space<vmem>>, vector<16x4xf32>
    %c613 = arith.constant 613 : index
    %c0_65 = arith.constant 0 : index
    %65 = vector.load %arg12[%c613, %c0_65] : memref<688x4xf32, #tpu.memory_space<vmem>>, vector<16x4xf32>
    tpu.vector_store %arg12[%c613, %c0_65], %64 {strides = array<i32>} : memref<688x4xf32, #tpu.memory_space<vmem>>, vector<16x4xf32>,
    %c0_66 = arith.constant 0 : index
    %c0_67 = arith.constant 0 : index
    %66 = vector.load %arg12[%c0_66, %c0_67] : memref<688x4xf32, #tpu.memory_space<vmem>>, vector<648x4xf32>
    %c0_68 = arith.constant 0 : index
    %c0_69 = arith.constant 0 : index
    %67 = vector.load %arg13[%c0_68, %c0_69] : memref<648x36xf32, #tpu.memory_space<vmem>>, vector<648x4xf32>
    tpu.vector_store %arg13[%c0_68, %c0_69], %66 {strides = array<i32>} : memref<648x36xf32, #tpu.memory_space<vmem>>, vector<648x4xf32>,
    %c1 = arith.constant 1 : index
    %c0_70 = arith.constant 0 : index
    %68 = vector.load %arg12[%c1, %c0_70] : memref<688x4xf32, #tpu.memory_space<vmem>>, vector<648x4xf32>
    %c0_71 = arith.constant 0 : index
    %c4 = arith.constant 4 : index
    %69 = vector.load %arg13[%c0_71, %c4] : memref<648x36xf32, #tpu.memory_space<vmem>>, vector<648x4xf32>
    tpu.vector_store %arg13[%c0_71, %c4], %68 {strides = array<i32>} : memref<648x36xf32, #tpu.memory_space<vmem>>, vector<648x4xf32>,
    %c2 = arith.constant 2 : index
    %c0_72 = arith.constant 0 : index
    %70 = vector.load %arg12[%c2, %c0_72] : memref<688x4xf32, #tpu.memory_space<vmem>>, vector<648x4xf32>
    %c0_73 = arith.constant 0 : index
    %c8 = arith.constant 8 : index
    %71 = vector.load %arg13[%c0_73, %c8] : memref<648x36xf32, #tpu.memory_space<vmem>>, vector<648x4xf32>
    tpu.vector_store %arg13[%c0_73, %c8], %70 {strides = array<i32>} : memref<648x36xf32, #tpu.memory_space<vmem>>, vector<648x4xf32>,
    %c18 = arith.constant 18 : index
    %c0_74 = arith.constant 0 : index
    %72 = vector.load %arg12[%c18, %c0_74] : memref<688x4xf32, #tpu.memory_space<vmem>>, vector<648x4xf32>
    %c0_75 = arith.constant 0 : index
    %c12 = arith.constant 12 : index
    %73 = vector.load %arg13[%c0_75, %c12] : memref<648x36xf32, #tpu.memory_space<vmem>>, vector<648x4xf32>
    tpu.vector_store %arg13[%c0_75, %c12], %72 {strides = array<i32>} : memref<648x36xf32, #tpu.memory_space<vmem>>, vector<648x4xf32>,
    %c19_76 = arith.constant 19 : index
    %c0_77 = arith.constant 0 : index
    %74 = vector.load %arg12[%c19_76, %c0_77] : memref<688x4xf32, #tpu.memory_space<vmem>>, vector<648x4xf32>
    %c0_78 = arith.constant 0 : index
    %c16_79 = arith.constant 16 : index
    %75 = vector.load %arg13[%c0_78, %c16_79] : memref<648x36xf32, #tpu.memory_space<vmem>>, vector<648x4xf32>
    tpu.vector_store %arg13[%c0_78, %c16_79], %74 {strides = array<i32>} : memref<648x36xf32, #tpu.memory_space<vmem>>, vector<648x4xf32>,
    %c20 = arith.constant 20 : index
    %c0_80 = arith.constant 0 : index
    %76 = vector.load %arg12[%c20, %c0_80] : memref<688x4xf32, #tpu.memory_space<vmem>>, vector<648x4xf32>
    %c0_81 = arith.constant 0 : index
    %c20_82 = arith.constant 20 : index
    %77 = vector.load %arg13[%c0_81, %c20_82] : memref<648x36xf32, #tpu.memory_space<vmem>>, vector<648x4xf32>
    tpu.vector_store %arg13[%c0_81, %c20_82], %76 {strides = array<i32>} : memref<648x36xf32, #tpu.memory_space<vmem>>, vector<648x4xf32>,
    %c36 = arith.constant 36 : index
    %c0_83 = arith.constant 0 : index
    %78 = vector.load %arg12[%c36, %c0_83] : memref<688x4xf32, #tpu.memory_space<vmem>>, vector<648x4xf32>
    %c0_84 = arith.constant 0 : index
    %c24 = arith.constant 24 : index
    %79 = vector.load %arg13[%c0_84, %c24] : memref<648x36xf32, #tpu.memory_space<vmem>>, vector<648x4xf32>
    tpu.vector_store %arg13[%c0_84, %c24], %78 {strides = array<i32>} : memref<648x36xf32, #tpu.memory_space<vmem>>, vector<648x4xf32>,
    %c37_85 = arith.constant 37 : index
    %c0_86 = arith.constant 0 : index
    %80 = vector.load %arg12[%c37_85, %c0_86] : memref<688x4xf32, #tpu.memory_space<vmem>>, vector<648x4xf32>
    %c0_87 = arith.constant 0 : index
    %c28 = arith.constant 28 : index
    %81 = vector.load %arg13[%c0_87, %c28] : memref<648x36xf32, #tpu.memory_space<vmem>>, vector<648x4xf32>
    tpu.vector_store %arg13[%c0_87, %c28], %80 {strides = array<i32>} : memref<648x36xf32, #tpu.memory_space<vmem>>, vector<648x4xf32>,
    %c38 = arith.constant 38 : index
    %c0_88 = arith.constant 0 : index
    %82 = vector.load %arg12[%c38, %c0_88] : memref<688x4xf32, #tpu.memory_space<vmem>>, vector<648x4xf32>
    %c0_89 = arith.constant 0 : index
    %c32_90 = arith.constant 32 : index
    %83 = vector.load %arg13[%c0_89, %c32_90] : memref<648x36xf32, #tpu.memory_space<vmem>>, vector<648x4xf32>
    tpu.vector_store %arg13[%c0_89, %c32_90], %82 {strides = array<i32>} : memref<648x36xf32, #tpu.memory_space<vmem>>, vector<648x4xf32>,
    %c0_91 = arith.constant 0 : index
    %c0_92 = arith.constant 0 : index
    %84 = vector.load %arg13[%c0_91, %c0_92] : memref<648x36xf32, #tpu.memory_space<vmem>>, vector<648x36xf32>
    %c0_93 = arith.constant 0 : index
    %c0_94 = arith.constant 0 : index
    %85 = vector.load %arg1[%c0_93, %c0_94] : memref<36x8xf32, #tpu.memory_space<vmem>>, vector<36x8xf32>
    %cst_95 = arith.constant dense<0.000000e+00> : vector<648x8xf32>
    %86 = tpu.matmul %84, %85, %cst_95 {dimension_numbers = #tpu.dot_dimension_numbers<[1], [0], [0], [1], [0, 0, 1, 1], [], []>} : vector<648x36xf32>, vector<36x8xf32>, vector<648x8xf32> -> vector<648x8xf32>
    %c0_96 = arith.constant 0 : index
    %c0_97 = arith.constant 0 : index
    %87 = vector.load %arg2[%c0_96, %c0_97] : memref<1x8xf32, #tpu.memory_space<vmem>>, vector<1x8xf32>
    %88 = vector.broadcast %87 : vector<1x8xf32> to vector<648x8xf32>
    %89 = arith.addf %86, %88 : vector<648x8xf32>
    %cst_98 = arith.constant 0.000000e+00 : f32
    %90 = vector.broadcast %cst_98 : f32 to vector<648x8xf32>
    %91 = arith.maximumf %89, %90 : vector<648x8xf32>
    %c0_99 = arith.constant 0 : index
    %c0_100 = arith.constant 0 : index
    %92 = vector.load %arg14[%c0_99, %c0_100] : memref<648x8xf32, #tpu.memory_space<vmem>>, vector<648x8xf32>
    tpu.vector_store %arg14[%c0_99, %c0_100], %91 {strides = array<i32>} : memref<648x8xf32, #tpu.memory_space<vmem>>, vector<648x8xf32>,
    %cst_101 = arith.constant 0.000000e+00 : f32
    %93 = vector.broadcast %cst_101 : f32 to vector<224x8xf32>
    %c0_102 = arith.constant 0 : index
    %c0_103 = arith.constant 0 : index
    %94 = vector.load %arg15[%c0_102, %c0_103] : memref<224x8xf32, #tpu.memory_space<vmem>>, vector<224x8xf32>
    tpu.vector_store %arg15[%c0_102, %c0_103], %93 {strides = array<i32>} : memref<224x8xf32, #tpu.memory_space<vmem>>, vector<224x8xf32>,
    %c0_104 = arith.constant 0 : index
    %c0_105 = arith.constant 0 : index
    %95 = tpu.strided_load %arg14[%c0_104, %c0_105] {strides = array<i32: 2, 1>} : memref<648x8xf32, #tpu.memory_space<vmem>>, vector<8x8xf32>
    %c1_106 = arith.constant 1 : index
    %c0_107 = arith.constant 0 : index
    %96 = tpu.strided_load %arg14[%c1_106, %c0_107] {strides = array<i32: 2, 1>} : memref<648x8xf32, #tpu.memory_space<vmem>>, vector<8x8xf32>
    %97 = arith.maximumf %95, %96 : vector<8x8xf32>
    %c18_108 = arith.constant 18 : index
    %c0_109 = arith.constant 0 : index
    %98 = tpu.strided_load %arg14[%c18_108, %c0_109] {strides = array<i32: 2, 1>} : memref<648x8xf32, #tpu.memory_space<vmem>>, vector<8x8xf32>
    %c19_110 = arith.constant 19 : index
    %c0_111 = arith.constant 0 : index
    %99 = tpu.strided_load %arg14[%c19_110, %c0_111] {strides = array<i32: 2, 1>} : memref<648x8xf32, #tpu.memory_space<vmem>>, vector<8x8xf32>
    %100 = arith.maximumf %98, %99 : vector<8x8xf32>
    %101 = arith.maximumf %97, %100 : vector<8x8xf32>
    %c11 = arith.constant 11 : index
    %c0_112 = arith.constant 0 : index
    %102 = vector.load %arg15[%c11, %c0_112] : memref<224x8xf32, #tpu.memory_space<vmem>>, vector<8x8xf32>
    tpu.vector_store %arg15[%c11, %c0_112], %101 {strides = array<i32>} : memref<224x8xf32, #tpu.memory_space<vmem>>, vector<8x8xf32>,
    %c36_113 = arith.constant 36 : index
    %c0_114 = arith.constant 0 : index
    %103 = tpu.strided_load %arg14[%c36_113, %c0_114] {strides = array<i32: 2, 1>} : memref<648x8xf32, #tpu.memory_space<vmem>>, vector<8x8xf32>
    %c37_115 = arith.constant 37 : index
    %c0_116 = arith.constant 0 : index
    %104 = tpu.strided_load %arg14[%c37_115, %c0_116] {strides = array<i32: 2, 1>} : memref<648x8xf32, #tpu.memory_space<vmem>>, vector<8x8xf32>
    %105 = arith.maximumf %103, %104 : vector<8x8xf32>
    %c54 = arith.constant 54 : index
    %c0_117 = arith.constant 0 : index
    %106 = tpu.strided_load %arg14[%c54, %c0_117] {strides = array<i32: 2, 1>} : memref<648x8xf32, #tpu.memory_space<vmem>>, vector<8x8xf32>
    %c55_118 = arith.constant 55 : index
    %c0_119 = arith.constant 0 : index
    %107 = tpu.strided_load %arg14[%c55_118, %c0_119] {strides = array<i32: 2, 1>} : memref<648x8xf32, #tpu.memory_space<vmem>>, vector<8x8xf32>
    %108 = arith.maximumf %106, %107 : vector<8x8xf32>
    %109 = arith.maximumf %105, %108 : vector<8x8xf32>
    %c21 = arith.constant 21 : index
    %c0_120 = arith.constant 0 : index
    %110 = vector.load %arg15[%c21, %c0_120] : memref<224x8xf32, #tpu.memory_space<vmem>>, vector<8x8xf32>
    tpu.vector_store %arg15[%c21, %c0_120], %109 {strides = array<i32>} : memref<224x8xf32, #tpu.memory_space<vmem>>, vector<8x8xf32>,
    %c72 = arith.constant 72 : index
    %c0_121 = arith.constant 0 : index
    %111 = tpu.strided_load %arg14[%c72, %c0_121] {strides = array<i32: 2, 1>} : memref<648x8xf32, #tpu.memory_space<vmem>>, vector<8x8xf32>
    %c73_122 = arith.constant 73 : index
    %c0_123 = arith.constant 0 : index
    %112 = tpu.strided_load %arg14[%c73_122, %c0_123] {strides = array<i32: 2, 1>} : memref<648x8xf32, #tpu.memory_space<vmem>>, vector<8x8xf32>
    %113 = arith.maximumf %111, %112 : vector<8x8xf32>
    %c90 = arith.constant 90 : index
    %c0_124 = arith.constant 0 : index
    %114 = tpu.strided_load %arg14[%c90, %c0_124] {strides = array<i32: 2, 1>} : memref<648x8xf32, #tpu.memory_space<vmem>>, vector<8x8xf32>
    %c91_125 = arith.constant 91 : index
    %c0_126 = arith.constant 0 : index
    %115 = tpu.strided_load %arg14[%c91_125, %c0_126] {strides = array<i32: 2, 1>} : memref<648x8xf32, #tpu.memory_space<vmem>>, vector<8x8xf32>
    %116 = arith.maximumf %114, %115 : vector<8x8xf32>
    %117 = arith.maximumf %113, %116 : vector<8x8xf32>
    %c31 = arith.constant 31 : index
    %c0_127 = arith.constant 0 : index
    %118 = vector.load %arg15[%c31, %c0_127] : memref<224x8xf32, #tpu.memory_space<vmem>>, vector<8x8xf32>
    tpu.vector_store %arg15[%c31, %c0_127], %117 {strides = array<i32>} : memref<224x8xf32, #tpu.memory_space<vmem>>, vector<8x8xf32>,
    %c108 = arith.constant 108 : index
    %c0_128 = arith.constant 0 : index
    %119 = tpu.strided_load %arg14[%c108, %c0_128] {strides = array<i32: 2, 1>} : memref<648x8xf32, #tpu.memory_space<vmem>>, vector<8x8xf32>
    %c109_129 = arith.constant 109 : index
    %c0_130 = arith.constant 0 : index
    %120 = tpu.strided_load %arg14[%c109_129, %c0_130] {strides = array<i32: 2, 1>} : memref<648x8xf32, #tpu.memory_space<vmem>>, vector<8x8xf32>
    %121 = arith.maximumf %119, %120 : vector<8x8xf32>
    %c126 = arith.constant 126 : index
    %c0_131 = arith.constant 0 : index
    %122 = tpu.strided_load %arg14[%c126, %c0_131] {strides = array<i32: 2, 1>} : memref<648x8xf32, #tpu.memory_space<vmem>>, vector<8x8xf32>
    %c127_132 = arith.constant 127 : index
    %c0_133 = arith.constant 0 : index
    %123 = tpu.strided_load %arg14[%c127_132, %c0_133] {strides = array<i32: 2, 1>} : memref<648x8xf32, #tpu.memory_space<vmem>>, vector<8x8xf32>
    %124 = arith.maximumf %122, %123 : vector<8x8xf32>
    %125 = arith.maximumf %121, %124 : vector<8x8xf32>
    %c41 = arith.constant 41 : index
    %c0_134 = arith.constant 0 : index
    %126 = vector.load %arg15[%c41, %c0_134] : memref<224x8xf32, #tpu.memory_space<vmem>>, vector<8x8xf32>
    tpu.vector_store %arg15[%c41, %c0_134], %125 {strides = array<i32>} : memref<224x8xf32, #tpu.memory_space<vmem>>, vector<8x8xf32>,
    %c144_135 = arith.constant 144 : index
    %c0_136 = arith.constant 0 : index
    %127 = tpu.strided_load %arg14[%c144_135, %c0_136] {strides = array<i32: 2, 1>} : memref<648x8xf32, #tpu.memory_space<vmem>>, vector<8x8xf32>
    %c145_137 = arith.constant 145 : index
    %c0_138 = arith.constant 0 : index
    %128 = tpu.strided_load %arg14[%c145_137, %c0_138] {strides = array<i32: 2, 1>} : memref<648x8xf32, #tpu.memory_space<vmem>>, vector<8x8xf32>
    %129 = arith.maximumf %127, %128 : vector<8x8xf32>
    %c162 = arith.constant 162 : index
    %c0_139 = arith.constant 0 : index
    %130 = tpu.strided_load %arg14[%c162, %c0_139] {strides = array<i32: 2, 1>} : memref<648x8xf32, #tpu.memory_space<vmem>>, vector<8x8xf32>
    %c163_140 = arith.constant 163 : index
    %c0_141 = arith.constant 0 : index
    %131 = tpu.strided_load %arg14[%c163_140, %c0_141] {strides = array<i32: 2, 1>} : memref<648x8xf32, #tpu.memory_space<vmem>>, vector<8x8xf32>
    %132 = arith.maximumf %130, %131 : vector<8x8xf32>
    %133 = arith.maximumf %129, %132 : vector<8x8xf32>
    %c51 = arith.constant 51 : index
    %c0_142 = arith.constant 0 : index
    %134 = vector.load %arg15[%c51, %c0_142] : memref<224x8xf32, #tpu.memory_space<vmem>>, vector<8x8xf32>
    tpu.vector_store %arg15[%c51, %c0_142], %133 {strides = array<i32>} : memref<224x8xf32, #tpu.memory_space<vmem>>, vector<8x8xf32>,
    %c180 = arith.constant 180 : index
    %c0_143 = arith.constant 0 : index
    %135 = tpu.strided_load %arg14[%c180, %c0_143] {strides = array<i32: 2, 1>} : memref<648x8xf32, #tpu.memory_space<vmem>>, vector<8x8xf32>
    %c181_144 = arith.constant 181 : index
    %c0_145 = arith.constant 0 : index
    %136 = tpu.strided_load %arg14[%c181_144, %c0_145] {strides = array<i32: 2, 1>} : memref<648x8xf32, #tpu.memory_space<vmem>>, vector<8x8xf32>
    %137 = arith.maximumf %135, %136 : vector<8x8xf32>
    %c198 = arith.constant 198 : index
    %c0_146 = arith.constant 0 : index
    %138 = tpu.strided_load %arg14[%c198, %c0_146] {strides = array<i32: 2, 1>} : memref<648x8xf32, #tpu.memory_space<vmem>>, vector<8x8xf32>
    %c199_147 = arith.constant 199 : index
    %c0_148 = arith.constant 0 : index
    %139 = tpu.strided_load %arg14[%c199_147, %c0_148] {strides = array<i32: 2, 1>} : memref<648x8xf32, #tpu.memory_space<vmem>>, vector<8x8xf32>
    %140 = arith.maximumf %138, %139 : vector<8x8xf32>
    %141 = arith.maximumf %137, %140 : vector<8x8xf32>
    %c61 = arith.constant 61 : index
    %c0_149 = arith.constant 0 : index
    %142 = vector.load %arg15[%c61, %c0_149] : memref<224x8xf32, #tpu.memory_space<vmem>>, vector<8x8xf32>
    tpu.vector_store %arg15[%c61, %c0_149], %141 {strides = array<i32>} : memref<224x8xf32, #tpu.memory_space<vmem>>, vector<8x8xf32>,
    %c216 = arith.constant 216 : index
    %c0_150 = arith.constant 0 : index
    %143 = tpu.strided_load %arg14[%c216, %c0_150] {strides = array<i32: 2, 1>} : memref<648x8xf32, #tpu.memory_space<vmem>>, vector<8x8xf32>
    %c217_151 = arith.constant 217 : index
    %c0_152 = arith.constant 0 : index
    %144 = tpu.strided_load %arg14[%c217_151, %c0_152] {strides = array<i32: 2, 1>} : memref<648x8xf32, #tpu.memory_space<vmem>>, vector<8x8xf32>
    %145 = arith.maximumf %143, %144 : vector<8x8xf32>
    %c234 = arith.constant 234 : index
    %c0_153 = arith.constant 0 : index
    %146 = tpu.strided_load %arg14[%c234, %c0_153] {strides = array<i32: 2, 1>} : memref<648x8xf32, #tpu.memory_space<vmem>>, vector<8x8xf32>
    %c235_154 = arith.constant 235 : index
    %c0_155 = arith.constant 0 : index
    %147 = tpu.strided_load %arg14[%c235_154, %c0_155] {strides = array<i32: 2, 1>} : memref<648x8xf32, #tpu.memory_space<vmem>>, vector<8x8xf32>
    %148 = arith.maximumf %146, %147 : vector<8x8xf32>
    %149 = arith.maximumf %145, %148 : vector<8x8xf32>
    %c71 = arith.constant 71 : index
    %c0_156 = arith.constant 0 : index
    %150 = vector.load %arg15[%c71, %c0_156] : memref<224x8xf32, #tpu.memory_space<vmem>>, vector<8x8xf32>
    tpu.vector_store %arg15[%c71, %c0_156], %149 {strides = array<i32>} : memref<224x8xf32, #tpu.memory_space<vmem>>, vector<8x8xf32>,
    %c252 = arith.constant 252 : index
    %c0_157 = arith.constant 0 : index
    %151 = tpu.strided_load %arg14[%c252, %c0_157] {strides = array<i32: 2, 1>} : memref<648x8xf32, #tpu.memory_space<vmem>>, vector<8x8xf32>
    %c253_158 = arith.constant 253 : index
    %c0_159 = arith.constant 0 : index
    %152 = tpu.strided_load %arg14[%c253_158, %c0_159] {strides = array<i32: 2, 1>} : memref<648x8xf32, #tpu.memory_space<vmem>>, vector<8x8xf32>
    %153 = arith.maximumf %151, %152 : vector<8x8xf32>
    %c270 = arith.constant 270 : index
    %c0_160 = arith.constant 0 : index
    %154 = tpu.strided_load %arg14[%c270, %c0_160] {strides = array<i32: 2, 1>} : memref<648x8xf32, #tpu.memory_space<vmem>>, vector<8x8xf32>
    %c271_161 = arith.constant 271 : index
    %c0_162 = arith.constant 0 : index
    %155 = tpu.strided_load %arg14[%c271_161, %c0_162] {strides = array<i32: 2, 1>} : memref<648x8xf32, #tpu.memory_space<vmem>>, vector<8x8xf32>
    %156 = arith.maximumf %154, %155 : vector<8x8xf32>
    %157 = arith.maximumf %153, %156 : vector<8x8xf32>
    %c81 = arith.constant 81 : index
    %c0_163 = arith.constant 0 : index
    %158 = vector.load %arg15[%c81, %c0_163] : memref<224x8xf32, #tpu.memory_space<vmem>>, vector<8x8xf32>
    tpu.vector_store %arg15[%c81, %c0_163], %157 {strides = array<i32>} : memref<224x8xf32, #tpu.memory_space<vmem>>, vector<8x8xf32>,
    %c324 = arith.constant 324 : index
    %c0_164 = arith.constant 0 : index
    %159 = tpu.strided_load %arg14[%c324, %c0_164] {strides = array<i32: 2, 1>} : memref<648x8xf32, #tpu.memory_space<vmem>>, vector<8x8xf32>
    %c325 = arith.constant 325 : index
    %c0_165 = arith.constant 0 : index
    %160 = tpu.strided_load %arg14[%c325, %c0_165] {strides = array<i32: 2, 1>} : memref<648x8xf32, #tpu.memory_space<vmem>>, vector<8x8xf32>
    %161 = arith.maximumf %159, %160 : vector<8x8xf32>
    %c342 = arith.constant 342 : index
    %c0_166 = arith.constant 0 : index
    %162 = tpu.strided_load %arg14[%c342, %c0_166] {strides = array<i32: 2, 1>} : memref<648x8xf32, #tpu.memory_space<vmem>>, vector<8x8xf32>
    %c343_167 = arith.constant 343 : index
    %c0_168 = arith.constant 0 : index
    %163 = tpu.strided_load %arg14[%c343_167, %c0_168] {strides = array<i32: 2, 1>} : memref<648x8xf32, #tpu.memory_space<vmem>>, vector<8x8xf32>
    %164 = arith.maximumf %162, %163 : vector<8x8xf32>
    %165 = arith.maximumf %161, %164 : vector<8x8xf32>
    %c111 = arith.constant 111 : index
    %c0_169 = arith.constant 0 : index
    %166 = vector.load %arg15[%c111, %c0_169] : memref<224x8xf32, #tpu.memory_space<vmem>>, vector<8x8xf32>
    tpu.vector_store %arg15[%c111, %c0_169], %165 {strides = array<i32>} : memref<224x8xf32, #tpu.memory_space<vmem>>, vector<8x8xf32>,
    %c360 = arith.constant 360 : index
    %c0_170 = arith.constant 0 : index
    %167 = tpu.strided_load %arg14[%c360, %c0_170] {strides = array<i32: 2, 1>} : memref<648x8xf32, #tpu.memory_space<vmem>>, vector<8x8xf32>
    %c361_171 = arith.constant 361 : index
    %c0_172 = arith.constant 0 : index
    %168 = tpu.strided_load %arg14[%c361_171, %c0_172] {strides = array<i32: 2, 1>} : memref<648x8xf32, #tpu.memory_space<vmem>>, vector<8x8xf32>
    %169 = arith.maximumf %167, %168 : vector<8x8xf32>
    %c378 = arith.constant 378 : index
    %c0_173 = arith.constant 0 : index
    %170 = tpu.strided_load %arg14[%c378, %c0_173] {strides = array<i32: 2, 1>} : memref<648x8xf32, #tpu.memory_space<vmem>>, vector<8x8xf32>
    %c379_174 = arith.constant 379 : index
    %c0_175 = arith.constant 0 : index
    %171 = tpu.strided_load %arg14[%c379_174, %c0_175] {strides = array<i32: 2, 1>} : memref<648x8xf32, #tpu.memory_space<vmem>>, vector<8x8xf32>
    %172 = arith.maximumf %170, %171 : vector<8x8xf32>
    %173 = arith.maximumf %169, %172 : vector<8x8xf32>
    %c121 = arith.constant 121 : index
    %c0_176 = arith.constant 0 : index
    %174 = vector.load %arg15[%c121, %c0_176] : memref<224x8xf32, #tpu.memory_space<vmem>>, vector<8x8xf32>
    tpu.vector_store %arg15[%c121, %c0_176], %173 {strides = array<i32>} : memref<224x8xf32, #tpu.memory_space<vmem>>, vector<8x8xf32>,
    %c396 = arith.constant 396 : index
    %c0_177 = arith.constant 0 : index
    %175 = tpu.strided_load %arg14[%c396, %c0_177] {strides = array<i32: 2, 1>} : memref<648x8xf32, #tpu.memory_space<vmem>>, vector<8x8xf32>
    %c397_178 = arith.constant 397 : index
    %c0_179 = arith.constant 0 : index
    %176 = tpu.strided_load %arg14[%c397_178, %c0_179] {strides = array<i32: 2, 1>} : memref<648x8xf32, #tpu.memory_space<vmem>>, vector<8x8xf32>
    %177 = arith.maximumf %175, %176 : vector<8x8xf32>
    %c414 = arith.constant 414 : index
    %c0_180 = arith.constant 0 : index
    %178 = tpu.strided_load %arg14[%c414, %c0_180] {strides = array<i32: 2, 1>} : memref<648x8xf32, #tpu.memory_space<vmem>>, vector<8x8xf32>
    %c415_181 = arith.constant 415 : index
    %c0_182 = arith.constant 0 : index
    %179 = tpu.strided_load %arg14[%c415_181, %c0_182] {strides = array<i32: 2, 1>} : memref<648x8xf32, #tpu.memory_space<vmem>>, vector<8x8xf32>
    %180 = arith.maximumf %178, %179 : vector<8x8xf32>
    %181 = arith.maximumf %177, %180 : vector<8x8xf32>
    %c131 = arith.constant 131 : index
    %c0_183 = arith.constant 0 : index
    %182 = vector.load %arg15[%c131, %c0_183] : memref<224x8xf32, #tpu.memory_space<vmem>>, vector<8x8xf32>
    tpu.vector_store %arg15[%c131, %c0_183], %181 {strides = array<i32>} : memref<224x8xf32, #tpu.memory_space<vmem>>, vector<8x8xf32>,
    %c432_184 = arith.constant 432 : index
    %c0_185 = arith.constant 0 : index
    %183 = tpu.strided_load %arg14[%c432_184, %c0_185] {strides = array<i32: 2, 1>} : memref<648x8xf32, #tpu.memory_space<vmem>>, vector<8x8xf32>
    %c433_186 = arith.constant 433 : index
    %c0_187 = arith.constant 0 : index
    %184 = tpu.strided_load %arg14[%c433_186, %c0_187] {strides = array<i32: 2, 1>} : memref<648x8xf32, #tpu.memory_space<vmem>>, vector<8x8xf32>
    %185 = arith.maximumf %183, %184 : vector<8x8xf32>
    %c450 = arith.constant 450 : index
    %c0_188 = arith.constant 0 : index
    %186 = tpu.strided_load %arg14[%c450, %c0_188] {strides = array<i32: 2, 1>} : memref<648x8xf32, #tpu.memory_space<vmem>>, vector<8x8xf32>
    %c451_189 = arith.constant 451 : index
    %c0_190 = arith.constant 0 : index
    %187 = tpu.strided_load %arg14[%c451_189, %c0_190] {strides = array<i32: 2, 1>} : memref<648x8xf32, #tpu.memory_space<vmem>>, vector<8x8xf32>
    %188 = arith.maximumf %186, %187 : vector<8x8xf32>
    %189 = arith.maximumf %185, %188 : vector<8x8xf32>
    %c141 = arith.constant 141 : index
    %c0_191 = arith.constant 0 : index
    %190 = vector.load %arg15[%c141, %c0_191] : memref<224x8xf32, #tpu.memory_space<vmem>>, vector<8x8xf32>
    tpu.vector_store %arg15[%c141, %c0_191], %189 {strides = array<i32>} : memref<224x8xf32, #tpu.memory_space<vmem>>, vector<8x8xf32>,
    %c468 = arith.constant 468 : index
    %c0_192 = arith.constant 0 : index
    %191 = tpu.strided_load %arg14[%c468, %c0_192] {strides = array<i32: 2, 1>} : memref<648x8xf32, #tpu.memory_space<vmem>>, vector<8x8xf32>
    %c469_193 = arith.constant 469 : index
    %c0_194 = arith.constant 0 : index
    %192 = tpu.strided_load %arg14[%c469_193, %c0_194] {strides = array<i32: 2, 1>} : memref<648x8xf32, #tpu.memory_space<vmem>>, vector<8x8xf32>
    %193 = arith.maximumf %191, %192 : vector<8x8xf32>
    %c486 = arith.constant 486 : index
    %c0_195 = arith.constant 0 : index
    %194 = tpu.strided_load %arg14[%c486, %c0_195] {strides = array<i32: 2, 1>} : memref<648x8xf32, #tpu.memory_space<vmem>>, vector<8x8xf32>
    %c487_196 = arith.constant 487 : index
    %c0_197 = arith.constant 0 : index
    %195 = tpu.strided_load %arg14[%c487_196, %c0_197] {strides = array<i32: 2, 1>} : memref<648x8xf32, #tpu.memory_space<vmem>>, vector<8x8xf32>
    %196 = arith.maximumf %194, %195 : vector<8x8xf32>
    %197 = arith.maximumf %193, %196 : vector<8x8xf32>
    %c151 = arith.constant 151 : index
    %c0_198 = arith.constant 0 : index
    %198 = vector.load %arg15[%c151, %c0_198] : memref<224x8xf32, #tpu.memory_space<vmem>>, vector<8x8xf32>
    tpu.vector_store %arg15[%c151, %c0_198], %197 {strides = array<i32>} : memref<224x8xf32, #tpu.memory_space<vmem>>, vector<8x8xf32>,
    %c504 = arith.constant 504 : index
    %c0_199 = arith.constant 0 : index
    %199 = tpu.strided_load %arg14[%c504, %c0_199] {strides = array<i32: 2, 1>} : memref<648x8xf32, #tpu.memory_space<vmem>>, vector<8x8xf32>
    %c505_200 = arith.constant 505 : index
    %c0_201 = arith.constant 0 : index
    %200 = tpu.strided_load %arg14[%c505_200, %c0_201] {strides = array<i32: 2, 1>} : memref<648x8xf32, #tpu.memory_space<vmem>>, vector<8x8xf32>
    %201 = arith.maximumf %199, %200 : vector<8x8xf32>
    %c522 = arith.constant 522 : index
    %c0_202 = arith.constant 0 : index
    %202 = tpu.strided_load %arg14[%c522, %c0_202] {strides = array<i32: 2, 1>} : memref<648x8xf32, #tpu.memory_space<vmem>>, vector<8x8xf32>
    %c523_203 = arith.constant 523 : index
    %c0_204 = arith.constant 0 : index
    %203 = tpu.strided_load %arg14[%c523_203, %c0_204] {strides = array<i32: 2, 1>} : memref<648x8xf32, #tpu.memory_space<vmem>>, vector<8x8xf32>
    %204 = arith.maximumf %202, %203 : vector<8x8xf32>
    %205 = arith.maximumf %201, %204 : vector<8x8xf32>
    %c161 = arith.constant 161 : index
    %c0_205 = arith.constant 0 : index
    %206 = vector.load %arg15[%c161, %c0_205] : memref<224x8xf32, #tpu.memory_space<vmem>>, vector<8x8xf32>
    tpu.vector_store %arg15[%c161, %c0_205], %205 {strides = array<i32>} : memref<224x8xf32, #tpu.memory_space<vmem>>, vector<8x8xf32>,
    %c540 = arith.constant 540 : index
    %c0_206 = arith.constant 0 : index
    %207 = tpu.strided_load %arg14[%c540, %c0_206] {strides = array<i32: 2, 1>} : memref<648x8xf32, #tpu.memory_space<vmem>>, vector<8x8xf32>
    %c541_207 = arith.constant 541 : index
    %c0_208 = arith.constant 0 : index
    %208 = tpu.strided_load %arg14[%c541_207, %c0_208] {strides = array<i32: 2, 1>} : memref<648x8xf32, #tpu.memory_space<vmem>>, vector<8x8xf32>
    %209 = arith.maximumf %207, %208 : vector<8x8xf32>
    %c558 = arith.constant 558 : index
    %c0_209 = arith.constant 0 : index
    %210 = tpu.strided_load %arg14[%c558, %c0_209] {strides = array<i32: 2, 1>} : memref<648x8xf32, #tpu.memory_space<vmem>>, vector<8x8xf32>
    %c559_210 = arith.constant 559 : index
    %c0_211 = arith.constant 0 : index
    %211 = tpu.strided_load %arg14[%c559_210, %c0_211] {strides = array<i32: 2, 1>} : memref<648x8xf32, #tpu.memory_space<vmem>>, vector<8x8xf32>
    %212 = arith.maximumf %210, %211 : vector<8x8xf32>
    %213 = arith.maximumf %209, %212 : vector<8x8xf32>
    %c171 = arith.constant 171 : index
    %c0_212 = arith.constant 0 : index
    %214 = vector.load %arg15[%c171, %c0_212] : memref<224x8xf32, #tpu.memory_space<vmem>>, vector<8x8xf32>
    tpu.vector_store %arg15[%c171, %c0_212], %213 {strides = array<i32>} : memref<224x8xf32, #tpu.memory_space<vmem>>, vector<8x8xf32>,
    %c576 = arith.constant 576 : index
    %c0_213 = arith.constant 0 : index
    %215 = tpu.strided_load %arg14[%c576, %c0_213] {strides = array<i32: 2, 1>} : memref<648x8xf32, #tpu.memory_space<vmem>>, vector<8x8xf32>
    %c577_214 = arith.constant 577 : index
    %c0_215 = arith.constant 0 : index
    %216 = tpu.strided_load %arg14[%c577_214, %c0_215] {strides = array<i32: 2, 1>} : memref<648x8xf32, #tpu.memory_space<vmem>>, vector<8x8xf32>
    %217 = arith.maximumf %215, %216 : vector<8x8xf32>
    %c594 = arith.constant 594 : index
    %c0_216 = arith.constant 0 : index
    %218 = tpu.strided_load %arg14[%c594, %c0_216] {strides = array<i32: 2, 1>} : memref<648x8xf32, #tpu.memory_space<vmem>>, vector<8x8xf32>
    %c595_217 = arith.constant 595 : index
    %c0_218 = arith.constant 0 : index
    %219 = tpu.strided_load %arg14[%c595_217, %c0_218] {strides = array<i32: 2, 1>} : memref<648x8xf32, #tpu.memory_space<vmem>>, vector<8x8xf32>
    %220 = arith.maximumf %218, %219 : vector<8x8xf32>
    %221 = arith.maximumf %217, %220 : vector<8x8xf32>
    %c181_219 = arith.constant 181 : index
    %c0_220 = arith.constant 0 : index
    %222 = vector.load %arg15[%c181_219, %c0_220] : memref<224x8xf32, #tpu.memory_space<vmem>>, vector<8x8xf32>
    tpu.vector_store %arg15[%c181_219, %c0_220], %221 {strides = array<i32>} : memref<224x8xf32, #tpu.memory_space<vmem>>, vector<8x8xf32>,
    %c0_221 = arith.constant 0 : index
    %c0_222 = arith.constant 0 : index
    %223 = vector.load %arg15[%c0_221, %c0_222] : memref<224x8xf32, #tpu.memory_space<vmem>>, vector<200x8xf32>
    %c0_223 = arith.constant 0 : index
    %c0_224 = arith.constant 0 : index
    %224 = vector.load %arg16[%c0_223, %c0_224] : memref<200x72xf32, #tpu.memory_space<vmem>>, vector<200x8xf32>
    tpu.vector_store %arg16[%c0_223, %c0_224], %223 {strides = array<i32>} : memref<200x72xf32, #tpu.memory_space<vmem>>, vector<200x8xf32>,
    %c1_225 = arith.constant 1 : index
    %c0_226 = arith.constant 0 : index
    %225 = vector.load %arg15[%c1_225, %c0_226] : memref<224x8xf32, #tpu.memory_space<vmem>>, vector<200x8xf32>
    %c0_227 = arith.constant 0 : index
    %c8_228 = arith.constant 8 : index
    %226 = vector.load %arg16[%c0_227, %c8_228] : memref<200x72xf32, #tpu.memory_space<vmem>>, vector<200x8xf32>
    tpu.vector_store %arg16[%c0_227, %c8_228], %225 {strides = array<i32>} : memref<200x72xf32, #tpu.memory_space<vmem>>, vector<200x8xf32>,
    %c2_229 = arith.constant 2 : index
    %c0_230 = arith.constant 0 : index
    %227 = vector.load %arg15[%c2_229, %c0_230] : memref<224x8xf32, #tpu.memory_space<vmem>>, vector<200x8xf32>
    %c0_231 = arith.constant 0 : index
    %c16_232 = arith.constant 16 : index
    %228 = vector.load %arg16[%c0_231, %c16_232] : memref<200x72xf32, #tpu.memory_space<vmem>>, vector<200x8xf32>
    tpu.vector_store %arg16[%c0_231, %c16_232], %227 {strides = array<i32>} : memref<200x72xf32, #tpu.memory_space<vmem>>, vector<200x8xf32>,
    %c10 = arith.constant 10 : index
    %c0_233 = arith.constant 0 : index
    %229 = vector.load %arg15[%c10, %c0_233] : memref<224x8xf32, #tpu.memory_space<vmem>>, vector<200x8xf32>
    %c0_234 = arith.constant 0 : index
    %c24_235 = arith.constant 24 : index
    %230 = vector.load %arg16[%c0_234, %c24_235] : memref<200x72xf32, #tpu.memory_space<vmem>>, vector<200x8xf32>
    tpu.vector_store %arg16[%c0_234, %c24_235], %229 {strides = array<i32>} : memref<200x72xf32, #tpu.memory_space<vmem>>, vector<200x8xf32>,
    %c11_236 = arith.constant 11 : index
    %c0_237 = arith.constant 0 : index
    %231 = vector.load %arg15[%c11_236, %c0_237] : memref<224x8xf32, #tpu.memory_space<vmem>>, vector<200x8xf32>
    %c0_238 = arith.constant 0 : index
    %c32_239 = arith.constant 32 : index
    %232 = vector.load %arg16[%c0_238, %c32_239] : memref<200x72xf32, #tpu.memory_space<vmem>>, vector<200x8xf32>
    tpu.vector_store %arg16[%c0_238, %c32_239], %231 {strides = array<i32>} : memref<200x72xf32, #tpu.memory_space<vmem>>, vector<200x8xf32>,
    %c12_240 = arith.constant 12 : index
    %c0_241 = arith.constant 0 : index
    %233 = vector.load %arg15[%c12_240, %c0_241] : memref<224x8xf32, #tpu.memory_space<vmem>>, vector<200x8xf32>
    %c0_242 = arith.constant 0 : index
    %c40 = arith.constant 40 : index
    %234 = vector.load %arg16[%c0_242, %c40] : memref<200x72xf32, #tpu.memory_space<vmem>>, vector<200x8xf32>
    tpu.vector_store %arg16[%c0_242, %c40], %233 {strides = array<i32>} : memref<200x72xf32, #tpu.memory_space<vmem>>, vector<200x8xf32>,
    %c20_243 = arith.constant 20 : index
    %c0_244 = arith.constant 0 : index
    %235 = vector.load %arg15[%c20_243, %c0_244] : memref<224x8xf32, #tpu.memory_space<vmem>>, vector<200x8xf32>
    %c0_245 = arith.constant 0 : index
    %c48_246 = arith.constant 48 : index
    %236 = vector.load %arg16[%c0_245, %c48_246] : memref<200x72xf32, #tpu.memory_space<vmem>>, vector<200x8xf32>
    tpu.vector_store %arg16[%c0_245, %c48_246], %235 {strides = array<i32>} : memref<200x72xf32, #tpu.memory_space<vmem>>, vector<200x8xf32>,
    %c21_247 = arith.constant 21 : index
    %c0_248 = arith.constant 0 : index
    %237 = vector.load %arg15[%c21_247, %c0_248] : memref<224x8xf32, #tpu.memory_space<vmem>>, vector<200x8xf32>
    %c0_249 = arith.constant 0 : index
    %c56 = arith.constant 56 : index
    %238 = vector.load %arg16[%c0_249, %c56] : memref<200x72xf32, #tpu.memory_space<vmem>>, vector<200x8xf32>
    tpu.vector_store %arg16[%c0_249, %c56], %237 {strides = array<i32>} : memref<200x72xf32, #tpu.memory_space<vmem>>, vector<200x8xf32>,
    %c22 = arith.constant 22 : index
    %c0_250 = arith.constant 0 : index
    %239 = vector.load %arg15[%c22, %c0_250] : memref<224x8xf32, #tpu.memory_space<vmem>>, vector<200x8xf32>
    %c0_251 = arith.constant 0 : index
    %c64_252 = arith.constant 64 : index
    %240 = vector.load %arg16[%c0_251, %c64_252] : memref<200x72xf32, #tpu.memory_space<vmem>>, vector<200x8xf32>
    tpu.vector_store %arg16[%c0_251, %c64_252], %239 {strides = array<i32>} : memref<200x72xf32, #tpu.memory_space<vmem>>, vector<200x8xf32>,
    %c0_253 = arith.constant 0 : index
    %c0_254 = arith.constant 0 : index
    %241 = vector.load %arg16[%c0_253, %c0_254] : memref<200x72xf32, #tpu.memory_space<vmem>>, vector<200x72xf32>
    %c0_255 = arith.constant 0 : index
    %c0_256 = arith.constant 0 : index
    %242 = vector.load %arg3[%c0_255, %c0_256] : memref<72x16xf32, #tpu.memory_space<vmem>>, vector<72x16xf32>
    %cst_257 = arith.constant dense<0.000000e+00> : vector<200x16xf32>
    %243 = tpu.matmul %241, %242, %cst_257 {dimension_numbers = #tpu.dot_dimension_numbers<[1], [0], [0], [1], [0, 0, 1, 1], [], []>} : vector<200x72xf32>, vector<72x16xf32>, vector<200x16xf32> -> vector<200x16xf32>
    %c0_258 = arith.constant 0 : index
    %c0_259 = arith.constant 0 : index
    %244 = vector.load %arg4[%c0_258, %c0_259] : memref<1x16xf32, #tpu.memory_space<vmem>>, vector<1x16xf32>
    %245 = vector.broadcast %244 : vector<1x16xf32> to vector<200x16xf32>
    %246 = arith.addf %243, %245 : vector<200x16xf32>
    %cst_260 = arith.constant 0.000000e+00 : f32
    %247 = vector.broadcast %cst_260 : f32 to vector<200x16xf32>
    %248 = arith.maximumf %246, %247 : vector<200x16xf32>
    %c0_261 = arith.constant 0 : index
    %c0_262 = arith.constant 0 : index
    %249 = vector.load %arg17[%c0_261, %c0_262] : memref<200x16xf32, #tpu.memory_space<vmem>>, vector<200x16xf32>
    tpu.vector_store %arg17[%c0_261, %c0_262], %248 {strides = array<i32>} : memref<200x16xf32, #tpu.memory_space<vmem>>, vector<200x16xf32>,
    %c0_263 = arith.constant 0 : index
    %c0_264 = arith.constant 0 : index
    %250 = vector.load %arg17[%c0_263, %c0_264] : memref<200x16xf32, #tpu.memory_space<vmem>>, vector<8x16xf32>
    %c10_265 = arith.constant 10 : index
    %c0_266 = arith.constant 0 : index
    %251 = vector.load %arg17[%c10_265, %c0_266] : memref<200x16xf32, #tpu.memory_space<vmem>>, vector<8x16xf32>
    %252 = arith.maximumf %250, %251 : vector<8x16xf32>
    %253 = vector.extract_strided_slice %252 {offsets = [0, 0], sizes = [1, 16], strides = [1, 1]} : vector<8x16xf32> to vector<1x16xf32>
    %254 = vector.extract_strided_slice %252 {offsets = [1, 0], sizes = [1, 16], strides = [1, 1]} : vector<8x16xf32> to vector<1x16xf32>
    %255 = arith.maximumf %253, %254 : vector<1x16xf32>
    %c0_267 = arith.constant 0 : index
    %c0_268 = arith.constant 0 : index
    %256 = vector.load %arg18[%c0_267, %c0_268] : memref<2x256xf32, #tpu.memory_space<vmem>>, vector<1x16xf32>
    tpu.vector_store %arg18[%c0_267, %c0_268], %255 {strides = array<i32>} : memref<2x256xf32, #tpu.memory_space<vmem>>, vector<1x16xf32>,
    %257 = vector.extract_strided_slice %252 {offsets = [2, 0], sizes = [1, 16], strides = [1, 1]} : vector<8x16xf32> to vector<1x16xf32>
    %258 = vector.extract_strided_slice %252 {offsets = [3, 0], sizes = [1, 16], strides = [1, 1]} : vector<8x16xf32> to vector<1x16xf32>
    %259 = arith.maximumf %257, %258 : vector<1x16xf32>
    %c0_269 = arith.constant 0 : index
    %c16_270 = arith.constant 16 : index
    %260 = vector.load %arg18[%c0_269, %c16_270] : memref<2x256xf32, #tpu.memory_space<vmem>>, vector<1x16xf32>
    tpu.vector_store %arg18[%c0_269, %c16_270], %259 {strides = array<i32>} : memref<2x256xf32, #tpu.memory_space<vmem>>, vector<1x16xf32>,
    %261 = vector.extract_strided_slice %252 {offsets = [4, 0], sizes = [1, 16], strides = [1, 1]} : vector<8x16xf32> to vector<1x16xf32>
    %262 = vector.extract_strided_slice %252 {offsets = [5, 0], sizes = [1, 16], strides = [1, 1]} : vector<8x16xf32> to vector<1x16xf32>
    %263 = arith.maximumf %261, %262 : vector<1x16xf32>
    %c0_271 = arith.constant 0 : index
    %c32_272 = arith.constant 32 : index
    %264 = vector.load %arg18[%c0_271, %c32_272] : memref<2x256xf32, #tpu.memory_space<vmem>>, vector<1x16xf32>
    tpu.vector_store %arg18[%c0_271, %c32_272], %263 {strides = array<i32>} : memref<2x256xf32, #tpu.memory_space<vmem>>, vector<1x16xf32>,
    %265 = vector.extract_strided_slice %252 {offsets = [6, 0], sizes = [1, 16], strides = [1, 1]} : vector<8x16xf32> to vector<1x16xf32>
    %266 = vector.extract_strided_slice %252 {offsets = [7, 0], sizes = [1, 16], strides = [1, 1]} : vector<8x16xf32> to vector<1x16xf32>
    %267 = arith.maximumf %265, %266 : vector<1x16xf32>
    %c0_273 = arith.constant 0 : index
    %c48_274 = arith.constant 48 : index
    %268 = vector.load %arg18[%c0_273, %c48_274] : memref<2x256xf32, #tpu.memory_space<vmem>>, vector<1x16xf32>
    tpu.vector_store %arg18[%c0_273, %c48_274], %267 {strides = array<i32>} : memref<2x256xf32, #tpu.memory_space<vmem>>, vector<1x16xf32>,
    %c20_275 = arith.constant 20 : index
    %c0_276 = arith.constant 0 : index
    %269 = vector.load %arg17[%c20_275, %c0_276] : memref<200x16xf32, #tpu.memory_space<vmem>>, vector<8x16xf32>
    %c30 = arith.constant 30 : index
    %c0_277 = arith.constant 0 : index
    %270 = vector.load %arg17[%c30, %c0_277] : memref<200x16xf32, #tpu.memory_space<vmem>>, vector<8x16xf32>
    %271 = arith.maximumf %269, %270 : vector<8x16xf32>
    %272 = vector.extract_strided_slice %271 {offsets = [0, 0], sizes = [1, 16], strides = [1, 1]} : vector<8x16xf32> to vector<1x16xf32>
    %273 = vector.extract_strided_slice %271 {offsets = [1, 0], sizes = [1, 16], strides = [1, 1]} : vector<8x16xf32> to vector<1x16xf32>
    %274 = arith.maximumf %272, %273 : vector<1x16xf32>
    %c0_278 = arith.constant 0 : index
    %c64_279 = arith.constant 64 : index
    %275 = vector.load %arg18[%c0_278, %c64_279] : memref<2x256xf32, #tpu.memory_space<vmem>>, vector<1x16xf32>
    tpu.vector_store %arg18[%c0_278, %c64_279], %274 {strides = array<i32>} : memref<2x256xf32, #tpu.memory_space<vmem>>, vector<1x16xf32>,
    %276 = vector.extract_strided_slice %271 {offsets = [2, 0], sizes = [1, 16], strides = [1, 1]} : vector<8x16xf32> to vector<1x16xf32>
    %277 = vector.extract_strided_slice %271 {offsets = [3, 0], sizes = [1, 16], strides = [1, 1]} : vector<8x16xf32> to vector<1x16xf32>
    %278 = arith.maximumf %276, %277 : vector<1x16xf32>
    %c0_280 = arith.constant 0 : index
    %c80_281 = arith.constant 80 : index
    %279 = vector.load %arg18[%c0_280, %c80_281] : memref<2x256xf32, #tpu.memory_space<vmem>>, vector<1x16xf32>
    tpu.vector_store %arg18[%c0_280, %c80_281], %278 {strides = array<i32>} : memref<2x256xf32, #tpu.memory_space<vmem>>, vector<1x16xf32>,
    %280 = vector.extract_strided_slice %271 {offsets = [4, 0], sizes = [1, 16], strides = [1, 1]} : vector<8x16xf32> to vector<1x16xf32>
    %281 = vector.extract_strided_slice %271 {offsets = [5, 0], sizes = [1, 16], strides = [1, 1]} : vector<8x16xf32> to vector<1x16xf32>
    %282 = arith.maximumf %280, %281 : vector<1x16xf32>
    %c0_282 = arith.constant 0 : index
    %c96_283 = arith.constant 96 : index
    %283 = vector.load %arg18[%c0_282, %c96_283] : memref<2x256xf32, #tpu.memory_space<vmem>>, vector<1x16xf32>
    tpu.vector_store %arg18[%c0_282, %c96_283], %282 {strides = array<i32>} : memref<2x256xf32, #tpu.memory_space<vmem>>, vector<1x16xf32>,
    %284 = vector.extract_strided_slice %271 {offsets = [6, 0], sizes = [1, 16], strides = [1, 1]} : vector<8x16xf32> to vector<1x16xf32>
    %285 = vector.extract_strided_slice %271 {offsets = [7, 0], sizes = [1, 16], strides = [1, 1]} : vector<8x16xf32> to vector<1x16xf32>
    %286 = arith.maximumf %284, %285 : vector<1x16xf32>
    %c0_284 = arith.constant 0 : index
    %c112_285 = arith.constant 112 : index
    %287 = vector.load %arg18[%c0_284, %c112_285] : memref<2x256xf32, #tpu.memory_space<vmem>>, vector<1x16xf32>
    tpu.vector_store %arg18[%c0_284, %c112_285], %286 {strides = array<i32>} : memref<2x256xf32, #tpu.memory_space<vmem>>, vector<1x16xf32>,
    %c40_286 = arith.constant 40 : index
    %c0_287 = arith.constant 0 : index
    %288 = vector.load %arg17[%c40_286, %c0_287] : memref<200x16xf32, #tpu.memory_space<vmem>>, vector<8x16xf32>
    %c50 = arith.constant 50 : index
    %c0_288 = arith.constant 0 : index
    %289 = vector.load %arg17[%c50, %c0_288] : memref<200x16xf32, #tpu.memory_space<vmem>>, vector<8x16xf32>
    %290 = arith.maximumf %288, %289 : vector<8x16xf32>
    %291 = vector.extract_strided_slice %290 {offsets = [0, 0], sizes = [1, 16], strides = [1, 1]} : vector<8x16xf32> to vector<1x16xf32>
    %292 = vector.extract_strided_slice %290 {offsets = [1, 0], sizes = [1, 16], strides = [1, 1]} : vector<8x16xf32> to vector<1x16xf32>
    %293 = arith.maximumf %291, %292 : vector<1x16xf32>
    %c0_289 = arith.constant 0 : index
    %c128_290 = arith.constant 128 : index
    %294 = vector.load %arg18[%c0_289, %c128_290] : memref<2x256xf32, #tpu.memory_space<vmem>>, vector<1x16xf32>
    tpu.vector_store %arg18[%c0_289, %c128_290], %293 {strides = array<i32>} : memref<2x256xf32, #tpu.memory_space<vmem>>, vector<1x16xf32>,
    %295 = vector.extract_strided_slice %290 {offsets = [2, 0], sizes = [1, 16], strides = [1, 1]} : vector<8x16xf32> to vector<1x16xf32>
    %296 = vector.extract_strided_slice %290 {offsets = [3, 0], sizes = [1, 16], strides = [1, 1]} : vector<8x16xf32> to vector<1x16xf32>
    %297 = arith.maximumf %295, %296 : vector<1x16xf32>
    %c0_291 = arith.constant 0 : index
    %c144_292 = arith.constant 144 : index
    %298 = vector.load %arg18[%c0_291, %c144_292] : memref<2x256xf32, #tpu.memory_space<vmem>>, vector<1x16xf32>
    tpu.vector_store %arg18[%c0_291, %c144_292], %297 {strides = array<i32>} : memref<2x256xf32, #tpu.memory_space<vmem>>, vector<1x16xf32>,
    %299 = vector.extract_strided_slice %290 {offsets = [4, 0], sizes = [1, 16], strides = [1, 1]} : vector<8x16xf32> to vector<1x16xf32>
    %300 = vector.extract_strided_slice %290 {offsets = [5, 0], sizes = [1, 16], strides = [1, 1]} : vector<8x16xf32> to vector<1x16xf32>
    %301 = arith.maximumf %299, %300 : vector<1x16xf32>
    %c0_293 = arith.constant 0 : index
    %c160_294 = arith.constant 160 : index
    %302 = vector.load %arg18[%c0_293, %c160_294] : memref<2x256xf32, #tpu.memory_space<vmem>>, vector<1x16xf32>
    tpu.vector_store %arg18[%c0_293, %c160_294], %301 {strides = array<i32>} : memref<2x256xf32, #tpu.memory_space<vmem>>, vector<1x16xf32>,
    %303 = vector.extract_strided_slice %290 {offsets = [6, 0], sizes = [1, 16], strides = [1, 1]} : vector<8x16xf32> to vector<1x16xf32>
    %304 = vector.extract_strided_slice %290 {offsets = [7, 0], sizes = [1, 16], strides = [1, 1]} : vector<8x16xf32> to vector<1x16xf32>
    %305 = arith.maximumf %303, %304 : vector<1x16xf32>
    %c0_295 = arith.constant 0 : index
    %c176_296 = arith.constant 176 : index
    %306 = vector.load %arg18[%c0_295, %c176_296] : memref<2x256xf32, #tpu.memory_space<vmem>>, vector<1x16xf32>
    tpu.vector_store %arg18[%c0_295, %c176_296], %305 {strides = array<i32>} : memref<2x256xf32, #tpu.memory_space<vmem>>, vector<1x16xf32>,
    %c60 = arith.constant 60 : index
    %c0_297 = arith.constant 0 : index
    %307 = vector.load %arg17[%c60, %c0_297] : memref<200x16xf32, #tpu.memory_space<vmem>>, vector<8x16xf32>
    %c70 = arith.constant 70 : index
    %c0_298 = arith.constant 0 : index
    %308 = vector.load %arg17[%c70, %c0_298] : memref<200x16xf32, #tpu.memory_space<vmem>>, vector<8x16xf32>
    %309 = arith.maximumf %307, %308 : vector<8x16xf32>
    %310 = vector.extract_strided_slice %309 {offsets = [0, 0], sizes = [1, 16], strides = [1, 1]} : vector<8x16xf32> to vector<1x16xf32>
    %311 = vector.extract_strided_slice %309 {offsets = [1, 0], sizes = [1, 16], strides = [1, 1]} : vector<8x16xf32> to vector<1x16xf32>
    %312 = arith.maximumf %310, %311 : vector<1x16xf32>
    %c0_299 = arith.constant 0 : index
    %c192_300 = arith.constant 192 : index
    %313 = vector.load %arg18[%c0_299, %c192_300] : memref<2x256xf32, #tpu.memory_space<vmem>>, vector<1x16xf32>
    tpu.vector_store %arg18[%c0_299, %c192_300], %312 {strides = array<i32>} : memref<2x256xf32, #tpu.memory_space<vmem>>, vector<1x16xf32>,
    %314 = vector.extract_strided_slice %309 {offsets = [2, 0], sizes = [1, 16], strides = [1, 1]} : vector<8x16xf32> to vector<1x16xf32>
    %315 = vector.extract_strided_slice %309 {offsets = [3, 0], sizes = [1, 16], strides = [1, 1]} : vector<8x16xf32> to vector<1x16xf32>
    %316 = arith.maximumf %314, %315 : vector<1x16xf32>
    %c0_301 = arith.constant 0 : index
    %c208_302 = arith.constant 208 : index
    %317 = vector.load %arg18[%c0_301, %c208_302] : memref<2x256xf32, #tpu.memory_space<vmem>>, vector<1x16xf32>
    tpu.vector_store %arg18[%c0_301, %c208_302], %316 {strides = array<i32>} : memref<2x256xf32, #tpu.memory_space<vmem>>, vector<1x16xf32>,
    %318 = vector.extract_strided_slice %309 {offsets = [4, 0], sizes = [1, 16], strides = [1, 1]} : vector<8x16xf32> to vector<1x16xf32>
    %319 = vector.extract_strided_slice %309 {offsets = [5, 0], sizes = [1, 16], strides = [1, 1]} : vector<8x16xf32> to vector<1x16xf32>
    %320 = arith.maximumf %318, %319 : vector<1x16xf32>
    %c0_303 = arith.constant 0 : index
    %c224_304 = arith.constant 224 : index
    %321 = vector.load %arg18[%c0_303, %c224_304] : memref<2x256xf32, #tpu.memory_space<vmem>>, vector<1x16xf32>
    tpu.vector_store %arg18[%c0_303, %c224_304], %320 {strides = array<i32>} : memref<2x256xf32, #tpu.memory_space<vmem>>, vector<1x16xf32>,
    %322 = vector.extract_strided_slice %309 {offsets = [6, 0], sizes = [1, 16], strides = [1, 1]} : vector<8x16xf32> to vector<1x16xf32>
    %323 = vector.extract_strided_slice %309 {offsets = [7, 0], sizes = [1, 16], strides = [1, 1]} : vector<8x16xf32> to vector<1x16xf32>
    %324 = arith.maximumf %322, %323 : vector<1x16xf32>
    %c0_305 = arith.constant 0 : index
    %c240_306 = arith.constant 240 : index
    %325 = vector.load %arg18[%c0_305, %c240_306] : memref<2x256xf32, #tpu.memory_space<vmem>>, vector<1x16xf32>
    tpu.vector_store %arg18[%c0_305, %c240_306], %324 {strides = array<i32>} : memref<2x256xf32, #tpu.memory_space<vmem>>, vector<1x16xf32>,
    %c100 = arith.constant 100 : index
    %c0_307 = arith.constant 0 : index
    %326 = vector.load %arg17[%c100, %c0_307] : memref<200x16xf32, #tpu.memory_space<vmem>>, vector<8x16xf32>
    %c110 = arith.constant 110 : index
    %c0_308 = arith.constant 0 : index
    %327 = vector.load %arg17[%c110, %c0_308] : memref<200x16xf32, #tpu.memory_space<vmem>>, vector<8x16xf32>
    %328 = arith.maximumf %326, %327 : vector<8x16xf32>
    %329 = vector.extract_strided_slice %328 {offsets = [0, 0], sizes = [1, 16], strides = [1, 1]} : vector<8x16xf32> to vector<1x16xf32>
    %330 = vector.extract_strided_slice %328 {offsets = [1, 0], sizes = [1, 16], strides = [1, 1]} : vector<8x16xf32> to vector<1x16xf32>
    %331 = arith.maximumf %329, %330 : vector<1x16xf32>
    %c1_309 = arith.constant 1 : index
    %c0_310 = arith.constant 0 : index
    %332 = vector.load %arg18[%c1_309, %c0_310] : memref<2x256xf32, #tpu.memory_space<vmem>>, vector<1x16xf32>
    tpu.vector_store %arg18[%c1_309, %c0_310], %331 {strides = array<i32>} : memref<2x256xf32, #tpu.memory_space<vmem>>, vector<1x16xf32>,
    %333 = vector.extract_strided_slice %328 {offsets = [2, 0], sizes = [1, 16], strides = [1, 1]} : vector<8x16xf32> to vector<1x16xf32>
    %334 = vector.extract_strided_slice %328 {offsets = [3, 0], sizes = [1, 16], strides = [1, 1]} : vector<8x16xf32> to vector<1x16xf32>
    %335 = arith.maximumf %333, %334 : vector<1x16xf32>
    %c1_311 = arith.constant 1 : index
    %c16_312 = arith.constant 16 : index
    %336 = vector.load %arg18[%c1_311, %c16_312] : memref<2x256xf32, #tpu.memory_space<vmem>>, vector<1x16xf32>
    tpu.vector_store %arg18[%c1_311, %c16_312], %335 {strides = array<i32>} : memref<2x256xf32, #tpu.memory_space<vmem>>, vector<1x16xf32>,
    %337 = vector.extract_strided_slice %328 {offsets = [4, 0], sizes = [1, 16], strides = [1, 1]} : vector<8x16xf32> to vector<1x16xf32>
    %338 = vector.extract_strided_slice %328 {offsets = [5, 0], sizes = [1, 16], strides = [1, 1]} : vector<8x16xf32> to vector<1x16xf32>
    %339 = arith.maximumf %337, %338 : vector<1x16xf32>
    %c1_313 = arith.constant 1 : index
    %c32_314 = arith.constant 32 : index
    %340 = vector.load %arg18[%c1_313, %c32_314] : memref<2x256xf32, #tpu.memory_space<vmem>>, vector<1x16xf32>
    tpu.vector_store %arg18[%c1_313, %c32_314], %339 {strides = array<i32>} : memref<2x256xf32, #tpu.memory_space<vmem>>, vector<1x16xf32>,
    %341 = vector.extract_strided_slice %328 {offsets = [6, 0], sizes = [1, 16], strides = [1, 1]} : vector<8x16xf32> to vector<1x16xf32>
    %342 = vector.extract_strided_slice %328 {offsets = [7, 0], sizes = [1, 16], strides = [1, 1]} : vector<8x16xf32> to vector<1x16xf32>
    %343 = arith.maximumf %341, %342 : vector<1x16xf32>
    %c1_315 = arith.constant 1 : index
    %c48_316 = arith.constant 48 : index
    %344 = vector.load %arg18[%c1_315, %c48_316] : memref<2x256xf32, #tpu.memory_space<vmem>>, vector<1x16xf32>
    tpu.vector_store %arg18[%c1_315, %c48_316], %343 {strides = array<i32>} : memref<2x256xf32, #tpu.memory_space<vmem>>, vector<1x16xf32>,
    %c120 = arith.constant 120 : index
    %c0_317 = arith.constant 0 : index
    %345 = vector.load %arg17[%c120, %c0_317] : memref<200x16xf32, #tpu.memory_space<vmem>>, vector<8x16xf32>
    %c130 = arith.constant 130 : index
    %c0_318 = arith.constant 0 : index
    %346 = vector.load %arg17[%c130, %c0_318] : memref<200x16xf32, #tpu.memory_space<vmem>>, vector<8x16xf32>
    %347 = arith.maximumf %345, %346 : vector<8x16xf32>
    %348 = vector.extract_strided_slice %347 {offsets = [0, 0], sizes = [1, 16], strides = [1, 1]} : vector<8x16xf32> to vector<1x16xf32>
    %349 = vector.extract_strided_slice %347 {offsets = [1, 0], sizes = [1, 16], strides = [1, 1]} : vector<8x16xf32> to vector<1x16xf32>
    %350 = arith.maximumf %348, %349 : vector<1x16xf32>
    %c1_319 = arith.constant 1 : index
    %c64_320 = arith.constant 64 : index
    %351 = vector.load %arg18[%c1_319, %c64_320] : memref<2x256xf32, #tpu.memory_space<vmem>>, vector<1x16xf32>
    tpu.vector_store %arg18[%c1_319, %c64_320], %350 {strides = array<i32>} : memref<2x256xf32, #tpu.memory_space<vmem>>, vector<1x16xf32>,
    %352 = vector.extract_strided_slice %347 {offsets = [2, 0], sizes = [1, 16], strides = [1, 1]} : vector<8x16xf32> to vector<1x16xf32>
    %353 = vector.extract_strided_slice %347 {offsets = [3, 0], sizes = [1, 16], strides = [1, 1]} : vector<8x16xf32> to vector<1x16xf32>
    %354 = arith.maximumf %352, %353 : vector<1x16xf32>
    %c1_321 = arith.constant 1 : index
    %c80_322 = arith.constant 80 : index
    %355 = vector.load %arg18[%c1_321, %c80_322] : memref<2x256xf32, #tpu.memory_space<vmem>>, vector<1x16xf32>
    tpu.vector_store %arg18[%c1_321, %c80_322], %354 {strides = array<i32>} : memref<2x256xf32, #tpu.memory_space<vmem>>, vector<1x16xf32>,
    %356 = vector.extract_strided_slice %347 {offsets = [4, 0], sizes = [1, 16], strides = [1, 1]} : vector<8x16xf32> to vector<1x16xf32>
    %357 = vector.extract_strided_slice %347 {offsets = [5, 0], sizes = [1, 16], strides = [1, 1]} : vector<8x16xf32> to vector<1x16xf32>
    %358 = arith.maximumf %356, %357 : vector<1x16xf32>
    %c1_323 = arith.constant 1 : index
    %c96_324 = arith.constant 96 : index
    %359 = vector.load %arg18[%c1_323, %c96_324] : memref<2x256xf32, #tpu.memory_space<vmem>>, vector<1x16xf32>
    tpu.vector_store %arg18[%c1_323, %c96_324], %358 {strides = array<i32>} : memref<2x256xf32, #tpu.memory_space<vmem>>, vector<1x16xf32>,
    %360 = vector.extract_strided_slice %347 {offsets = [6, 0], sizes = [1, 16], strides = [1, 1]} : vector<8x16xf32> to vector<1x16xf32>
    %361 = vector.extract_strided_slice %347 {offsets = [7, 0], sizes = [1, 16], strides = [1, 1]} : vector<8x16xf32> to vector<1x16xf32>
    %362 = arith.maximumf %360, %361 : vector<1x16xf32>
    %c1_325 = arith.constant 1 : index
    %c112_326 = arith.constant 112 : index
    %363 = vector.load %arg18[%c1_325, %c112_326] : memref<2x256xf32, #tpu.memory_space<vmem>>, vector<1x16xf32>
    tpu.vector_store %arg18[%c1_325, %c112_326], %362 {strides = array<i32>} : memref<2x256xf32, #tpu.memory_space<vmem>>, vector<1x16xf32>,
    %c140 = arith.constant 140 : index
    %c0_327 = arith.constant 0 : index
    %364 = vector.load %arg17[%c140, %c0_327] : memref<200x16xf32, #tpu.memory_space<vmem>>, vector<8x16xf32>
    %c150 = arith.constant 150 : index
    %c0_328 = arith.constant 0 : index
    %365 = vector.load %arg17[%c150, %c0_328] : memref<200x16xf32, #tpu.memory_space<vmem>>, vector<8x16xf32>
    %366 = arith.maximumf %364, %365 : vector<8x16xf32>
    %367 = vector.extract_strided_slice %366 {offsets = [0, 0], sizes = [1, 16], strides = [1, 1]} : vector<8x16xf32> to vector<1x16xf32>
    %368 = vector.extract_strided_slice %366 {offsets = [1, 0], sizes = [1, 16], strides = [1, 1]} : vector<8x16xf32> to vector<1x16xf32>
    %369 = arith.maximumf %367, %368 : vector<1x16xf32>
    %c1_329 = arith.constant 1 : index
    %c128_330 = arith.constant 128 : index
    %370 = vector.load %arg18[%c1_329, %c128_330] : memref<2x256xf32, #tpu.memory_space<vmem>>, vector<1x16xf32>
    tpu.vector_store %arg18[%c1_329, %c128_330], %369 {strides = array<i32>} : memref<2x256xf32, #tpu.memory_space<vmem>>, vector<1x16xf32>,
    %371 = vector.extract_strided_slice %366 {offsets = [2, 0], sizes = [1, 16], strides = [1, 1]} : vector<8x16xf32> to vector<1x16xf32>
    %372 = vector.extract_strided_slice %366 {offsets = [3, 0], sizes = [1, 16], strides = [1, 1]} : vector<8x16xf32> to vector<1x16xf32>
    %373 = arith.maximumf %371, %372 : vector<1x16xf32>
    %c1_331 = arith.constant 1 : index
    %c144_332 = arith.constant 144 : index
    %374 = vector.load %arg18[%c1_331, %c144_332] : memref<2x256xf32, #tpu.memory_space<vmem>>, vector<1x16xf32>
    tpu.vector_store %arg18[%c1_331, %c144_332], %373 {strides = array<i32>} : memref<2x256xf32, #tpu.memory_space<vmem>>, vector<1x16xf32>,
    %375 = vector.extract_strided_slice %366 {offsets = [4, 0], sizes = [1, 16], strides = [1, 1]} : vector<8x16xf32> to vector<1x16xf32>
    %376 = vector.extract_strided_slice %366 {offsets = [5, 0], sizes = [1, 16], strides = [1, 1]} : vector<8x16xf32> to vector<1x16xf32>
    %377 = arith.maximumf %375, %376 : vector<1x16xf32>
    %c1_333 = arith.constant 1 : index
    %c160_334 = arith.constant 160 : index
    %378 = vector.load %arg18[%c1_333, %c160_334] : memref<2x256xf32, #tpu.memory_space<vmem>>, vector<1x16xf32>
    tpu.vector_store %arg18[%c1_333, %c160_334], %377 {strides = array<i32>} : memref<2x256xf32, #tpu.memory_space<vmem>>, vector<1x16xf32>,
    %379 = vector.extract_strided_slice %366 {offsets = [6, 0], sizes = [1, 16], strides = [1, 1]} : vector<8x16xf32> to vector<1x16xf32>
    %380 = vector.extract_strided_slice %366 {offsets = [7, 0], sizes = [1, 16], strides = [1, 1]} : vector<8x16xf32> to vector<1x16xf32>
    %381 = arith.maximumf %379, %380 : vector<1x16xf32>
    %c1_335 = arith.constant 1 : index
    %c176_336 = arith.constant 176 : index
    %382 = vector.load %arg18[%c1_335, %c176_336] : memref<2x256xf32, #tpu.memory_space<vmem>>, vector<1x16xf32>
    tpu.vector_store %arg18[%c1_335, %c176_336], %381 {strides = array<i32>} : memref<2x256xf32, #tpu.memory_space<vmem>>, vector<1x16xf32>,
    %c160_337 = arith.constant 160 : index
    %c0_338 = arith.constant 0 : index
    %383 = vector.load %arg17[%c160_337, %c0_338] : memref<200x16xf32, #tpu.memory_space<vmem>>, vector<8x16xf32>
    %c170 = arith.constant 170 : index
    %c0_339 = arith.constant 0 : index
    %384 = vector.load %arg17[%c170, %c0_339] : memref<200x16xf32, #tpu.memory_space<vmem>>, vector<8x16xf32>
    %385 = arith.maximumf %383, %384 : vector<8x16xf32>
    %386 = vector.extract_strided_slice %385 {offsets = [0, 0], sizes = [1, 16], strides = [1, 1]} : vector<8x16xf32> to vector<1x16xf32>
    %387 = vector.extract_strided_slice %385 {offsets = [1, 0], sizes = [1, 16], strides = [1, 1]} : vector<8x16xf32> to vector<1x16xf32>
    %388 = arith.maximumf %386, %387 : vector<1x16xf32>
    %c1_340 = arith.constant 1 : index
    %c192_341 = arith.constant 192 : index
    %389 = vector.load %arg18[%c1_340, %c192_341] : memref<2x256xf32, #tpu.memory_space<vmem>>, vector<1x16xf32>
    tpu.vector_store %arg18[%c1_340, %c192_341], %388 {strides = array<i32>} : memref<2x256xf32, #tpu.memory_space<vmem>>, vector<1x16xf32>,
    %390 = vector.extract_strided_slice %385 {offsets = [2, 0], sizes = [1, 16], strides = [1, 1]} : vector<8x16xf32> to vector<1x16xf32>
    %391 = vector.extract_strided_slice %385 {offsets = [3, 0], sizes = [1, 16], strides = [1, 1]} : vector<8x16xf32> to vector<1x16xf32>
    %392 = arith.maximumf %390, %391 : vector<1x16xf32>
    %c1_342 = arith.constant 1 : index
    %c208_343 = arith.constant 208 : index
    %393 = vector.load %arg18[%c1_342, %c208_343] : memref<2x256xf32, #tpu.memory_space<vmem>>, vector<1x16xf32>
    tpu.vector_store %arg18[%c1_342, %c208_343], %392 {strides = array<i32>} : memref<2x256xf32, #tpu.memory_space<vmem>>, vector<1x16xf32>,
    %394 = vector.extract_strided_slice %385 {offsets = [4, 0], sizes = [1, 16], strides = [1, 1]} : vector<8x16xf32> to vector<1x16xf32>
    %395 = vector.extract_strided_slice %385 {offsets = [5, 0], sizes = [1, 16], strides = [1, 1]} : vector<8x16xf32> to vector<1x16xf32>
    %396 = arith.maximumf %394, %395 : vector<1x16xf32>
    %c1_344 = arith.constant 1 : index
    %c224_345 = arith.constant 224 : index
    %397 = vector.load %arg18[%c1_344, %c224_345] : memref<2x256xf32, #tpu.memory_space<vmem>>, vector<1x16xf32>
    tpu.vector_store %arg18[%c1_344, %c224_345], %396 {strides = array<i32>} : memref<2x256xf32, #tpu.memory_space<vmem>>, vector<1x16xf32>,
    %398 = vector.extract_strided_slice %385 {offsets = [6, 0], sizes = [1, 16], strides = [1, 1]} : vector<8x16xf32> to vector<1x16xf32>
    %399 = vector.extract_strided_slice %385 {offsets = [7, 0], sizes = [1, 16], strides = [1, 1]} : vector<8x16xf32> to vector<1x16xf32>
    %400 = arith.maximumf %398, %399 : vector<1x16xf32>
    %c1_346 = arith.constant 1 : index
    %c240_347 = arith.constant 240 : index
    %401 = vector.load %arg18[%c1_346, %c240_347] : memref<2x256xf32, #tpu.memory_space<vmem>>, vector<1x16xf32>
    tpu.vector_store %arg18[%c1_346, %c240_347], %400 {strides = array<i32>} : memref<2x256xf32, #tpu.memory_space<vmem>>, vector<1x16xf32>,
    %c0_348 = arith.constant 0 : index
    %c0_349 = arith.constant 0 : index
    %402 = vector.load %arg18[%c0_348, %c0_349] : memref<2x256xf32, #tpu.memory_space<vmem>>, vector<2x256xf32>
    %c0_350 = arith.constant 0 : index
    %c0_351 = arith.constant 0 : index
    %403 = vector.load %arg5[%c0_350, %c0_351] : memref<256x64xf32, #tpu.memory_space<vmem>>, vector<256x64xf32>
    %cst_352 = arith.constant dense<0.000000e+00> : vector<2x64xf32>
    %404 = tpu.matmul %402, %403, %cst_352 {dimension_numbers = #tpu.dot_dimension_numbers<[1], [0], [0], [1], [0, 0, 1, 1], [], []>} : vector<2x256xf32>, vector<256x64xf32>, vector<2x64xf32> -> vector<2x64xf32>
    %c0_353 = arith.constant 0 : index
    %c0_354 = arith.constant 0 : index
    %405 = vector.load %arg6[%c0_353, %c0_354] : memref<1x64xf32, #tpu.memory_space<vmem>>, vector<1x64xf32>
    %406 = vector.broadcast %405 : vector<1x64xf32> to vector<2x64xf32>
    %407 = arith.addf %404, %406 : vector<2x64xf32>
    %cst_355 = arith.constant 0.000000e+00 : f32
    %408 = vector.broadcast %cst_355 : f32 to vector<2x64xf32>
    %409 = arith.maximumf %407, %408 : vector<2x64xf32>
    %c0_356 = arith.constant 0 : index
    %c0_357 = arith.constant 0 : index
    %410 = vector.load %arg7[%c0_356, %c0_357] : memref<64x64xf32, #tpu.memory_space<vmem>>, vector<64x64xf32>
    %cst_358 = arith.constant dense<0.000000e+00> : vector<2x64xf32>
    %411 = tpu.matmul %409, %410, %cst_358 {dimension_numbers = #tpu.dot_dimension_numbers<[1], [0], [0], [1], [0, 0, 1, 1], [], []>} : vector<2x64xf32>, vector<64x64xf32>, vector<2x64xf32> -> vector<2x64xf32>
    %c0_359 = arith.constant 0 : index
    %c0_360 = arith.constant 0 : index
    %412 = vector.load %arg8[%c0_359, %c0_360] : memref<1x64xf32, #tpu.memory_space<vmem>>, vector<1x64xf32>
    %413 = vector.broadcast %412 : vector<1x64xf32> to vector<2x64xf32>
    %414 = arith.addf %411, %413 : vector<2x64xf32>
    %cst_361 = arith.constant 0.000000e+00 : f32
    %415 = vector.broadcast %cst_361 : f32 to vector<2x64xf32>
    %416 = arith.maximumf %414, %415 : vector<2x64xf32>
    %417 = arith.mulf %416, %416 : vector<2x64xf32>
    %cst_362 = arith.constant dense<0.000000e+00> : vector<2xf32>
    %418 = vector.multi_reduction <add>, %417, %cst_362 [1] : vector<2x64xf32> to vector<2xf32>
    %419 = vector.shape_cast %418 : vector<2xf32> to vector<2x1xf32>
    %420 = math.rsqrt %419 : vector<2x1xf32>
    %421 = vector.broadcast %420 : vector<2x1xf32> to vector<2x64xf32>
    %422 = arith.mulf %416, %421 : vector<2x64xf32>
    %c0_363 = arith.constant 0 : index
    %c0_364 = arith.constant 0 : index
    %423 = vector.load %arg9[%c0_363, %c0_364] : memref<64x32xf32, #tpu.memory_space<vmem>>, vector<64x32xf32>
    %cst_365 = arith.constant dense<0.000000e+00> : vector<2x32xf32>
    %424 = tpu.matmul %422, %423, %cst_365 {dimension_numbers = #tpu.dot_dimension_numbers<[1], [0], [0], [1], [0, 0, 1, 1], [], []>} : vector<2x64xf32>, vector<64x32xf32>, vector<2x32xf32> -> vector<2x32xf32>
    %c0_366 = arith.constant 0 : index
    %c0_367 = arith.constant 0 : index
    %425 = vector.load %arg10[%c0_366, %c0_367] : memref<1x32xf32, #tpu.memory_space<vmem>>, vector<1x32xf32>
    %426 = vector.broadcast %425 : vector<1x32xf32> to vector<2x32xf32>
    %427 = arith.addf %424, %426 : vector<2x32xf32>
    %428 = arith.mulf %427, %427 : vector<2x32xf32>
    %cst_368 = arith.constant dense<0.000000e+00> : vector<2xf32>
    %429 = vector.multi_reduction <add>, %428, %cst_368 [1] : vector<2x32xf32> to vector<2xf32>
    %430 = vector.shape_cast %429 : vector<2xf32> to vector<2x1xf32>
    %431 = math.rsqrt %430 : vector<2x1xf32>
    %432 = vector.broadcast %431 : vector<2x1xf32> to vector<2x32xf32>
    %433 = arith.mulf %427, %432 : vector<2x32xf32>
    %c0_369 = arith.constant 0 : index
    %c0_370 = arith.constant 0 : index
    %434 = vector.load %arg11[%c0_369, %c0_370] : memref<2x32xf32, #tpu.memory_space<vmem>>, vector<2x32xf32>
    tpu.vector_store %arg11[%c0_369, %c0_370], %433 {strides = array<i32>} : memref<2x32xf32, #tpu.memory_space<vmem>>, vector<2x32xf32>,
    return
  }
}

</mosaic_0001>

<llo_original>
// kernel: _lambda_.1
$region0: #{_lambda_.1}
  #allocation0 [shape = 'u32[]', space=smem, size = 0x4, offset = 0x4, fixed_abs, tag = 'smem constant byte address 0x4 - core index']
  #allocation1 [shape = 'u32[72,128]{1,0:T(1,128)}', space=vmem, size = 0x9000, scoped, tag = 'internal scratch']
  #allocation2 [shape = 'f32[688,4]{1,0:T(8,128)}', space=vmem, size = 0x56000, scoped, tag = 'scratch operand']
  #allocation3 [shape = 'f32[648,36]{1,0:T(8,128)}', space=vmem, size = 0x51000, scoped, tag = 'scratch operand']
  #allocation4 [shape = 'f32[648,8]{1,0:T(8,128)}', space=vmem, size = 0x51000, scoped, tag = 'scratch operand']
  #allocation5 [shape = 'f32[224,8]{1,0:T(8,128)}', space=vmem, size = 0x1c000, scoped, tag = 'scratch operand']
  #allocation6 [shape = 'f32[200,72]{1,0:T(8,128)}', space=vmem, size = 0x19000, scoped, tag = 'scratch operand']
  #allocation7 [shape = 'f32[200,16]{1,0:T(8,128)}', space=vmem, size = 0x19000, scoped, tag = 'scratch operand']
  #allocation8 [shape = 'f32[2,256]{1,0:T(2,128)}', space=vmem, size = 0x800, scoped, tag = 'scratch operand']
  %s0 = inlined_call_operand.vmem [shape: f32[512,4], index: 0, kind: input, shape index: {}]
  %s1 = inlined_call_operand.vmem [shape: f32[36,8], index: 1, kind: input, shape index: {}]
  %s2 = inlined_call_operand.vmem [shape: f32[1,8], index: 2, kind: input, shape index: {}]
  %s3 = inlined_call_operand.vmem [shape: f32[72,16], index: 3, kind: input, shape index: {}]
  %s4 = inlined_call_operand.vmem [shape: f32[1,16], index: 4, kind: input, shape index: {}]
  %s5 = inlined_call_operand.vmem [shape: f32[256,64], index: 5, kind: input, shape index: {}]
  %s6 = inlined_call_operand.vmem [shape: f32[1,64], index: 6, kind: input, shape index: {}]
  %s7 = inlined_call_operand.vmem [shape: f32[64,64], index: 7, kind: input, shape index: {}]
  %s8 = inlined_call_operand.vmem [shape: f32[1,64], index: 8, kind: input, shape index: {}]
  %s9 = inlined_call_operand.vmem [shape: f32[64,32], index: 9, kind: input, shape index: {}]
  %s10 = inlined_call_operand.vmem [shape: f32[1,32], index: 10, kind: input, shape index: {}]
  %s11 = inlined_call_operand.hbm [shape: f32[2,32], index: 11, kind: output, shape index: {}]
  %s12 = sld [smem:[#allocation0]]
  $region54: #{_lambda_.1} parent=0
    _
  %s14 = ssub.s32 1, %s12
  %s15 = scalar_select 0, %s14, %s12
  $region1: #{_lambda_.1} parent=0
    #allocation9 [shape = 'u8[1024]{0}', space=vmem, size = 0x400, scoped, tag = 'output window, operand 0, single buffered']
    #allocation10 [shape = 's32[1]{0}', space=sflag, size = 0x4, scoped, tag = 'scoped memory for _lambda_.1']
    %16 = vsyncpa [#allocation10], 0
    // Predicated region
    $region2: #{_lambda_.1} parent=1 // pred_check
      _
    $region3: #{_lambda_.1} parent=1 // pred_check_branch
      %18 = sbr.rel (0) target = $region5
    $region4: #{_lambda_.1} parent=1 // pred_region
      _
    $region5: #{_lambda_.1} parent=1 // pred_fallthru
      _
    // Predicated region
    $region6: #{_lambda_.1} parent=1 // pred_check
      _
    $region7: #{_lambda_.1} parent=1 // pred_check_branch
      %20 = sbr.rel (0) target = $region9
    $region8: #{_lambda_.1} parent=1 // pred_region
      _
    $region9: #{_lambda_.1} parent=1 // pred_fallthru
      _
    // Predicated region
    $region10: #{_lambda_.1} parent=1 // pred_check
      _
    $region11: #{_lambda_.1} parent=1 // pred_check_branch
      %22 = sbr.rel (0) target = $region13
    $region12: #{_lambda_.1} parent=1 // pred_region
      _
    $region13: #{_lambda_.1} parent=1 // pred_fallthru
      _
    // Predicated region
    $region14: #{_lambda_.1} parent=1 // pred_check
      _
    $region15: #{_lambda_.1} parent=1 // pred_check_branch
      %24 = sbr.rel (0) target = $region17
    $region16: #{_lambda_.1} parent=1 // pred_region
      _
    $region17: #{_lambda_.1} parent=1 // pred_fallthru
      _
    // Predicated region
    $region18: #{_lambda_.1} parent=1 // pred_check
      _
    $region19: #{_lambda_.1} parent=1 // pred_check_branch
      %26 = sbr.rel (0) target = $region21
    $region20: #{_lambda_.1} parent=1 // pred_region
      _
    $region21: #{_lambda_.1} parent=1 // pred_fallthru
      _
    // Predicated region
    $region22: #{_lambda_.1} parent=1 // pred_check
      _
    $region23: #{_lambda_.1} parent=1 // pred_check_branch
      %28 = sbr.rel (0) target = $region25
    $region24: #{_lambda_.1} parent=1 // pred_region
      _
    $region25: #{_lambda_.1} parent=1 // pred_fallthru
      _
    // Predicated region
    $region26: #{_lambda_.1} parent=1 // pred_check
      _
    $region27: #{_lambda_.1} parent=1 // pred_check_branch
      %30 = sbr.rel (0) target = $region29
    $region28: #{_lambda_.1} parent=1 // pred_region
      _
    $region29: #{_lambda_.1} parent=1 // pred_fallthru
      _
    // Predicated region
    $region30: #{_lambda_.1} parent=1 // pred_check
      _
    $region31: #{_lambda_.1} parent=1 // pred_check_branch
      %32 = sbr.rel (0) target = $region33
    $region32: #{_lambda_.1} parent=1 // pred_region
      _
    $region33: #{_lambda_.1} parent=1 // pred_fallthru
      _
    // Predicated region
    $region34: #{_lambda_.1} parent=1 // pred_check
      _
    $region35: #{_lambda_.1} parent=1 // pred_check_branch
      %34 = sbr.rel (0) target = $region37
    $region36: #{_lambda_.1} parent=1 // pred_region
      _
    $region37: #{_lambda_.1} parent=1 // pred_fallthru
      _
    // Predicated region
    $region38: #{_lambda_.1} parent=1 // pred_check
      _
    $region39: #{_lambda_.1} parent=1 // pred_check_branch
      %36 = sbr.rel (0) target = $region41
    $region40: #{_lambda_.1} parent=1 // pred_region
      _
    $region41: #{_lambda_.1} parent=1 // pred_fallthru
      _
    // Predicated region
    $region42: #{_lambda_.1} parent=1 // pred_check
      _
    $region43: #{_lambda_.1} parent=1 // pred_check_branch
      %38 = sbr.rel (0) target = $region45
    $region44: #{_lambda_.1} parent=1 // pred_region
      _
    $region45: #{_lambda_.1} parent=1 // pred_fallthru
      _
    %vm39 = vcmask 31744
    %40 = vst.msk [vmem:[#allocation2] sm:$0xff] %vm39, 0.0
    %41 = vst.msk [vmem:[#allocation2 + $0x8] sm:$0xff] %vm39, 0.0
    %42 = vst.msk [vmem:[#allocation2 + $0x10] sm:$0xff] %vm39, 0.0
    %43 = vst.msk [vmem:[#allocation2 + $0x18] sm:$0xff] %vm39, 0.0
    %44 = vst.msk [vmem:[#allocation2 + $0x20] sm:$0xff] %vm39, 0.0
    %45 = vst.msk [vmem:[#allocation2 + $0x28] sm:$0xff] %vm39, 0.0
    %46 = vst.msk [vmem:[#allocation2 + $0x30] sm:$0xff] %vm39, 0.0
    %47 = vst.msk [vmem:[#allocation2 + $0x38] sm:$0xff] %vm39, 0.0
    %48 = vst.msk [vmem:[#allocation2 + $0x40] sm:$0xff] %vm39, 0.0
    %49 = vst.msk [vmem:[#allocation2 + $0x48] sm:$0xff] %vm39, 0.0
    %50 = vst.msk [vmem:[#allocation2 + $0x50] sm:$0xff] %vm39, 0.0
    %51 = vst.msk [vmem:[#allocation2 + $0x58] sm:$0xff] %vm39, 0.0
    %52 = vst.msk [vmem:[#allocation2 + $0x60] sm:$0xff] %vm39, 0.0
    %53 = vst.msk [vmem:[#allocation2 + $0x68] sm:$0xff] %vm39, 0.0
    %54 = vst.msk [vmem:[#allocation2 + $0x70] sm:$0xff] %vm39, 0.0
    %55 = vst.msk [vmem:[#allocation2 + $0x78] sm:$0xff] %vm39, 0.0
    %56 = vst.msk [vmem:[#allocation2 + $0x80] sm:$0xff] %vm39, 0.0
    %57 = vst.msk [vmem:[#allocation2 + $0x88] sm:$0xff] %vm39, 0.0
    %58 = vst.msk [vmem:[#allocation2 + $0x90] sm:$0xff] %vm39, 0.0
    %59 = vst.msk [vmem:[#allocation2 + $0x98] sm:$0xff] %vm39, 0.0
    %60 = vst.msk [vmem:[#allocation2 + $0xa0] sm:$0xff] %vm39, 0.0
    %61 = vst.msk [vmem:[#allocation2 + $0xa8] sm:$0xff] %vm39, 0.0
    %62 = vst.msk [vmem:[#allocation2 + $0xb0] sm:$0xff] %vm39, 0.0
    %63 = vst.msk [vmem:[#allocation2 + $0xb8] sm:$0xff] %vm39, 0.0
    %64 = vst.msk [vmem:[#allocation2 + $0xc0] sm:$0xff] %vm39, 0.0
    %65 = vst.msk [vmem:[#allocation2 + $0xc8] sm:$0xff] %vm39, 0.0
    %66 = vst.msk [vmem:[#allocation2 + $0xd0] sm:$0xff] %vm39, 0.0
    %67 = vst.msk [vmem:[#allocation2 + $0xd8] sm:$0xff] %vm39, 0.0
    %68 = vst.msk [vmem:[#allocation2 + $0xe0] sm:$0xff] %vm39, 0.0
    %69 = vst.msk [vmem:[#allocation2 + $0xe8] sm:$0xff] %vm39, 0.0
    %70 = vst.msk [vmem:[#allocation2 + $0xf0] sm:$0xff] %vm39, 0.0
    %71 = vst.msk [vmem:[#allocation2 + $0xf8] sm:$0xff] %vm39, 0.0
    %72 = vst.msk [vmem:[#allocation2 + $0x100] sm:$0xff] %vm39, 0.0
    %73 = vst.msk [vmem:[#allocation2 + $0x108] sm:$0xff] %vm39, 0.0
    %74 = vst.msk [vmem:[#allocation2 + $0x110] sm:$0xff] %vm39, 0.0
    %75 = vst.msk [vmem:[#allocation2 + $0x118] sm:$0xff] %vm39, 0.0
    %76 = vst.msk [vmem:[#allocation2 + $0x120] sm:$0xff] %vm39, 0.0
    %77 = vst.msk [vmem:[#allocation2 + $0x128] sm:$0xff] %vm39, 0.0
    %78 = vst.msk [vmem:[#allocation2 + $0x130] sm:$0xff] %vm39, 0.0
    %79 = vst.msk [vmem:[#allocation2 + $0x138] sm:$0xff] %vm39, 0.0
    %80 = vst.msk [vmem:[#allocation2 + $0x140] sm:$0xff] %vm39, 0.0
    %81 = vst.msk [vmem:[#allocation2 + $0x148] sm:$0xff] %vm39, 0.0
    %82 = vst.msk [vmem:[#allocation2 + $0x150] sm:$0xff] %vm39, 0.0
    %83 = vst.msk [vmem:[#allocation2 + $0x158] sm:$0xff] %vm39, 0.0
    %84 = vst.msk [vmem:[#allocation2 + $0x160] sm:$0xff] %vm39, 0.0
    %85 = vst.msk [vmem:[#allocation2 + $0x168] sm:$0xff] %vm39, 0.0
    %86 = vst.msk [vmem:[#allocation2 + $0x170] sm:$0xff] %vm39, 0.0
    %87 = vst.msk [vmem:[#allocation2 + $0x178] sm:$0xff] %vm39, 0.0
    %88 = vst.msk [vmem:[#allocation2 + $0x180] sm:$0xff] %vm39, 0.0
    %89 = vst.msk [vmem:[#allocation2 + $0x188] sm:$0xff] %vm39, 0.0
    %90 = vst.msk [vmem:[#allocation2 + $0x190] sm:$0xff] %vm39, 0.0
    %91 = vst.msk [vmem:[#allocation2 + $0x198] sm:$0xff] %vm39, 0.0
    %92 = vst.msk [vmem:[#allocation2 + $0x1a0] sm:$0xff] %vm39, 0.0
    %93 = vst.msk [vmem:[#allocation2 + $0x1a8] sm:$0xff] %vm39, 0.0
    %94 = vst.msk [vmem:[#allocation2 + $0x1b0] sm:$0xff] %vm39, 0.0
    %95 = vst.msk [vmem:[#allocation2 + $0x1b8] sm:$0xff] %vm39, 0.0
    %96 = vst.msk [vmem:[#allocation2 + $0x1c0] sm:$0xff] %vm39, 0.0
    %97 = vst.msk [vmem:[#allocation2 + $0x1c8] sm:$0xff] %vm39, 0.0
    %98 = vst.msk [vmem:[#allocation2 + $0x1d0] sm:$0xff] %vm39, 0.0
    %99 = vst.msk [vmem:[#allocation2 + $0x1d8] sm:$0xff] %vm39, 0.0
    %100 = vst.msk [vmem:[#allocation2 + $0x1e0] sm:$0xff] %vm39, 0.0
    %101 = vst.msk [vmem:[#allocation2 + $0x1e8] sm:$0xff] %vm39, 0.0
    %102 = vst.msk [vmem:[#allocation2 + $0x1f0] sm:$0xff] %vm39, 0.0
    %103 = vst.msk [vmem:[#allocation2 + $0x1f8] sm:$0xff] %vm39, 0.0
    %104 = vst.msk [vmem:[#allocation2 + $0x200] sm:$0xff] %vm39, 0.0
    %105 = vst.msk [vmem:[#allocation2 + $0x208] sm:$0xff] %vm39, 0.0
    %106 = vst.msk [vmem:[#allocation2 + $0x210] sm:$0xff] %vm39, 0.0
    %107 = vst.msk [vmem:[#allocation2 + $0x218] sm:$0xff] %vm39, 0.0
    %108 = vst.msk [vmem:[#allocation2 + $0x220] sm:$0xff] %vm39, 0.0
    %109 = vst.msk [vmem:[#allocation2 + $0x228] sm:$0xff] %vm39, 0.0
    %110 = vst.msk [vmem:[#allocation2 + $0x230] sm:$0xff] %vm39, 0.0
    %111 = vst.msk [vmem:[#allocation2 + $0x238] sm:$0xff] %vm39, 0.0
    %112 = vst.msk [vmem:[#allocation2 + $0x240] sm:$0xff] %vm39, 0.0
    %113 = vst.msk [vmem:[#allocation2 + $0x248] sm:$0xff] %vm39, 0.0
    %114 = vst.msk [vmem:[#allocation2 + $0x250] sm:$0xff] %vm39, 0.0
    %115 = vst.msk [vmem:[#allocation2 + $0x258] sm:$0xff] %vm39, 0.0
    %116 = vst.msk [vmem:[#allocation2 + $0x260] sm:$0xff] %vm39, 0.0
    %117 = vst.msk [vmem:[#allocation2 + $0x268] sm:$0xff] %vm39, 0.0
    %118 = vst.msk [vmem:[#allocation2 + $0x270] sm:$0xff] %vm39, 0.0
    %119 = vst.msk [vmem:[#allocation2 + $0x278] sm:$0xff] %vm39, 0.0
    %120 = vst.msk [vmem:[#allocation2 + $0x280] sm:$0xff] %vm39, 0.0
    %121 = vst.msk [vmem:[#allocation2 + $0x288] sm:$0xff] %vm39, 0.0
    %122 = vst.msk [vmem:[#allocation2 + $0x290] sm:$0xff] %vm39, 0.0
    %123 = vst.msk [vmem:[#allocation2 + $0x298] sm:$0xff] %vm39, 0.0
    %124 = vst.msk [vmem:[#allocation2 + $0x2a0] sm:$0xff] %vm39, 0.0
    %125 = vst.msk [vmem:[#allocation2 + $0x2a8] sm:$0xff] %vm39, 0.0
    %v126 = vld [vmem:[%s0] sm:$0xff]
    %v127 = vld [vmem:[%s0 + $0x8] sm:$0xff]
    %128 = vst.msk [vmem:[#allocation2 + $0x13] sm:$0xff] %vm39, %v126
    %129 = vst.msk [vmem:[#allocation2 + $0x1b] sm:$0xff] %vm39, %v127
    %v130 = vld [vmem:[%s0 + $0x10] sm:$0xff]
    %v131 = vld [vmem:[%s0 + $0x18] sm:$0xff]
    %132 = vst.msk [vmem:[#allocation2 + $0x25] sm:$0xff] %vm39, %v130
    %133 = vst.msk [vmem:[#allocation2 + $0x2d] sm:$0xff] %vm39, %v131
    %v134 = vld [vmem:[%s0 + $0x20] sm:$0xff]
    %v135 = vld [vmem:[%s0 + $0x28] sm:$0xff]
    %136 = vst.msk [vmem:[#allocation2 + $0x37] sm:$0xff] %vm39, %v134
    %137 = vst.msk [vmem:[#allocation2 + $0x3f] sm:$0xff] %vm39, %v135
    %v138 = vld [vmem:[%s0 + $0x30] sm:$0xff]
    %v139 = vld [vmem:[%s0 + $0x38] sm:$0xff]
    %140 = vst.msk [vmem:[#allocation2 + $0x49] sm:$0xff] %vm39, %v138
    %141 = vst.msk [vmem:[#allocation2 + $0x51] sm:$0xff] %vm39, %v139
    %v142 = vld [vmem:[%s0 + $0x40] sm:$0xff]
    %v143 = vld [vmem:[%s0 + $0x48] sm:$0xff]
    %144 = vst.msk [vmem:[#allocation2 + $0x5b] sm:$0xff] %vm39, %v142
    %145 = vst.msk [vmem:[#allocation2 + $0x63] sm:$0xff] %vm39, %v143
    %v146 = vld [vmem:[%s0 + $0x50] sm:$0xff]
    %v147 = vld [vmem:[%s0 + $0x58] sm:$0xff]
    %148 = vst.msk [vmem:[#allocation2 + $0x6d] sm:$0xff] %vm39, %v146
    %149 = vst.msk [vmem:[#allocation2 + $0x75] sm:$0xff] %vm39, %v147
    %v150 = vld [vmem:[%s0 + $0x60] sm:$0xff]
    %v151 = vld [vmem:[%s0 + $0x68] sm:$0xff]
    %152 = vst.msk [vmem:[#allocation2 + $0x7f] sm:$0xff] %vm39, %v150
    %153 = vst.msk [vmem:[#allocation2 + $0x87] sm:$0xff] %vm39, %v151
    %v154 = vld [vmem:[%s0 + $0x70] sm:$0xff]
    %v155 = vld [vmem:[%s0 + $0x78] sm:$0xff]
    %156 = vst.msk [vmem:[#allocation2 + $0x91] sm:$0xff] %vm39, %v154
    %157 = vst.msk [vmem:[#allocation2 + $0x99] sm:$0xff] %vm39, %v155
    %v158 = vld [vmem:[%s0 + $0x80] sm:$0xff]
    %v159 = vld [vmem:[%s0 + $0x88] sm:$0xff]
    %160 = vst.msk [vmem:[#allocation2 + $0xa3] sm:$0xff] %vm39, %v158
    %161 = vst.msk [vmem:[#allocation2 + $0xab] sm:$0xff] %vm39, %v159
    %v162 = vld [vmem:[%s0 + $0x90] sm:$0xff]
    %v163 = vld [vmem:[%s0 + $0x98] sm:$0xff]
    %164 = vst.msk [vmem:[#allocation2 + $0xb5] sm:$0xff] %vm39, %v162
    %165 = vst.msk [vmem:[#allocation2 + $0xbd] sm:$0xff] %vm39, %v163
    %v166 = vld [vmem:[%s0 + $0xa0] sm:$0xff]
    %v167 = vld [vmem:[%s0 + $0xa8] sm:$0xff]
    %168 = vst.msk [vmem:[#allocation2 + $0xc7] sm:$0xff] %vm39, %v166
    %169 = vst.msk [vmem:[#allocation2 + $0xcf] sm:$0xff] %vm39, %v167
    %v170 = vld [vmem:[%s0 + $0xb0] sm:$0xff]
    %v171 = vld [vmem:[%s0 + $0xb8] sm:$0xff]
    %172 = vst.msk [vmem:[#allocation2 + $0xd9] sm:$0xff] %vm39, %v170
    %173 = vst.msk [vmem:[#allocation2 + $0xe1] sm:$0xff] %vm39, %v171
    %v174 = vld [vmem:[%s0 + $0xc0] sm:$0xff]
    %v175 = vld [vmem:[%s0 + $0xc8] sm:$0xff]
    %176 = vst.msk [vmem:[#allocation2 + $0xeb] sm:$0xff] %vm39, %v174
    %177 = vst.msk [vmem:[#allocation2 + $0xf3] sm:$0xff] %vm39, %v175
    %v178 = vld [vmem:[%s0 + $0xd0] sm:$0xff]
    %v179 = vld [vmem:[%s0 + $0xd8] sm:$0xff]
    %180 = vst.msk [vmem:[#allocation2 + $0xfd] sm:$0xff] %vm39, %v178
    %181 = vst.msk [vmem:[#allocation2 + $0x105] sm:$0xff] %vm39, %v179
    %v182 = vld [vmem:[%s0 + $0xe0] sm:$0xff]
    %v183 = vld [vmem:[%s0 + $0xe8] sm:$0xff]
    %184 = vst.msk [vmem:[#allocation2 + $0x10f] sm:$0xff] %vm39, %v182
    %185 = vst.msk [vmem:[#allocation2 + $0x117] sm:$0xff] %vm39, %v183
    %v186 = vld [vmem:[%s0 + $0xf0] sm:$0xff]
    %v187 = vld [vmem:[%s0 + $0xf8] sm:$0xff]
    %188 = vst.msk [vmem:[#allocation2 + $0x121] sm:$0xff] %vm39, %v186
    %189 = vst.msk [vmem:[#allocation2 + $0x129] sm:$0xff] %vm39, %v187
    %v190 = vld [vmem:[%s0 + $0x100] sm:$0xff]
    %v191 = vld [vmem:[%s0 + $0x108] sm:$0xff]
    %192 = vst.msk [vmem:[#allocation2 + $0x157] sm:$0xff] %vm39, %v190
    %193 = vst.msk [vmem:[#allocation2 + $0x15f] sm:$0xff] %vm39, %v191
    %v194 = vld [vmem:[%s0 + $0x110] sm:$0xff]
    %v195 = vld [vmem:[%s0 + $0x118] sm:$0xff]
    %196 = vst.msk [vmem:[#allocation2 + $0x169] sm:$0xff] %vm39, %v194
    %197 = vst.msk [vmem:[#allocation2 + $0x171] sm:$0xff] %vm39, %v195
    %v198 = vld [vmem:[%s0 + $0x120] sm:$0xff]
    %v199 = vld [vmem:[%s0 + $0x128] sm:$0xff]
    %200 = vst.msk [vmem:[#allocation2 + $0x17b] sm:$0xff] %vm39, %v198
    %201 = vst.msk [vmem:[#allocation2 + $0x183] sm:$0xff] %vm39, %v199
    %v202 = vld [vmem:[%s0 + $0x130] sm:$0xff]
    %v203 = vld [vmem:[%s0 + $0x138] sm:$0xff]
    %204 = vst.msk [vmem:[#allocation2 + $0x18d] sm:$0xff] %vm39, %v202
    %205 = vst.msk [vmem:[#allocation2 + $0x195] sm:$0xff] %vm39, %v203
    %v206 = vld [vmem:[%s0 + $0x140] sm:$0xff]
    %v207 = vld [vmem:[%s0 + $0x148] sm:$0xff]
    %208 = vst.msk [vmem:[#allocation2 + $0x19f] sm:$0xff] %vm39, %v206
    %209 = vst.msk [vmem:[#allocation2 + $0x1a7] sm:$0xff] %vm39, %v207
    %v210 = vld [vmem:[%s0 + $0x150] sm:$0xff]
    %v211 = vld [vmem:[%s0 + $0x158] sm:$0xff]
    %212 = vst.msk [vmem:[#allocation2 + $0x1b1] sm:$0xff] %vm39, %v210
    %213 = vst.msk [vmem:[#allocation2 + $0x1b9] sm:$0xff] %vm39, %v211
    %v214 = vld [vmem:[%s0 + $0x160] sm:$0xff]
    %v215 = vld [vmem:[%s0 + $0x168] sm:$0xff]
    %216 = vst.msk [vmem:[#allocation2 + $0x1c3] sm:$0xff] %vm39, %v214
    %217 = vst.msk [vmem:[#allocation2 + $0x1cb] sm:$0xff] %vm39, %v215
    %v218 = vld [vmem:[%s0 + $0x170] sm:$0xff]
    %v219 = vld [vmem:[%s0 + $0x178] sm:$0xff]
    %220 = vst.msk [vmem:[#allocation2 + $0x1d5] sm:$0xff] %vm39, %v218
    %221 = vst.msk [vmem:[#allocation2 + $0x1dd] sm:$0xff] %vm39, %v219
    %v222 = vld [vmem:[%s0 + $0x180] sm:$0xff]
    %v223 = vld [vmem:[%s0 + $0x188] sm:$0xff]
    %224 = vst.msk [vmem:[#allocation2 + $0x1e7] sm:$0xff] %vm39, %v222
    %225 = vst.msk [vmem:[#allocation2 + $0x1ef] sm:$0xff] %vm39, %v223
    %v226 = vld [vmem:[%s0 + $0x190] sm:$0xff]
    %v227 = vld [vmem:[%s0 + $0x198] sm:$0xff]
    %228 = vst.msk [vmem:[#allocation2 + $0x1f9] sm:$0xff] %vm39, %v226
    %229 = vst.msk [vmem:[#allocation2 + $0x201] sm:$0xff] %vm39, %v227
    %v230 = vld [vmem:[%s0 + $0x1a0] sm:$0xff]
    %v231 = vld [vmem:[%s0 + $0x1a8] sm:$0xff]
    %232 = vst.msk [vmem:[#allocation2 + $0x20b] sm:$0xff] %vm39, %v230
    %233 = vst.msk [vmem:[#allocation2 + $0x213] sm:$0xff] %vm39, %v231
    %v234 = vld [vmem:[%s0 + $0x1b0] sm:$0xff]
    %v235 = vld [vmem:[%s0 + $0x1b8] sm:$0xff]
    %236 = vst.msk [vmem:[#allocation2 + $0x21d] sm:$0xff] %vm39, %v234
    %237 = vst.msk [vmem:[#allocation2 + $0x225] sm:$0xff] %vm39, %v235
    %v238 = vld [vmem:[%s0 + $0x1c0] sm:$0xff]
    %v239 = vld [vmem:[%s0 + $0x1c8] sm:$0xff]
    %240 = vst.msk [vmem:[#allocation2 + $0x22f] sm:$0xff] %vm39, %v238
    %241 = vst.msk [vmem:[#allocation2 + $0x237] sm:$0xff] %vm39, %v239
    %v242 = vld [vmem:[%s0 + $0x1d0] sm:$0xff]
    %v243 = vld [vmem:[%s0 + $0x1d8] sm:$0xff]
    %244 = vst.msk [vmem:[#allocation2 + $0x241] sm:$0xff] %vm39, %v242
    %245 = vst.msk [vmem:[#allocation2 + $0x249] sm:$0xff] %vm39, %v243
    %v246 = vld [vmem:[%s0 + $0x1e0] sm:$0xff]
    %v247 = vld [vmem:[%s0 + $0x1e8] sm:$0xff]
    %248 = vst.msk [vmem:[#allocation2 + $0x253] sm:$0xff] %vm39, %v246
    %249 = vst.msk [vmem:[#allocation2 + $0x25b] sm:$0xff] %vm39, %v247
    %v250 = vld [vmem:[%s0 + $0x1f0] sm:$0xff]
    %v251 = vld [vmem:[%s0 + $0x1f8] sm:$0xff]
    %252 = vst.msk [vmem:[#allocation2 + $0x265] sm:$0xff] %vm39, %v250
    %253 = vst.msk [vmem:[#allocation2 + $0x26d] sm:$0xff] %vm39, %v251
    %v254 = vld [vmem:[#allocation2] sm:$0xff]
    %v255 = vld [vmem:[#allocation2 + $0x8] sm:$0xff]
    %v256 = vld [vmem:[#allocation2 + $0x10] sm:$0xff]
    %v257 = vld [vmem:[#allocation2 + $0x18] sm:$0xff]
    %v258 = vld [vmem:[#allocation2 + $0x20] sm:$0xff]
    %v259 = vld [vmem:[#allocation2 + $0x28] sm:$0xff]
    %v260 = vld [vmem:[#allocation2 + $0x30] sm:$0xff]
    %v261 = vld [vmem:[#allocation2 + $0x38] sm:$0xff]
    %v262 = vld [vmem:[#allocation2 + $0x40] sm:$0xff]
    %v263 = vld [vmem:[#allocation2 + $0x48] sm:$0xff]
    %v264 = vld [vmem:[#allocation2 + $0x50] sm:$0xff]
    %v265 = vld [vmem:[#allocation2 + $0x58] sm:$0xff]
    %v266 = vld [vmem:[#allocation2 + $0x60] sm:$0xff]
    %v267 = vld [vmem:[#allocation2 + $0x68] sm:$0xff]
    %v268 = vld [vmem:[#allocation2 + $0x70] sm:$0xff]
    %v269 = vld [vmem:[#allocation2 + $0x78] sm:$0xff]
    %v270 = vld [vmem:[#allocation2 + $0x80] sm:$0xff]
    %v271 = vld [vmem:[#allocation2 + $0x88] sm:$0xff]
    %v272 = vld [vmem:[#allocation2 + $0x90] sm:$0xff]
    %v273 = vld [vmem:[#allocation2 + $0x98] sm:$0xff]
    %v274 = vld [vmem:[#allocation2 + $0xa0] sm:$0xff]
    %v275 = vld [vmem:[#allocation2 + $0xa8] sm:$0xff]
    %v276 = vld [vmem:[#allocation2 + $0xb0] sm:$0xff]
    %v277 = vld [vmem:[#allocation2 + $0xb8] sm:$0xff]
    %v278 = vld [vmem:[#allocation2 + $0xc0] sm:$0xff]
    %v279 = vld [vmem:[#allocation2 + $0xc8] sm:$0xff]
    %v280 = vld [vmem:[#allocation2 + $0xd0] sm:$0xff]
    %v281 = vld [vmem:[#allocation2 + $0xd8] sm:$0xff]
    %v282 = vld [vmem:[#allocation2 + $0xe0] sm:$0xff]
    %v283 = vld [vmem:[#allocation2 + $0xe8] sm:$0xff]
    %v284 = vld [vmem:[#allocation2 + $0xf0] sm:$0xff]
    %v285 = vld [vmem:[#allocation2 + $0xf8] sm:$0xff]
    %v286 = vld [vmem:[#allocation2 + $0x100] sm:$0xff]
    %v287 = vld [vmem:[#allocation2 + $0x108] sm:$0xff]
    %v288 = vld [vmem:[#allocation2 + $0x110] sm:$0xff]
    %v289 = vld [vmem:[#allocation2 + $0x118] sm:$0xff]
    %v290 = vld [vmem:[#allocation2 + $0x120] sm:$0xff]
    %v291 = vld [vmem:[#allocation2 + $0x128] sm:$0xff]
    %v292 = vld [vmem:[#allocation2 + $0x130] sm:$0xff]
    %v293 = vld [vmem:[#allocation2 + $0x138] sm:$0xff]
    %v294 = vld [vmem:[#allocation2 + $0x140] sm:$0xff]
    %v295 = vld [vmem:[#allocation2 + $0x148] sm:$0xff]
    %v296 = vld [vmem:[#allocation2 + $0x150] sm:$0xff]
    %v297 = vld [vmem:[#allocation2 + $0x158] sm:$0xff]
    %v298 = vld [vmem:[#allocation2 + $0x160] sm:$0xff]
    %v299 = vld [vmem:[#allocation2 + $0x168] sm:$0xff]
    %v300 = vld [vmem:[#allocation2 + $0x170] sm:$0xff]
    %v301 = vld [vmem:[#allocation2 + $0x178] sm:$0xff]
    %v302 = vld [vmem:[#allocation2 + $0x180] sm:$0xff]
    %v303 = vld [vmem:[#allocation2 + $0x188] sm:$0xff]
    %v304 = vld [vmem:[#allocation2 + $0x190] sm:$0xff]
    %v305 = vld [vmem:[#allocation2 + $0x198] sm:$0xff]
    %v306 = vld [vmem:[#allocation2 + $0x1a0] sm:$0xff]
    %v307 = vld [vmem:[#allocation2 + $0x1a8] sm:$0xff]
    %v308 = vld [vmem:[#allocation2 + $0x1b0] sm:$0xff]
    %v309 = vld [vmem:[#allocation2 + $0x1b8] sm:$0xff]
    %v310 = vld [vmem:[#allocation2 + $0x1c0] sm:$0xff]
    %v311 = vld [vmem:[#allocation2 + $0x1c8] sm:$0xff]
    %v312 = vld [vmem:[#allocation2 + $0x1d0] sm:$0xff]
    %v313 = vld [vmem:[#allocation2 + $0x1d8] sm:$0xff]
    %v314 = vld [vmem:[#allocation2 + $0x1e0] sm:$0xff]
    %v315 = vld [vmem:[#allocation2 + $0x1e8] sm:$0xff]
    %v316 = vld [vmem:[#allocation2 + $0x1f0] sm:$0xff]
    %v317 = vld [vmem:[#allocation2 + $0x1f8] sm:$0xff]
    %v318 = vld [vmem:[#allocation2 + $0x200] sm:$0xff]
    %v319 = vld [vmem:[#allocation2 + $0x208] sm:$0xff]
    %v320 = vld [vmem:[#allocation2 + $0x210] sm:$0xff]
    %v321 = vld [vmem:[#allocation2 + $0x218] sm:$0xff]
    %v322 = vld [vmem:[#allocation2 + $0x220] sm:$0xff]
    %v323 = vld [vmem:[#allocation2 + $0x228] sm:$0xff]
    %v324 = vld [vmem:[#allocation2 + $0x230] sm:$0xff]
    %v325 = vld [vmem:[#allocation2 + $0x238] sm:$0xff]
    %v326 = vld [vmem:[#allocation2 + $0x240] sm:$0xff]
    %v327 = vld [vmem:[#allocation2 + $0x248] sm:$0xff]
    %v328 = vld [vmem:[#allocation2 + $0x250] sm:$0xff]
    %v329 = vld [vmem:[#allocation2 + $0x258] sm:$0xff]
    %v330 = vld [vmem:[#allocation2 + $0x260] sm:$0xff]
    %v331 = vld [vmem:[#allocation2 + $0x268] sm:$0xff]
    %v332 = vld [vmem:[#allocation2 + $0x270] sm:$0xff]
    %v333 = vld [vmem:[#allocation2 + $0x278] sm:$0xff]
    %v334 = vld [vmem:[#allocation2 + $0x280] sm:$0xff]
    %335 = vst.msk [vmem:[#allocation3] sm:$0xff] %vm39, %v254
    %336 = vst.msk [vmem:[#allocation3 + $0x8] sm:$0xff] %vm39, %v255
    %337 = vst.msk [vmem:[#allocation3 + $0x10] sm:$0xff] %vm39, %v256
    %338 = vst.msk [vmem:[#allocation3 + $0x18] sm:$0xff] %vm39, %v257
    %339 = vst.msk [vmem:[#allocation3 + $0x20] sm:$0xff] %vm39, %v258
    %340 = vst.msk [vmem:[#allocation3 + $0x28] sm:$0xff] %vm39, %v259
    %341 = vst.msk [vmem:[#allocation3 + $0x30] sm:$0xff] %vm39, %v260
    %342 = vst.msk [vmem:[#allocation3 + $0x38] sm:$0xff] %vm39, %v261
    %343 = vst.msk [vmem:[#allocation3 + $0x40] sm:$0xff] %vm39, %v262
    %344 = vst.msk [vmem:[#allocation3 + $0x48] sm:$0xff] %vm39, %v263
    %345 = vst.msk [vmem:[#allocation3 + $0x50] sm:$0xff] %vm39, %v264
    %346 = vst.msk [vmem:[#allocation3 + $0x58] sm:$0xff] %vm39, %v265
    %347 = vst.msk [vmem:[#allocation3 + $0x60] sm:$0xff] %vm39, %v266
    %348 = vst.msk [vmem:[#allocation3 + $0x68] sm:$0xff] %vm39, %v267
    %349 = vst.msk [vmem:[#allocation3 + $0x70] sm:$0xff] %vm39, %v268
    %350 = vst.msk [vmem:[#allocation3 + $0x78] sm:$0xff] %vm39, %v269
    %351 = vst.msk [vmem:[#allocation3 + $0x80] sm:$0xff] %vm39, %v270
    %352 = vst.msk [vmem:[#allocation3 + $0x88] sm:$0xff] %vm39, %v271
    %353 = vst.msk [vmem:[#allocation3 + $0x90] sm:$0xff] %vm39, %v272
    %354 = vst.msk [vmem:[#allocation3 + $0x98] sm:$0xff] %vm39, %v273
    %355 = vst.msk [vmem:[#allocation3 + $0xa0] sm:$0xff] %vm39, %v274
    %356 = vst.msk [vmem:[#allocation3 + $0xa8] sm:$0xff] %vm39, %v275
    %357 = vst.msk [vmem:[#allocation3 + $0xb0] sm:$0xff] %vm39, %v276
    %358 = vst.msk [vmem:[#allocation3 + $0xb8] sm:$0xff] %vm39, %v277
    %359 = vst.msk [vmem:[#allocation3 + $0xc0] sm:$0xff] %vm39, %v278
    %360 = vst.msk [vmem:[#allocation3 + $0xc8] sm:$0xff] %vm39, %v279
    %361 = vst.msk [vmem:[#allocation3 + $0xd0] sm:$0xff] %vm39, %v280
    %362 = vst.msk [vmem:[#allocation3 + $0xd8] sm:$0xff] %vm39, %v281
    %363 = vst.msk [vmem:[#allocation3 + $0xe0] sm:$0xff] %vm39, %v282
    %364 = vst.msk [vmem:[#allocation3 + $0xe8] sm:$0xff] %vm39, %v283
    %365 = vst.msk [vmem:[#allocation3 + $0xf0] sm:$0xff] %vm39, %v284
    %366 = vst.msk [vmem:[#allocation3 + $0xf8] sm:$0xff] %vm39, %v285
    %367 = vst.msk [vmem:[#allocation3 + $0x100] sm:$0xff] %vm39, %v286
    %368 = vst.msk [vmem:[#allocation3 + $0x108] sm:$0xff] %vm39, %v287
    %369 = vst.msk [vmem:[#allocation3 + $0x110] sm:$0xff] %vm39, %v288
    %370 = vst.msk [vmem:[#allocation3 + $0x118] sm:$0xff] %vm39, %v289
    %371 = vst.msk [vmem:[#allocation3 + $0x120] sm:$0xff] %vm39, %v290
    %372 = vst.msk [vmem:[#allocation3 + $0x128] sm:$0xff] %vm39, %v291
    %373 = vst.msk [vmem:[#allocation3 + $0x130] sm:$0xff] %vm39, %v292
    %374 = vst.msk [vmem:[#allocation3 + $0x138] sm:$0xff] %vm39, %v293
    %375 = vst.msk [vmem:[#allocation3 + $0x140] sm:$0xff] %vm39, %v294
    %376 = vst.msk [vmem:[#allocation3 + $0x148] sm:$0xff] %vm39, %v295
    %377 = vst.msk [vmem:[#allocation3 + $0x150] sm:$0xff] %vm39, %v296
    %378 = vst.msk [vmem:[#allocation3 + $0x158] sm:$0xff] %vm39, %v297
    %379 = vst.msk [vmem:[#allocation3 + $0x160] sm:$0xff] %vm39, %v298
    %380 = vst.msk [vmem:[#allocation3 + $0x168] sm:$0xff] %vm39, %v299
    %381 = vst.msk [vmem:[#allocation3 + $0x170] sm:$0xff] %vm39, %v300
    %382 = vst.msk [vmem:[#allocation3 + $0x178] sm:$0xff] %vm39, %v301
    %383 = vst.msk [vmem:[#allocation3 + $0x180] sm:$0xff] %vm39, %v302
    %384 = vst.msk [vmem:[#allocation3 + $0x188] sm:$0xff] %vm39, %v303
    %385 = vst.msk [vmem:[#allocation3 + $0x190] sm:$0xff] %vm39, %v304
    %386 = vst.msk [vmem:[#allocation3 + $0x198] sm:$0xff] %vm39, %v305
    %387 = vst.msk [vmem:[#allocation3 + $0x1a0] sm:$0xff] %vm39, %v306
    %388 = vst.msk [vmem:[#allocation3 + $0x1a8] sm:$0xff] %vm39, %v307
    %389 = vst.msk [vmem:[#allocation3 + $0x1b0] sm:$0xff] %vm39, %v308
    %390 = vst.msk [vmem:[#allocation3 + $0x1b8] sm:$0xff] %vm39, %v309
    %391 = vst.msk [vmem:[#allocation3 + $0x1c0] sm:$0xff] %vm39, %v310
    %392 = vst.msk [vmem:[#allocation3 + $0x1c8] sm:$0xff] %vm39, %v311
    %393 = vst.msk [vmem:[#allocation3 + $0x1d0] sm:$0xff] %vm39, %v312
    %394 = vst.msk [vmem:[#allocation3 + $0x1d8] sm:$0xff] %vm39, %v313
    %395 = vst.msk [vmem:[#allocation3 + $0x1e0] sm:$0xff] %vm39, %v314
    %396 = vst.msk [vmem:[#allocation3 + $0x1e8] sm:$0xff] %vm39, %v315
    %397 = vst.msk [vmem:[#allocation3 + $0x1f0] sm:$0xff] %vm39, %v316
    %398 = vst.msk [vmem:[#allocation3 + $0x1f8] sm:$0xff] %vm39, %v317
    %399 = vst.msk [vmem:[#allocation3 + $0x200] sm:$0xff] %vm39, %v318
    %400 = vst.msk [vmem:[#allocation3 + $0x208] sm:$0xff] %vm39, %v319
    %401 = vst.msk [vmem:[#allocation3 + $0x210] sm:$0xff] %vm39, %v320
    %402 = vst.msk [vmem:[#allocation3 + $0x218] sm:$0xff] %vm39, %v321
    %403 = vst.msk [vmem:[#allocation3 + $0x220] sm:$0xff] %vm39, %v322
    %404 = vst.msk [vmem:[#allocation3 + $0x228] sm:$0xff] %vm39, %v323
    %405 = vst.msk [vmem:[#allocation3 + $0x230] sm:$0xff] %vm39, %v324
    %406 = vst.msk [vmem:[#allocation3 + $0x238] sm:$0xff] %vm39, %v325
    %407 = vst.msk [vmem:[#allocation3 + $0x240] sm:$0xff] %vm39, %v326
    %408 = vst.msk [vmem:[#allocation3 + $0x248] sm:$0xff] %vm39, %v327
    %409 = vst.msk [vmem:[#allocation3 + $0x250] sm:$0xff] %vm39, %v328
    %410 = vst.msk [vmem:[#allocation3 + $0x258] sm:$0xff] %vm39, %v329
    %411 = vst.msk [vmem:[#allocation3 + $0x260] sm:$0xff] %vm39, %v330
    %412 = vst.msk [vmem:[#allocation3 + $0x268] sm:$0xff] %vm39, %v331
    %413 = vst.msk [vmem:[#allocation3 + $0x270] sm:$0xff] %vm39, %v332
    %414 = vst.msk [vmem:[#allocation3 + $0x278] sm:$0xff] %vm39, %v333
    %415 = vst.msk [vmem:[#allocation3 + $0x280] sm:$0xff] %vm39, %v334
    %v416 = vld [vmem:[#allocation2 + $0x1] sm:$0xff]
    %v417 = vld [vmem:[#allocation2 + $0x9] sm:$0xff]
    %v418 = vld [vmem:[#allocation2 + $0x11] sm:$0xff]
    %v419 = vld [vmem:[#allocation2 + $0x19] sm:$0xff]
    %v420 = vld [vmem:[#allocation2 + $0x21] sm:$0xff]
    %v421 = vld [vmem:[#allocation2 + $0x29] sm:$0xff]
    %v422 = vld [vmem:[#allocation2 + $0x31] sm:$0xff]
    %v423 = vld [vmem:[#allocation2 + $0x39] sm:$0xff]
    %v424 = vld [vmem:[#allocation2 + $0x41] sm:$0xff]
    %v425 = vld [vmem:[#allocation2 + $0x49] sm:$0xff]
    %v426 = vld [vmem:[#allocation2 + $0x51] sm:$0xff]
    %v427 = vld [vmem:[#allocation2 + $0x59] sm:$0xff]
    %v428 = vld [vmem:[#allocation2 + $0x61] sm:$0xff]
    %v429 = vld [vmem:[#allocation2 + $0x69] sm:$0xff]
    %v430 = vld [vmem:[#allocation2 + $0x71] sm:$0xff]
    %v431 = vld [vmem:[#allocation2 + $0x79] sm:$0xff]
    %v432 = vld [vmem:[#allocation2 + $0x81] sm:$0xff]
    %v433 = vld [vmem:[#allocation2 + $0x89] sm:$0xff]
    %v434 = vld [vmem:[#allocation2 + $0x91] sm:$0xff]
    %v435 = vld [vmem:[#allocation2 + $0x99] sm:$0xff]
    %v436 = vld [vmem:[#allocation2 + $0xa1] sm:$0xff]
    %v437 = vld [vmem:[#allocation2 + $0xa9] sm:$0xff]
    %v438 = vld [vmem:[#allocation2 + $0xb1] sm:$0xff]
    %v439 = vld [vmem:[#allocation2 + $0xb9] sm:$0xff]
    %v440 = vld [vmem:[#allocation2 + $0xc1] sm:$0xff]
    %v441 = vld [vmem:[#allocation2 + $0xc9] sm:$0xff]
    %v442 = vld [vmem:[#allocation2 + $0xd1] sm:$0xff]
    %v443 = vld [vmem:[#allocation2 + $0xd9] sm:$0xff]
    %v444 = vld [vmem:[#allocation2 + $0xe1] sm:$0xff]
    %v445 = vld [vmem:[#allocation2 + $0xe9] sm:$0xff]
    %v446 = vld [vmem:[#allocation2 + $0xf1] sm:$0xff]
    %v447 = vld [vmem:[#allocation2 + $0xf9] sm:$0xff]
    %v448 = vld [vmem:[#allocation2 + $0x101] sm:$0xff]
    %v449 = vld [vmem:[#allocation2 + $0x109] sm:$0xff]
    %v450 = vld [vmem:[#allocation2 + $0x111] sm:$0xff]
    %v451 = vld [vmem:[#allocation2 + $0x119] sm:$0xff]
    %v452 = vld [vmem:[#allocation2 + $0x121] sm:$0xff]
    %v453 = vld [vmem:[#allocation2 + $0x129] sm:$0xff]
    %v454 = vld [vmem:[#allocation2 + $0x131] sm:$0xff]
    %v455 = vld [vmem:[#allocation2 + $0x139] sm:$0xff]
    %v456 = vld [vmem:[#allocation2 + $0x141] sm:$0xff]
    %v457 = vld [vmem:[#allocation2 + $0x149] sm:$0xff]
    %v458 = vld [vmem:[#allocation2 + $0x151] sm:$0xff]
    %v459 = vld [vmem:[#allocation2 + $0x159] sm:$0xff]
    %v460 = vld [vmem:[#allocation2 + $0x161] sm:$0xff]
    %v461 = vld [vmem:[#allocation2 + $0x169] sm:$0xff]
    %v462 = vld [vmem:[#allocation2 + $0x171] sm:$0xff]
    %v463 = vld [vmem:[#allocation2 + $0x179] sm:$0xff]
    %v464 = vld [vmem:[#allocation2 + $0x181] sm:$0xff]
    %v465 = vld [vmem:[#allocation2 + $0x189] sm:$0xff]
    %v466 = vld [vmem:[#allocation2 + $0x191] sm:$0xff]
    %v467 = vld [vmem:[#allocation2 + $0x199] sm:$0xff]
    %v468 = vld [vmem:[#allocation2 + $0x1a1] sm:$0xff]
    %v469 = vld [vmem:[#allocation2 + $0x1a9] sm:$0xff]
    %v470 = vld [vmem:[#allocation2 + $0x1b1] sm:$0xff]
    %v471 = vld [vmem:[#allocation2 + $0x1b9] sm:$0xff]
    %v472 = vld [vmem:[#allocation2 + $0x1c1] sm:$0xff]
    %v473 = vld [vmem:[#allocation2 + $0x1c9] sm:$0xff]
    %v474 = vld [vmem:[#allocation2 + $0x1d1] sm:$0xff]
    %v475 = vld [vmem:[#allocation2 + $0x1d9] sm:$0xff]
    %v476 = vld [vmem:[#allocation2 + $0x1e1] sm:$0xff]
    %v477 = vld [vmem:[#allocation2 + $0x1e9] sm:$0xff]
    %v478 = vld [vmem:[#allocation2 + $0x1f1] sm:$0xff]
    %v479 = vld [vmem:[#allocation2 + $0x1f9] sm:$0xff]
    %v480 = vld [vmem:[#allocation2 + $0x201] sm:$0xff]
    %v481 = vld [vmem:[#allocation2 + $0x209] sm:$0xff]
    %v482 = vld [vmem:[#allocation2 + $0x211] sm:$0xff]
    %v483 = vld [vmem:[#allocation2 + $0x219] sm:$0xff]
    %v484 = vld [vmem:[#allocation2 + $0x221] sm:$0xff]
    %v485 = vld [vmem:[#allocation2 + $0x229] sm:$0xff]
    %v486 = vld [vmem:[#allocation2 + $0x231] sm:$0xff]
    %v487 = vld [vmem:[#allocation2 + $0x239] sm:$0xff]
    %v488 = vld [vmem:[#allocation2 + $0x241] sm:$0xff]
    %v489 = vld [vmem:[#allocation2 + $0x249] sm:$0xff]
    %v490 = vld [vmem:[#allocation2 + $0x251] sm:$0xff]
    %v491 = vld [vmem:[#allocation2 + $0x259] sm:$0xff]
    %v492 = vld [vmem:[#allocation2 + $0x261] sm:$0xff]
    %v493 = vld [vmem:[#allocation2 + $0x269] sm:$0xff]
    %v494 = vld [vmem:[#allocation2 + $0x271] sm:$0xff]
    %v495 = vld [vmem:[#allocation2 + $0x279] sm:$0xff]
    %v496 = vld [vmem:[#allocation2 + $0x281] sm:$0xff]
    %578 = vrot.lane.b32.xlu0 %v416, 4
    %v579 = vpop.permute.xlu0 %578
    %580 = vrot.lane.b32.xlu0 %v417, 4
    %v581 = vpop.permute.xlu0 %580
    %582 = vrot.lane.b32.xlu0 %v418, 4
    %v583 = vpop.permute.xlu0 %582
    %584 = vrot.lane.b32.xlu0 %v419, 4
    %v585 = vpop.permute.xlu0 %584
    %586 = vrot.lane.b32.xlu0 %v420, 4
    %v587 = vpop.permute.xlu0 %586
    %588 = vrot.lane.b32.xlu0 %v421, 4
    %v589 = vpop.permute.xlu0 %588
    %590 = vrot.lane.b32.xlu0 %v422, 4
    %v591 = vpop.permute.xlu0 %590
    %592 = vrot.lane.b32.xlu0 %v423, 4
    %v593 = vpop.permute.xlu0 %592
    %594 = vrot.lane.b32.xlu0 %v424, 4
    %v595 = vpop.permute.xlu0 %594
    %596 = vrot.lane.b32.xlu0 %v425, 4
    %v597 = vpop.permute.xlu0 %596
    %598 = vrot.lane.b32.xlu0 %v426, 4
    %v599 = vpop.permute.xlu0 %598
    %600 = vrot.lane.b32.xlu0 %v427, 4
    %v601 = vpop.permute.xlu0 %600
    %602 = vrot.lane.b32.xlu0 %v428, 4
    %v603 = vpop.permute.xlu0 %602
    %604 = vrot.lane.b32.xlu0 %v429, 4
    %v605 = vpop.permute.xlu0 %604
    %606 = vrot.lane.b32.xlu0 %v430, 4
    %v607 = vpop.permute.xlu0 %606
    %608 = vrot.lane.b32.xlu0 %v431, 4
    %v609 = vpop.permute.xlu0 %608
    %610 = vrot.lane.b32.xlu0 %v432, 4
    %v611 = vpop.permute.xlu0 %610
    %612 = vrot.lane.b32.xlu0 %v433, 4
    %v613 = vpop.permute.xlu0 %612
    %614 = vrot.lane.b32.xlu0 %v434, 4
    %v615 = vpop.permute.xlu0 %614
    %616 = vrot.lane.b32.xlu0 %v435, 4
    %v617 = vpop.permute.xlu0 %616
    %618 = vrot.lane.b32.xlu0 %v436, 4
    %v619 = vpop.permute.xlu0 %618
    %620 = vrot.lane.b32.xlu0 %v437, 4
    %v621 = vpop.permute.xlu0 %620
    %622 = vrot.lane.b32.xlu0 %v438, 4
    %v623 = vpop.permute.xlu0 %622
    %624 = vrot.lane.b32.xlu0 %v439, 4
    %v625 = vpop.permute.xlu0 %624
    %626 = vrot.lane.b32.xlu0 %v440, 4
    %v627 = vpop.permute.xlu0 %626
    %628 = vrot.lane.b32.xlu0 %v441, 4
    %v629 = vpop.permute.xlu0 %628
    %630 = vrot.lane.b32.xlu0 %v442, 4
    %v631 = vpop.permute.xlu0 %630
    %632 = vrot.lane.b32.xlu0 %v443, 4
    %v633 = vpop.permute.xlu0 %632
    %634 = vrot.lane.b32.xlu0 %v444, 4
    %v635 = vpop.permute.xlu0 %634
    %636 = vrot.lane.b32.xlu0 %v445, 4
    %v637 = vpop.permute.xlu0 %636
    %638 = vrot.lane.b32.xlu0 %v446, 4
    %v639 = vpop.permute.xlu0 %638
    %640 = vrot.lane.b32.xlu0 %v447, 4
    %v641 = vpop.permute.xlu0 %640
    %642 = vrot.lane.b32.xlu0 %v448, 4
    %v643 = vpop.permute.xlu0 %642
    %644 = vrot.lane.b32.xlu0 %v449, 4
    %v645 = vpop.permute.xlu0 %644
    %646 = vrot.lane.b32.xlu0 %v450, 4
    %v647 = vpop.permute.xlu0 %646
    %648 = vrot.lane.b32.xlu0 %v451, 4
    %v649 = vpop.permute.xlu0 %648
    %650 = vrot.lane.b32.xlu0 %v452, 4
    %v651 = vpop.permute.xlu0 %650
    %652 = vrot.lane.b32.xlu0 %v453, 4
    %v653 = vpop.permute.xlu0 %652
    %654 = vrot.lane.b32.xlu0 %v454, 4
    %v655 = vpop.permute.xlu0 %654
    %656 = vrot.lane.b32.xlu0 %v455, 4
    %v657 = vpop.permute.xlu0 %656
    %658 = vrot.lane.b32.xlu0 %v456, 4
    %v659 = vpop.permute.xlu0 %658
    %660 = vrot.lane.b32.xlu0 %v457, 4
    %v661 = vpop.permute.xlu0 %660
    %662 = vrot.lane.b32.xlu0 %v458, 4
    %v663 = vpop.permute.xlu0 %662
    %664 = vrot.lane.b32.xlu0 %v459, 4
    %v665 = vpop.permute.xlu0 %664
    %666 = vrot.lane.b32.xlu0 %v460, 4
    %v667 = vpop.permute.xlu0 %666
    %668 = vrot.lane.b32.xlu0 %v461, 4
    %v669 = vpop.permute.xlu0 %668
    %670 = vrot.lane.b32.xlu0 %v462, 4
    %v671 = vpop.permute.xlu0 %670
    %672 = vrot.lane.b32.xlu0 %v463, 4
    %v673 = vpop.permute.xlu0 %672
    %674 = vrot.lane.b32.xlu0 %v464, 4
    %v675 = vpop.permute.xlu0 %674
    %676 = vrot.lane.b32.xlu0 %v465, 4
    %v677 = vpop.permute.xlu0 %676
    %678 = vrot.lane.b32.xlu0 %v466, 4
    %v679 = vpop.permute.xlu0 %678
    %680 = vrot.lane.b32.xlu0 %v467, 4
    %v681 = vpop.permute.xlu0 %680
    %682 = vrot.lane.b32.xlu0 %v468, 4
    %v683 = vpop.permute.xlu0 %682
    %684 = vrot.lane.b32.xlu0 %v469, 4
    %v685 = vpop.permute.xlu0 %684
    %686 = vrot.lane.b32.xlu0 %v470, 4
    %v687 = vpop.permute.xlu0 %686
    %688 = vrot.lane.b32.xlu0 %v471, 4
    %v689 = vpop.permute.xlu0 %688
    %690 = vrot.lane.b32.xlu0 %v472, 4
    %v691 = vpop.permute.xlu0 %690
    %692 = vrot.lane.b32.xlu0 %v473, 4
    %v693 = vpop.permute.xlu0 %692
    %694 = vrot.lane.b32.xlu0 %v474, 4
    %v695 = vpop.permute.xlu0 %694
    %696 = vrot.lane.b32.xlu0 %v475, 4
    %v697 = vpop.permute.xlu0 %696
    %698 = vrot.lane.b32.xlu0 %v476, 4
    %v699 = vpop.permute.xlu0 %698
    %700 = vrot.lane.b32.xlu0 %v477, 4
    %v701 = vpop.permute.xlu0 %700
    %702 = vrot.lane.b32.xlu0 %v478, 4
    %v703 = vpop.permute.xlu0 %702
    %704 = vrot.lane.b32.xlu0 %v479, 4
    %v705 = vpop.permute.xlu0 %704
    %706 = vrot.lane.b32.xlu0 %v480, 4
    %v707 = vpop.permute.xlu0 %706
    %708 = vrot.lane.b32.xlu0 %v481, 4
    %v709 = vpop.permute.xlu0 %708
    %710 = vrot.lane.b32.xlu0 %v482, 4
    %v711 = vpop.permute.xlu0 %710
    %712 = vrot.lane.b32.xlu0 %v483, 4
    %v713 = vpop.permute.xlu0 %712
    %714 = vrot.lane.b32.xlu0 %v484, 4
    %v715 = vpop.permute.xlu0 %714
    %716 = vrot.lane.b32.xlu0 %v485, 4
    %v717 = vpop.permute.xlu0 %716
    %718 = vrot.lane.b32.xlu0 %v486, 4
    %v719 = vpop.permute.xlu0 %718
    %720 = vrot.lane.b32.xlu0 %v487, 4
    %v721 = vpop.permute.xlu0 %720
    %722 = vrot.lane.b32.xlu0 %v488, 4
    %v723 = vpop.permute.xlu0 %722
    %724 = vrot.lane.b32.xlu0 %v489, 4
    %v725 = vpop.permute.xlu0 %724
    %726 = vrot.lane.b32.xlu0 %v490, 4
    %v727 = vpop.permute.xlu0 %726
    %728 = vrot.lane.b32.xlu0 %v491, 4
    %v729 = vpop.permute.xlu0 %728
    %730 = vrot.lane.b32.xlu0 %v492, 4
    %v731 = vpop.permute.xlu0 %730
    %732 = vrot.lane.b32.xlu0 %v493, 4
    %v733 = vpop.permute.xlu0 %732
    %734 = vrot.lane.b32.xlu0 %v494, 4
    %v735 = vpop.permute.xlu0 %734
    %736 = vrot.lane.b32.xlu0 %v495, 4
    %v737 = vpop.permute.xlu0 %736
    %738 = vrot.lane.b32.xlu0 %v496, 4
    %v739 = vpop.permute.xlu0 %738
    %vm821 = vcmask 64544
    %822 = vst.msk [vmem:[#allocation3] sm:$0xff] %vm821, %v579
    %823 = vst.msk [vmem:[#allocation3 + $0x8] sm:$0xff] %vm821, %v581
    %824 = vst.msk [vmem:[#allocation3 + $0x10] sm:$0xff] %vm821, %v583
    %825 = vst.msk [vmem:[#allocation3 + $0x18] sm:$0xff] %vm821, %v585
    %826 = vst.msk [vmem:[#allocation3 + $0x20] sm:$0xff] %vm821, %v587
    %827 = vst.msk [vmem:[#allocation3 + $0x28] sm:$0xff] %vm821, %v589
    %828 = vst.msk [vmem:[#allocation3 + $0x30] sm:$0xff] %vm821, %v591
    %829 = vst.msk [vmem:[#allocation3 + $0x38] sm:$0xff] %vm821, %v593
    %830 = vst.msk [vmem:[#allocation3 + $0x40] sm:$0xff] %vm821, %v595
    %831 = vst.msk [vmem:[#allocation3 + $0x48] sm:$0xff] %vm821, %v597
    %832 = vst.msk [vmem:[#allocation3 + $0x50] sm:$0xff] %vm821, %v599
    %833 = vst.msk [vmem:[#allocation3 + $0x58] sm:$0xff] %vm821, %v601
    %834 = vst.msk [vmem:[#allocation3 + $0x60] sm:$0xff] %vm821, %v603
    %835 = vst.msk [vmem:[#allocation3 + $0x68] sm:$0xff] %vm821, %v605
    %836 = vst.msk [vmem:[#allocation3 + $0x70] sm:$0xff] %vm821, %v607
    %837 = vst.msk [vmem:[#allocation3 + $0x78] sm:$0xff] %vm821, %v609
    %838 = vst.msk [vmem:[#allocation3 + $0x80] sm:$0xff] %vm821, %v611
    %839 = vst.msk [vmem:[#allocation3 + $0x88] sm:$0xff] %vm821, %v613
    %840 = vst.msk [vmem:[#allocation3 + $0x90] sm:$0xff] %vm821, %v615
    %841 = vst.msk [vmem:[#allocation3 + $0x98] sm:$0xff] %vm821, %v617
    %842 = vst.msk [vmem:[#allocation3 + $0xa0] sm:$0xff] %vm821, %v619
    %843 = vst.msk [vmem:[#allocation3 + $0xa8] sm:$0xff] %vm821, %v621
    %844 = vst.msk [vmem:[#allocation3 + $0xb0] sm:$0xff] %vm821, %v623
    %845 = vst.msk [vmem:[#allocation3 + $0xb8] sm:$0xff] %vm821, %v625
    %846 = vst.msk [vmem:[#allocation3 + $0xc0] sm:$0xff] %vm821, %v627
    %847 = vst.msk [vmem:[#allocation3 + $0xc8] sm:$0xff] %vm821, %v629
    %848 = vst.msk [vmem:[#allocation3 + $0xd0] sm:$0xff] %vm821, %v631
    %849 = vst.msk [vmem:[#allocation3 + $0xd8] sm:$0xff] %vm821, %v633
    %850 = vst.msk [vmem:[#allocation3 + $0xe0] sm:$0xff] %vm821, %v635
    %851 = vst.msk [vmem:[#allocation3 + $0xe8] sm:$0xff] %vm821, %v637
    %852 = vst.msk [vmem:[#allocation3 + $0xf0] sm:$0xff] %vm821, %v639
    %853 = vst.msk [vmem:[#allocation3 + $0xf8] sm:$0xff] %vm821, %v641
    %854 = vst.msk [vmem:[#allocation3 + $0x100] sm:$0xff] %vm821, %v643
    %855 = vst.msk [vmem:[#allocation3 + $0x108] sm:$0xff] %vm821, %v645
    %856 = vst.msk [vmem:[#allocation3 + $0x110] sm:$0xff] %vm821, %v647
    %857 = vst.msk [vmem:[#allocation3 + $0x118] sm:$0xff] %vm821, %v649
    %858 = vst.msk [vmem:[#allocation3 + $0x120] sm:$0xff] %vm821, %v651
    %859 = vst.msk [vmem:[#allocation3 + $0x128] sm:$0xff] %vm821, %v653
    %860 = vst.msk [vmem:[#allocation3 + $0x130] sm:$0xff] %vm821, %v655
    %861 = vst.msk [vmem:[#allocation3 + $0x138] sm:$0xff] %vm821, %v657
    %862 = vst.msk [vmem:[#allocation3 + $0x140] sm:$0xff] %vm821, %v659
    %863 = vst.msk [vmem:[#allocation3 + $0x148] sm:$0xff] %vm821, %v661
    %864 = vst.msk [vmem:[#allocation3 + $0x150] sm:$0xff] %vm821, %v663
    %865 = vst.msk [vmem:[#allocation3 + $0x158] sm:$0xff] %vm821, %v665
    %866 = vst.msk [vmem:[#allocation3 + $0x160] sm:$0xff] %vm821, %v667
    %867 = vst.msk [vmem:[#allocation3 + $0x168] sm:$0xff] %vm821, %v669
    %868 = vst.msk [vmem:[#allocation3 + $0x170] sm:$0xff] %vm821, %v671
    %869 = vst.msk [vmem:[#allocation3 + $0x178] sm:$0xff] %vm821, %v673
    %870 = vst.msk [vmem:[#allocation3 + $0x180] sm:$0xff] %vm821, %v675
    %871 = vst.msk [vmem:[#allocation3 + $0x188] sm:$0xff] %vm821, %v677
    %872 = vst.msk [vmem:[#allocation3 + $0x190] sm:$0xff] %vm821, %v679
    %873 = vst.msk [vmem:[#allocation3 + $0x198] sm:$0xff] %vm821, %v681
    %874 = vst.msk [vmem:[#allocation3 + $0x1a0] sm:$0xff] %vm821, %v683
    %875 = vst.msk [vmem:[#allocation3 + $0x1a8] sm:$0xff] %vm821, %v685
    %876 = vst.msk [vmem:[#allocation3 + $0x1b0] sm:$0xff] %vm821, %v687
    %877 = vst.msk [vmem:[#allocation3 + $0x1b8] sm:$0xff] %vm821, %v689
    %878 = vst.msk [vmem:[#allocation3 + $0x1c0] sm:$0xff] %vm821, %v691
    %879 = vst.msk [vmem:[#allocation3 + $0x1c8] sm:$0xff] %vm821, %v693
    %880 = vst.msk [vmem:[#allocation3 + $0x1d0] sm:$0xff] %vm821, %v695
    %881 = vst.msk [vmem:[#allocation3 + $0x1d8] sm:$0xff] %vm821, %v697
    %882 = vst.msk [vmem:[#allocation3 + $0x1e0] sm:$0xff] %vm821, %v699
    %883 = vst.msk [vmem:[#allocation3 + $0x1e8] sm:$0xff] %vm821, %v701
    %884 = vst.msk [vmem:[#allocation3 + $0x1f0] sm:$0xff] %vm821, %v703
    %885 = vst.msk [vmem:[#allocation3 + $0x1f8] sm:$0xff] %vm821, %v705
    %886 = vst.msk [vmem:[#allocation3 + $0x200] sm:$0xff] %vm821, %v707
    %887 = vst.msk [vmem:[#allocation3 + $0x208] sm:$0xff] %vm821, %v709
    %888 = vst.msk [vmem:[#allocation3 + $0x210] sm:$0xff] %vm821, %v711
    %889 = vst.msk [vmem:[#allocation3 + $0x218] sm:$0xff] %vm821, %v713
    %890 = vst.msk [vmem:[#allocation3 + $0x220] sm:$0xff] %vm821, %v715
    %891 = vst.msk [vmem:[#allocation3 + $0x228] sm:$0xff] %vm821, %v717
    %892 = vst.msk [vmem:[#allocation3 + $0x230] sm:$0xff] %vm821, %v719
    %893 = vst.msk [vmem:[#allocation3 + $0x238] sm:$0xff] %vm821, %v721
    %894 = vst.msk [vmem:[#allocation3 + $0x240] sm:$0xff] %vm821, %v723
    %895 = vst.msk [vmem:[#allocation3 + $0x248] sm:$0xff] %vm821, %v725
    %896 = vst.msk [vmem:[#allocation3 + $0x250] sm:$0xff] %vm821, %v727
    %897 = vst.msk [vmem:[#allocation3 + $0x258] sm:$0xff] %vm821, %v729
    %898 = vst.msk [vmem:[#allocation3 + $0x260] sm:$0xff] %vm821, %v731
    %899 = vst.msk [vmem:[#allocation3 + $0x268] sm:$0xff] %vm821, %v733
    %900 = vst.msk [vmem:[#allocation3 + $0x270] sm:$0xff] %vm821, %v735
    %901 = vst.msk [vmem:[#allocation3 + $0x278] sm:$0xff] %vm821, %v737
    %902 = vst.msk [vmem:[#allocation3 + $0x280] sm:$0xff] %vm821, %v739
    %v903 = vld [vmem:[#allocation2 + $0x2] sm:$0xff]
    %v904 = vld [vmem:[#allocation2 + $0xa] sm:$0xff]
    %v905 = vld [vmem:[#allocation2 + $0x12] sm:$0xff]
    %v906 = vld [vmem:[#allocation2 + $0x1a] sm:$0xff]
    %v907 = vld [vmem:[#allocation2 + $0x22] sm:$0xff]
    %v908 = vld [vmem:[#allocation2 + $0x2a] sm:$0xff]
    %v909 = vld [vmem:[#allocation2 + $0x32] sm:$0xff]
    %v910 = vld [vmem:[#allocation2 + $0x3a] sm:$0xff]
    %v911 = vld [vmem:[#allocation2 + $0x42] sm:$0xff]
    %v912 = vld [vmem:[#allocation2 + $0x4a] sm:$0xff]
    %v913 = vld [vmem:[#allocation2 + $0x52] sm:$0xff]
    %v914 = vld [vmem:[#allocation2 + $0x5a] sm:$0xff]
    %v915 = vld [vmem:[#allocation2 + $0x62] sm:$0xff]
    %v916 = vld [vmem:[#allocation2 + $0x6a] sm:$0xff]
    %v917 = vld [vmem:[#allocation2 + $0x72] sm:$0xff]
    %v918 = vld [vmem:[#allocation2 + $0x7a] sm:$0xff]
    %v919 = vld [vmem:[#allocation2 + $0x82] sm:$0xff]
    %v920 = vld [vmem:[#allocation2 + $0x8a] sm:$0xff]
    %v921 = vld [vmem:[#allocation2 + $0x92] sm:$0xff]
    %v922 = vld [vmem:[#allocation2 + $0x9a] sm:$0xff]
    %v923 = vld [vmem:[#allocation2 + $0xa2] sm:$0xff]
    %v924 = vld [vmem:[#allocation2 + $0xaa] sm:$0xff]
    %v925 = vld [vmem:[#allocation2 + $0xb2] sm:$0xff]
    %v926 = vld [vmem:[#allocation2 + $0xba] sm:$0xff]
    %v927 = vld [vmem:[#allocation2 + $0xc2] sm:$0xff]
    %v928 = vld [vmem:[#allocation2 + $0xca] sm:$0xff]
    %v929 = vld [vmem:[#allocation2 + $0xd2] sm:$0xff]
    %v930 = vld [vmem:[#allocation2 + $0xda] sm:$0xff]
    %v931 = vld [vmem:[#allocation2 + $0xe2] sm:$0xff]
    %v932 = vld [vmem:[#allocation2 + $0xea] sm:$0xff]
    %v933 = vld [vmem:[#allocation2 + $0xf2] sm:$0xff]
    %v934 = vld [vmem:[#allocation2 + $0xfa] sm:$0xff]
    %v935 = vld [vmem:[#allocation2 + $0x102] sm:$0xff]
    %v936 = vld [vmem:[#allocation2 + $0x10a] sm:$0xff]
    %v937 = vld [vmem:[#allocation2 + $0x112] sm:$0xff]
    %v938 = vld [vmem:[#allocation2 + $0x11a] sm:$0xff]
    %v939 = vld [vmem:[#allocation2 + $0x122] sm:$0xff]
    %v940 = vld [vmem:[#allocation2 + $0x12a] sm:$0xff]
    %v941 = vld [vmem:[#allocation2 + $0x132] sm:$0xff]
    %v942 = vld [vmem:[#allocation2 + $0x13a] sm:$0xff]
    %v943 = vld [vmem:[#allocation2 + $0x142] sm:$0xff]
    %v944 = vld [vmem:[#allocation2 + $0x14a] sm:$0xff]
    %v945 = vld [vmem:[#allocation2 + $0x152] sm:$0xff]
    %v946 = vld [vmem:[#allocation2 + $0x15a] sm:$0xff]
    %v947 = vld [vmem:[#allocation2 + $0x162] sm:$0xff]
    %v948 = vld [vmem:[#allocation2 + $0x16a] sm:$0xff]
    %v949 = vld [vmem:[#allocation2 + $0x172] sm:$0xff]
    %v950 = vld [vmem:[#allocation2 + $0x17a] sm:$0xff]
    %v951 = vld [vmem:[#allocation2 + $0x182] sm:$0xff]
    %v952 = vld [vmem:[#allocation2 + $0x18a] sm:$0xff]
    %v953 = vld [vmem:[#allocation2 + $0x192] sm:$0xff]
    %v954 = vld [vmem:[#allocation2 + $0x19a] sm:$0xff]
    %v955 = vld [vmem:[#allocation2 + $0x1a2] sm:$0xff]
    %v956 = vld [vmem:[#allocation2 + $0x1aa] sm:$0xff]
    %v957 = vld [vmem:[#allocation2 + $0x1b2] sm:$0xff]
    %v958 = vld [vmem:[#allocation2 + $0x1ba] sm:$0xff]
    %v959 = vld [vmem:[#allocation2 + $0x1c2] sm:$0xff]
    %v960 = vld [vmem:[#allocation2 + $0x1ca] sm:$0xff]
    %v961 = vld [vmem:[#allocation2 + $0x1d2] sm:$0xff]
    %v962 = vld [vmem:[#allocation2 + $0x1da] sm:$0xff]
    %v963 = vld [vmem:[#allocation2 + $0x1e2] sm:$0xff]
    %v964 = vld [vmem:[#allocation2 + $0x1ea] sm:$0xff]
    %v965 = vld [vmem:[#allocation2 + $0x1f2] sm:$0xff]
    %v966 = vld [vmem:[#allocation2 + $0x1fa] sm:$0xff]
    %v967 = vld [vmem:[#allocation2 + $0x202] sm:$0xff]
    %v968 = vld [vmem:[#allocation2 + $0x20a] sm:$0xff]
    %v969 = vld [vmem:[#allocation2 + $0x212] sm:$0xff]
    %v970 = vld [vmem:[#allocation2 + $0x21a] sm:$0xff]
    %v971 = vld [vmem:[#allocation2 + $0x222] sm:$0xff]
    %v972 = vld [vmem:[#allocation2 + $0x22a] sm:$0xff]
    %v973 = vld [vmem:[#allocation2 + $0x232] sm:$0xff]
    %v974 = vld [vmem:[#allocation2 + $0x23a] sm:$0xff]
    %v975 = vld [vmem:[#allocation2 + $0x242] sm:$0xff]
    %v976 = vld [vmem:[#allocation2 + $0x24a] sm:$0xff]
    %v977 = vld [vmem:[#allocation2 + $0x252] sm:$0xff]
    %v978 = vld [vmem:[#allocation2 + $0x25a] sm:$0xff]
    %v979 = vld [vmem:[#allocation2 + $0x262] sm:$0xff]
    %v980 = vld [vmem:[#allocation2 + $0x26a] sm:$0xff]
    %v981 = vld [vmem:[#allocation2 + $0x272] sm:$0xff]
    %v982 = vld [vmem:[#allocation2 + $0x27a] sm:$0xff]
    %v983 = vld [vmem:[#allocation2 + $0x282] sm:$0xff]
    %1065 = vrot.lane.b32.xlu0 %v903, 8
    %v1066 = vpop.permute.xlu0 %1065
    %1067 = vrot.lane.b32.xlu0 %v904, 8
    %v1068 = vpop.permute.xlu0 %1067
    %1069 = vrot.lane.b32.xlu0 %v905, 8
    %v1070 = vpop.permute.xlu0 %1069
    %1071 = vrot.lane.b32.xlu0 %v906, 8
    %v1072 = vpop.permute.xlu0 %1071
    %1073 = vrot.lane.b32.xlu0 %v907, 8
    %v1074 = vpop.permute.xlu0 %1073
    %1075 = vrot.lane.b32.xlu0 %v908, 8
    %v1076 = vpop.permute.xlu0 %1075
    %1077 = vrot.lane.b32.xlu0 %v909, 8
    %v1078 = vpop.permute.xlu0 %1077
    %1079 = vrot.lane.b32.xlu0 %v910, 8
    %v1080 = vpop.permute.xlu0 %1079
    %1081 = vrot.lane.b32.xlu0 %v911, 8
    %v1082 = vpop.permute.xlu0 %1081
    %1083 = vrot.lane.b32.xlu0 %v912, 8
    %v1084 = vpop.permute.xlu0 %1083
    %1085 = vrot.lane.b32.xlu0 %v913, 8
    %v1086 = vpop.permute.xlu0 %1085
    %1087 = vrot.lane.b32.xlu0 %v914, 8
    %v1088 = vpop.permute.xlu0 %1087
    %1089 = vrot.lane.b32.xlu0 %v915, 8
    %v1090 = vpop.permute.xlu0 %1089
    %1091 = vrot.lane.b32.xlu0 %v916, 8
    %v1092 = vpop.permute.xlu0 %1091
    %1093 = vrot.lane.b32.xlu0 %v917, 8
    %v1094 = vpop.permute.xlu0 %1093
    %1095 = vrot.lane.b32.xlu0 %v918, 8
    %v1096 = vpop.permute.xlu0 %1095
    %1097 = vrot.lane.b32.xlu0 %v919, 8
    %v1098 = vpop.permute.xlu0 %1097
    %1099 = vrot.lane.b32.xlu0 %v920, 8
    %v1100 = vpop.permute.xlu0 %1099
    %1101 = vrot.lane.b32.xlu0 %v921, 8
    %v1102 = vpop.permute.xlu0 %1101
    %1103 = vrot.lane.b32.xlu0 %v922, 8
    %v1104 = vpop.permute.xlu0 %1103
    %1105 = vrot.lane.b32.xlu0 %v923, 8
    %v1106 = vpop.permute.xlu0 %1105
    %1107 = vrot.lane.b32.xlu0 %v924, 8
    %v1108 = vpop.permute.xlu0 %1107
    %1109 = vrot.lane.b32.xlu0 %v925, 8
    %v1110 = vpop.permute.xlu0 %1109
    %1111 = vrot.lane.b32.xlu0 %v926, 8
    %v1112 = vpop.permute.xlu0 %1111
    %1113 = vrot.lane.b32.xlu0 %v927, 8
    %v1114 = vpop.permute.xlu0 %1113
    %1115 = vrot.lane.b32.xlu0 %v928, 8
    %v1116 = vpop.permute.xlu0 %1115
    %1117 = vrot.lane.b32.xlu0 %v929, 8
    %v1118 = vpop.permute.xlu0 %1117
    %1119 = vrot.lane.b32.xlu0 %v930, 8
    %v1120 = vpop.permute.xlu0 %1119
    %1121 = vrot.lane.b32.xlu0 %v931, 8
    %v1122 = vpop.permute.xlu0 %1121
    %1123 = vrot.lane.b32.xlu0 %v932, 8
    %v1124 = vpop.permute.xlu0 %1123
    %1125 = vrot.lane.b32.xlu0 %v933, 8
    %v1126 = vpop.permute.xlu0 %1125
    %1127 = vrot.lane.b32.xlu0 %v934, 8
    %v1128 = vpop.permute.xlu0 %1127
    %1129 = vrot.lane.b32.xlu0 %v935, 8
    %v1130 = vpop.permute.xlu0 %1129
    %1131 = vrot.lane.b32.xlu0 %v936, 8
    %v1132 = vpop.permute.xlu0 %1131
    %1133 = vrot.lane.b32.xlu0 %v937, 8
    %v1134 = vpop.permute.xlu0 %1133
    %1135 = vrot.lane.b32.xlu0 %v938, 8
    %v1136 = vpop.permute.xlu0 %1135
    %1137 = vrot.lane.b32.xlu0 %v939, 8
    %v1138 = vpop.permute.xlu0 %1137
    %1139 = vrot.lane.b32.xlu0 %v940, 8
    %v1140 = vpop.permute.xlu0 %1139
    %1141 = vrot.lane.b32.xlu0 %v941, 8
    %v1142 = vpop.permute.xlu0 %1141
    %1143 = vrot.lane.b32.xlu0 %v942, 8
    %v1144 = vpop.permute.xlu0 %1143
    %1145 = vrot.lane.b32.xlu0 %v943, 8
    %v1146 = vpop.permute.xlu0 %1145
    %1147 = vrot.lane.b32.xlu0 %v944, 8
    %v1148 = vpop.permute.xlu0 %1147
    %1149 = vrot.lane.b32.xlu0 %v945, 8
    %v1150 = vpop.permute.xlu0 %1149
    %1151 = vrot.lane.b32.xlu0 %v946, 8
    %v1152 = vpop.permute.xlu0 %1151
    %1153 = vrot.lane.b32.xlu0 %v947, 8
    %v1154 = vpop.permute.xlu0 %1153
    %1155 = vrot.lane.b32.xlu0 %v948, 8
    %v1156 = vpop.permute.xlu0 %1155
    %1157 = vrot.lane.b32.xlu0 %v949, 8
    %v1158 = vpop.permute.xlu0 %1157
    %1159 = vrot.lane.b32.xlu0 %v950, 8
    %v1160 = vpop.permute.xlu0 %1159
    %1161 = vrot.lane.b32.xlu0 %v951, 8
    %v1162 = vpop.permute.xlu0 %1161
    %1163 = vrot.lane.b32.xlu0 %v952, 8
    %v1164 = vpop.permute.xlu0 %1163
    %1165 = vrot.lane.b32.xlu0 %v953, 8
    %v1166 = vpop.permute.xlu0 %1165
    %1167 = vrot.lane.b32.xlu0 %v954, 8
    %v1168 = vpop.permute.xlu0 %1167
    %1169 = vrot.lane.b32.xlu0 %v955, 8
    %v1170 = vpop.permute.xlu0 %1169
    %1171 = vrot.lane.b32.xlu0 %v956, 8
    %v1172 = vpop.permute.xlu0 %1171
    %1173 = vrot.lane.b32.xlu0 %v957, 8
    %v1174 = vpop.permute.xlu0 %1173
    %1175 = vrot.lane.b32.xlu0 %v958, 8
    %v1176 = vpop.permute.xlu0 %1175
    %1177 = vrot.lane.b32.xlu0 %v959, 8
    %v1178 = vpop.permute.xlu0 %1177
    %1179 = vrot.lane.b32.xlu0 %v960, 8
    %v1180 = vpop.permute.xlu0 %1179
    %1181 = vrot.lane.b32.xlu0 %v961, 8
    %v1182 = vpop.permute.xlu0 %1181
    %1183 = vrot.lane.b32.xlu0 %v962, 8
    %v1184 = vpop.permute.xlu0 %1183
    %1185 = vrot.lane.b32.xlu0 %v963, 8
    %v1186 = vpop.permute.xlu0 %1185
    %1187 = vrot.lane.b32.xlu0 %v964, 8
    %v1188 = vpop.permute.xlu0 %1187
    %1189 = vrot.lane.b32.xlu0 %v965, 8
    %v1190 = vpop.permute.xlu0 %1189
    %1191 = vrot.lane.b32.xlu0 %v966, 8
    %v1192 = vpop.permute.xlu0 %1191
    %1193 = vrot.lane.b32.xlu0 %v967, 8
    %v1194 = vpop.permute.xlu0 %1193
    %1195 = vrot.lane.b32.xlu0 %v968, 8
    %v1196 = vpop.permute.xlu0 %1195
    %1197 = vrot.lane.b32.xlu0 %v969, 8
    %v1198 = vpop.permute.xlu0 %1197
    %1199 = vrot.lane.b32.xlu0 %v970, 8
    %v1200 = vpop.permute.xlu0 %1199
    %1201 = vrot.lane.b32.xlu0 %v971, 8
    %v1202 = vpop.permute.xlu0 %1201
    %1203 = vrot.lane.b32.xlu0 %v972, 8
    %v1204 = vpop.permute.xlu0 %1203
    %1205 = vrot.lane.b32.xlu0 %v973, 8
    %v1206 = vpop.permute.xlu0 %1205
    %1207 = vrot.lane.b32.xlu0 %v974, 8
    %v1208 = vpop.permute.xlu0 %1207
    %1209 = vrot.lane.b32.xlu0 %v975, 8
    %v1210 = vpop.permute.xlu0 %1209
    %1211 = vrot.lane.b32.xlu0 %v976, 8
    %v1212 = vpop.permute.xlu0 %1211
    %1213 = vrot.lane.b32.xlu0 %v977, 8
    %v1214 = vpop.permute.xlu0 %1213
    %1215 = vrot.lane.b32.xlu0 %v978, 8
    %v1216 = vpop.permute.xlu0 %1215
    %1217 = vrot.lane.b32.xlu0 %v979, 8
    %v1218 = vpop.permute.xlu0 %1217
    %1219 = vrot.lane.b32.xlu0 %v980, 8
    %v1220 = vpop.permute.xlu0 %1219
    %1221 = vrot.lane.b32.xlu0 %v981, 8
    %v1222 = vpop.permute.xlu0 %1221
    %1223 = vrot.lane.b32.xlu0 %v982, 8
    %v1224 = vpop.permute.xlu0 %1223
    %1225 = vrot.lane.b32.xlu0 %v983, 8
    %v1226 = vpop.permute.xlu0 %1225
    %vm1308 = vcmask 97344
    %1309 = vst.msk [vmem:[#allocation3] sm:$0xff] %vm1308, %v1066
    %1310 = vst.msk [vmem:[#allocation3 + $0x8] sm:$0xff] %vm1308, %v1068
    %1311 = vst.msk [vmem:[#allocation3 + $0x10] sm:$0xff] %vm1308, %v1070
    %1312 = vst.msk [vmem:[#allocation3 + $0x18] sm:$0xff] %vm1308, %v1072
    %1313 = vst.msk [vmem:[#allocation3 + $0x20] sm:$0xff] %vm1308, %v1074
    %1314 = vst.msk [vmem:[#allocation3 + $0x28] sm:$0xff] %vm1308, %v1076
    %1315 = vst.msk [vmem:[#allocation3 + $0x30] sm:$0xff] %vm1308, %v1078
    %1316 = vst.msk [vmem:[#allocation3 + $0x38] sm:$0xff] %vm1308, %v1080
    %1317 = vst.msk [vmem:[#allocation3 + $0x40] sm:$0xff] %vm1308, %v1082
    %1318 = vst.msk [vmem:[#allocation3 + $0x48] sm:$0xff] %vm1308, %v1084
    %1319 = vst.msk [vmem:[#allocation3 + $0x50] sm:$0xff] %vm1308, %v1086
    %1320 = vst.msk [vmem:[#allocation3 + $0x58] sm:$0xff] %vm1308, %v1088
    %1321 = vst.msk [vmem:[#allocation3 + $0x60] sm:$0xff] %vm1308, %v1090
    %1322 = vst.msk [vmem:[#allocation3 + $0x68] sm:$0xff] %vm1308, %v1092
    %1323 = vst.msk [vmem:[#allocation3 + $0x70] sm:$0xff] %vm1308, %v1094
    %1324 = vst.msk [vmem:[#allocation3 + $0x78] sm:$0xff] %vm1308, %v1096
    %1325 = vst.msk [vmem:[#allocation3 + $0x80] sm:$0xff] %vm1308, %v1098
    %1326 = vst.msk [vmem:[#allocation3 + $0x88] sm:$0xff] %vm1308, %v1100
    %1327 = vst.msk [vmem:[#allocation3 + $0x90] sm:$0xff] %vm1308, %v1102
    %1328 = vst.msk [vmem:[#allocation3 + $0x98] sm:$0xff] %vm1308, %v1104
    %1329 = vst.msk [vmem:[#allocation3 + $0xa0] sm:$0xff] %vm1308, %v1106
    %1330 = vst.msk [vmem:[#allocation3 + $0xa8] sm:$0xff] %vm1308, %v1108
    %1331 = vst.msk [vmem:[#allocation3 + $0xb0] sm:$0xff] %vm1308, %v1110
    %1332 = vst.msk [vmem:[#allocation3 + $0xb8] sm:$0xff] %vm1308, %v1112
    %1333 = vst.msk [vmem:[#allocation3 + $0xc0] sm:$0xff] %vm1308, %v1114
    %1334 = vst.msk [vmem:[#allocation3 + $0xc8] sm:$0xff] %vm1308, %v1116
    %1335 = vst.msk [vmem:[#allocation3 + $0xd0] sm:$0xff] %vm1308, %v1118
    %1336 = vst.msk [vmem:[#allocation3 + $0xd8] sm:$0xff] %vm1308, %v1120
    %1337 = vst.msk [vmem:[#allocation3 + $0xe0] sm:$0xff] %vm1308, %v1122
    %1338 = vst.msk [vmem:[#allocation3 + $0xe8] sm:$0xff] %vm1308, %v1124
    %1339 = vst.msk [vmem:[#allocation3 + $0xf0] sm:$0xff] %vm1308, %v1126
    %1340 = vst.msk [vmem:[#allocation3 + $0xf8] sm:$0xff] %vm1308, %v1128
    %1341 = vst.msk [vmem:[#allocation3 + $0x100] sm:$0xff] %vm1308, %v1130
    %1342 = vst.msk [vmem:[#allocation3 + $0x108] sm:$0xff] %vm1308, %v1132
    %1343 = vst.msk [vmem:[#allocation3 + $0x110] sm:$0xff] %vm1308, %v1134
    %1344 = vst.msk [vmem:[#allocation3 + $0x118] sm:$0xff] %vm1308, %v1136
    %1345 = vst.msk [vmem:[#allocation3 + $0x120] sm:$0xff] %vm1308, %v1138
    %1346 = vst.msk [vmem:[#allocation3 + $0x128] sm:$0xff] %vm1308, %v1140
    %1347 = vst.msk [vmem:[#allocation3 + $0x130] sm:$0xff] %vm1308, %v1142
    %1348 = vst.msk [vmem:[#allocation3 + $0x138] sm:$0xff] %vm1308, %v1144
    %1349 = vst.msk [vmem:[#allocation3 + $0x140] sm:$0xff] %vm1308, %v1146
    %1350 = vst.msk [vmem:[#allocation3 + $0x148] sm:$0xff] %vm1308, %v1148
    %1351 = vst.msk [vmem:[#allocation3 + $0x150] sm:$0xff] %vm1308, %v1150
    %1352 = vst.msk [vmem:[#allocation3 + $0x158] sm:$0xff] %vm1308, %v1152
    %1353 = vst.msk [vmem:[#allocation3 + $0x160] sm:$0xff] %vm1308, %v1154
    %1354 = vst.msk [vmem:[#allocation3 + $0x168] sm:$0xff] %vm1308, %v1156
    %1355 = vst.msk [vmem:[#allocation3 + $0x170] sm:$0xff] %vm1308, %v1158
    %1356 = vst.msk [vmem:[#allocation3 + $0x178] sm:$0xff] %vm1308, %v1160
    %1357 = vst.msk [vmem:[#allocation3 + $0x180] sm:$0xff] %vm1308, %v1162
    %1358 = vst.msk [vmem:[#allocation3 + $0x188] sm:$0xff] %vm1308, %v1164
    %1359 = vst.msk [vmem:[#allocation3 + $0x190] sm:$0xff] %vm1308, %v1166
    %1360 = vst.msk [vmem:[#allocation3 + $0x198] sm:$0xff] %vm1308, %v1168
    %1361 = vst.msk [vmem:[#allocation3 + $0x1a0] sm:$0xff] %vm1308, %v1170
    %1362 = vst.msk [vmem:[#allocation3 + $0x1a8] sm:$0xff] %vm1308, %v1172
    %1363 = vst.msk [vmem:[#allocation3 + $0x1b0] sm:$0xff] %vm1308, %v1174
    %1364 = vst.msk [vmem:[#allocation3 + $0x1b8] sm:$0xff] %vm1308, %v1176
    %1365 = vst.msk [vmem:[#allocation3 + $0x1c0] sm:$0xff] %vm1308, %v1178
    %1366 = vst.msk [vmem:[#allocation3 + $0x1c8] sm:$0xff] %vm1308, %v1180
    %1367 = vst.msk [vmem:[#allocation3 + $0x1d0] sm:$0xff] %vm1308, %v1182
    %1368 = vst.msk [vmem:[#allocation3 + $0x1d8] sm:$0xff] %vm1308, %v1184
    %1369 = vst.msk [vmem:[#allocation3 + $0x1e0] sm:$0xff] %vm1308, %v1186
    %1370 = vst.msk [vmem:[#allocation3 + $0x1e8] sm:$0xff] %vm1308, %v1188
    %1371 = vst.msk [vmem:[#allocation3 + $0x1f0] sm:$0xff] %vm1308, %v1190
    %1372 = vst.msk [vmem:[#allocation3 + $0x1f8] sm:$0xff] %vm1308, %v1192
    %1373 = vst.msk [vmem:[#allocation3 + $0x200] sm:$0xff] %vm1308, %v1194
    %1374 = vst.msk [vmem:[#allocation3 + $0x208] sm:$0xff] %vm1308, %v1196
    %1375 = vst.msk [vmem:[#allocation3 + $0x210] sm:$0xff] %vm1308, %v1198
    %1376 = vst.msk [vmem:[#allocation3 + $0x218] sm:$0xff] %vm1308, %v1200
    %1377 = vst.msk [vmem:[#allocation3 + $0x220] sm:$0xff] %vm1308, %v1202
    %1378 = vst.msk [vmem:[#allocation3 + $0x228] sm:$0xff] %vm1308, %v1204
    %1379 = vst.msk [vmem:[#allocation3 + $0x230] sm:$0xff] %vm1308, %v1206
    %1380 = vst.msk [vmem:[#allocation3 + $0x238] sm:$0xff] %vm1308, %v1208
    %1381 = vst.msk [vmem:[#allocation3 + $0x240] sm:$0xff] %vm1308, %v1210
    %1382 = vst.msk [vmem:[#allocation3 + $0x248] sm:$0xff] %vm1308, %v1212
    %1383 = vst.msk [vmem:[#allocation3 + $0x250] sm:$0xff] %vm1308, %v1214
    %1384 = vst.msk [vmem:[#allocation3 + $0x258] sm:$0xff] %vm1308, %v1216
    %1385 = vst.msk [vmem:[#allocation3 + $0x260] sm:$0xff] %vm1308, %v1218
    %1386 = vst.msk [vmem:[#allocation3 + $0x268] sm:$0xff] %vm1308, %v1220
    %1387 = vst.msk [vmem:[#allocation3 + $0x270] sm:$0xff] %vm1308, %v1222
    %1388 = vst.msk [vmem:[#allocation3 + $0x278] sm:$0xff] %vm1308, %v1224
    %1389 = vst.msk [vmem:[#allocation3 + $0x280] sm:$0xff] %vm1308, %v1226
    %v1390 = vld [vmem:[#allocation2 + $0x12] sm:$0xff]
    %v1391 = vld [vmem:[#allocation2 + $0x1a] sm:$0xff]
    %v1392 = vld [vmem:[#allocation2 + $0x22] sm:$0xff]
    %v1393 = vld [vmem:[#allocation2 + $0x2a] sm:$0xff]
    %v1394 = vld [vmem:[#allocation2 + $0x32] sm:$0xff]
    %v1395 = vld [vmem:[#allocation2 + $0x3a] sm:$0xff]
    %v1396 = vld [vmem:[#allocation2 + $0x42] sm:$0xff]
    %v1397 = vld [vmem:[#allocation2 + $0x4a] sm:$0xff]
    %v1398 = vld [vmem:[#allocation2 + $0x52] sm:$0xff]
    %v1399 = vld [vmem:[#allocation2 + $0x5a] sm:$0xff]
    %v1400 = vld [vmem:[#allocation2 + $0x62] sm:$0xff]
    %v1401 = vld [vmem:[#allocation2 + $0x6a] sm:$0xff]
    %v1402 = vld [vmem:[#allocation2 + $0x72] sm:$0xff]
    %v1403 = vld [vmem:[#allocation2 + $0x7a] sm:$0xff]
    %v1404 = vld [vmem:[#allocation2 + $0x82] sm:$0xff]
    %v1405 = vld [vmem:[#allocation2 + $0x8a] sm:$0xff]
    %v1406 = vld [vmem:[#allocation2 + $0x92] sm:$0xff]
    %v1407 = vld [vmem:[#allocation2 + $0x9a] sm:$0xff]
    %v1408 = vld [vmem:[#allocation2 + $0xa2] sm:$0xff]
    %v1409 = vld [vmem:[#allocation2 + $0xaa] sm:$0xff]
    %v1410 = vld [vmem:[#allocation2 + $0xb2] sm:$0xff]
    %v1411 = vld [vmem:[#allocation2 + $0xba] sm:$0xff]
    %v1412 = vld [vmem:[#allocation2 + $0xc2] sm:$0xff]
    %v1413 = vld [vmem:[#allocation2 + $0xca] sm:$0xff]
    %v1414 = vld [vmem:[#allocation2 + $0xd2] sm:$0xff]
    %v1415 = vld [vmem:[#allocation2 + $0xda] sm:$0xff]
    %v1416 = vld [vmem:[#allocation2 + $0xe2] sm:$0xff]
    %v1417 = vld [vmem:[#allocation2 + $0xea] sm:$0xff]
    %v1418 = vld [vmem:[#allocation2 + $0xf2] sm:$0xff]
    %v1419 = vld [vmem:[#allocation2 + $0xfa] sm:$0xff]
    %v1420 = vld [vmem:[#allocation2 + $0x102] sm:$0xff]
    %v1421 = vld [vmem:[#allocation2 + $0x10a] sm:$0xff]
    %v1422 = vld [vmem:[#allocation2 + $0x112] sm:$0xff]
    %v1423 = vld [vmem:[#allocation2 + $0x11a] sm:$0xff]
    %v1424 = vld [vmem:[#allocation2 + $0x122] sm:$0xff]
    %v1425 = vld [vmem:[#allocation2 + $0x12a] sm:$0xff]
    %v1426 = vld [vmem:[#allocation2 + $0x132] sm:$0xff]
    %v1427 = vld [vmem:[#allocation2 + $0x13a] sm:$0xff]
    %v1428 = vld [vmem:[#allocation2 + $0x142] sm:$0xff]
    %v1429 = vld [vmem:[#allocation2 + $0x14a] sm:$0xff]
    %v1430 = vld [vmem:[#allocation2 + $0x152] sm:$0xff]
    %v1431 = vld [vmem:[#allocation2 + $0x15a] sm:$0xff]
    %v1432 = vld [vmem:[#allocation2 + $0x162] sm:$0xff]
    %v1433 = vld [vmem:[#allocation2 + $0x16a] sm:$0xff]
    %v1434 = vld [vmem:[#allocation2 + $0x172] sm:$0xff]
    %v1435 = vld [vmem:[#allocation2 + $0x17a] sm:$0xff]
    %v1436 = vld [vmem:[#allocation2 + $0x182] sm:$0xff]
    %v1437 = vld [vmem:[#allocation2 + $0x18a] sm:$0xff]
    %v1438 = vld [vmem:[#allocation2 + $0x192] sm:$0xff]
    %v1439 = vld [vmem:[#allocation2 + $0x19a] sm:$0xff]
    %v1440 = vld [vmem:[#allocation2 + $0x1a2] sm:$0xff]
    %v1441 = vld [vmem:[#allocation2 + $0x1aa] sm:$0xff]
    %v1442 = vld [vmem:[#allocation2 + $0x1b2] sm:$0xff]
    %v1443 = vld [vmem:[#allocation2 + $0x1ba] sm:$0xff]
    %v1444 = vld [vmem:[#allocation2 + $0x1c2] sm:$0xff]
    %v1445 = vld [vmem:[#allocation2 + $0x1ca] sm:$0xff]
    %v1446 = vld [vmem:[#allocation2 + $0x1d2] sm:$0xff]
    %v1447 = vld [vmem:[#allocation2 + $0x1da] sm:$0xff]
    %v1448 = vld [vmem:[#allocation2 + $0x1e2] sm:$0xff]
    %v1449 = vld [vmem:[#allocation2 + $0x1ea] sm:$0xff]
    %v1450 = vld [vmem:[#allocation2 + $0x1f2] sm:$0xff]
    %v1451 = vld [vmem:[#allocation2 + $0x1fa] sm:$0xff]
    %v1452 = vld [vmem:[#allocation2 + $0x202] sm:$0xff]
    %v1453 = vld [vmem:[#allocation2 + $0x20a] sm:$0xff]
    %v1454 = vld [vmem:[#allocation2 + $0x212] sm:$0xff]
    %v1455 = vld [vmem:[#allocation2 + $0x21a] sm:$0xff]
    %v1456 = vld [vmem:[#allocation2 + $0x222] sm:$0xff]
    %v1457 = vld [vmem:[#allocation2 + $0x22a] sm:$0xff]
    %v1458 = vld [vmem:[#allocation2 + $0x232] sm:$0xff]
    %v1459 = vld [vmem:[#allocation2 + $0x23a] sm:$0xff]
    %v1460 = vld [vmem:[#allocation2 + $0x242] sm:$0xff]
    %v1461 = vld [vmem:[#allocation2 + $0x24a] sm:$0xff]
    %v1462 = vld [vmem:[#allocation2 + $0x252] sm:$0xff]
    %v1463 = vld [vmem:[#allocation2 + $0x25a] sm:$0xff]
    %v1464 = vld [vmem:[#allocation2 + $0x262] sm:$0xff]
    %v1465 = vld [vmem:[#allocation2 + $0x26a] sm:$0xff]
    %v1466 = vld [vmem:[#allocation2 + $0x272] sm:$0xff]
    %v1467 = vld [vmem:[#allocation2 + $0x27a] sm:$0xff]
    %v1468 = vld [vmem:[#allocation2 + $0x282] sm:$0xff]
    %v1469 = vld [vmem:[#allocation2 + $0x28a] sm:$0xff]
    %v1470 = vld [vmem:[#allocation2 + $0x292] sm:$0xff]
    %1552 = vrot.lane.b32.xlu0 %v1390, 12
    %v1553 = vpop.permute.xlu0 %1552
    %1554 = vrot.lane.b32.xlu0 %v1391, 12
    %v1555 = vpop.permute.xlu0 %1554
    %1556 = vrot.lane.b32.xlu0 %v1392, 12
    %v1557 = vpop.permute.xlu0 %1556
    %1558 = vrot.lane.b32.xlu0 %v1393, 12
    %v1559 = vpop.permute.xlu0 %1558
    %1560 = vrot.lane.b32.xlu0 %v1394, 12
    %v1561 = vpop.permute.xlu0 %1560
    %1562 = vrot.lane.b32.xlu0 %v1395, 12
    %v1563 = vpop.permute.xlu0 %1562
    %1564 = vrot.lane.b32.xlu0 %v1396, 12
    %v1565 = vpop.permute.xlu0 %1564
    %1566 = vrot.lane.b32.xlu0 %v1397, 12
    %v1567 = vpop.permute.xlu0 %1566
    %1568 = vrot.lane.b32.xlu0 %v1398, 12
    %v1569 = vpop.permute.xlu0 %1568
    %1570 = vrot.lane.b32.xlu0 %v1399, 12
    %v1571 = vpop.permute.xlu0 %1570
    %1572 = vrot.lane.b32.xlu0 %v1400, 12
    %v1573 = vpop.permute.xlu0 %1572
    %1574 = vrot.lane.b32.xlu0 %v1401, 12
    %v1575 = vpop.permute.xlu0 %1574
    %1576 = vrot.lane.b32.xlu0 %v1402, 12
    %v1577 = vpop.permute.xlu0 %1576
    %1578 = vrot.lane.b32.xlu0 %v1403, 12
    %v1579 = vpop.permute.xlu0 %1578
    %1580 = vrot.lane.b32.xlu0 %v1404, 12
    %v1581 = vpop.permute.xlu0 %1580
    %1582 = vrot.lane.b32.xlu0 %v1405, 12
    %v1583 = vpop.permute.xlu0 %1582
    %1584 = vrot.lane.b32.xlu0 %v1406, 12
    %v1585 = vpop.permute.xlu0 %1584
    %1586 = vrot.lane.b32.xlu0 %v1407, 12
    %v1587 = vpop.permute.xlu0 %1586
    %1588 = vrot.lane.b32.xlu0 %v1408, 12
    %v1589 = vpop.permute.xlu0 %1588
    %1590 = vrot.lane.b32.xlu0 %v1409, 12
    %v1591 = vpop.permute.xlu0 %1590
    %1592 = vrot.lane.b32.xlu0 %v1410, 12
    %v1593 = vpop.permute.xlu0 %1592
    %1594 = vrot.lane.b32.xlu0 %v1411, 12
    %v1595 = vpop.permute.xlu0 %1594
    %1596 = vrot.lane.b32.xlu0 %v1412, 12
    %v1597 = vpop.permute.xlu0 %1596
    %1598 = vrot.lane.b32.xlu0 %v1413, 12
    %v1599 = vpop.permute.xlu0 %1598
    %1600 = vrot.lane.b32.xlu0 %v1414, 12
    %v1601 = vpop.permute.xlu0 %1600
    %1602 = vrot.lane.b32.xlu0 %v1415, 12
    %v1603 = vpop.permute.xlu0 %1602
    %1604 = vrot.lane.b32.xlu0 %v1416, 12
    %v1605 = vpop.permute.xlu0 %1604
    %1606 = vrot.lane.b32.xlu0 %v1417, 12
    %v1607 = vpop.permute.xlu0 %1606
    %1608 = vrot.lane.b32.xlu0 %v1418, 12
    %v1609 = vpop.permute.xlu0 %1608
    %1610 = vrot.lane.b32.xlu0 %v1419, 12
    %v1611 = vpop.permute.xlu0 %1610
    %1612 = vrot.lane.b32.xlu0 %v1420, 12
    %v1613 = vpop.permute.xlu0 %1612
    %1614 = vrot.lane.b32.xlu0 %v1421, 12
    %v1615 = vpop.permute.xlu0 %1614
    %1616 = vrot.lane.b32.xlu0 %v1422, 12
    %v1617 = vpop.permute.xlu0 %1616
    %1618 = vrot.lane.b32.xlu0 %v1423, 12
    %v1619 = vpop.permute.xlu0 %1618
    %1620 = vrot.lane.b32.xlu0 %v1424, 12
    %v1621 = vpop.permute.xlu0 %1620
    %1622 = vrot.lane.b32.xlu0 %v1425, 12
    %v1623 = vpop.permute.xlu0 %1622
    %1624 = vrot.lane.b32.xlu0 %v1426, 12
    %v1625 = vpop.permute.xlu0 %1624
    %1626 = vrot.lane.b32.xlu0 %v1427, 12
    %v1627 = vpop.permute.xlu0 %1626
    %1628 = vrot.lane.b32.xlu0 %v1428, 12
    %v1629 = vpop.permute.xlu0 %1628
    %1630 = vrot.lane.b32.xlu0 %v1429, 12
    %v1631 = vpop.permute.xlu0 %1630
    %1632 = vrot.lane.b32.xlu0 %v1430, 12
    %v1633 = vpop.permute.xlu0 %1632
    %1634 = vrot.lane.b32.xlu0 %v1431, 12
    %v1635 = vpop.permute.xlu0 %1634
    %1636 = vrot.lane.b32.xlu0 %v1432, 12
    %v1637 = vpop.permute.xlu0 %1636
    %1638 = vrot.lane.b32.xlu0 %v1433, 12
    %v1639 = vpop.permute.xlu0 %1638
    %1640 = vrot.lane.b32.xlu0 %v1434, 12
    %v1641 = vpop.permute.xlu0 %1640
    %1642 = vrot.lane.b32.xlu0 %v1435, 12
    %v1643 = vpop.permute.xlu0 %1642
    %1644 = vrot.lane.b32.xlu0 %v1436, 12
    %v1645 = vpop.permute.xlu0 %1644
    %1646 = vrot.lane.b32.xlu0 %v1437, 12
    %v1647 = vpop.permute.xlu0 %1646
    %1648 = vrot.lane.b32.xlu0 %v1438, 12
    %v1649 = vpop.permute.xlu0 %1648
    %1650 = vrot.lane.b32.xlu0 %v1439, 12
    %v1651 = vpop.permute.xlu0 %1650
    %1652 = vrot.lane.b32.xlu0 %v1440, 12
    %v1653 = vpop.permute.xlu0 %1652
    %1654 = vrot.lane.b32.xlu0 %v1441, 12
    %v1655 = vpop.permute.xlu0 %1654
    %1656 = vrot.lane.b32.xlu0 %v1442, 12
    %v1657 = vpop.permute.xlu0 %1656
    %1658 = vrot.lane.b32.xlu0 %v1443, 12
    %v1659 = vpop.permute.xlu0 %1658
    %1660 = vrot.lane.b32.xlu0 %v1444, 12
    %v1661 = vpop.permute.xlu0 %1660
    %1662 = vrot.lane.b32.xlu0 %v1445, 12
    %v1663 = vpop.permute.xlu0 %1662
    %1664 = vrot.lane.b32.xlu0 %v1446, 12
    %v1665 = vpop.permute.xlu0 %1664
    %1666 = vrot.lane.b32.xlu0 %v1447, 12
    %v1667 = vpop.permute.xlu0 %1666
    %1668 = vrot.lane.b32.xlu0 %v1448, 12
    %v1669 = vpop.permute.xlu0 %1668
    %1670 = vrot.lane.b32.xlu0 %v1449, 12
    %v1671 = vpop.permute.xlu0 %1670
    %1672 = vrot.lane.b32.xlu0 %v1450, 12
    %v1673 = vpop.permute.xlu0 %1672
    %1674 = vrot.lane.b32.xlu0 %v1451, 12
    %v1675 = vpop.permute.xlu0 %1674
    %1676 = vrot.lane.b32.xlu0 %v1452, 12
    %v1677 = vpop.permute.xlu0 %1676
    %1678 = vrot.lane.b32.xlu0 %v1453, 12
    %v1679 = vpop.permute.xlu0 %1678
    %1680 = vrot.lane.b32.xlu0 %v1454, 12
    %v1681 = vpop.permute.xlu0 %1680
    %1682 = vrot.lane.b32.xlu0 %v1455, 12
    %v1683 = vpop.permute.xlu0 %1682
    %1684 = vrot.lane.b32.xlu0 %v1456, 12
    %v1685 = vpop.permute.xlu0 %1684
    %1686 = vrot.lane.b32.xlu0 %v1457, 12
    %v1687 = vpop.permute.xlu0 %1686
    %1688 = vrot.lane.b32.xlu0 %v1458, 12
    %v1689 = vpop.permute.xlu0 %1688
    %1690 = vrot.lane.b32.xlu0 %v1459, 12
    %v1691 = vpop.permute.xlu0 %1690
    %1692 = vrot.lane.b32.xlu0 %v1460, 12
    %v1693 = vpop.permute.xlu0 %1692
    %1694 = vrot.lane.b32.xlu0 %v1461, 12
    %v1695 = vpop.permute.xlu0 %1694
    %1696 = vrot.lane.b32.xlu0 %v1462, 12
    %v1697 = vpop.permute.xlu0 %1696
    %1698 = vrot.lane.b32.xlu0 %v1463, 12
    %v1699 = vpop.permute.xlu0 %1698
    %1700 = vrot.lane.b32.xlu0 %v1464, 12
    %v1701 = vpop.permute.xlu0 %1700
    %1702 = vrot.lane.b32.xlu0 %v1465, 12
    %v1703 = vpop.permute.xlu0 %1702
    %1704 = vrot.lane.b32.xlu0 %v1466, 12
    %v1705 = vpop.permute.xlu0 %1704
    %1706 = vrot.lane.b32.xlu0 %v1467, 12
    %v1707 = vpop.permute.xlu0 %1706
    %1708 = vrot.lane.b32.xlu0 %v1468, 12
    %v1709 = vpop.permute.xlu0 %1708
    %1710 = vrot.lane.b32.xlu0 %v1469, 12
    %v1711 = vpop.permute.xlu0 %1710
    %1712 = vrot.lane.b32.xlu0 %v1470, 12
    %v1713 = vpop.permute.xlu0 %1712
    %vm1795 = vcmask 130144
    %1796 = vst.msk [vmem:[#allocation3] sm:$0xff] %vm1795, %v1553
    %1797 = vst.msk [vmem:[#allocation3 + $0x8] sm:$0xff] %vm1795, %v1555
    %1798 = vst.msk [vmem:[#allocation3 + $0x10] sm:$0xff] %vm1795, %v1557
    %1799 = vst.msk [vmem:[#allocation3 + $0x18] sm:$0xff] %vm1795, %v1559
    %1800 = vst.msk [vmem:[#allocation3 + $0x20] sm:$0xff] %vm1795, %v1561
    %1801 = vst.msk [vmem:[#allocation3 + $0x28] sm:$0xff] %vm1795, %v1563
    %1802 = vst.msk [vmem:[#allocation3 + $0x30] sm:$0xff] %vm1795, %v1565
    %1803 = vst.msk [vmem:[#allocation3 + $0x38] sm:$0xff] %vm1795, %v1567
    %1804 = vst.msk [vmem:[#allocation3 + $0x40] sm:$0xff] %vm1795, %v1569
    %1805 = vst.msk [vmem:[#allocation3 + $0x48] sm:$0xff] %vm1795, %v1571
    %1806 = vst.msk [vmem:[#allocation3 + $0x50] sm:$0xff] %vm1795, %v1573
    %1807 = vst.msk [vmem:[#allocation3 + $0x58] sm:$0xff] %vm1795, %v1575
    %1808 = vst.msk [vmem:[#allocation3 + $0x60] sm:$0xff] %vm1795, %v1577
    %1809 = vst.msk [vmem:[#allocation3 + $0x68] sm:$0xff] %vm1795, %v1579
    %1810 = vst.msk [vmem:[#allocation3 + $0x70] sm:$0xff] %vm1795, %v1581
    %1811 = vst.msk [vmem:[#allocation3 + $0x78] sm:$0xff] %vm1795, %v1583
    %1812 = vst.msk [vmem:[#allocation3 + $0x80] sm:$0xff] %vm1795, %v1585
    %1813 = vst.msk [vmem:[#allocation3 + $0x88] sm:$0xff] %vm1795, %v1587
    %1814 = vst.msk [vmem:[#allocation3 + $0x90] sm:$0xff] %vm1795, %v1589
    %1815 = vst.msk [vmem:[#allocation3 + $0x98] sm:$0xff] %vm1795, %v1591
    %1816 = vst.msk [vmem:[#allocation3 + $0xa0] sm:$0xff] %vm1795, %v1593
    %1817 = vst.msk [vmem:[#allocation3 + $0xa8] sm:$0xff] %vm1795, %v1595
    %1818 = vst.msk [vmem:[#allocation3 + $0xb0] sm:$0xff] %vm1795, %v1597
    %1819 = vst.msk [vmem:[#allocation3 + $0xb8] sm:$0xff] %vm1795, %v1599
    %1820 = vst.msk [vmem:[#allocation3 + $0xc0] sm:$0xff] %vm1795, %v1601
    %1821 = vst.msk [vmem:[#allocation3 + $0xc8] sm:$0xff] %vm1795, %v1603
    %1822 = vst.msk [vmem:[#allocation3 + $0xd0] sm:$0xff] %vm1795, %v1605
    %1823 = vst.msk [vmem:[#allocation3 + $0xd8] sm:$0xff] %vm1795, %v1607
    %1824 = vst.msk [vmem:[#allocation3 + $0xe0] sm:$0xff] %vm1795, %v1609
    %1825 = vst.msk [vmem:[#allocation3 + $0xe8] sm:$0xff] %vm1795, %v1611
    %1826 = vst.msk [vmem:[#allocation3 + $0xf0] sm:$0xff] %vm1795, %v1613
    %1827 = vst.msk [vmem:[#allocation3 + $0xf8] sm:$0xff] %vm1795, %v1615
    %1828 = vst.msk [vmem:[#allocation3 + $0x100] sm:$0xff] %vm1795, %v1617
    %1829 = vst.msk [vmem:[#allocation3 + $0x108] sm:$0xff] %vm1795, %v1619
    %1830 = vst.msk [vmem:[#allocation3 + $0x110] sm:$0xff] %vm1795, %v1621
    %1831 = vst.msk [vmem:[#allocation3 + $0x118] sm:$0xff] %vm1795, %v1623
    %1832 = vst.msk [vmem:[#allocation3 + $0x120] sm:$0xff] %vm1795, %v1625
    %1833 = vst.msk [vmem:[#allocation3 + $0x128] sm:$0xff] %vm1795, %v1627
    %1834 = vst.msk [vmem:[#allocation3 + $0x130] sm:$0xff] %vm1795, %v1629
    %1835 = vst.msk [vmem:[#allocation3 + $0x138] sm:$0xff] %vm1795, %v1631
    %1836 = vst.msk [vmem:[#allocation3 + $0x140] sm:$0xff] %vm1795, %v1633
    %1837 = vst.msk [vmem:[#allocation3 + $0x148] sm:$0xff] %vm1795, %v1635
    %1838 = vst.msk [vmem:[#allocation3 + $0x150] sm:$0xff] %vm1795, %v1637
    %1839 = vst.msk [vmem:[#allocation3 + $0x158] sm:$0xff] %vm1795, %v1639
    %1840 = vst.msk [vmem:[#allocation3 + $0x160] sm:$0xff] %vm1795, %v1641
    %1841 = vst.msk [vmem:[#allocation3 + $0x168] sm:$0xff] %vm1795, %v1643
    %1842 = vst.msk [vmem:[#allocation3 + $0x170] sm:$0xff] %vm1795, %v1645
    %1843 = vst.msk [vmem:[#allocation3 + $0x178] sm:$0xff] %vm1795, %v1647
    %1844 = vst.msk [vmem:[#allocation3 + $0x180] sm:$0xff] %vm1795, %v1649
    %1845 = vst.msk [vmem:[#allocation3 + $0x188] sm:$0xff] %vm1795, %v1651
    %1846 = vst.msk [vmem:[#allocation3 + $0x190] sm:$0xff] %vm1795, %v1653
    %1847 = vst.msk [vmem:[#allocation3 + $0x198] sm:$0xff] %vm1795, %v1655
    %1848 = vst.msk [vmem:[#allocation3 + $0x1a0] sm:$0xff] %vm1795, %v1657
    %1849 = vst.msk [vmem:[#allocation3 + $0x1a8] sm:$0xff] %vm1795, %v1659
    %1850 = vst.msk [vmem:[#allocation3 + $0x1b0] sm:$0xff] %vm1795, %v1661
    %1851 = vst.msk [vmem:[#allocation3 + $0x1b8] sm:$0xff] %vm1795, %v1663
    %1852 = vst.msk [vmem:[#allocation3 + $0x1c0] sm:$0xff] %vm1795, %v1665
    %1853 = vst.msk [vmem:[#allocation3 + $0x1c8] sm:$0xff] %vm1795, %v1667
    %1854 = vst.msk [vmem:[#allocation3 + $0x1d0] sm:$0xff] %vm1795, %v1669
    %1855 = vst.msk [vmem:[#allocation3 + $0x1d8] sm:$0xff] %vm1795, %v1671
    %1856 = vst.msk [vmem:[#allocation3 + $0x1e0] sm:$0xff] %vm1795, %v1673
    %1857 = vst.msk [vmem:[#allocation3 + $0x1e8] sm:$0xff] %vm1795, %v1675
    %1858 = vst.msk [vmem:[#allocation3 + $0x1f0] sm:$0xff] %vm1795, %v1677
    %1859 = vst.msk [vmem:[#allocation3 + $0x1f8] sm:$0xff] %vm1795, %v1679
    %1860 = vst.msk [vmem:[#allocation3 + $0x200] sm:$0xff] %vm1795, %v1681
    %1861 = vst.msk [vmem:[#allocation3 + $0x208] sm:$0xff] %vm1795, %v1683
    %1862 = vst.msk [vmem:[#allocation3 + $0x210] sm:$0xff] %vm1795, %v1685
    %1863 = vst.msk [vmem:[#allocation3 + $0x218] sm:$0xff] %vm1795, %v1687
    %1864 = vst.msk [vmem:[#allocation3 + $0x220] sm:$0xff] %vm1795, %v1689
    %1865 = vst.msk [vmem:[#allocation3 + $0x228] sm:$0xff] %vm1795, %v1691
    %1866 = vst.msk [vmem:[#allocation3 + $0x230] sm:$0xff] %vm1795, %v1693
    %1867 = vst.msk [vmem:[#allocation3 + $0x238] sm:$0xff] %vm1795, %v1695
    %1868 = vst.msk [vmem:[#allocation3 + $0x240] sm:$0xff] %vm1795, %v1697
    %1869 = vst.msk [vmem:[#allocation3 + $0x248] sm:$0xff] %vm1795, %v1699
    %1870 = vst.msk [vmem:[#allocation3 + $0x250] sm:$0xff] %vm1795, %v1701
    %1871 = vst.msk [vmem:[#allocation3 + $0x258] sm:$0xff] %vm1795, %v1703
    %1872 = vst.msk [vmem:[#allocation3 + $0x260] sm:$0xff] %vm1795, %v1705
    %1873 = vst.msk [vmem:[#allocation3 + $0x268] sm:$0xff] %vm1795, %v1707
    %1874 = vst.msk [vmem:[#allocation3 + $0x270] sm:$0xff] %vm1795, %v1709
    %1875 = vst.msk [vmem:[#allocation3 + $0x278] sm:$0xff] %vm1795, %v1711
    %1876 = vst.msk [vmem:[#allocation3 + $0x280] sm:$0xff] %vm1795, %v1713
    %v1877 = vld [vmem:[#allocation2 + $0x13] sm:$0xff]
    %v1878 = vld [vmem:[#allocation2 + $0x1b] sm:$0xff]
    %v1879 = vld [vmem:[#allocation2 + $0x23] sm:$0xff]
    %v1880 = vld [vmem:[#allocation2 + $0x2b] sm:$0xff]
    %v1881 = vld [vmem:[#allocation2 + $0x33] sm:$0xff]
    %v1882 = vld [vmem:[#allocation2 + $0x3b] sm:$0xff]
    %v1883 = vld [vmem:[#allocation2 + $0x43] sm:$0xff]
    %v1884 = vld [vmem:[#allocation2 + $0x4b] sm:$0xff]
    %v1885 = vld [vmem:[#allocation2 + $0x53] sm:$0xff]
    %v1886 = vld [vmem:[#allocation2 + $0x5b] sm:$0xff]
    %v1887 = vld [vmem:[#allocation2 + $0x63] sm:$0xff]
    %v1888 = vld [vmem:[#allocation2 + $0x6b] sm:$0xff]
    %v1889 = vld [vmem:[#allocation2 + $0x73] sm:$0xff]
    %v1890 = vld [vmem:[#allocation2 + $0x7b] sm:$0xff]
    %v1891 = vld [vmem:[#allocation2 + $0x83] sm:$0xff]
    %v1892 = vld [vmem:[#allocation2 + $0x8b] sm:$0xff]
    %v1893 = vld [vmem:[#allocation2 + $0x93] sm:$0xff]
    %v1894 = vld [vmem:[#allocation2 + $0x9b] sm:$0xff]
    %v1895 = vld [vmem:[#allocation2 + $0xa3] sm:$0xff]
    %v1896 = vld [vmem:[#allocation2 + $0xab] sm:$0xff]
    %v1897 = vld [vmem:[#allocation2 + $0xb3] sm:$0xff]
    %v1898 = vld [vmem:[#allocation2 + $0xbb] sm:$0xff]
    %v1899 = vld [vmem:[#allocation2 + $0xc3] sm:$0xff]
    %v1900 = vld [vmem:[#allocation2 + $0xcb] sm:$0xff]
    %v1901 = vld [vmem:[#allocation2 + $0xd3] sm:$0xff]
    %v1902 = vld [vmem:[#allocation2 + $0xdb] sm:$0xff]
    %v1903 = vld [vmem:[#allocation2 + $0xe3] sm:$0xff]
    %v1904 = vld [vmem:[#allocation2 + $0xeb] sm:$0xff]
    %v1905 = vld [vmem:[#allocation2 + $0xf3] sm:$0xff]
    %v1906 = vld [vmem:[#allocation2 + $0xfb] sm:$0xff]
    %v1907 = vld [vmem:[#allocation2 + $0x103] sm:$0xff]
    %v1908 = vld [vmem:[#allocation2 + $0x10b] sm:$0xff]
    %v1909 = vld [vmem:[#allocation2 + $0x113] sm:$0xff]
    %v1910 = vld [vmem:[#allocation2 + $0x11b] sm:$0xff]
    %v1911 = vld [vmem:[#allocation2 + $0x123] sm:$0xff]
    %v1912 = vld [vmem:[#allocation2 + $0x12b] sm:$0xff]
    %v1913 = vld [vmem:[#allocation2 + $0x133] sm:$0xff]
    %v1914 = vld [vmem:[#allocation2 + $0x13b] sm:$0xff]
    %v1915 = vld [vmem:[#allocation2 + $0x143] sm:$0xff]
    %v1916 = vld [vmem:[#allocation2 + $0x14b] sm:$0xff]
    %v1917 = vld [vmem:[#allocation2 + $0x153] sm:$0xff]
    %v1918 = vld [vmem:[#allocation2 + $0x15b] sm:$0xff]
    %v1919 = vld [vmem:[#allocation2 + $0x163] sm:$0xff]
    %v1920 = vld [vmem:[#allocation2 + $0x16b] sm:$0xff]
    %v1921 = vld [vmem:[#allocation2 + $0x173] sm:$0xff]
    %v1922 = vld [vmem:[#allocation2 + $0x17b] sm:$0xff]
    %v1923 = vld [vmem:[#allocation2 + $0x183] sm:$0xff]
    %v1924 = vld [vmem:[#allocation2 + $0x18b] sm:$0xff]
    %v1925 = vld [vmem:[#allocation2 + $0x193] sm:$0xff]
    %v1926 = vld [vmem:[#allocation2 + $0x19b] sm:$0xff]
    %v1927 = vld [vmem:[#allocation2 + $0x1a3] sm:$0xff]
    %v1928 = vld [vmem:[#allocation2 + $0x1ab] sm:$0xff]
    %v1929 = vld [vmem:[#allocation2 + $0x1b3] sm:$0xff]
    %v1930 = vld [vmem:[#allocation2 + $0x1bb] sm:$0xff]
    %v1931 = vld [vmem:[#allocation2 + $0x1c3] sm:$0xff]
    %v1932 = vld [vmem:[#allocation2 + $0x1cb] sm:$0xff]
    %v1933 = vld [vmem:[#allocation2 + $0x1d3] sm:$0xff]
    %v1934 = vld [vmem:[#allocation2 + $0x1db] sm:$0xff]
    %v1935 = vld [vmem:[#allocation2 + $0x1e3] sm:$0xff]
    %v1936 = vld [vmem:[#allocation2 + $0x1eb] sm:$0xff]
    %v1937 = vld [vmem:[#allocation2 + $0x1f3] sm:$0xff]
    %v1938 = vld [vmem:[#allocation2 + $0x1fb] sm:$0xff]
    %v1939 = vld [vmem:[#allocation2 + $0x203] sm:$0xff]
    %v1940 = vld [vmem:[#allocation2 + $0x20b] sm:$0xff]
    %v1941 = vld [vmem:[#allocation2 + $0x213] sm:$0xff]
    %v1942 = vld [vmem:[#allocation2 + $0x21b] sm:$0xff]
    %v1943 = vld [vmem:[#allocation2 + $0x223] sm:$0xff]
    %v1944 = vld [vmem:[#allocation2 + $0x22b] sm:$0xff]
    %v1945 = vld [vmem:[#allocation2 + $0x233] sm:$0xff]
    %v1946 = vld [vmem:[#allocation2 + $0x23b] sm:$0xff]
    %v1947 = vld [vmem:[#allocation2 + $0x243] sm:$0xff]
    %v1948 = vld [vmem:[#allocation2 + $0x24b] sm:$0xff]
    %v1949 = vld [vmem:[#allocation2 + $0x253] sm:$0xff]
    %v1950 = vld [vmem:[#allocation2 + $0x25b] sm:$0xff]
    %v1951 = vld [vmem:[#allocation2 + $0x263] sm:$0xff]
    %v1952 = vld [vmem:[#allocation2 + $0x26b] sm:$0xff]
    %v1953 = vld [vmem:[#allocation2 + $0x273] sm:$0xff]
    %v1954 = vld [vmem:[#allocation2 + $0x27b] sm:$0xff]
    %v1955 = vld [vmem:[#allocation2 + $0x283] sm:$0xff]
    %v1956 = vld [vmem:[#allocation2 + $0x28b] sm:$0xff]
    %v1957 = vld [vmem:[#allocation2 + $0x293] sm:$0xff]
    %2039 = vrot.lane.b32.xlu0 %v1877, 16
    %v2040 = vpop.permute.xlu0 %2039
    %2041 = vrot.lane.b32.xlu0 %v1878, 16
    %v2042 = vpop.permute.xlu0 %2041
    %2043 = vrot.lane.b32.xlu0 %v1879, 16
    %v2044 = vpop.permute.xlu0 %2043
    %2045 = vrot.lane.b32.xlu0 %v1880, 16
    %v2046 = vpop.permute.xlu0 %2045
    %2047 = vrot.lane.b32.xlu0 %v1881, 16
    %v2048 = vpop.permute.xlu0 %2047
    %2049 = vrot.lane.b32.xlu0 %v1882, 16
    %v2050 = vpop.permute.xlu0 %2049
    %2051 = vrot.lane.b32.xlu0 %v1883, 16
    %v2052 = vpop.permute.xlu0 %2051
    %2053 = vrot.lane.b32.xlu0 %v1884, 16
    %v2054 = vpop.permute.xlu0 %2053
    %2055 = vrot.lane.b32.xlu0 %v1885, 16
    %v2056 = vpop.permute.xlu0 %2055
    %2057 = vrot.lane.b32.xlu0 %v1886, 16
    %v2058 = vpop.permute.xlu0 %2057
    %2059 = vrot.lane.b32.xlu0 %v1887, 16
    %v2060 = vpop.permute.xlu0 %2059
    %2061 = vrot.lane.b32.xlu0 %v1888, 16
    %v2062 = vpop.permute.xlu0 %2061
    %2063 = vrot.lane.b32.xlu0 %v1889, 16
    %v2064 = vpop.permute.xlu0 %2063
    %2065 = vrot.lane.b32.xlu0 %v1890, 16
    %v2066 = vpop.permute.xlu0 %2065
    %2067 = vrot.lane.b32.xlu0 %v1891, 16
    %v2068 = vpop.permute.xlu0 %2067
    %2069 = vrot.lane.b32.xlu0 %v1892, 16
    %v2070 = vpop.permute.xlu0 %2069
    %2071 = vrot.lane.b32.xlu0 %v1893, 16
    %v2072 = vpop.permute.xlu0 %2071
    %2073 = vrot.lane.b32.xlu0 %v1894, 16
    %v2074 = vpop.permute.xlu0 %2073
    %2075 = vrot.lane.b32.xlu0 %v1895, 16
    %v2076 = vpop.permute.xlu0 %2075
    %2077 = vrot.lane.b32.xlu0 %v1896, 16
    %v2078 = vpop.permute.xlu0 %2077
    %2079 = vrot.lane.b32.xlu0 %v1897, 16
    %v2080 = vpop.permute.xlu0 %2079
    %2081 = vrot.lane.b32.xlu0 %v1898, 16
    %v2082 = vpop.permute.xlu0 %2081
    %2083 = vrot.lane.b32.xlu0 %v1899, 16
    %v2084 = vpop.permute.xlu0 %2083
    %2085 = vrot.lane.b32.xlu0 %v1900, 16
    %v2086 = vpop.permute.xlu0 %2085
    %2087 = vrot.lane.b32.xlu0 %v1901, 16
    %v2088 = vpop.permute.xlu0 %2087
    %2089 = vrot.lane.b32.xlu0 %v1902, 16
    %v2090 = vpop.permute.xlu0 %2089
    %2091 = vrot.lane.b32.xlu0 %v1903, 16
    %v2092 = vpop.permute.xlu0 %2091
    %2093 = vrot.lane.b32.xlu0 %v1904, 16
    %v2094 = vpop.permute.xlu0 %2093
    %2095 = vrot.lane.b32.xlu0 %v1905, 16
    %v2096 = vpop.permute.xlu0 %2095
    %2097 = vrot.lane.b32.xlu0 %v1906, 16
    %v2098 = vpop.permute.xlu0 %2097
    %2099 = vrot.lane.b32.xlu0 %v1907, 16
    %v2100 = vpop.permute.xlu0 %2099
    %2101 = vrot.lane.b32.xlu0 %v1908, 16
    %v2102 = vpop.permute.xlu0 %2101
    %2103 = vrot.lane.b32.xlu0 %v1909, 16
    %v2104 = vpop.permute.xlu0 %2103
    %2105 = vrot.lane.b32.xlu0 %v1910, 16
    %v2106 = vpop.permute.xlu0 %2105
    %2107 = vrot.lane.b32.xlu0 %v1911, 16
    %v2108 = vpop.permute.xlu0 %2107
    %2109 = vrot.lane.b32.xlu0 %v1912, 16
    %v2110 = vpop.permute.xlu0 %2109
    %2111 = vrot.lane.b32.xlu0 %v1913, 16
    %v2112 = vpop.permute.xlu0 %2111
    %2113 = vrot.lane.b32.xlu0 %v1914, 16
    %v2114 = vpop.permute.xlu0 %2113
    %2115 = vrot.lane.b32.xlu0 %v1915, 16
    %v2116 = vpop.permute.xlu0 %2115
    %2117 = vrot.lane.b32.xlu0 %v1916, 16
    %v2118 = vpop.permute.xlu0 %2117
    %2119 = vrot.lane.b32.xlu0 %v1917, 16
    %v2120 = vpop.permute.xlu0 %2119
    %2121 = vrot.lane.b32.xlu0 %v1918, 16
    %v2122 = vpop.permute.xlu0 %2121
    %2123 = vrot.lane.b32.xlu0 %v1919, 16
    %v2124 = vpop.permute.xlu0 %2123
    %2125 = vrot.lane.b32.xlu0 %v1920, 16
    %v2126 = vpop.permute.xlu0 %2125
    %2127 = vrot.lane.b32.xlu0 %v1921, 16
    %v2128 = vpop.permute.xlu0 %2127
    %2129 = vrot.lane.b32.xlu0 %v1922, 16
    %v2130 = vpop.permute.xlu0 %2129
    %2131 = vrot.lane.b32.xlu0 %v1923, 16
    %v2132 = vpop.permute.xlu0 %2131
    %2133 = vrot.lane.b32.xlu0 %v1924, 16
    %v2134 = vpop.permute.xlu0 %2133
    %2135 = vrot.lane.b32.xlu0 %v1925, 16
    %v2136 = vpop.permute.xlu0 %2135
    %2137 = vrot.lane.b32.xlu0 %v1926, 16
    %v2138 = vpop.permute.xlu0 %2137
    %2139 = vrot.lane.b32.xlu0 %v1927, 16
    %v2140 = vpop.permute.xlu0 %2139
    %2141 = vrot.lane.b32.xlu0 %v1928, 16
    %v2142 = vpop.permute.xlu0 %2141
    %2143 = vrot.lane.b32.xlu0 %v1929, 16
    %v2144 = vpop.permute.xlu0 %2143
    %2145 = vrot.lane.b32.xlu0 %v1930, 16
    %v2146 = vpop.permute.xlu0 %2145
    %2147 = vrot.lane.b32.xlu0 %v1931, 16
    %v2148 = vpop.permute.xlu0 %2147
    %2149 = vrot.lane.b32.xlu0 %v1932, 16
    %v2150 = vpop.permute.xlu0 %2149
    %2151 = vrot.lane.b32.xlu0 %v1933, 16
    %v2152 = vpop.permute.xlu0 %2151
    %2153 = vrot.lane.b32.xlu0 %v1934, 16
    %v2154 = vpop.permute.xlu0 %2153
    %2155 = vrot.lane.b32.xlu0 %v1935, 16
    %v2156 = vpop.permute.xlu0 %2155
    %2157 = vrot.lane.b32.xlu0 %v1936, 16
    %v2158 = vpop.permute.xlu0 %2157
    %2159 = vrot.lane.b32.xlu0 %v1937, 16
    %v2160 = vpop.permute.xlu0 %2159
    %2161 = vrot.lane.b32.xlu0 %v1938, 16
    %v2162 = vpop.permute.xlu0 %2161
    %2163 = vrot.lane.b32.xlu0 %v1939, 16
    %v2164 = vpop.permute.xlu0 %2163
    %2165 = vrot.lane.b32.xlu0 %v1940, 16
    %v2166 = vpop.permute.xlu0 %2165
    %2167 = vrot.lane.b32.xlu0 %v1941, 16
    %v2168 = vpop.permute.xlu0 %2167
    %2169 = vrot.lane.b32.xlu0 %v1942, 16
    %v2170 = vpop.permute.xlu0 %2169
    %2171 = vrot.lane.b32.xlu0 %v1943, 16
    %v2172 = vpop.permute.xlu0 %2171
    %2173 = vrot.lane.b32.xlu0 %v1944, 16
    %v2174 = vpop.permute.xlu0 %2173
    %2175 = vrot.lane.b32.xlu0 %v1945, 16
    %v2176 = vpop.permute.xlu0 %2175
    %2177 = vrot.lane.b32.xlu0 %v1946, 16
    %v2178 = vpop.permute.xlu0 %2177
    %2179 = vrot.lane.b32.xlu0 %v1947, 16
    %v2180 = vpop.permute.xlu0 %2179
    %2181 = vrot.lane.b32.xlu0 %v1948, 16
    %v2182 = vpop.permute.xlu0 %2181
    %2183 = vrot.lane.b32.xlu0 %v1949, 16
    %v2184 = vpop.permute.xlu0 %2183
    %2185 = vrot.lane.b32.xlu0 %v1950, 16
    %v2186 = vpop.permute.xlu0 %2185
    %2187 = vrot.lane.b32.xlu0 %v1951, 16
    %v2188 = vpop.permute.xlu0 %2187
    %2189 = vrot.lane.b32.xlu0 %v1952, 16
    %v2190 = vpop.permute.xlu0 %2189
    %2191 = vrot.lane.b32.xlu0 %v1953, 16
    %v2192 = vpop.permute.xlu0 %2191
    %2193 = vrot.lane.b32.xlu0 %v1954, 16
    %v2194 = vpop.permute.xlu0 %2193
    %2195 = vrot.lane.b32.xlu0 %v1955, 16
    %v2196 = vpop.permute.xlu0 %2195
    %2197 = vrot.lane.b32.xlu0 %v1956, 16
    %v2198 = vpop.permute.xlu0 %2197
    %2199 = vrot.lane.b32.xlu0 %v1957, 16
    %v2200 = vpop.permute.xlu0 %2199
    %vm2282 = vcmask 162944
    %2283 = vst.msk [vmem:[#allocation3] sm:$0xff] %vm2282, %v2040
    %2284 = vst.msk [vmem:[#allocation3 + $0x8] sm:$0xff] %vm2282, %v2042
    %2285 = vst.msk [vmem:[#allocation3 + $0x10] sm:$0xff] %vm2282, %v2044
    %2286 = vst.msk [vmem:[#allocation3 + $0x18] sm:$0xff] %vm2282, %v2046
    %2287 = vst.msk [vmem:[#allocation3 + $0x20] sm:$0xff] %vm2282, %v2048
    %2288 = vst.msk [vmem:[#allocation3 + $0x28] sm:$0xff] %vm2282, %v2050
    %2289 = vst.msk [vmem:[#allocation3 + $0x30] sm:$0xff] %vm2282, %v2052
    %2290 = vst.msk [vmem:[#allocation3 + $0x38] sm:$0xff] %vm2282, %v2054
    %2291 = vst.msk [vmem:[#allocation3 + $0x40] sm:$0xff] %vm2282, %v2056
    %2292 = vst.msk [vmem:[#allocation3 + $0x48] sm:$0xff] %vm2282, %v2058
    %2293 = vst.msk [vmem:[#allocation3 + $0x50] sm:$0xff] %vm2282, %v2060
    %2294 = vst.msk [vmem:[#allocation3 + $0x58] sm:$0xff] %vm2282, %v2062
    %2295 = vst.msk [vmem:[#allocation3 + $0x60] sm:$0xff] %vm2282, %v2064
    %2296 = vst.msk [vmem:[#allocation3 + $0x68] sm:$0xff] %vm2282, %v2066
    %2297 = vst.msk [vmem:[#allocation3 + $0x70] sm:$0xff] %vm2282, %v2068
    %2298 = vst.msk [vmem:[#allocation3 + $0x78] sm:$0xff] %vm2282, %v2070
    %2299 = vst.msk [vmem:[#allocation3 + $0x80] sm:$0xff] %vm2282, %v2072
    %2300 = vst.msk [vmem:[#allocation3 + $0x88] sm:$0xff] %vm2282, %v2074
    %2301 = vst.msk [vmem:[#allocation3 + $0x90] sm:$0xff] %vm2282, %v2076
    %2302 = vst.msk [vmem:[#allocation3 + $0x98] sm:$0xff] %vm2282, %v2078
    %2303 = vst.msk [vmem:[#allocation3 + $0xa0] sm:$0xff] %vm2282, %v2080
    %2304 = vst.msk [vmem:[#allocation3 + $0xa8] sm:$0xff] %vm2282, %v2082
    %2305 = vst.msk [vmem:[#allocation3 + $0xb0] sm:$0xff] %vm2282, %v2084
    %2306 = vst.msk [vmem:[#allocation3 + $0xb8] sm:$0xff] %vm2282, %v2086
    %2307 = vst.msk [vmem:[#allocation3 + $0xc0] sm:$0xff] %vm2282, %v2088
    %2308 = vst.msk [vmem:[#allocation3 + $0xc8] sm:$0xff] %vm2282, %v2090
    %2309 = vst.msk [vmem:[#allocation3 + $0xd0] sm:$0xff] %vm2282, %v2092
    %2310 = vst.msk [vmem:[#allocation3 + $0xd8] sm:$0xff] %vm2282, %v2094
    %2311 = vst.msk [vmem:[#allocation3 + $0xe0] sm:$0xff] %vm2282, %v2096
    %2312 = vst.msk [vmem:[#allocation3 + $0xe8] sm:$0xff] %vm2282, %v2098
    %2313 = vst.msk [vmem:[#allocation3 + $0xf0] sm:$0xff] %vm2282, %v2100
    %2314 = vst.msk [vmem:[#allocation3 + $0xf8] sm:$0xff] %vm2282, %v2102
    %2315 = vst.msk [vmem:[#allocation3 + $0x100] sm:$0xff] %vm2282, %v2104
    %2316 = vst.msk [vmem:[#allocation3 + $0x108] sm:$0xff] %vm2282, %v2106
    %2317 = vst.msk [vmem:[#allocation3 + $0x110] sm:$0xff] %vm2282, %v2108
    %2318 = vst.msk [vmem:[#allocation3 + $0x118] sm:$0xff] %vm2282, %v2110
    %2319 = vst.msk [vmem:[#allocation3 + $0x120] sm:$0xff] %vm2282, %v2112
    %2320 = vst.msk [vmem:[#allocation3 + $0x128] sm:$0xff] %vm2282, %v2114
    %2321 = vst.msk [vmem:[#allocation3 + $0x130] sm:$0xff] %vm2282, %v2116
    %2322 = vst.msk [vmem:[#allocation3 + $0x138] sm:$0xff] %vm2282, %v2118
    %2323 = vst.msk [vmem:[#allocation3 + $0x140] sm:$0xff] %vm2282, %v2120
    %2324 = vst.msk [vmem:[#allocation3 + $0x148] sm:$0xff] %vm2282, %v2122
    %2325 = vst.msk [vmem:[#allocation3 + $0x150] sm:$0xff] %vm2282, %v2124
    %2326 = vst.msk [vmem:[#allocation3 + $0x158] sm:$0xff] %vm2282, %v2126
    %2327 = vst.msk [vmem:[#allocation3 + $0x160] sm:$0xff] %vm2282, %v2128
    %2328 = vst.msk [vmem:[#allocation3 + $0x168] sm:$0xff] %vm2282, %v2130
    %2329 = vst.msk [vmem:[#allocation3 + $0x170] sm:$0xff] %vm2282, %v2132
    %2330 = vst.msk [vmem:[#allocation3 + $0x178] sm:$0xff] %vm2282, %v2134
    %2331 = vst.msk [vmem:[#allocation3 + $0x180] sm:$0xff] %vm2282, %v2136
    %2332 = vst.msk [vmem:[#allocation3 + $0x188] sm:$0xff] %vm2282, %v2138
    %2333 = vst.msk [vmem:[#allocation3 + $0x190] sm:$0xff] %vm2282, %v2140
    %2334 = vst.msk [vmem:[#allocation3 + $0x198] sm:$0xff] %vm2282, %v2142
    %2335 = vst.msk [vmem:[#allocation3 + $0x1a0] sm:$0xff] %vm2282, %v2144
    %2336 = vst.msk [vmem:[#allocation3 + $0x1a8] sm:$0xff] %vm2282, %v2146
    %2337 = vst.msk [vmem:[#allocation3 + $0x1b0] sm:$0xff] %vm2282, %v2148
    %2338 = vst.msk [vmem:[#allocation3 + $0x1b8] sm:$0xff] %vm2282, %v2150
    %2339 = vst.msk [vmem:[#allocation3 + $0x1c0] sm:$0xff] %vm2282, %v2152
    %2340 = vst.msk [vmem:[#allocation3 + $0x1c8] sm:$0xff] %vm2282, %v2154
    %2341 = vst.msk [vmem:[#allocation3 + $0x1d0] sm:$0xff] %vm2282, %v2156
    %2342 = vst.msk [vmem:[#allocation3 + $0x1d8] sm:$0xff] %vm2282, %v2158
    %2343 = vst.msk [vmem:[#allocation3 + $0x1e0] sm:$0xff] %vm2282, %v2160
    %2344 = vst.msk [vmem:[#allocation3 + $0x1e8] sm:$0xff] %vm2282, %v2162
    %2345 = vst.msk [vmem:[#allocation3 + $0x1f0] sm:$0xff] %vm2282, %v2164
    %2346 = vst.msk [vmem:[#allocation3 + $0x1f8] sm:$0xff] %vm2282, %v2166
    %2347 = vst.msk [vmem:[#allocation3 + $0x200] sm:$0xff] %vm2282, %v2168
    %2348 = vst.msk [vmem:[#allocation3 + $0x208] sm:$0xff] %vm2282, %v2170
    %2349 = vst.msk [vmem:[#allocation3 + $0x210] sm:$0xff] %vm2282, %v2172
    %2350 = vst.msk [vmem:[#allocation3 + $0x218] sm:$0xff] %vm2282, %v2174
    %2351 = vst.msk [vmem:[#allocation3 + $0x220] sm:$0xff] %vm2282, %v2176
    %2352 = vst.msk [vmem:[#allocation3 + $0x228] sm:$0xff] %vm2282, %v2178
    %2353 = vst.msk [vmem:[#allocation3 + $0x230] sm:$0xff] %vm2282, %v2180
    %2354 = vst.msk [vmem:[#allocation3 + $0x238] sm:$0xff] %vm2282, %v2182
    %2355 = vst.msk [vmem:[#allocation3 + $0x240] sm:$0xff] %vm2282, %v2184
    %2356 = vst.msk [vmem:[#allocation3 + $0x248] sm:$0xff] %vm2282, %v2186
    %2357 = vst.msk [vmem:[#allocation3 + $0x250] sm:$0xff] %vm2282, %v2188
    %2358 = vst.msk [vmem:[#allocation3 + $0x258] sm:$0xff] %vm2282, %v2190
    %2359 = vst.msk [vmem:[#allocation3 + $0x260] sm:$0xff] %vm2282, %v2192
    %2360 = vst.msk [vmem:[#allocation3 + $0x268] sm:$0xff] %vm2282, %v2194
    %2361 = vst.msk [vmem:[#allocation3 + $0x270] sm:$0xff] %vm2282, %v2196
    %2362 = vst.msk [vmem:[#allocation3 + $0x278] sm:$0xff] %vm2282, %v2198
    %2363 = vst.msk [vmem:[#allocation3 + $0x280] sm:$0xff] %vm2282, %v2200
    %v2364 = vld [vmem:[#allocation2 + $0x14] sm:$0xff]
    %v2365 = vld [vmem:[#allocation2 + $0x1c] sm:$0xff]
    %v2366 = vld [vmem:[#allocation2 + $0x24] sm:$0xff]
    %v2367 = vld [vmem:[#allocation2 + $0x2c] sm:$0xff]
    %v2368 = vld [vmem:[#allocation2 + $0x34] sm:$0xff]
    %v2369 = vld [vmem:[#allocation2 + $0x3c] sm:$0xff]
    %v2370 = vld [vmem:[#allocation2 + $0x44] sm:$0xff]
    %v2371 = vld [vmem:[#allocation2 + $0x4c] sm:$0xff]
    %v2372 = vld [vmem:[#allocation2 + $0x54] sm:$0xff]
    %v2373 = vld [vmem:[#allocation2 + $0x5c] sm:$0xff]
    %v2374 = vld [vmem:[#allocation2 + $0x64] sm:$0xff]
    %v2375 = vld [vmem:[#allocation2 + $0x6c] sm:$0xff]
    %v2376 = vld [vmem:[#allocation2 + $0x74] sm:$0xff]
    %v2377 = vld [vmem:[#allocation2 + $0x7c] sm:$0xff]
    %v2378 = vld [vmem:[#allocation2 + $0x84] sm:$0xff]
    %v2379 = vld [vmem:[#allocation2 + $0x8c] sm:$0xff]
    %v2380 = vld [vmem:[#allocation2 + $0x94] sm:$0xff]
    %v2381 = vld [vmem:[#allocation2 + $0x9c] sm:$0xff]
    %v2382 = vld [vmem:[#allocation2 + $0xa4] sm:$0xff]
    %v2383 = vld [vmem:[#allocation2 + $0xac] sm:$0xff]
    %v2384 = vld [vmem:[#allocation2 + $0xb4] sm:$0xff]
    %v2385 = vld [vmem:[#allocation2 + $0xbc] sm:$0xff]
    %v2386 = vld [vmem:[#allocation2 + $0xc4] sm:$0xff]
    %v2387 = vld [vmem:[#allocation2 + $0xcc] sm:$0xff]
    %v2388 = vld [vmem:[#allocation2 + $0xd4] sm:$0xff]
    %v2389 = vld [vmem:[#allocation2 + $0xdc] sm:$0xff]
    %v2390 = vld [vmem:[#allocation2 + $0xe4] sm:$0xff]
    %v2391 = vld [vmem:[#allocation2 + $0xec] sm:$0xff]
    %v2392 = vld [vmem:[#allocation2 + $0xf4] sm:$0xff]
    %v2393 = vld [vmem:[#allocation2 + $0xfc] sm:$0xff]
    %v2394 = vld [vmem:[#allocation2 + $0x104] sm:$0xff]
    %v2395 = vld [vmem:[#allocation2 + $0x10c] sm:$0xff]
    %v2396 = vld [vmem:[#allocation2 + $0x114] sm:$0xff]
    %v2397 = vld [vmem:[#allocation2 + $0x11c] sm:$0xff]
    %v2398 = vld [vmem:[#allocation2 + $0x124] sm:$0xff]
    %v2399 = vld [vmem:[#allocation2 + $0x12c] sm:$0xff]
    %v2400 = vld [vmem:[#allocation2 + $0x134] sm:$0xff]
    %v2401 = vld [vmem:[#allocation2 + $0x13c] sm:$0xff]
    %v2402 = vld [vmem:[#allocation2 + $0x144] sm:$0xff]
    %v2403 = vld [vmem:[#allocation2 + $0x14c] sm:$0xff]
    %v2404 = vld [vmem:[#allocation2 + $0x154] sm:$0xff]
    %v2405 = vld [vmem:[#allocation2 + $0x15c] sm:$0xff]
    %v2406 = vld [vmem:[#allocation2 + $0x164] sm:$0xff]
    %v2407 = vld [vmem:[#allocation2 + $0x16c] sm:$0xff]
    %v2408 = vld [vmem:[#allocation2 + $0x174] sm:$0xff]
    %v2409 = vld [vmem:[#allocation2 + $0x17c] sm:$0xff]
    %v2410 = vld [vmem:[#allocation2 + $0x184] sm:$0xff]
    %v2411 = vld [vmem:[#allocation2 + $0x18c] sm:$0xff]
    %v2412 = vld [vmem:[#allocation2 + $0x194] sm:$0xff]
    %v2413 = vld [vmem:[#allocation2 + $0x19c] sm:$0xff]
    %v2414 = vld [vmem:[#allocation2 + $0x1a4] sm:$0xff]
    %v2415 = vld [vmem:[#allocation2 + $0x1ac] sm:$0xff]
    %v2416 = vld [vmem:[#allocation2 + $0x1b4] sm:$0xff]
    %v2417 = vld [vmem:[#allocation2 + $0x1bc] sm:$0xff]
    %v2418 = vld [vmem:[#allocation2 + $0x1c4] sm:$0xff]
    %v2419 = vld [vmem:[#allocation2 + $0x1cc] sm:$0xff]
    %v2420 = vld [vmem:[#allocation2 + $0x1d4] sm:$0xff]
    %v2421 = vld [vmem:[#allocation2 + $0x1dc] sm:$0xff]
    %v2422 = vld [vmem:[#allocation2 + $0x1e4] sm:$0xff]
    %v2423 = vld [vmem:[#allocation2 + $0x1ec] sm:$0xff]
    %v2424 = vld [vmem:[#allocation2 + $0x1f4] sm:$0xff]
    %v2425 = vld [vmem:[#allocation2 + $0x1fc] sm:$0xff]
    %v2426 = vld [vmem:[#allocation2 + $0x204] sm:$0xff]
    %v2427 = vld [vmem:[#allocation2 + $0x20c] sm:$0xff]
    %v2428 = vld [vmem:[#allocation2 + $0x214] sm:$0xff]
    %v2429 = vld [vmem:[#allocation2 + $0x21c] sm:$0xff]
    %v2430 = vld [vmem:[#allocation2 + $0x224] sm:$0xff]
    %v2431 = vld [vmem:[#allocation2 + $0x22c] sm:$0xff]
    %v2432 = vld [vmem:[#allocation2 + $0x234] sm:$0xff]
    %v2433 = vld [vmem:[#allocation2 + $0x23c] sm:$0xff]
    %v2434 = vld [vmem:[#allocation2 + $0x244] sm:$0xff]
    %v2435 = vld [vmem:[#allocation2 + $0x24c] sm:$0xff]
    %v2436 = vld [vmem:[#allocation2 + $0x254] sm:$0xff]
    %v2437 = vld [vmem:[#allocation2 + $0x25c] sm:$0xff]
    %v2438 = vld [vmem:[#allocation2 + $0x264] sm:$0xff]
    %v2439 = vld [vmem:[#allocation2 + $0x26c] sm:$0xff]
    %v2440 = vld [vmem:[#allocation2 + $0x274] sm:$0xff]
    %v2441 = vld [vmem:[#allocation2 + $0x27c] sm:$0xff]
    %v2442 = vld [vmem:[#allocation2 + $0x284] sm:$0xff]
    %v2443 = vld [vmem:[#allocation2 + $0x28c] sm:$0xff]
    %v2444 = vld [vmem:[#allocation2 + $0x294] sm:$0xff]
    %2526 = vrot.lane.b32.xlu0 %v2364, 20
    %v2527 = vpop.permute.xlu0 %2526
    %2528 = vrot.lane.b32.xlu0 %v2365, 20
    %v2529 = vpop.permute.xlu0 %2528
    %2530 = vrot.lane.b32.xlu0 %v2366, 20
    %v2531 = vpop.permute.xlu0 %2530
    %2532 = vrot.lane.b32.xlu0 %v2367, 20
    %v2533 = vpop.permute.xlu0 %2532
    %2534 = vrot.lane.b32.xlu0 %v2368, 20
    %v2535 = vpop.permute.xlu0 %2534
    %2536 = vrot.lane.b32.xlu0 %v2369, 20
    %v2537 = vpop.permute.xlu0 %2536
    %2538 = vrot.lane.b32.xlu0 %v2370, 20
    %v2539 = vpop.permute.xlu0 %2538
    %2540 = vrot.lane.b32.xlu0 %v2371, 20
    %v2541 = vpop.permute.xlu0 %2540
    %2542 = vrot.lane.b32.xlu0 %v2372, 20
    %v2543 = vpop.permute.xlu0 %2542
    %2544 = vrot.lane.b32.xlu0 %v2373, 20
    %v2545 = vpop.permute.xlu0 %2544
    %2546 = vrot.lane.b32.xlu0 %v2374, 20
    %v2547 = vpop.permute.xlu0 %2546
    %2548 = vrot.lane.b32.xlu0 %v2375, 20
    %v2549 = vpop.permute.xlu0 %2548
    %2550 = vrot.lane.b32.xlu0 %v2376, 20
    %v2551 = vpop.permute.xlu0 %2550
    %2552 = vrot.lane.b32.xlu0 %v2377, 20
    %v2553 = vpop.permute.xlu0 %2552
    %2554 = vrot.lane.b32.xlu0 %v2378, 20
    %v2555 = vpop.permute.xlu0 %2554
    %2556 = vrot.lane.b32.xlu0 %v2379, 20
    %v2557 = vpop.permute.xlu0 %2556
    %2558 = vrot.lane.b32.xlu0 %v2380, 20
    %v2559 = vpop.permute.xlu0 %2558
    %2560 = vrot.lane.b32.xlu0 %v2381, 20
    %v2561 = vpop.permute.xlu0 %2560
    %2562 = vrot.lane.b32.xlu0 %v2382, 20
    %v2563 = vpop.permute.xlu0 %2562
    %2564 = vrot.lane.b32.xlu0 %v2383, 20
    %v2565 = vpop.permute.xlu0 %2564
    %2566 = vrot.lane.b32.xlu0 %v2384, 20
    %v2567 = vpop.permute.xlu0 %2566
    %2568 = vrot.lane.b32.xlu0 %v2385, 20
    %v2569 = vpop.permute.xlu0 %2568
    %2570 = vrot.lane.b32.xlu0 %v2386, 20
    %v2571 = vpop.permute.xlu0 %2570
    %2572 = vrot.lane.b32.xlu0 %v2387, 20
    %v2573 = vpop.permute.xlu0 %2572
    %2574 = vrot.lane.b32.xlu0 %v2388, 20
    %v2575 = vpop.permute.xlu0 %2574
    %2576 = vrot.lane.b32.xlu0 %v2389, 20
    %v2577 = vpop.permute.xlu0 %2576
    %2578 = vrot.lane.b32.xlu0 %v2390, 20
    %v2579 = vpop.permute.xlu0 %2578
    %2580 = vrot.lane.b32.xlu0 %v2391, 20
    %v2581 = vpop.permute.xlu0 %2580
    %2582 = vrot.lane.b32.xlu0 %v2392, 20
    %v2583 = vpop.permute.xlu0 %2582
    %2584 = vrot.lane.b32.xlu0 %v2393, 20
    %v2585 = vpop.permute.xlu0 %2584
    %2586 = vrot.lane.b32.xlu0 %v2394, 20
    %v2587 = vpop.permute.xlu0 %2586
    %2588 = vrot.lane.b32.xlu0 %v2395, 20
    %v2589 = vpop.permute.xlu0 %2588
    %2590 = vrot.lane.b32.xlu0 %v2396, 20
    %v2591 = vpop.permute.xlu0 %2590
    %2592 = vrot.lane.b32.xlu0 %v2397, 20
    %v2593 = vpop.permute.xlu0 %2592
    %2594 = vrot.lane.b32.xlu0 %v2398, 20
    %v2595 = vpop.permute.xlu0 %2594
    %2596 = vrot.lane.b32.xlu0 %v2399, 20
    %v2597 = vpop.permute.xlu0 %2596
    %2598 = vrot.lane.b32.xlu0 %v2400, 20
    %v2599 = vpop.permute.xlu0 %2598
    %2600 = vrot.lane.b32.xlu0 %v2401, 20
    %v2601 = vpop.permute.xlu0 %2600
    %2602 = vrot.lane.b32.xlu0 %v2402, 20
    %v2603 = vpop.permute.xlu0 %2602
    %2604 = vrot.lane.b32.xlu0 %v2403, 20
    %v2605 = vpop.permute.xlu0 %2604
    %2606 = vrot.lane.b32.xlu0 %v2404, 20
    %v2607 = vpop.permute.xlu0 %2606
    %2608 = vrot.lane.b32.xlu0 %v2405, 20
    %v2609 = vpop.permute.xlu0 %2608
    %2610 = vrot.lane.b32.xlu0 %v2406, 20
    %v2611 = vpop.permute.xlu0 %2610
    %2612 = vrot.lane.b32.xlu0 %v2407, 20
    %v2613 = vpop.permute.xlu0 %2612
    %2614 = vrot.lane.b32.xlu0 %v2408, 20
    %v2615 = vpop.permute.xlu0 %2614
    %2616 = vrot.lane.b32.xlu0 %v2409, 20
    %v2617 = vpop.permute.xlu0 %2616
    %2618 = vrot.lane.b32.xlu0 %v2410, 20
    %v2619 = vpop.permute.xlu0 %2618
    %2620 = vrot.lane.b32.xlu0 %v2411, 20
    %v2621 = vpop.permute.xlu0 %2620
    %2622 = vrot.lane.b32.xlu0 %v2412, 20
    %v2623 = vpop.permute.xlu0 %2622
    %2624 = vrot.lane.b32.xlu0 %v2413, 20
    %v2625 = vpop.permute.xlu0 %2624
    %2626 = vrot.lane.b32.xlu0 %v2414, 20
    %v2627 = vpop.permute.xlu0 %2626
    %2628 = vrot.lane.b32.xlu0 %v2415, 20
    %v2629 = vpop.permute.xlu0 %2628
    %2630 = vrot.lane.b32.xlu0 %v2416, 20
    %v2631 = vpop.permute.xlu0 %2630
    %2632 = vrot.lane.b32.xlu0 %v2417, 20
    %v2633 = vpop.permute.xlu0 %2632
    %2634 = vrot.lane.b32.xlu0 %v2418, 20
    %v2635 = vpop.permute.xlu0 %2634
    %2636 = vrot.lane.b32.xlu0 %v2419, 20
    %v2637 = vpop.permute.xlu0 %2636
    %2638 = vrot.lane.b32.xlu0 %v2420, 20
    %v2639 = vpop.permute.xlu0 %2638
    %2640 = vrot.lane.b32.xlu0 %v2421, 20
    %v2641 = vpop.permute.xlu0 %2640
    %2642 = vrot.lane.b32.xlu0 %v2422, 20
    %v2643 = vpop.permute.xlu0 %2642
    %2644 = vrot.lane.b32.xlu0 %v2423, 20
    %v2645 = vpop.permute.xlu0 %2644
    %2646 = vrot.lane.b32.xlu0 %v2424, 20
    %v2647 = vpop.permute.xlu0 %2646
    %2648 = vrot.lane.b32.xlu0 %v2425, 20
    %v2649 = vpop.permute.xlu0 %2648
    %2650 = vrot.lane.b32.xlu0 %v2426, 20
    %v2651 = vpop.permute.xlu0 %2650
    %2652 = vrot.lane.b32.xlu0 %v2427, 20
    %v2653 = vpop.permute.xlu0 %2652
    %2654 = vrot.lane.b32.xlu0 %v2428, 20
    %v2655 = vpop.permute.xlu0 %2654
    %2656 = vrot.lane.b32.xlu0 %v2429, 20
    %v2657 = vpop.permute.xlu0 %2656
    %2658 = vrot.lane.b32.xlu0 %v2430, 20
    %v2659 = vpop.permute.xlu0 %2658
    %2660 = vrot.lane.b32.xlu0 %v2431, 20
    %v2661 = vpop.permute.xlu0 %2660
    %2662 = vrot.lane.b32.xlu0 %v2432, 20
    %v2663 = vpop.permute.xlu0 %2662
    %2664 = vrot.lane.b32.xlu0 %v2433, 20
    %v2665 = vpop.permute.xlu0 %2664
    %2666 = vrot.lane.b32.xlu0 %v2434, 20
    %v2667 = vpop.permute.xlu0 %2666
    %2668 = vrot.lane.b32.xlu0 %v2435, 20
    %v2669 = vpop.permute.xlu0 %2668
    %2670 = vrot.lane.b32.xlu0 %v2436, 20
    %v2671 = vpop.permute.xlu0 %2670
    %2672 = vrot.lane.b32.xlu0 %v2437, 20
    %v2673 = vpop.permute.xlu0 %2672
    %2674 = vrot.lane.b32.xlu0 %v2438, 20
    %v2675 = vpop.permute.xlu0 %2674
    %2676 = vrot.lane.b32.xlu0 %v2439, 20
    %v2677 = vpop.permute.xlu0 %2676
    %2678 = vrot.lane.b32.xlu0 %v2440, 20
    %v2679 = vpop.permute.xlu0 %2678
    %2680 = vrot.lane.b32.xlu0 %v2441, 20
    %v2681 = vpop.permute.xlu0 %2680
    %2682 = vrot.lane.b32.xlu0 %v2442, 20
    %v2683 = vpop.permute.xlu0 %2682
    %2684 = vrot.lane.b32.xlu0 %v2443, 20
    %v2685 = vpop.permute.xlu0 %2684
    %2686 = vrot.lane.b32.xlu0 %v2444, 20
    %v2687 = vpop.permute.xlu0 %2686
    %vm2769 = vcmask 195744
    %2770 = vst.msk [vmem:[#allocation3] sm:$0xff] %vm2769, %v2527
    %2771 = vst.msk [vmem:[#allocation3 + $0x8] sm:$0xff] %vm2769, %v2529
    %2772 = vst.msk [vmem:[#allocation3 + $0x10] sm:$0xff] %vm2769, %v2531
    %2773 = vst.msk [vmem:[#allocation3 + $0x18] sm:$0xff] %vm2769, %v2533
    %2774 = vst.msk [vmem:[#allocation3 + $0x20] sm:$0xff] %vm2769, %v2535
    %2775 = vst.msk [vmem:[#allocation3 + $0x28] sm:$0xff] %vm2769, %v2537
    %2776 = vst.msk [vmem:[#allocation3 + $0x30] sm:$0xff] %vm2769, %v2539
    %2777 = vst.msk [vmem:[#allocation3 + $0x38] sm:$0xff] %vm2769, %v2541
    %2778 = vst.msk [vmem:[#allocation3 + $0x40] sm:$0xff] %vm2769, %v2543
    %2779 = vst.msk [vmem:[#allocation3 + $0x48] sm:$0xff] %vm2769, %v2545
    %2780 = vst.msk [vmem:[#allocation3 + $0x50] sm:$0xff] %vm2769, %v2547
    %2781 = vst.msk [vmem:[#allocation3 + $0x58] sm:$0xff] %vm2769, %v2549
    %2782 = vst.msk [vmem:[#allocation3 + $0x60] sm:$0xff] %vm2769, %v2551
    %2783 = vst.msk [vmem:[#allocation3 + $0x68] sm:$0xff] %vm2769, %v2553
    %2784 = vst.msk [vmem:[#allocation3 + $0x70] sm:$0xff] %vm2769, %v2555
    %2785 = vst.msk [vmem:[#allocation3 + $0x78] sm:$0xff] %vm2769, %v2557
    %2786 = vst.msk [vmem:[#allocation3 + $0x80] sm:$0xff] %vm2769, %v2559
    %2787 = vst.msk [vmem:[#allocation3 + $0x88] sm:$0xff] %vm2769, %v2561
    %2788 = vst.msk [vmem:[#allocation3 + $0x90] sm:$0xff] %vm2769, %v2563
    %2789 = vst.msk [vmem:[#allocation3 + $0x98] sm:$0xff] %vm2769, %v2565
    %2790 = vst.msk [vmem:[#allocation3 + $0xa0] sm:$0xff] %vm2769, %v2567
    %2791 = vst.msk [vmem:[#allocation3 + $0xa8] sm:$0xff] %vm2769, %v2569
    %2792 = vst.msk [vmem:[#allocation3 + $0xb0] sm:$0xff] %vm2769, %v2571
    %2793 = vst.msk [vmem:[#allocation3 + $0xb8] sm:$0xff] %vm2769, %v2573
    %2794 = vst.msk [vmem:[#allocation3 + $0xc0] sm:$0xff] %vm2769, %v2575
    %2795 = vst.msk [vmem:[#allocation3 + $0xc8] sm:$0xff] %vm2769, %v2577
    %2796 = vst.msk [vmem:[#allocation3 + $0xd0] sm:$0xff] %vm2769, %v2579
    %2797 = vst.msk [vmem:[#allocation3 + $0xd8] sm:$0xff] %vm2769, %v2581
    %2798 = vst.msk [vmem:[#allocation3 + $0xe0] sm:$0xff] %vm2769, %v2583
    %2799 = vst.msk [vmem:[#allocation3 + $0xe8] sm:$0xff] %vm2769, %v2585
    %2800 = vst.msk [vmem:[#allocation3 + $0xf0] sm:$0xff] %vm2769, %v2587
    %2801 = vst.msk [vmem:[#allocation3 + $0xf8] sm:$0xff] %vm2769, %v2589
    %2802 = vst.msk [vmem:[#allocation3 + $0x100] sm:$0xff] %vm2769, %v2591
    %2803 = vst.msk [vmem:[#allocation3 + $0x108] sm:$0xff] %vm2769, %v2593
    %2804 = vst.msk [vmem:[#allocation3 + $0x110] sm:$0xff] %vm2769, %v2595
    %2805 = vst.msk [vmem:[#allocation3 + $0x118] sm:$0xff] %vm2769, %v2597
    %2806 = vst.msk [vmem:[#allocation3 + $0x120] sm:$0xff] %vm2769, %v2599
    %2807 = vst.msk [vmem:[#allocation3 + $0x128] sm:$0xff] %vm2769, %v2601
    %2808 = vst.msk [vmem:[#allocation3 + $0x130] sm:$0xff] %vm2769, %v2603
    %2809 = vst.msk [vmem:[#allocation3 + $0x138] sm:$0xff] %vm2769, %v2605
    %2810 = vst.msk [vmem:[#allocation3 + $0x140] sm:$0xff] %vm2769, %v2607
    %2811 = vst.msk [vmem:[#allocation3 + $0x148] sm:$0xff] %vm2769, %v2609
    %2812 = vst.msk [vmem:[#allocation3 + $0x150] sm:$0xff] %vm2769, %v2611
    %2813 = vst.msk [vmem:[#allocation3 + $0x158] sm:$0xff] %vm2769, %v2613
    %2814 = vst.msk [vmem:[#allocation3 + $0x160] sm:$0xff] %vm2769, %v2615
    %2815 = vst.msk [vmem:[#allocation3 + $0x168] sm:$0xff] %vm2769, %v2617
    %2816 = vst.msk [vmem:[#allocation3 + $0x170] sm:$0xff] %vm2769, %v2619
    %2817 = vst.msk [vmem:[#allocation3 + $0x178] sm:$0xff] %vm2769, %v2621
    %2818 = vst.msk [vmem:[#allocation3 + $0x180] sm:$0xff] %vm2769, %v2623
    %2819 = vst.msk [vmem:[#allocation3 + $0x188] sm:$0xff] %vm2769, %v2625
    %2820 = vst.msk [vmem:[#allocation3 + $0x190] sm:$0xff] %vm2769, %v2627
    %2821 = vst.msk [vmem:[#allocation3 + $0x198] sm:$0xff] %vm2769, %v2629
    %2822 = vst.msk [vmem:[#allocation3 + $0x1a0] sm:$0xff] %vm2769, %v2631
    %2823 = vst.msk [vmem:[#allocation3 + $0x1a8] sm:$0xff] %vm2769, %v2633
    %2824 = vst.msk [vmem:[#allocation3 + $0x1b0] sm:$0xff] %vm2769, %v2635
    %2825 = vst.msk [vmem:[#allocation3 + $0x1b8] sm:$0xff] %vm2769, %v2637
    %2826 = vst.msk [vmem:[#allocation3 + $0x1c0] sm:$0xff] %vm2769, %v2639
    %2827 = vst.msk [vmem:[#allocation3 + $0x1c8] sm:$0xff] %vm2769, %v2641
    %2828 = vst.msk [vmem:[#allocation3 + $0x1d0] sm:$0xff] %vm2769, %v2643
    %2829 = vst.msk [vmem:[#allocation3 + $0x1d8] sm:$0xff] %vm2769, %v2645
    %2830 = vst.msk [vmem:[#allocation3 + $0x1e0] sm:$0xff] %vm2769, %v2647
    %2831 = vst.msk [vmem:[#allocation3 + $0x1e8] sm:$0xff] %vm2769, %v2649
    %2832 = vst.msk [vmem:[#allocation3 + $0x1f0] sm:$0xff] %vm2769, %v2651
    %2833 = vst.msk [vmem:[#allocation3 + $0x1f8] sm:$0xff] %vm2769, %v2653
    %2834 = vst.msk [vmem:[#allocation3 + $0x200] sm:$0xff] %vm2769, %v2655
    %2835 = vst.msk [vmem:[#allocation3 + $0x208] sm:$0xff] %vm2769, %v2657
    %2836 = vst.msk [vmem:[#allocation3 + $0x210] sm:$0xff] %vm2769, %v2659
    %2837 = vst.msk [vmem:[#allocation3 + $0x218] sm:$0xff] %vm2769, %v2661
    %2838 = vst.msk [vmem:[#allocation3 + $0x220] sm:$0xff] %vm2769, %v2663
    %2839 = vst.msk [vmem:[#allocation3 + $0x228] sm:$0xff] %vm2769, %v2665
    %2840 = vst.msk [vmem:[#allocation3 + $0x230] sm:$0xff] %vm2769, %v2667
    %2841 = vst.msk [vmem:[#allocation3 + $0x238] sm:$0xff] %vm2769, %v2669
    %2842 = vst.msk [vmem:[#allocation3 + $0x240] sm:$0xff] %vm2769, %v2671
    %2843 = vst.msk [vmem:[#allocation3 + $0x248] sm:$0xff] %vm2769, %v2673
    %2844 = vst.msk [vmem:[#allocation3 + $0x250] sm:$0xff] %vm2769, %v2675
    %2845 = vst.msk [vmem:[#allocation3 + $0x258] sm:$0xff] %vm2769, %v2677
    %2846 = vst.msk [vmem:[#allocation3 + $0x260] sm:$0xff] %vm2769, %v2679
    %2847 = vst.msk [vmem:[#allocation3 + $0x268] sm:$0xff] %vm2769, %v2681
    %2848 = vst.msk [vmem:[#allocation3 + $0x270] sm:$0xff] %vm2769, %v2683
    %2849 = vst.msk [vmem:[#allocation3 + $0x278] sm:$0xff] %vm2769, %v2685
    %2850 = vst.msk [vmem:[#allocation3 + $0x280] sm:$0xff] %vm2769, %v2687
    %v2851 = vld [vmem:[#allocation2 + $0x24] sm:$0xff]
    %v2852 = vld [vmem:[#allocation2 + $0x2c] sm:$0xff]
    %v2853 = vld [vmem:[#allocation2 + $0x34] sm:$0xff]
    %v2854 = vld [vmem:[#allocation2 + $0x3c] sm:$0xff]
    %v2855 = vld [vmem:[#allocation2 + $0x44] sm:$0xff]
    %v2856 = vld [vmem:[#allocation2 + $0x4c] sm:$0xff]
    %v2857 = vld [vmem:[#allocation2 + $0x54] sm:$0xff]
    %v2858 = vld [vmem:[#allocation2 + $0x5c] sm:$0xff]
    %v2859 = vld [vmem:[#allocation2 + $0x64] sm:$0xff]
    %v2860 = vld [vmem:[#allocation2 + $0x6c] sm:$0xff]
    %v2861 = vld [vmem:[#allocation2 + $0x74] sm:$0xff]
    %v2862 = vld [vmem:[#allocation2 + $0x7c] sm:$0xff]
    %v2863 = vld [vmem:[#allocation2 + $0x84] sm:$0xff]
    %v2864 = vld [vmem:[#allocation2 + $0x8c] sm:$0xff]
    %v2865 = vld [vmem:[#allocation2 + $0x94] sm:$0xff]
    %v2866 = vld [vmem:[#allocation2 + $0x9c] sm:$0xff]
    %v2867 = vld [vmem:[#allocation2 + $0xa4] sm:$0xff]
    %v2868 = vld [vmem:[#allocation2 + $0xac] sm:$0xff]
    %v2869 = vld [vmem:[#allocation2 + $0xb4] sm:$0xff]
    %v2870 = vld [vmem:[#allocation2 + $0xbc] sm:$0xff]
    %v2871 = vld [vmem:[#allocation2 + $0xc4] sm:$0xff]
    %v2872 = vld [vmem:[#allocation2 + $0xcc] sm:$0xff]
    %v2873 = vld [vmem:[#allocation2 + $0xd4] sm:$0xff]
    %v2874 = vld [vmem:[#allocation2 + $0xdc] sm:$0xff]
    %v2875 = vld [vmem:[#allocation2 + $0xe4] sm:$0xff]
    %v2876 = vld [vmem:[#allocation2 + $0xec] sm:$0xff]
    %v2877 = vld [vmem:[#allocation2 + $0xf4] sm:$0xff]
    %v2878 = vld [vmem:[#allocation2 + $0xfc] sm:$0xff]
    %v2879 = vld [vmem:[#allocation2 + $0x104] sm:$0xff]
    %v2880 = vld [vmem:[#allocation2 + $0x10c] sm:$0xff]
    %v2881 = vld [vmem:[#allocation2 + $0x114] sm:$0xff]
    %v2882 = vld [vmem:[#allocation2 + $0x11c] sm:$0xff]
    %v2883 = vld [vmem:[#allocation2 + $0x124] sm:$0xff]
    %v2884 = vld [vmem:[#allocation2 + $0x12c] sm:$0xff]
    %v2885 = vld [vmem:[#allocation2 + $0x134] sm:$0xff]
    %v2886 = vld [vmem:[#allocation2 + $0x13c] sm:$0xff]
    %v2887 = vld [vmem:[#allocation2 + $0x144] sm:$0xff]
    %v2888 = vld [vmem:[#allocation2 + $0x14c] sm:$0xff]
    %v2889 = vld [vmem:[#allocation2 + $0x154] sm:$0xff]
    %v2890 = vld [vmem:[#allocation2 + $0x15c] sm:$0xff]
    %v2891 = vld [vmem:[#allocation2 + $0x164] sm:$0xff]
    %v2892 = vld [vmem:[#allocation2 + $0x16c] sm:$0xff]
    %v2893 = vld [vmem:[#allocation2 + $0x174] sm:$0xff]
    %v2894 = vld [vmem:[#allocation2 + $0x17c] sm:$0xff]
    %v2895 = vld [vmem:[#allocation2 + $0x184] sm:$0xff]
    %v2896 = vld [vmem:[#allocation2 + $0x18c] sm:$0xff]
    %v2897 = vld [vmem:[#allocation2 + $0x194] sm:$0xff]
    %v2898 = vld [vmem:[#allocation2 + $0x19c] sm:$0xff]
    %v2899 = vld [vmem:[#allocation2 + $0x1a4] sm:$0xff]
    %v2900 = vld [vmem:[#allocation2 + $0x1ac] sm:$0xff]
    %v2901 = vld [vmem:[#allocation2 + $0x1b4] sm:$0xff]
    %v2902 = vld [vmem:[#allocation2 + $0x1bc] sm:$0xff]
    %v2903 = vld [vmem:[#allocation2 + $0x1c4] sm:$0xff]
    %v2904 = vld [vmem:[#allocation2 + $0x1cc] sm:$0xff]
    %v2905 = vld [vmem:[#allocation2 + $0x1d4] sm:$0xff]
    %v2906 = vld [vmem:[#allocation2 + $0x1dc] sm:$0xff]
    %v2907 = vld [vmem:[#allocation2 + $0x1e4] sm:$0xff]
    %v2908 = vld [vmem:[#allocation2 + $0x1ec] sm:$0xff]
    %v2909 = vld [vmem:[#allocation2 + $0x1f4] sm:$0xff]
    %v2910 = vld [vmem:[#allocation2 + $0x1fc] sm:$0xff]
    %v2911 = vld [vmem:[#allocation2 + $0x204] sm:$0xff]
    %v2912 = vld [vmem:[#allocation2 + $0x20c] sm:$0xff]
    %v2913 = vld [vmem:[#allocation2 + $0x214] sm:$0xff]
    %v2914 = vld [vmem:[#allocation2 + $0x21c] sm:$0xff]
    %v2915 = vld [vmem:[#allocation2 + $0x224] sm:$0xff]
    %v2916 = vld [vmem:[#allocation2 + $0x22c] sm:$0xff]
    %v2917 = vld [vmem:[#allocation2 + $0x234] sm:$0xff]
    %v2918 = vld [vmem:[#allocation2 + $0x23c] sm:$0xff]
    %v2919 = vld [vmem:[#allocation2 + $0x244] sm:$0xff]
    %v2920 = vld [vmem:[#allocation2 + $0x24c] sm:$0xff]
    %v2921 = vld [vmem:[#allocation2 + $0x254] sm:$0xff]
    %v2922 = vld [vmem:[#allocation2 + $0x25c] sm:$0xff]
    %v2923 = vld [vmem:[#allocation2 + $0x264] sm:$0xff]
    %v2924 = vld [vmem:[#allocation2 + $0x26c] sm:$0xff]
    %v2925 = vld [vmem:[#allocation2 + $0x274] sm:$0xff]
    %v2926 = vld [vmem:[#allocation2 + $0x27c] sm:$0xff]
    %v2927 = vld [vmem:[#allocation2 + $0x284] sm:$0xff]
    %v2928 = vld [vmem:[#allocation2 + $0x28c] sm:$0xff]
    %v2929 = vld [vmem:[#allocation2 + $0x294] sm:$0xff]
    %v2930 = vld [vmem:[#allocation2 + $0x29c] sm:$0xff]
    %v2931 = vld [vmem:[#allocation2 + $0x2a4] sm:$0xff]
    %3013 = vrot.lane.b32.xlu0 %v2851, 24
    %v3014 = vpop.permute.xlu0 %3013
    %3015 = vrot.lane.b32.xlu0 %v2852, 24
    %v3016 = vpop.permute.xlu0 %3015
    %3017 = vrot.lane.b32.xlu0 %v2853, 24
    %v3018 = vpop.permute.xlu0 %3017
    %3019 = vrot.lane.b32.xlu0 %v2854, 24
    %v3020 = vpop.permute.xlu0 %3019
    %3021 = vrot.lane.b32.xlu0 %v2855, 24
    %v3022 = vpop.permute.xlu0 %3021
    %3023 = vrot.lane.b32.xlu0 %v2856, 24
    %v3024 = vpop.permute.xlu0 %3023
    %3025 = vrot.lane.b32.xlu0 %v2857, 24
    %v3026 = vpop.permute.xlu0 %3025
    %3027 = vrot.lane.b32.xlu0 %v2858, 24
    %v3028 = vpop.permute.xlu0 %3027
    %3029 = vrot.lane.b32.xlu0 %v2859, 24
    %v3030 = vpop.permute.xlu0 %3029
    %3031 = vrot.lane.b32.xlu0 %v2860, 24
    %v3032 = vpop.permute.xlu0 %3031
    %3033 = vrot.lane.b32.xlu0 %v2861, 24
    %v3034 = vpop.permute.xlu0 %3033
    %3035 = vrot.lane.b32.xlu0 %v2862, 24
    %v3036 = vpop.permute.xlu0 %3035
    %3037 = vrot.lane.b32.xlu0 %v2863, 24
    %v3038 = vpop.permute.xlu0 %3037
    %3039 = vrot.lane.b32.xlu0 %v2864, 24
    %v3040 = vpop.permute.xlu0 %3039
    %3041 = vrot.lane.b32.xlu0 %v2865, 24
    %v3042 = vpop.permute.xlu0 %3041
    %3043 = vrot.lane.b32.xlu0 %v2866, 24
    %v3044 = vpop.permute.xlu0 %3043
    %3045 = vrot.lane.b32.xlu0 %v2867, 24
    %v3046 = vpop.permute.xlu0 %3045
    %3047 = vrot.lane.b32.xlu0 %v2868, 24
    %v3048 = vpop.permute.xlu0 %3047
    %3049 = vrot.lane.b32.xlu0 %v2869, 24
    %v3050 = vpop.permute.xlu0 %3049
    %3051 = vrot.lane.b32.xlu0 %v2870, 24
    %v3052 = vpop.permute.xlu0 %3051
    %3053 = vrot.lane.b32.xlu0 %v2871, 24
    %v3054 = vpop.permute.xlu0 %3053
    %3055 = vrot.lane.b32.xlu0 %v2872, 24
    %v3056 = vpop.permute.xlu0 %3055
    %3057 = vrot.lane.b32.xlu0 %v2873, 24
    %v3058 = vpop.permute.xlu0 %3057
    %3059 = vrot.lane.b32.xlu0 %v2874, 24
    %v3060 = vpop.permute.xlu0 %3059
    %3061 = vrot.lane.b32.xlu0 %v2875, 24
    %v3062 = vpop.permute.xlu0 %3061
    %3063 = vrot.lane.b32.xlu0 %v2876, 24
    %v3064 = vpop.permute.xlu0 %3063
    %3065 = vrot.lane.b32.xlu0 %v2877, 24
    %v3066 = vpop.permute.xlu0 %3065
    %3067 = vrot.lane.b32.xlu0 %v2878, 24
    %v3068 = vpop.permute.xlu0 %3067
    %3069 = vrot.lane.b32.xlu0 %v2879, 24
    %v3070 = vpop.permute.xlu0 %3069
    %3071 = vrot.lane.b32.xlu0 %v2880, 24
    %v3072 = vpop.permute.xlu0 %3071
    %3073 = vrot.lane.b32.xlu0 %v2881, 24
    %v3074 = vpop.permute.xlu0 %3073
    %3075 = vrot.lane.b32.xlu0 %v2882, 24
    %v3076 = vpop.permute.xlu0 %3075
    %3077 = vrot.lane.b32.xlu0 %v2883, 24
    %v3078 = vpop.permute.xlu0 %3077
    %3079 = vrot.lane.b32.xlu0 %v2884, 24
    %v3080 = vpop.permute.xlu0 %3079
    %3081 = vrot.lane.b32.xlu0 %v2885, 24
    %v3082 = vpop.permute.xlu0 %3081
    %3083 = vrot.lane.b32.xlu0 %v2886, 24
    %v3084 = vpop.permute.xlu0 %3083
    %3085 = vrot.lane.b32.xlu0 %v2887, 24
    %v3086 = vpop.permute.xlu0 %3085
    %3087 = vrot.lane.b32.xlu0 %v2888, 24
    %v3088 = vpop.permute.xlu0 %3087
    %3089 = vrot.lane.b32.xlu0 %v2889, 24
    %v3090 = vpop.permute.xlu0 %3089
    %3091 = vrot.lane.b32.xlu0 %v2890, 24
    %v3092 = vpop.permute.xlu0 %3091
    %3093 = vrot.lane.b32.xlu0 %v2891, 24
    %v3094 = vpop.permute.xlu0 %3093
    %3095 = vrot.lane.b32.xlu0 %v2892, 24
    %v3096 = vpop.permute.xlu0 %3095
    %3097 = vrot.lane.b32.xlu0 %v2893, 24
    %v3098 = vpop.permute.xlu0 %3097
    %3099 = vrot.lane.b32.xlu0 %v2894, 24
    %v3100 = vpop.permute.xlu0 %3099
    %3101 = vrot.lane.b32.xlu0 %v2895, 24
    %v3102 = vpop.permute.xlu0 %3101
    %3103 = vrot.lane.b32.xlu0 %v2896, 24
    %v3104 = vpop.permute.xlu0 %3103
    %3105 = vrot.lane.b32.xlu0 %v2897, 24
    %v3106 = vpop.permute.xlu0 %3105
    %3107 = vrot.lane.b32.xlu0 %v2898, 24
    %v3108 = vpop.permute.xlu0 %3107
    %3109 = vrot.lane.b32.xlu0 %v2899, 24
    %v3110 = vpop.permute.xlu0 %3109
    %3111 = vrot.lane.b32.xlu0 %v2900, 24
    %v3112 = vpop.permute.xlu0 %3111
    %3113 = vrot.lane.b32.xlu0 %v2901, 24
    %v3114 = vpop.permute.xlu0 %3113
    %3115 = vrot.lane.b32.xlu0 %v2902, 24
    %v3116 = vpop.permute.xlu0 %3115
    %3117 = vrot.lane.b32.xlu0 %v2903, 24
    %v3118 = vpop.permute.xlu0 %3117
    %3119 = vrot.lane.b32.xlu0 %v2904, 24
    %v3120 = vpop.permute.xlu0 %3119
    %3121 = vrot.lane.b32.xlu0 %v2905, 24
    %v3122 = vpop.permute.xlu0 %3121
    %3123 = vrot.lane.b32.xlu0 %v2906, 24
    %v3124 = vpop.permute.xlu0 %3123
    %3125 = vrot.lane.b32.xlu0 %v2907, 24
    %v3126 = vpop.permute.xlu0 %3125
    %3127 = vrot.lane.b32.xlu0 %v2908, 24
    %v3128 = vpop.permute.xlu0 %3127
    %3129 = vrot.lane.b32.xlu0 %v2909, 24
    %v3130 = vpop.permute.xlu0 %3129
    %3131 = vrot.lane.b32.xlu0 %v2910, 24
    %v3132 = vpop.permute.xlu0 %3131
    %3133 = vrot.lane.b32.xlu0 %v2911, 24
    %v3134 = vpop.permute.xlu0 %3133
    %3135 = vrot.lane.b32.xlu0 %v2912, 24
    %v3136 = vpop.permute.xlu0 %3135
    %3137 = vrot.lane.b32.xlu0 %v2913, 24
    %v3138 = vpop.permute.xlu0 %3137
    %3139 = vrot.lane.b32.xlu0 %v2914, 24
    %v3140 = vpop.permute.xlu0 %3139
    %3141 = vrot.lane.b32.xlu0 %v2915, 24
    %v3142 = vpop.permute.xlu0 %3141
    %3143 = vrot.lane.b32.xlu0 %v2916, 24
    %v3144 = vpop.permute.xlu0 %3143
    %3145 = vrot.lane.b32.xlu0 %v2917, 24
    %v3146 = vpop.permute.xlu0 %3145
    %3147 = vrot.lane.b32.xlu0 %v2918, 24
    %v3148 = vpop.permute.xlu0 %3147
    %3149 = vrot.lane.b32.xlu0 %v2919, 24
    %v3150 = vpop.permute.xlu0 %3149
    %3151 = vrot.lane.b32.xlu0 %v2920, 24
    %v3152 = vpop.permute.xlu0 %3151
    %3153 = vrot.lane.b32.xlu0 %v2921, 24
    %v3154 = vpop.permute.xlu0 %3153
    %3155 = vrot.lane.b32.xlu0 %v2922, 24
    %v3156 = vpop.permute.xlu0 %3155
    %3157 = vrot.lane.b32.xlu0 %v2923, 24
    %v3158 = vpop.permute.xlu0 %3157
    %3159 = vrot.lane.b32.xlu0 %v2924, 24
    %v3160 = vpop.permute.xlu0 %3159
    %3161 = vrot.lane.b32.xlu0 %v2925, 24
    %v3162 = vpop.permute.xlu0 %3161
    %3163 = vrot.lane.b32.xlu0 %v2926, 24
    %v3164 = vpop.permute.xlu0 %3163
    %3165 = vrot.lane.b32.xlu0 %v2927, 24
    %v3166 = vpop.permute.xlu0 %3165
    %3167 = vrot.lane.b32.xlu0 %v2928, 24
    %v3168 = vpop.permute.xlu0 %3167
    %3169 = vrot.lane.b32.xlu0 %v2929, 24
    %v3170 = vpop.permute.xlu0 %3169
    %3171 = vrot.lane.b32.xlu0 %v2930, 24
    %v3172 = vpop.permute.xlu0 %3171
    %3173 = vrot.lane.b32.xlu0 %v2931, 24
    %v3174 = vpop.permute.xlu0 %3173
    %vm3256 = vcmask 228544
    %3257 = vst.msk [vmem:[#allocation3] sm:$0xff] %vm3256, %v3014
    %3258 = vst.msk [vmem:[#allocation3 + $0x8] sm:$0xff] %vm3256, %v3016
    %3259 = vst.msk [vmem:[#allocation3 + $0x10] sm:$0xff] %vm3256, %v3018
    %3260 = vst.msk [vmem:[#allocation3 + $0x18] sm:$0xff] %vm3256, %v3020
    %3261 = vst.msk [vmem:[#allocation3 + $0x20] sm:$0xff] %vm3256, %v3022
    %3262 = vst.msk [vmem:[#allocation3 + $0x28] sm:$0xff] %vm3256, %v3024
    %3263 = vst.msk [vmem:[#allocation3 + $0x30] sm:$0xff] %vm3256, %v3026
    %3264 = vst.msk [vmem:[#allocation3 + $0x38] sm:$0xff] %vm3256, %v3028
    %3265 = vst.msk [vmem:[#allocation3 + $0x40] sm:$0xff] %vm3256, %v3030
    %3266 = vst.msk [vmem:[#allocation3 + $0x48] sm:$0xff] %vm3256, %v3032
    %3267 = vst.msk [vmem:[#allocation3 + $0x50] sm:$0xff] %vm3256, %v3034
    %3268 = vst.msk [vmem:[#allocation3 + $0x58] sm:$0xff] %vm3256, %v3036
    %3269 = vst.msk [vmem:[#allocation3 + $0x60] sm:$0xff] %vm3256, %v3038
    %3270 = vst.msk [vmem:[#allocation3 + $0x68] sm:$0xff] %vm3256, %v3040
    %3271 = vst.msk [vmem:[#allocation3 + $0x70] sm:$0xff] %vm3256, %v3042
    %3272 = vst.msk [vmem:[#allocation3 + $0x78] sm:$0xff] %vm3256, %v3044
    %3273 = vst.msk [vmem:[#allocation3 + $0x80] sm:$0xff] %vm3256, %v3046
    %3274 = vst.msk [vmem:[#allocation3 + $0x88] sm:$0xff] %vm3256, %v3048
    %3275 = vst.msk [vmem:[#allocation3 + $0x90] sm:$0xff] %vm3256, %v3050
    %3276 = vst.msk [vmem:[#allocation3 + $0x98] sm:$0xff] %vm3256, %v3052
    %3277 = vst.msk [vmem:[#allocation3 + $0xa0] sm:$0xff] %vm3256, %v3054
    %3278 = vst.msk [vmem:[#allocation3 + $0xa8] sm:$0xff] %vm3256, %v3056
    %3279 = vst.msk [vmem:[#allocation3 + $0xb0] sm:$0xff] %vm3256, %v3058
    %3280 = vst.msk [vmem:[#allocation3 + $0xb8] sm:$0xff] %vm3256, %v3060
    %3281 = vst.msk [vmem:[#allocation3 + $0xc0] sm:$0xff] %vm3256, %v3062
    %3282 = vst.msk [vmem:[#allocation3 + $0xc8] sm:$0xff] %vm3256, %v3064
    %3283 = vst.msk [vmem:[#allocation3 + $0xd0] sm:$0xff] %vm3256, %v3066
    %3284 = vst.msk [vmem:[#allocation3 + $0xd8] sm:$0xff] %vm3256, %v3068
    %3285 = vst.msk [vmem:[#allocation3 + $0xe0] sm:$0xff] %vm3256, %v3070
    %3286 = vst.msk [vmem:[#allocation3 + $0xe8] sm:$0xff] %vm3256, %v3072
    %3287 = vst.msk [vmem:[#allocation3 + $0xf0] sm:$0xff] %vm3256, %v3074
    %3288 = vst.msk [vmem:[#allocation3 + $0xf8] sm:$0xff] %vm3256, %v3076
    %3289 = vst.msk [vmem:[#allocation3 + $0x100] sm:$0xff] %vm3256, %v3078
    %3290 = vst.msk [vmem:[#allocation3 + $0x108] sm:$0xff] %vm3256, %v3080
    %3291 = vst.msk [vmem:[#allocation3 + $0x110] sm:$0xff] %vm3256, %v3082
    %3292 = vst.msk [vmem:[#allocation3 + $0x118] sm:$0xff] %vm3256, %v3084
    %3293 = vst.msk [vmem:[#allocation3 + $0x120] sm:$0xff] %vm3256, %v3086
    %3294 = vst.msk [vmem:[#allocation3 + $0x128] sm:$0xff] %vm3256, %v3088
    %3295 = vst.msk [vmem:[#allocation3 + $0x130] sm:$0xff] %vm3256, %v3090
    %3296 = vst.msk [vmem:[#allocation3 + $0x138] sm:$0xff] %vm3256, %v3092
    %3297 = vst.msk [vmem:[#allocation3 + $0x140] sm:$0xff] %vm3256, %v3094
    %3298 = vst.msk [vmem:[#allocation3 + $0x148] sm:$0xff] %vm3256, %v3096
    %3299 = vst.msk [vmem:[#allocation3 + $0x150] sm:$0xff] %vm3256, %v3098
    %3300 = vst.msk [vmem:[#allocation3 + $0x158] sm:$0xff] %vm3256, %v3100
    %3301 = vst.msk [vmem:[#allocation3 + $0x160] sm:$0xff] %vm3256, %v3102
    %3302 = vst.msk [vmem:[#allocation3 + $0x168] sm:$0xff] %vm3256, %v3104
    %3303 = vst.msk [vmem:[#allocation3 + $0x170] sm:$0xff] %vm3256, %v3106
    %3304 = vst.msk [vmem:[#allocation3 + $0x178] sm:$0xff] %vm3256, %v3108
    %3305 = vst.msk [vmem:[#allocation3 + $0x180] sm:$0xff] %vm3256, %v3110
    %3306 = vst.msk [vmem:[#allocation3 + $0x188] sm:$0xff] %vm3256, %v3112
    %3307 = vst.msk [vmem:[#allocation3 + $0x190] sm:$0xff] %vm3256, %v3114
    %3308 = vst.msk [vmem:[#allocation3 + $0x198] sm:$0xff] %vm3256, %v3116
    %3309 = vst.msk [vmem:[#allocation3 + $0x1a0] sm:$0xff] %vm3256, %v3118
    %3310 = vst.msk [vmem:[#allocation3 + $0x1a8] sm:$0xff] %vm3256, %v3120
    %3311 = vst.msk [vmem:[#allocation3 + $0x1b0] sm:$0xff] %vm3256, %v3122
    %3312 = vst.msk [vmem:[#allocation3 + $0x1b8] sm:$0xff] %vm3256, %v3124
    %3313 = vst.msk [vmem:[#allocation3 + $0x1c0] sm:$0xff] %vm3256, %v3126
    %3314 = vst.msk [vmem:[#allocation3 + $0x1c8] sm:$0xff] %vm3256, %v3128
    %3315 = vst.msk [vmem:[#allocation3 + $0x1d0] sm:$0xff] %vm3256, %v3130
    %3316 = vst.msk [vmem:[#allocation3 + $0x1d8] sm:$0xff] %vm3256, %v3132
    %3317 = vst.msk [vmem:[#allocation3 + $0x1e0] sm:$0xff] %vm3256, %v3134
    %3318 = vst.msk [vmem:[#allocation3 + $0x1e8] sm:$0xff] %vm3256, %v3136
    %3319 = vst.msk [vmem:[#allocation3 + $0x1f0] sm:$0xff] %vm3256, %v3138
    %3320 = vst.msk [vmem:[#allocation3 + $0x1f8] sm:$0xff] %vm3256, %v3140
    %3321 = vst.msk [vmem:[#allocation3 + $0x200] sm:$0xff] %vm3256, %v3142
    %3322 = vst.msk [vmem:[#allocation3 + $0x208] sm:$0xff] %vm3256, %v3144
    %3323 = vst.msk [vmem:[#allocation3 + $0x210] sm:$0xff] %vm3256, %v3146
    %3324 = vst.msk [vmem:[#allocation3 + $0x218] sm:$0xff] %vm3256, %v3148
    %3325 = vst.msk [vmem:[#allocation3 + $0x220] sm:$0xff] %vm3256, %v3150
    %3326 = vst.msk [vmem:[#allocation3 + $0x228] sm:$0xff] %vm3256, %v3152
    %3327 = vst.msk [vmem:[#allocation3 + $0x230] sm:$0xff] %vm3256, %v3154
    %3328 = vst.msk [vmem:[#allocation3 + $0x238] sm:$0xff] %vm3256, %v3156
    %3329 = vst.msk [vmem:[#allocation3 + $0x240] sm:$0xff] %vm3256, %v3158
    %3330 = vst.msk [vmem:[#allocation3 + $0x248] sm:$0xff] %vm3256, %v3160
    %3331 = vst.msk [vmem:[#allocation3 + $0x250] sm:$0xff] %vm3256, %v3162
    %3332 = vst.msk [vmem:[#allocation3 + $0x258] sm:$0xff] %vm3256, %v3164
    %3333 = vst.msk [vmem:[#allocation3 + $0x260] sm:$0xff] %vm3256, %v3166
    %3334 = vst.msk [vmem:[#allocation3 + $0x268] sm:$0xff] %vm3256, %v3168
    %3335 = vst.msk [vmem:[#allocation3 + $0x270] sm:$0xff] %vm3256, %v3170
    %3336 = vst.msk [vmem:[#allocation3 + $0x278] sm:$0xff] %vm3256, %v3172
    %3337 = vst.msk [vmem:[#allocation3 + $0x280] sm:$0xff] %vm3256, %v3174
    %v3338 = vld [vmem:[#allocation2 + $0x25] sm:$0xff]
    %v3339 = vld [vmem:[#allocation2 + $0x2d] sm:$0xff]
    %v3340 = vld [vmem:[#allocation2 + $0x35] sm:$0xff]
    %v3341 = vld [vmem:[#allocation2 + $0x3d] sm:$0xff]
    %v3342 = vld [vmem:[#allocation2 + $0x45] sm:$0xff]
    %v3343 = vld [vmem:[#allocation2 + $0x4d] sm:$0xff]
    %v3344 = vld [vmem:[#allocation2 + $0x55] sm:$0xff]
    %v3345 = vld [vmem:[#allocation2 + $0x5d] sm:$0xff]
    %v3346 = vld [vmem:[#allocation2 + $0x65] sm:$0xff]
    %v3347 = vld [vmem:[#allocation2 + $0x6d] sm:$0xff]
    %v3348 = vld [vmem:[#allocation2 + $0x75] sm:$0xff]
    %v3349 = vld [vmem:[#allocation2 + $0x7d] sm:$0xff]
    %v3350 = vld [vmem:[#allocation2 + $0x85] sm:$0xff]
    %v3351 = vld [vmem:[#allocation2 + $0x8d] sm:$0xff]
    %v3352 = vld [vmem:[#allocation2 + $0x95] sm:$0xff]
    %v3353 = vld [vmem:[#allocation2 + $0x9d] sm:$0xff]
    %v3354 = vld [vmem:[#allocation2 + $0xa5] sm:$0xff]
    %v3355 = vld [vmem:[#allocation2 + $0xad] sm:$0xff]
    %v3356 = vld [vmem:[#allocation2 + $0xb5] sm:$0xff]
    %v3357 = vld [vmem:[#allocation2 + $0xbd] sm:$0xff]
    %v3358 = vld [vmem:[#allocation2 + $0xc5] sm:$0xff]
    %v3359 = vld [vmem:[#allocation2 + $0xcd] sm:$0xff]
    %v3360 = vld [vmem:[#allocation2 + $0xd5] sm:$0xff]
    %v3361 = vld [vmem:[#allocation2 + $0xdd] sm:$0xff]
    %v3362 = vld [vmem:[#allocation2 + $0xe5] sm:$0xff]
    %v3363 = vld [vmem:[#allocation2 + $0xed] sm:$0xff]
    %v3364 = vld [vmem:[#allocation2 + $0xf5] sm:$0xff]
    %v3365 = vld [vmem:[#allocation2 + $0xfd] sm:$0xff]
    %v3366 = vld [vmem:[#allocation2 + $0x105] sm:$0xff]
    %v3367 = vld [vmem:[#allocation2 + $0x10d] sm:$0xff]
    %v3368 = vld [vmem:[#allocation2 + $0x115] sm:$0xff]
    %v3369 = vld [vmem:[#allocation2 + $0x11d] sm:$0xff]
    %v3370 = vld [vmem:[#allocation2 + $0x125] sm:$0xff]
    %v3371 = vld [vmem:[#allocation2 + $0x12d] sm:$0xff]
    %v3372 = vld [vmem:[#allocation2 + $0x135] sm:$0xff]
    %v3373 = vld [vmem:[#allocation2 + $0x13d] sm:$0xff]
    %v3374 = vld [vmem:[#allocation2 + $0x145] sm:$0xff]
    %v3375 = vld [vmem:[#allocation2 + $0x14d] sm:$0xff]
    %v3376 = vld [vmem:[#allocation2 + $0x155] sm:$0xff]
    %v3377 = vld [vmem:[#allocation2 + $0x15d] sm:$0xff]
    %v3378 = vld [vmem:[#allocation2 + $0x165] sm:$0xff]
    %v3379 = vld [vmem:[#allocation2 + $0x16d] sm:$0xff]
    %v3380 = vld [vmem:[#allocation2 + $0x175] sm:$0xff]
    %v3381 = vld [vmem:[#allocation2 + $0x17d] sm:$0xff]
    %v3382 = vld [vmem:[#allocation2 + $0x185] sm:$0xff]
    %v3383 = vld [vmem:[#allocation2 + $0x18d] sm:$0xff]
    %v3384 = vld [vmem:[#allocation2 + $0x195] sm:$0xff]
    %v3385 = vld [vmem:[#allocation2 + $0x19d] sm:$0xff]
    %v3386 = vld [vmem:[#allocation2 + $0x1a5] sm:$0xff]
    %v3387 = vld [vmem:[#allocation2 + $0x1ad] sm:$0xff]
    %v3388 = vld [vmem:[#allocation2 + $0x1b5] sm:$0xff]
    %v3389 = vld [vmem:[#allocation2 + $0x1bd] sm:$0xff]
    %v3390 = vld [vmem:[#allocation2 + $0x1c5] sm:$0xff]
    %v3391 = vld [vmem:[#allocation2 + $0x1cd] sm:$0xff]
    %v3392 = vld [vmem:[#allocation2 + $0x1d5] sm:$0xff]
    %v3393 = vld [vmem:[#allocation2 + $0x1dd] sm:$0xff]
    %v3394 = vld [vmem:[#allocation2 + $0x1e5] sm:$0xff]
    %v3395 = vld [vmem:[#allocation2 + $0x1ed] sm:$0xff]
    %v3396 = vld [vmem:[#allocation2 + $0x1f5] sm:$0xff]
    %v3397 = vld [vmem:[#allocation2 + $0x1fd] sm:$0xff]
    %v3398 = vld [vmem:[#allocation2 + $0x205] sm:$0xff]
    %v3399 = vld [vmem:[#allocation2 + $0x20d] sm:$0xff]
    %v3400 = vld [vmem:[#allocation2 + $0x215] sm:$0xff]
    %v3401 = vld [vmem:[#allocation2 + $0x21d] sm:$0xff]
    %v3402 = vld [vmem:[#allocation2 + $0x225] sm:$0xff]
    %v3403 = vld [vmem:[#allocation2 + $0x22d] sm:$0xff]
    %v3404 = vld [vmem:[#allocation2 + $0x235] sm:$0xff]
    %v3405 = vld [vmem:[#allocation2 + $0x23d] sm:$0xff]
    %v3406 = vld [vmem:[#allocation2 + $0x245] sm:$0xff]
    %v3407 = vld [vmem:[#allocation2 + $0x24d] sm:$0xff]
    %v3408 = vld [vmem:[#allocation2 + $0x255] sm:$0xff]
    %v3409 = vld [vmem:[#allocation2 + $0x25d] sm:$0xff]
    %v3410 = vld [vmem:[#allocation2 + $0x265] sm:$0xff]
    %v3411 = vld [vmem:[#allocation2 + $0x26d] sm:$0xff]
    %v3412 = vld [vmem:[#allocation2 + $0x275] sm:$0xff]
    %v3413 = vld [vmem:[#allocation2 + $0x27d] sm:$0xff]
    %v3414 = vld [vmem:[#allocation2 + $0x285] sm:$0xff]
    %v3415 = vld [vmem:[#allocation2 + $0x28d] sm:$0xff]
    %v3416 = vld [vmem:[#allocation2 + $0x295] sm:$0xff]
    %v3417 = vld [vmem:[#allocation2 + $0x29d] sm:$0xff]
    %v3418 = vld [vmem:[#allocation2 + $0x2a5] sm:$0xff]
    %3500 = vrot.lane.b32.xlu0 %v3338, 28
    %v3501 = vpop.permute.xlu0 %3500
    %3502 = vrot.lane.b32.xlu0 %v3339, 28
    %v3503 = vpop.permute.xlu0 %3502
    %3504 = vrot.lane.b32.xlu0 %v3340, 28
    %v3505 = vpop.permute.xlu0 %3504
    %3506 = vrot.lane.b32.xlu0 %v3341, 28
    %v3507 = vpop.permute.xlu0 %3506
    %3508 = vrot.lane.b32.xlu0 %v3342, 28
    %v3509 = vpop.permute.xlu0 %3508
    %3510 = vrot.lane.b32.xlu0 %v3343, 28
    %v3511 = vpop.permute.xlu0 %3510
    %3512 = vrot.lane.b32.xlu0 %v3344, 28
    %v3513 = vpop.permute.xlu0 %3512
    %3514 = vrot.lane.b32.xlu0 %v3345, 28
    %v3515 = vpop.permute.xlu0 %3514
    %3516 = vrot.lane.b32.xlu0 %v3346, 28
    %v3517 = vpop.permute.xlu0 %3516
    %3518 = vrot.lane.b32.xlu0 %v3347, 28
    %v3519 = vpop.permute.xlu0 %3518
    %3520 = vrot.lane.b32.xlu0 %v3348, 28
    %v3521 = vpop.permute.xlu0 %3520
    %3522 = vrot.lane.b32.xlu0 %v3349, 28
    %v3523 = vpop.permute.xlu0 %3522
    %3524 = vrot.lane.b32.xlu0 %v3350, 28
    %v3525 = vpop.permute.xlu0 %3524
    %3526 = vrot.lane.b32.xlu0 %v3351, 28
    %v3527 = vpop.permute.xlu0 %3526
    %3528 = vrot.lane.b32.xlu0 %v3352, 28
    %v3529 = vpop.permute.xlu0 %3528
    %3530 = vrot.lane.b32.xlu0 %v3353, 28
    %v3531 = vpop.permute.xlu0 %3530
    %3532 = vrot.lane.b32.xlu0 %v3354, 28
    %v3533 = vpop.permute.xlu0 %3532
    %3534 = vrot.lane.b32.xlu0 %v3355, 28
    %v3535 = vpop.permute.xlu0 %3534
    %3536 = vrot.lane.b32.xlu0 %v3356, 28
    %v3537 = vpop.permute.xlu0 %3536
    %3538 = vrot.lane.b32.xlu0 %v3357, 28
    %v3539 = vpop.permute.xlu0 %3538
    %3540 = vrot.lane.b32.xlu0 %v3358, 28
    %v3541 = vpop.permute.xlu0 %3540
    %3542 = vrot.lane.b32.xlu0 %v3359, 28
    %v3543 = vpop.permute.xlu0 %3542
    %3544 = vrot.lane.b32.xlu0 %v3360, 28
    %v3545 = vpop.permute.xlu0 %3544
    %3546 = vrot.lane.b32.xlu0 %v3361, 28
    %v3547 = vpop.permute.xlu0 %3546
    %3548 = vrot.lane.b32.xlu0 %v3362, 28
    %v3549 = vpop.permute.xlu0 %3548
    %3550 = vrot.lane.b32.xlu0 %v3363, 28
    %v3551 = vpop.permute.xlu0 %3550
    %3552 = vrot.lane.b32.xlu0 %v3364, 28
    %v3553 = vpop.permute.xlu0 %3552
    %3554 = vrot.lane.b32.xlu0 %v3365, 28
    %v3555 = vpop.permute.xlu0 %3554
    %3556 = vrot.lane.b32.xlu0 %v3366, 28
    %v3557 = vpop.permute.xlu0 %3556
    %3558 = vrot.lane.b32.xlu0 %v3367, 28
    %v3559 = vpop.permute.xlu0 %3558
    %3560 = vrot.lane.b32.xlu0 %v3368, 28
    %v3561 = vpop.permute.xlu0 %3560
    %3562 = vrot.lane.b32.xlu0 %v3369, 28
    %v3563 = vpop.permute.xlu0 %3562
    %3564 = vrot.lane.b32.xlu0 %v3370, 28
    %v3565 = vpop.permute.xlu0 %3564
    %3566 = vrot.lane.b32.xlu0 %v3371, 28
    %v3567 = vpop.permute.xlu0 %3566
    %3568 = vrot.lane.b32.xlu0 %v3372, 28
    %v3569 = vpop.permute.xlu0 %3568
    %3570 = vrot.lane.b32.xlu0 %v3373, 28
    %v3571 = vpop.permute.xlu0 %3570
    %3572 = vrot.lane.b32.xlu0 %v3374, 28
    %v3573 = vpop.permute.xlu0 %3572
    %3574 = vrot.lane.b32.xlu0 %v3375, 28
    %v3575 = vpop.permute.xlu0 %3574
    %3576 = vrot.lane.b32.xlu0 %v3376, 28
    %v3577 = vpop.permute.xlu0 %3576
    %3578 = vrot.lane.b32.xlu0 %v3377, 28
    %v3579 = vpop.permute.xlu0 %3578
    %3580 = vrot.lane.b32.xlu0 %v3378, 28
    %v3581 = vpop.permute.xlu0 %3580
    %3582 = vrot.lane.b32.xlu0 %v3379, 28
    %v3583 = vpop.permute.xlu0 %3582
    %3584 = vrot.lane.b32.xlu0 %v3380, 28
    %v3585 = vpop.permute.xlu0 %3584
    %3586 = vrot.lane.b32.xlu0 %v3381, 28
    %v3587 = vpop.permute.xlu0 %3586
    %3588 = vrot.lane.b32.xlu0 %v3382, 28
    %v3589 = vpop.permute.xlu0 %3588
    %3590 = vrot.lane.b32.xlu0 %v3383, 28
    %v3591 = vpop.permute.xlu0 %3590
    %3592 = vrot.lane.b32.xlu0 %v3384, 28
    %v3593 = vpop.permute.xlu0 %3592
    %3594 = vrot.lane.b32.xlu0 %v3385, 28
    %v3595 = vpop.permute.xlu0 %3594
    %3596 = vrot.lane.b32.xlu0 %v3386, 28
    %v3597 = vpop.permute.xlu0 %3596
    %3598 = vrot.lane.b32.xlu0 %v3387, 28
    %v3599 = vpop.permute.xlu0 %3598
    %3600 = vrot.lane.b32.xlu0 %v3388, 28
    %v3601 = vpop.permute.xlu0 %3600
    %3602 = vrot.lane.b32.xlu0 %v3389, 28
    %v3603 = vpop.permute.xlu0 %3602
    %3604 = vrot.lane.b32.xlu0 %v3390, 28
    %v3605 = vpop.permute.xlu0 %3604
    %3606 = vrot.lane.b32.xlu0 %v3391, 28
    %v3607 = vpop.permute.xlu0 %3606
    %3608 = vrot.lane.b32.xlu0 %v3392, 28
    %v3609 = vpop.permute.xlu0 %3608
    %3610 = vrot.lane.b32.xlu0 %v3393, 28
    %v3611 = vpop.permute.xlu0 %3610
    %3612 = vrot.lane.b32.xlu0 %v3394, 28
    %v3613 = vpop.permute.xlu0 %3612
    %3614 = vrot.lane.b32.xlu0 %v3395, 28
    %v3615 = vpop.permute.xlu0 %3614
    %3616 = vrot.lane.b32.xlu0 %v3396, 28
    %v3617 = vpop.permute.xlu0 %3616
    %3618 = vrot.lane.b32.xlu0 %v3397, 28
    %v3619 = vpop.permute.xlu0 %3618
    %3620 = vrot.lane.b32.xlu0 %v3398, 28
    %v3621 = vpop.permute.xlu0 %3620
    %3622 = vrot.lane.b32.xlu0 %v3399, 28
    %v3623 = vpop.permute.xlu0 %3622
    %3624 = vrot.lane.b32.xlu0 %v3400, 28
    %v3625 = vpop.permute.xlu0 %3624
    %3626 = vrot.lane.b32.xlu0 %v3401, 28
    %v3627 = vpop.permute.xlu0 %3626
    %3628 = vrot.lane.b32.xlu0 %v3402, 28
    %v3629 = vpop.permute.xlu0 %3628
    %3630 = vrot.lane.b32.xlu0 %v3403, 28
    %v3631 = vpop.permute.xlu0 %3630
    %3632 = vrot.lane.b32.xlu0 %v3404, 28
    %v3633 = vpop.permute.xlu0 %3632
    %3634 = vrot.lane.b32.xlu0 %v3405, 28
    %v3635 = vpop.permute.xlu0 %3634
    %3636 = vrot.lane.b32.xlu0 %v3406, 28
    %v3637 = vpop.permute.xlu0 %3636
    %3638 = vrot.lane.b32.xlu0 %v3407, 28
    %v3639 = vpop.permute.xlu0 %3638
    %3640 = vrot.lane.b32.xlu0 %v3408, 28
    %v3641 = vpop.permute.xlu0 %3640
    %3642 = vrot.lane.b32.xlu0 %v3409, 28
    %v3643 = vpop.permute.xlu0 %3642
    %3644 = vrot.lane.b32.xlu0 %v3410, 28
    %v3645 = vpop.permute.xlu0 %3644
    %3646 = vrot.lane.b32.xlu0 %v3411, 28
    %v3647 = vpop.permute.xlu0 %3646
    %3648 = vrot.lane.b32.xlu0 %v3412, 28
    %v3649 = vpop.permute.xlu0 %3648
    %3650 = vrot.lane.b32.xlu0 %v3413, 28
    %v3651 = vpop.permute.xlu0 %3650
    %3652 = vrot.lane.b32.xlu0 %v3414, 28
    %v3653 = vpop.permute.xlu0 %3652
    %3654 = vrot.lane.b32.xlu0 %v3415, 28
    %v3655 = vpop.permute.xlu0 %3654
    %3656 = vrot.lane.b32.xlu0 %v3416, 28
    %v3657 = vpop.permute.xlu0 %3656
    %3658 = vrot.lane.b32.xlu0 %v3417, 28
    %v3659 = vpop.permute.xlu0 %3658
    %3660 = vrot.lane.b32.xlu0 %v3418, 28
    %v3661 = vpop.permute.xlu0 %3660
    %vm3743 = vcmask 261344
    %3744 = vst.msk [vmem:[#allocation3] sm:$0xff] %vm3743, %v3501
    %3745 = vst.msk [vmem:[#allocation3 + $0x8] sm:$0xff] %vm3743, %v3503
    %3746 = vst.msk [vmem:[#allocation3 + $0x10] sm:$0xff] %vm3743, %v3505
    %3747 = vst.msk [vmem:[#allocation3 + $0x18] sm:$0xff] %vm3743, %v3507
    %3748 = vst.msk [vmem:[#allocation3 + $0x20] sm:$0xff] %vm3743, %v3509
    %3749 = vst.msk [vmem:[#allocation3 + $0x28] sm:$0xff] %vm3743, %v3511
    %3750 = vst.msk [vmem:[#allocation3 + $0x30] sm:$0xff] %vm3743, %v3513
    %3751 = vst.msk [vmem:[#allocation3 + $0x38] sm:$0xff] %vm3743, %v3515
    %3752 = vst.msk [vmem:[#allocation3 + $0x40] sm:$0xff] %vm3743, %v3517
    %3753 = vst.msk [vmem:[#allocation3 + $0x48] sm:$0xff] %vm3743, %v3519
    %3754 = vst.msk [vmem:[#allocation3 + $0x50] sm:$0xff] %vm3743, %v3521
    %3755 = vst.msk [vmem:[#allocation3 + $0x58] sm:$0xff] %vm3743, %v3523
    %3756 = vst.msk [vmem:[#allocation3 + $0x60] sm:$0xff] %vm3743, %v3525
    %3757 = vst.msk [vmem:[#allocation3 + $0x68] sm:$0xff] %vm3743, %v3527
    %3758 = vst.msk [vmem:[#allocation3 + $0x70] sm:$0xff] %vm3743, %v3529
    %3759 = vst.msk [vmem:[#allocation3 + $0x78] sm:$0xff] %vm3743, %v3531
    %3760 = vst.msk [vmem:[#allocation3 + $0x80] sm:$0xff] %vm3743, %v3533
    %3761 = vst.msk [vmem:[#allocation3 + $0x88] sm:$0xff] %vm3743, %v3535
    %3762 = vst.msk [vmem:[#allocation3 + $0x90] sm:$0xff] %vm3743, %v3537
    %3763 = vst.msk [vmem:[#allocation3 + $0x98] sm:$0xff] %vm3743, %v3539
    %3764 = vst.msk [vmem:[#allocation3 + $0xa0] sm:$0xff] %vm3743, %v3541
    %3765 = vst.msk [vmem:[#allocation3 + $0xa8] sm:$0xff] %vm3743, %v3543
    %3766 = vst.msk [vmem:[#allocation3 + $0xb0] sm:$0xff] %vm3743, %v3545
    %3767 = vst.msk [vmem:[#allocation3 + $0xb8] sm:$0xff] %vm3743, %v3547
    %3768 = vst.msk [vmem:[#allocation3 + $0xc0] sm:$0xff] %vm3743, %v3549
    %3769 = vst.msk [vmem:[#allocation3 + $0xc8] sm:$0xff] %vm3743, %v3551
    %3770 = vst.msk [vmem:[#allocation3 + $0xd0] sm:$0xff] %vm3743, %v3553
    %3771 = vst.msk [vmem:[#allocation3 + $0xd8] sm:$0xff] %vm3743, %v3555
    %3772 = vst.msk [vmem:[#allocation3 + $0xe0] sm:$0xff] %vm3743, %v3557
    %3773 = vst.msk [vmem:[#allocation3 + $0xe8] sm:$0xff] %vm3743, %v3559
    %3774 = vst.msk [vmem:[#allocation3 + $0xf0] sm:$0xff] %vm3743, %v3561
    %3775 = vst.msk [vmem:[#allocation3 + $0xf8] sm:$0xff] %vm3743, %v3563
    %3776 = vst.msk [vmem:[#allocation3 + $0x100] sm:$0xff] %vm3743, %v3565
    %3777 = vst.msk [vmem:[#allocation3 + $0x108] sm:$0xff] %vm3743, %v3567
    %3778 = vst.msk [vmem:[#allocation3 + $0x110] sm:$0xff] %vm3743, %v3569
    %3779 = vst.msk [vmem:[#allocation3 + $0x118] sm:$0xff] %vm3743, %v3571
    %3780 = vst.msk [vmem:[#allocation3 + $0x120] sm:$0xff] %vm3743, %v3573
    %3781 = vst.msk [vmem:[#allocation3 + $0x128] sm:$0xff] %vm3743, %v3575
    %3782 = vst.msk [vmem:[#allocation3 + $0x130] sm:$0xff] %vm3743, %v3577
    %3783 = vst.msk [vmem:[#allocation3 + $0x138] sm:$0xff] %vm3743, %v3579
    %3784 = vst.msk [vmem:[#allocation3 + $0x140] sm:$0xff] %vm3743, %v3581
    %3785 = vst.msk [vmem:[#allocation3 + $0x148] sm:$0xff] %vm3743, %v3583
    %3786 = vst.msk [vmem:[#allocation3 + $0x150] sm:$0xff] %vm3743, %v3585
    %3787 = vst.msk [vmem:[#allocation3 + $0x158] sm:$0xff] %vm3743, %v3587
    %3788 = vst.msk [vmem:[#allocation3 + $0x160] sm:$0xff] %vm3743, %v3589
    %3789 = vst.msk [vmem:[#allocation3 + $0x168] sm:$0xff] %vm3743, %v3591
    %3790 = vst.msk [vmem:[#allocation3 + $0x170] sm:$0xff] %vm3743, %v3593
    %3791 = vst.msk [vmem:[#allocation3 + $0x178] sm:$0xff] %vm3743, %v3595
    %3792 = vst.msk [vmem:[#allocation3 + $0x180] sm:$0xff] %vm3743, %v3597
    %3793 = vst.msk [vmem:[#allocation3 + $0x188] sm:$0xff] %vm3743, %v3599
    %3794 = vst.msk [vmem:[#allocation3 + $0x190] sm:$0xff] %vm3743, %v3601
    %3795 = vst.msk [vmem:[#allocation3 + $0x198] sm:$0xff] %vm3743, %v3603
    %3796 = vst.msk [vmem:[#allocation3 + $0x1a0] sm:$0xff] %vm3743, %v3605
    %3797 = vst.msk [vmem:[#allocation3 + $0x1a8] sm:$0xff] %vm3743, %v3607
    %3798 = vst.msk [vmem:[#allocation3 + $0x1b0] sm:$0xff] %vm3743, %v3609
    %3799 = vst.msk [vmem:[#allocation3 + $0x1b8] sm:$0xff] %vm3743, %v3611
    %3800 = vst.msk [vmem:[#allocation3 + $0x1c0] sm:$0xff] %vm3743, %v3613
    %3801 = vst.msk [vmem:[#allocation3 + $0x1c8] sm:$0xff] %vm3743, %v3615
    %3802 = vst.msk [vmem:[#allocation3 + $0x1d0] sm:$0xff] %vm3743, %v3617
    %3803 = vst.msk [vmem:[#allocation3 + $0x1d8] sm:$0xff] %vm3743, %v3619
    %3804 = vst.msk [vmem:[#allocation3 + $0x1e0] sm:$0xff] %vm3743, %v3621
    %3805 = vst.msk [vmem:[#allocation3 + $0x1e8] sm:$0xff] %vm3743, %v3623
    %3806 = vst.msk [vmem:[#allocation3 + $0x1f0] sm:$0xff] %vm3743, %v3625
    %3807 = vst.msk [vmem:[#allocation3 + $0x1f8] sm:$0xff] %vm3743, %v3627
    %3808 = vst.msk [vmem:[#allocation3 + $0x200] sm:$0xff] %vm3743, %v3629
    %3809 = vst.msk [vmem:[#allocation3 + $0x208] sm:$0xff] %vm3743, %v3631
    %3810 = vst.msk [vmem:[#allocation3 + $0x210] sm:$0xff] %vm3743, %v3633
    %3811 = vst.msk [vmem:[#allocation3 + $0x218] sm:$0xff] %vm3743, %v3635
    %3812 = vst.msk [vmem:[#allocation3 + $0x220] sm:$0xff] %vm3743, %v3637
    %3813 = vst.msk [vmem:[#allocation3 + $0x228] sm:$0xff] %vm3743, %v3639
    %3814 = vst.msk [vmem:[#allocation3 + $0x230] sm:$0xff] %vm3743, %v3641
    %3815 = vst.msk [vmem:[#allocation3 + $0x238] sm:$0xff] %vm3743, %v3643
    %3816 = vst.msk [vmem:[#allocation3 + $0x240] sm:$0xff] %vm3743, %v3645
    %3817 = vst.msk [vmem:[#allocation3 + $0x248] sm:$0xff] %vm3743, %v3647
    %3818 = vst.msk [vmem:[#allocation3 + $0x250] sm:$0xff] %vm3743, %v3649
    %3819 = vst.msk [vmem:[#allocation3 + $0x258] sm:$0xff] %vm3743, %v3651
    %3820 = vst.msk [vmem:[#allocation3 + $0x260] sm:$0xff] %vm3743, %v3653
    %3821 = vst.msk [vmem:[#allocation3 + $0x268] sm:$0xff] %vm3743, %v3655
    %3822 = vst.msk [vmem:[#allocation3 + $0x270] sm:$0xff] %vm3743, %v3657
    %3823 = vst.msk [vmem:[#allocation3 + $0x278] sm:$0xff] %vm3743, %v3659
    %3824 = vst.msk [vmem:[#allocation3 + $0x280] sm:$0xff] %vm3743, %v3661
    %v3825 = vld [vmem:[#allocation2 + $0x26] sm:$0xff]
    %v3826 = vld [vmem:[#allocation2 + $0x2e] sm:$0xff]
    %v3827 = vld [vmem:[#allocation2 + $0x36] sm:$0xff]
    %v3828 = vld [vmem:[#allocation2 + $0x3e] sm:$0xff]
    %v3829 = vld [vmem:[#allocation2 + $0x46] sm:$0xff]
    %v3830 = vld [vmem:[#allocation2 + $0x4e] sm:$0xff]
    %v3831 = vld [vmem:[#allocation2 + $0x56] sm:$0xff]
    %v3832 = vld [vmem:[#allocation2 + $0x5e] sm:$0xff]
    %v3833 = vld [vmem:[#allocation2 + $0x66] sm:$0xff]
    %v3834 = vld [vmem:[#allocation2 + $0x6e] sm:$0xff]
    %v3835 = vld [vmem:[#allocation2 + $0x76] sm:$0xff]
    %v3836 = vld [vmem:[#allocation2 + $0x7e] sm:$0xff]
    %v3837 = vld [vmem:[#allocation2 + $0x86] sm:$0xff]
    %v3838 = vld [vmem:[#allocation2 + $0x8e] sm:$0xff]
    %v3839 = vld [vmem:[#allocation2 + $0x96] sm:$0xff]
    %v3840 = vld [vmem:[#allocation2 + $0x9e] sm:$0xff]
    %v3841 = vld [vmem:[#allocation2 + $0xa6] sm:$0xff]
    %v3842 = vld [vmem:[#allocation2 + $0xae] sm:$0xff]
    %v3843 = vld [vmem:[#allocation2 + $0xb6] sm:$0xff]
    %v3844 = vld [vmem:[#allocation2 + $0xbe] sm:$0xff]
    %v3845 = vld [vmem:[#allocation2 + $0xc6] sm:$0xff]
    %v3846 = vld [vmem:[#allocation2 + $0xce] sm:$0xff]
    %v3847 = vld [vmem:[#allocation2 + $0xd6] sm:$0xff]
    %v3848 = vld [vmem:[#allocation2 + $0xde] sm:$0xff]
    %v3849 = vld [vmem:[#allocation2 + $0xe6] sm:$0xff]
    %v3850 = vld [vmem:[#allocation2 + $0xee] sm:$0xff]
    %v3851 = vld [vmem:[#allocation2 + $0xf6] sm:$0xff]
    %v3852 = vld [vmem:[#allocation2 + $0xfe] sm:$0xff]
    %v3853 = vld [vmem:[#allocation2 + $0x106] sm:$0xff]
    %v3854 = vld [vmem:[#allocation2 + $0x10e] sm:$0xff]
    %v3855 = vld [vmem:[#allocation2 + $0x116] sm:$0xff]
    %v3856 = vld [vmem:[#allocation2 + $0x11e] sm:$0xff]
    %v3857 = vld [vmem:[#allocation2 + $0x126] sm:$0xff]
    %v3858 = vld [vmem:[#allocation2 + $0x12e] sm:$0xff]
    %v3859 = vld [vmem:[#allocation2 + $0x136] sm:$0xff]
    %v3860 = vld [vmem:[#allocation2 + $0x13e] sm:$0xff]
    %v3861 = vld [vmem:[#allocation2 + $0x146] sm:$0xff]
    %v3862 = vld [vmem:[#allocation2 + $0x14e] sm:$0xff]
    %v3863 = vld [vmem:[#allocation2 + $0x156] sm:$0xff]
    %v3864 = vld [vmem:[#allocation2 + $0x15e] sm:$0xff]
    %v3865 = vld [vmem:[#allocation2 + $0x166] sm:$0xff]
    %v3866 = vld [vmem:[#allocation2 + $0x16e] sm:$0xff]
    %v3867 = vld [vmem:[#allocation2 + $0x176] sm:$0xff]
    %v3868 = vld [vmem:[#allocation2 + $0x17e] sm:$0xff]
    %v3869 = vld [vmem:[#allocation2 + $0x186] sm:$0xff]
    %v3870 = vld [vmem:[#allocation2 + $0x18e] sm:$0xff]
    %v3871 = vld [vmem:[#allocation2 + $0x196] sm:$0xff]
    %v3872 = vld [vmem:[#allocation2 + $0x19e] sm:$0xff]
    %v3873 = vld [vmem:[#allocation2 + $0x1a6] sm:$0xff]
    %v3874 = vld [vmem:[#allocation2 + $0x1ae] sm:$0xff]
    %v3875 = vld [vmem:[#allocation2 + $0x1b6] sm:$0xff]
    %v3876 = vld [vmem:[#allocation2 + $0x1be] sm:$0xff]
    %v3877 = vld [vmem:[#allocation2 + $0x1c6] sm:$0xff]
    %v3878 = vld [vmem:[#allocation2 + $0x1ce] sm:$0xff]
    %v3879 = vld [vmem:[#allocation2 + $0x1d6] sm:$0xff]
    %v3880 = vld [vmem:[#allocation2 + $0x1de] sm:$0xff]
    %v3881 = vld [vmem:[#allocation2 + $0x1e6] sm:$0xff]
    %v3882 = vld [vmem:[#allocation2 + $0x1ee] sm:$0xff]
    %v3883 = vld [vmem:[#allocation2 + $0x1f6] sm:$0xff]
    %v3884 = vld [vmem:[#allocation2 + $0x1fe] sm:$0xff]
    %v3885 = vld [vmem:[#allocation2 + $0x206] sm:$0xff]
    %v3886 = vld [vmem:[#allocation2 + $0x20e] sm:$0xff]
    %v3887 = vld [vmem:[#allocation2 + $0x216] sm:$0xff]
    %v3888 = vld [vmem:[#allocation2 + $0x21e] sm:$0xff]
    %v3889 = vld [vmem:[#allocation2 + $0x226] sm:$0xff]
    %v3890 = vld [vmem:[#allocation2 + $0x22e] sm:$0xff]
    %v3891 = vld [vmem:[#allocation2 + $0x236] sm:$0xff]
    %v3892 = vld [vmem:[#allocation2 + $0x23e] sm:$0xff]
    %v3893 = vld [vmem:[#allocation2 + $0x246] sm:$0xff]
    %v3894 = vld [vmem:[#allocation2 + $0x24e] sm:$0xff]
    %v3895 = vld [vmem:[#allocation2 + $0x256] sm:$0xff]
    %v3896 = vld [vmem:[#allocation2 + $0x25e] sm:$0xff]
    %v3897 = vld [vmem:[#allocation2 + $0x266] sm:$0xff]
    %v3898 = vld [vmem:[#allocation2 + $0x26e] sm:$0xff]
    %v3899 = vld [vmem:[#allocation2 + $0x276] sm:$0xff]
    %v3900 = vld [vmem:[#allocation2 + $0x27e] sm:$0xff]
    %v3901 = vld [vmem:[#allocation2 + $0x286] sm:$0xff]
    %v3902 = vld [vmem:[#allocation2 + $0x28e] sm:$0xff]
    %v3903 = vld [vmem:[#allocation2 + $0x296] sm:$0xff]
    %v3904 = vld [vmem:[#allocation2 + $0x29e] sm:$0xff]
    %v3905 = vld [vmem:[#allocation2 + $0x2a6] sm:$0xff]
    %3987 = vrot.lane.b32.xlu0 %v3825, 32
    %v3988 = vpop.permute.xlu0 %3987
    %3989 = vrot.lane.b32.xlu0 %v3826, 32
    %v3990 = vpop.permute.xlu0 %3989
    %3991 = vrot.lane.b32.xlu0 %v3827, 32
    %v3992 = vpop.permute.xlu0 %3991
    %3993 = vrot.lane.b32.xlu0 %v3828, 32
    %v3994 = vpop.permute.xlu0 %3993
    %3995 = vrot.lane.b32.xlu0 %v3829, 32
    %v3996 = vpop.permute.xlu0 %3995
    %3997 = vrot.lane.b32.xlu0 %v3830, 32
    %v3998 = vpop.permute.xlu0 %3997
    %3999 = vrot.lane.b32.xlu0 %v3831, 32
    %v4000 = vpop.permute.xlu0 %3999
    %4001 = vrot.lane.b32.xlu0 %v3832, 32
    %v4002 = vpop.permute.xlu0 %4001
    %4003 = vrot.lane.b32.xlu0 %v3833, 32
    %v4004 = vpop.permute.xlu0 %4003
    %4005 = vrot.lane.b32.xlu0 %v3834, 32
    %v4006 = vpop.permute.xlu0 %4005
    %4007 = vrot.lane.b32.xlu0 %v3835, 32
    %v4008 = vpop.permute.xlu0 %4007
    %4009 = vrot.lane.b32.xlu0 %v3836, 32
    %v4010 = vpop.permute.xlu0 %4009
    %4011 = vrot.lane.b32.xlu0 %v3837, 32
    %v4012 = vpop.permute.xlu0 %4011
    %4013 = vrot.lane.b32.xlu0 %v3838, 32
    %v4014 = vpop.permute.xlu0 %4013
    %4015 = vrot.lane.b32.xlu0 %v3839, 32
    %v4016 = vpop.permute.xlu0 %4015
    %4017 = vrot.lane.b32.xlu0 %v3840, 32
    %v4018 = vpop.permute.xlu0 %4017
    %4019 = vrot.lane.b32.xlu0 %v3841, 32
    %v4020 = vpop.permute.xlu0 %4019
    %4021 = vrot.lane.b32.xlu0 %v3842, 32
    %v4022 = vpop.permute.xlu0 %4021
    %4023 = vrot.lane.b32.xlu0 %v3843, 32
    %v4024 = vpop.permute.xlu0 %4023
    %4025 = vrot.lane.b32.xlu0 %v3844, 32
    %v4026 = vpop.permute.xlu0 %4025
    %4027 = vrot.lane.b32.xlu0 %v3845, 32
    %v4028 = vpop.permute.xlu0 %4027
    %4029 = vrot.lane.b32.xlu0 %v3846, 32
    %v4030 = vpop.permute.xlu0 %4029
    %4031 = vrot.lane.b32.xlu0 %v3847, 32
    %v4032 = vpop.permute.xlu0 %4031
    %4033 = vrot.lane.b32.xlu0 %v3848, 32
    %v4034 = vpop.permute.xlu0 %4033
    %4035 = vrot.lane.b32.xlu0 %v3849, 32
    %v4036 = vpop.permute.xlu0 %4035
    %4037 = vrot.lane.b32.xlu0 %v3850, 32
    %v4038 = vpop.permute.xlu0 %4037
    %4039 = vrot.lane.b32.xlu0 %v3851, 32
    %v4040 = vpop.permute.xlu0 %4039
    %4041 = vrot.lane.b32.xlu0 %v3852, 32
    %v4042 = vpop.permute.xlu0 %4041
    %4043 = vrot.lane.b32.xlu0 %v3853, 32
    %v4044 = vpop.permute.xlu0 %4043
    %4045 = vrot.lane.b32.xlu0 %v3854, 32
    %v4046 = vpop.permute.xlu0 %4045
    %4047 = vrot.lane.b32.xlu0 %v3855, 32
    %v4048 = vpop.permute.xlu0 %4047
    %4049 = vrot.lane.b32.xlu0 %v3856, 32
    %v4050 = vpop.permute.xlu0 %4049
    %4051 = vrot.lane.b32.xlu0 %v3857, 32
    %v4052 = vpop.permute.xlu0 %4051
    %4053 = vrot.lane.b32.xlu0 %v3858, 32
    %v4054 = vpop.permute.xlu0 %4053
    %4055 = vrot.lane.b32.xlu0 %v3859, 32
    %v4056 = vpop.permute.xlu0 %4055
    %4057 = vrot.lane.b32.xlu0 %v3860, 32
    %v4058 = vpop.permute.xlu0 %4057
    %4059 = vrot.lane.b32.xlu0 %v3861, 32
    %v4060 = vpop.permute.xlu0 %4059
    %4061 = vrot.lane.b32.xlu0 %v3862, 32
    %v4062 = vpop.permute.xlu0 %4061
    %4063 = vrot.lane.b32.xlu0 %v3863, 32
    %v4064 = vpop.permute.xlu0 %4063
    %4065 = vrot.lane.b32.xlu0 %v3864, 32
    %v4066 = vpop.permute.xlu0 %4065
    %4067 = vrot.lane.b32.xlu0 %v3865, 32
    %v4068 = vpop.permute.xlu0 %4067
    %4069 = vrot.lane.b32.xlu0 %v3866, 32
    %v4070 = vpop.permute.xlu0 %4069
    %4071 = vrot.lane.b32.xlu0 %v3867, 32
    %v4072 = vpop.permute.xlu0 %4071
    %4073 = vrot.lane.b32.xlu0 %v3868, 32
    %v4074 = vpop.permute.xlu0 %4073
    %4075 = vrot.lane.b32.xlu0 %v3869, 32
    %v4076 = vpop.permute.xlu0 %4075
    %4077 = vrot.lane.b32.xlu0 %v3870, 32
    %v4078 = vpop.permute.xlu0 %4077
    %4079 = vrot.lane.b32.xlu0 %v3871, 32
    %v4080 = vpop.permute.xlu0 %4079
    %4081 = vrot.lane.b32.xlu0 %v3872, 32
    %v4082 = vpop.permute.xlu0 %4081
    %4083 = vrot.lane.b32.xlu0 %v3873, 32
    %v4084 = vpop.permute.xlu0 %4083
    %4085 = vrot.lane.b32.xlu0 %v3874, 32
    %v4086 = vpop.permute.xlu0 %4085
    %4087 = vrot.lane.b32.xlu0 %v3875, 32
    %v4088 = vpop.permute.xlu0 %4087
    %4089 = vrot.lane.b32.xlu0 %v3876, 32
    %v4090 = vpop.permute.xlu0 %4089
    %4091 = vrot.lane.b32.xlu0 %v3877, 32
    %v4092 = vpop.permute.xlu0 %4091
    %4093 = vrot.lane.b32.xlu0 %v3878, 32
    %v4094 = vpop.permute.xlu0 %4093
    %4095 = vrot.lane.b32.xlu0 %v3879, 32
    %v4096 = vpop.permute.xlu0 %4095
    %4097 = vrot.lane.b32.xlu0 %v3880, 32
    %v4098 = vpop.permute.xlu0 %4097
    %4099 = vrot.lane.b32.xlu0 %v3881, 32
    %v4100 = vpop.permute.xlu0 %4099
    %4101 = vrot.lane.b32.xlu0 %v3882, 32
    %v4102 = vpop.permute.xlu0 %4101
    %4103 = vrot.lane.b32.xlu0 %v3883, 32
    %v4104 = vpop.permute.xlu0 %4103
    %4105 = vrot.lane.b32.xlu0 %v3884, 32
    %v4106 = vpop.permute.xlu0 %4105
    %4107 = vrot.lane.b32.xlu0 %v3885, 32
    %v4108 = vpop.permute.xlu0 %4107
    %4109 = vrot.lane.b32.xlu0 %v3886, 32
    %v4110 = vpop.permute.xlu0 %4109
    %4111 = vrot.lane.b32.xlu0 %v3887, 32
    %v4112 = vpop.permute.xlu0 %4111
    %4113 = vrot.lane.b32.xlu0 %v3888, 32
    %v4114 = vpop.permute.xlu0 %4113
    %4115 = vrot.lane.b32.xlu0 %v3889, 32
    %v4116 = vpop.permute.xlu0 %4115
    %4117 = vrot.lane.b32.xlu0 %v3890, 32
    %v4118 = vpop.permute.xlu0 %4117
    %4119 = vrot.lane.b32.xlu0 %v3891, 32
    %v4120 = vpop.permute.xlu0 %4119
    %4121 = vrot.lane.b32.xlu0 %v3892, 32
    %v4122 = vpop.permute.xlu0 %4121
    %4123 = vrot.lane.b32.xlu0 %v3893, 32
    %v4124 = vpop.permute.xlu0 %4123
    %4125 = vrot.lane.b32.xlu0 %v3894, 32
    %v4126 = vpop.permute.xlu0 %4125
    %4127 = vrot.lane.b32.xlu0 %v3895, 32
    %v4128 = vpop.permute.xlu0 %4127
    %4129 = vrot.lane.b32.xlu0 %v3896, 32
    %v4130 = vpop.permute.xlu0 %4129
    %4131 = vrot.lane.b32.xlu0 %v3897, 32
    %v4132 = vpop.permute.xlu0 %4131
    %4133 = vrot.lane.b32.xlu0 %v3898, 32
    %v4134 = vpop.permute.xlu0 %4133
    %4135 = vrot.lane.b32.xlu0 %v3899, 32
    %v4136 = vpop.permute.xlu0 %4135
    %4137 = vrot.lane.b32.xlu0 %v3900, 32
    %v4138 = vpop.permute.xlu0 %4137
    %4139 = vrot.lane.b32.xlu0 %v3901, 32
    %v4140 = vpop.permute.xlu0 %4139
    %4141 = vrot.lane.b32.xlu0 %v3902, 32
    %v4142 = vpop.permute.xlu0 %4141
    %4143 = vrot.lane.b32.xlu0 %v3903, 32
    %v4144 = vpop.permute.xlu0 %4143
    %4145 = vrot.lane.b32.xlu0 %v3904, 32
    %v4146 = vpop.permute.xlu0 %4145
    %4147 = vrot.lane.b32.xlu0 %v3905, 32
    %v4148 = vpop.permute.xlu0 %4147
    %vm4230 = vcmask 294144
    %4231 = vst.msk [vmem:[#allocation3] sm:$0xff] %vm4230, %v3988
    %4232 = vst.msk [vmem:[#allocation3 + $0x8] sm:$0xff] %vm4230, %v3990
    %4233 = vst.msk [vmem:[#allocation3 + $0x10] sm:$0xff] %vm4230, %v3992
    %4234 = vst.msk [vmem:[#allocation3 + $0x18] sm:$0xff] %vm4230, %v3994
    %4235 = vst.msk [vmem:[#allocation3 + $0x20] sm:$0xff] %vm4230, %v3996
    %4236 = vst.msk [vmem:[#allocation3 + $0x28] sm:$0xff] %vm4230, %v3998
    %4237 = vst.msk [vmem:[#allocation3 + $0x30] sm:$0xff] %vm4230, %v4000
    %4238 = vst.msk [vmem:[#allocation3 + $0x38] sm:$0xff] %vm4230, %v4002
    %4239 = vst.msk [vmem:[#allocation3 + $0x40] sm:$0xff] %vm4230, %v4004
    %4240 = vst.msk [vmem:[#allocation3 + $0x48] sm:$0xff] %vm4230, %v4006
    %4241 = vst.msk [vmem:[#allocation3 + $0x50] sm:$0xff] %vm4230, %v4008
    %4242 = vst.msk [vmem:[#allocation3 + $0x58] sm:$0xff] %vm4230, %v4010
    %4243 = vst.msk [vmem:[#allocation3 + $0x60] sm:$0xff] %vm4230, %v4012
    %4244 = vst.msk [vmem:[#allocation3 + $0x68] sm:$0xff] %vm4230, %v4014
    %4245 = vst.msk [vmem:[#allocation3 + $0x70] sm:$0xff] %vm4230, %v4016
    %4246 = vst.msk [vmem:[#allocation3 + $0x78] sm:$0xff] %vm4230, %v4018
    %4247 = vst.msk [vmem:[#allocation3 + $0x80] sm:$0xff] %vm4230, %v4020
    %4248 = vst.msk [vmem:[#allocation3 + $0x88] sm:$0xff] %vm4230, %v4022
    %4249 = vst.msk [vmem:[#allocation3 + $0x90] sm:$0xff] %vm4230, %v4024
    %4250 = vst.msk [vmem:[#allocation3 + $0x98] sm:$0xff] %vm4230, %v4026
    %4251 = vst.msk [vmem:[#allocation3 + $0xa0] sm:$0xff] %vm4230, %v4028
    %4252 = vst.msk [vmem:[#allocation3 + $0xa8] sm:$0xff] %vm4230, %v4030
    %4253 = vst.msk [vmem:[#allocation3 + $0xb0] sm:$0xff] %vm4230, %v4032
    %4254 = vst.msk [vmem:[#allocation3 + $0xb8] sm:$0xff] %vm4230, %v4034
    %4255 = vst.msk [vmem:[#allocation3 + $0xc0] sm:$0xff] %vm4230, %v4036
    %4256 = vst.msk [vmem:[#allocation3 + $0xc8] sm:$0xff] %vm4230, %v4038
    %4257 = vst.msk [vmem:[#allocation3 + $0xd0] sm:$0xff] %vm4230, %v4040
    %4258 = vst.msk [vmem:[#allocation3 + $0xd8] sm:$0xff] %vm4230, %v4042
    %4259 = vst.msk [vmem:[#allocation3 + $0xe0] sm:$0xff] %vm4230, %v4044
    %4260 = vst.msk [vmem:[#allocation3 + $0xe8] sm:$0xff] %vm4230, %v4046
    %4261 = vst.msk [vmem:[#allocation3 + $0xf0] sm:$0xff] %vm4230, %v4048
    %4262 = vst.msk [vmem:[#allocation3 + $0xf8] sm:$0xff] %vm4230, %v4050
    %4263 = vst.msk [vmem:[#allocation3 + $0x100] sm:$0xff] %vm4230, %v4052
    %4264 = vst.msk [vmem:[#allocation3 + $0x108] sm:$0xff] %vm4230, %v4054
    %4265 = vst.msk [vmem:[#allocation3 + $0x110] sm:$0xff] %vm4230, %v4056
    %4266 = vst.msk [vmem:[#allocation3 + $0x118] sm:$0xff] %vm4230, %v4058
    %4267 = vst.msk [vmem:[#allocation3 + $0x120] sm:$0xff] %vm4230, %v4060
    %4268 = vst.msk [vmem:[#allocation3 + $0x128] sm:$0xff] %vm4230, %v4062
    %4269 = vst.msk [vmem:[#allocation3 + $0x130] sm:$0xff] %vm4230, %v4064
    %4270 = vst.msk [vmem:[#allocation3 + $0x138] sm:$0xff] %vm4230, %v4066
    %4271 = vst.msk [vmem:[#allocation3 + $0x140] sm:$0xff] %vm4230, %v4068
    %4272 = vst.msk [vmem:[#allocation3 + $0x148] sm:$0xff] %vm4230, %v4070
    %4273 = vst.msk [vmem:[#allocation3 + $0x150] sm:$0xff] %vm4230, %v4072
    %4274 = vst.msk [vmem:[#allocation3 + $0x158] sm:$0xff] %vm4230, %v4074
    %4275 = vst.msk [vmem:[#allocation3 + $0x160] sm:$0xff] %vm4230, %v4076
    %4276 = vst.msk [vmem:[#allocation3 + $0x168] sm:$0xff] %vm4230, %v4078
    %4277 = vst.msk [vmem:[#allocation3 + $0x170] sm:$0xff] %vm4230, %v4080
    %4278 = vst.msk [vmem:[#allocation3 + $0x178] sm:$0xff] %vm4230, %v4082
    %4279 = vst.msk [vmem:[#allocation3 + $0x180] sm:$0xff] %vm4230, %v4084
    %4280 = vst.msk [vmem:[#allocation3 + $0x188] sm:$0xff] %vm4230, %v4086
    %4281 = vst.msk [vmem:[#allocation3 + $0x190] sm:$0xff] %vm4230, %v4088
    %4282 = vst.msk [vmem:[#allocation3 + $0x198] sm:$0xff] %vm4230, %v4090
    %4283 = vst.msk [vmem:[#allocation3 + $0x1a0] sm:$0xff] %vm4230, %v4092
    %4284 = vst.msk [vmem:[#allocation3 + $0x1a8] sm:$0xff] %vm4230, %v4094
    %4285 = vst.msk [vmem:[#allocation3 + $0x1b0] sm:$0xff] %vm4230, %v4096
    %4286 = vst.msk [vmem:[#allocation3 + $0x1b8] sm:$0xff] %vm4230, %v4098
    %4287 = vst.msk [vmem:[#allocation3 + $0x1c0] sm:$0xff] %vm4230, %v4100
    %4288 = vst.msk [vmem:[#allocation3 + $0x1c8] sm:$0xff] %vm4230, %v4102
    %4289 = vst.msk [vmem:[#allocation3 + $0x1d0] sm:$0xff] %vm4230, %v4104
    %4290 = vst.msk [vmem:[#allocation3 + $0x1d8] sm:$0xff] %vm4230, %v4106
    %4291 = vst.msk [vmem:[#allocation3 + $0x1e0] sm:$0xff] %vm4230, %v4108
    %4292 = vst.msk [vmem:[#allocation3 + $0x1e8] sm:$0xff] %vm4230, %v4110
    %4293 = vst.msk [vmem:[#allocation3 + $0x1f0] sm:$0xff] %vm4230, %v4112
    %4294 = vst.msk [vmem:[#allocation3 + $0x1f8] sm:$0xff] %vm4230, %v4114
    %4295 = vst.msk [vmem:[#allocation3 + $0x200] sm:$0xff] %vm4230, %v4116
    %4296 = vst.msk [vmem:[#allocation3 + $0x208] sm:$0xff] %vm4230, %v4118
    %4297 = vst.msk [vmem:[#allocation3 + $0x210] sm:$0xff] %vm4230, %v4120
    %4298 = vst.msk [vmem:[#allocation3 + $0x218] sm:$0xff] %vm4230, %v4122
    %4299 = vst.msk [vmem:[#allocation3 + $0x220] sm:$0xff] %vm4230, %v4124
    %4300 = vst.msk [vmem:[#allocation3 + $0x228] sm:$0xff] %vm4230, %v4126
    %4301 = vst.msk [vmem:[#allocation3 + $0x230] sm:$0xff] %vm4230, %v4128
    %4302 = vst.msk [vmem:[#allocation3 + $0x238] sm:$0xff] %vm4230, %v4130
    %4303 = vst.msk [vmem:[#allocation3 + $0x240] sm:$0xff] %vm4230, %v4132
    %4304 = vst.msk [vmem:[#allocation3 + $0x248] sm:$0xff] %vm4230, %v4134
    %4305 = vst.msk [vmem:[#allocation3 + $0x250] sm:$0xff] %vm4230, %v4136
    %4306 = vst.msk [vmem:[#allocation3 + $0x258] sm:$0xff] %vm4230, %v4138
    %4307 = vst.msk [vmem:[#allocation3 + $0x260] sm:$0xff] %vm4230, %v4140
    %4308 = vst.msk [vmem:[#allocation3 + $0x268] sm:$0xff] %vm4230, %v4142
    %4309 = vst.msk [vmem:[#allocation3 + $0x270] sm:$0xff] %vm4230, %v4144
    %4310 = vst.msk [vmem:[#allocation3 + $0x278] sm:$0xff] %vm4230, %v4146
    %4311 = vst.msk [vmem:[#allocation3 + $0x280] sm:$0xff] %vm4230, %v4148
    %v4312 = vld [vmem:[#allocation3] sm:$0xff]
    %v4313 = vld [vmem:[#allocation3 + $0x8] sm:$0xff]
    %v4314 = vld [vmem:[#allocation3 + $0x10] sm:$0xff]
    %v4315 = vld [vmem:[#allocation3 + $0x18] sm:$0xff]
    %v4316 = vld [vmem:[#allocation3 + $0x20] sm:$0xff]
    %v4317 = vld [vmem:[#allocation3 + $0x28] sm:$0xff]
    %v4318 = vld [vmem:[#allocation3 + $0x30] sm:$0xff]
    %v4319 = vld [vmem:[#allocation3 + $0x38] sm:$0xff]
    %v4320 = vld [vmem:[#allocation3 + $0x40] sm:$0xff]
    %v4321 = vld [vmem:[#allocation3 + $0x48] sm:$0xff]
    %v4322 = vld [vmem:[#allocation3 + $0x50] sm:$0xff]
    %v4323 = vld [vmem:[#allocation3 + $0x58] sm:$0xff]
    %v4324 = vld [vmem:[#allocation3 + $0x60] sm:$0xff]
    %v4325 = vld [vmem:[#allocation3 + $0x68] sm:$0xff]
    %v4326 = vld [vmem:[#allocation3 + $0x70] sm:$0xff]
    %v4327 = vld [vmem:[#allocation3 + $0x78] sm:$0xff]
    %v4328 = vld [vmem:[#allocation3 + $0x80] sm:$0xff]
    %v4329 = vld [vmem:[#allocation3 + $0x88] sm:$0xff]
    %v4330 = vld [vmem:[#allocation3 + $0x90] sm:$0xff]
    %v4331 = vld [vmem:[#allocation3 + $0x98] sm:$0xff]
    %v4332 = vld [vmem:[#allocation3 + $0xa0] sm:$0xff]
    %v4333 = vld [vmem:[#allocation3 + $0xa8] sm:$0xff]
    %v4334 = vld [vmem:[#allocation3 + $0xb0] sm:$0xff]
    %v4335 = vld [vmem:[#allocation3 + $0xb8] sm:$0xff]
    %v4336 = vld [vmem:[#allocation3 + $0xc0] sm:$0xff]
    %v4337 = vld [vmem:[#allocation3 + $0xc8] sm:$0xff]
    %v4338 = vld [vmem:[#allocation3 + $0xd0] sm:$0xff]
    %v4339 = vld [vmem:[#allocation3 + $0xd8] sm:$0xff]
    %v4340 = vld [vmem:[#allocation3 + $0xe0] sm:$0xff]
    %v4341 = vld [vmem:[#allocation3 + $0xe8] sm:$0xff]
    %v4342 = vld [vmem:[#allocation3 + $0xf0] sm:$0xff]
    %v4343 = vld [vmem:[#allocation3 + $0xf8] sm:$0xff]
    %v4344 = vld [vmem:[#allocation3 + $0x100] sm:$0xff]
    %v4345 = vld [vmem:[#allocation3 + $0x108] sm:$0xff]
    %v4346 = vld [vmem:[#allocation3 + $0x110] sm:$0xff]
    %v4347 = vld [vmem:[#allocation3 + $0x118] sm:$0xff]
    %v4348 = vld [vmem:[#allocation3 + $0x120] sm:$0xff]
    %v4349 = vld [vmem:[#allocation3 + $0x128] sm:$0xff]
    %v4350 = vld [vmem:[#allocation3 + $0x130] sm:$0xff]
    %v4351 = vld [vmem:[#allocation3 + $0x138] sm:$0xff]
    %v4352 = vld [vmem:[#allocation3 + $0x140] sm:$0xff]
    %v4353 = vld [vmem:[#allocation3 + $0x148] sm:$0xff]
    %v4354 = vld [vmem:[#allocation3 + $0x150] sm:$0xff]
    %v4355 = vld [vmem:[#allocation3 + $0x158] sm:$0xff]
    %v4356 = vld [vmem:[#allocation3 + $0x160] sm:$0xff]
    %v4357 = vld [vmem:[#allocation3 + $0x168] sm:$0xff]
    %v4358 = vld [vmem:[#allocation3 + $0x170] sm:$0xff]
    %v4359 = vld [vmem:[#allocation3 + $0x178] sm:$0xff]
    %v4360 = vld [vmem:[#allocation3 + $0x180] sm:$0xff]
    %v4361 = vld [vmem:[#allocation3 + $0x188] sm:$0xff]
    %v4362 = vld [vmem:[#allocation3 + $0x190] sm:$0xff]
    %v4363 = vld [vmem:[#allocation3 + $0x198] sm:$0xff]
    %v4364 = vld [vmem:[#allocation3 + $0x1a0] sm:$0xff]
    %v4365 = vld [vmem:[#allocation3 + $0x1a8] sm:$0xff]
    %v4366 = vld [vmem:[#allocation3 + $0x1b0] sm:$0xff]
    %v4367 = vld [vmem:[#allocation3 + $0x1b8] sm:$0xff]
    %v4368 = vld [vmem:[#allocation3 + $0x1c0] sm:$0xff]
    %v4369 = vld [vmem:[#allocation3 + $0x1c8] sm:$0xff]
    %v4370 = vld [vmem:[#allocation3 + $0x1d0] sm:$0xff]
    %v4371 = vld [vmem:[#allocation3 + $0x1d8] sm:$0xff]
    %v4372 = vld [vmem:[#allocation3 + $0x1e0] sm:$0xff]
    %v4373 = vld [vmem:[#allocation3 + $0x1e8] sm:$0xff]
    %v4374 = vld [vmem:[#allocation3 + $0x1f0] sm:$0xff]
    %v4375 = vld [vmem:[#allocation3 + $0x1f8] sm:$0xff]
    %v4376 = vld [vmem:[#allocation3 + $0x200] sm:$0xff]
    %v4377 = vld [vmem:[#allocation3 + $0x208] sm:$0xff]
    %v4378 = vld [vmem:[#allocation3 + $0x210] sm:$0xff]
    %v4379 = vld [vmem:[#allocation3 + $0x218] sm:$0xff]
    %v4380 = vld [vmem:[#allocation3 + $0x220] sm:$0xff]
    %v4381 = vld [vmem:[#allocation3 + $0x228] sm:$0xff]
    %v4382 = vld [vmem:[#allocation3 + $0x230] sm:$0xff]
    %v4383 = vld [vmem:[#allocation3 + $0x238] sm:$0xff]
    %v4384 = vld [vmem:[#allocation3 + $0x240] sm:$0xff]
    %v4385 = vld [vmem:[#allocation3 + $0x248] sm:$0xff]
    %v4386 = vld [vmem:[#allocation3 + $0x250] sm:$0xff]
    %v4387 = vld [vmem:[#allocation3 + $0x258] sm:$0xff]
    %v4388 = vld [vmem:[#allocation3 + $0x260] sm:$0xff]
    %v4389 = vld [vmem:[#allocation3 + $0x268] sm:$0xff]
    %v4390 = vld [vmem:[#allocation3 + $0x270] sm:$0xff]
    %v4391 = vld [vmem:[#allocation3 + $0x278] sm:$0xff]
    %v4392 = vld [vmem:[#allocation3 + $0x280] sm:$0xff]
    %v4393 = vld [vmem:[%s1] sm:$0xff]
    %v4394 = vld [vmem:[%s1 + $0x8] sm:$0xff]
    %v4395 = vld [vmem:[%s1 + $0x10] sm:$0xff]
    %v4396 = vld [vmem:[%s1 + $0x18] sm:$0xff]
    %v4397 = vld [vmem:[%s1 + $0x20] sm:$0xf]
    %v4398 = vld [vmem:[%s2] sm:$0x1]
    %v4400 = vperm.slane %v4398, 0
    %vm4402 = vcmask 293888
    %v4404 = vsel %vm4402, %v4312, 0
    %v4407 = vsel %vm4402, %v4313, 0
    %v4410 = vsel %vm4402, %v4314, 0
    %v4413 = vsel %vm4402, %v4315, 0
    %v4416 = vsel %vm4402, %v4316, 0
    %v4419 = vsel %vm4402, %v4317, 0
    %v4422 = vsel %vm4402, %v4318, 0
    %v4425 = vsel %vm4402, %v4319, 0
    %v4428 = vsel %vm4402, %v4320, 0
    %v4431 = vsel %vm4402, %v4321, 0
    %v4434 = vsel %vm4402, %v4322, 0
    %v4437 = vsel %vm4402, %v4323, 0
    %v4440 = vsel %vm4402, %v4324, 0
    %v4443 = vsel %vm4402, %v4325, 0
    %v4446 = vsel %vm4402, %v4326, 0
    %v4449 = vsel %vm4402, %v4327, 0
    %v4452 = vsel %vm4402, %v4328, 0
    %v4455 = vsel %vm4402, %v4329, 0
    %v4458 = vsel %vm4402, %v4330, 0
    %v4461 = vsel %vm4402, %v4331, 0
    %v4464 = vsel %vm4402, %v4332, 0
    %v4467 = vsel %vm4402, %v4333, 0
    %v4470 = vsel %vm4402, %v4334, 0
    %v4473 = vsel %vm4402, %v4335, 0
    %v4476 = vsel %vm4402, %v4336, 0
    %v4479 = vsel %vm4402, %v4337, 0
    %v4482 = vsel %vm4402, %v4338, 0
    %v4485 = vsel %vm4402, %v4339, 0
    %v4488 = vsel %vm4402, %v4340, 0
    %v4491 = vsel %vm4402, %v4341, 0
    %v4494 = vsel %vm4402, %v4342, 0
    %v4497 = vsel %vm4402, %v4343, 0
    %v4500 = vsel %vm4402, %v4344, 0
    %v4503 = vsel %vm4402, %v4345, 0
    %v4506 = vsel %vm4402, %v4346, 0
    %v4509 = vsel %vm4402, %v4347, 0
    %v4512 = vsel %vm4402, %v4348, 0
    %v4515 = vsel %vm4402, %v4349, 0
    %v4518 = vsel %vm4402, %v4350, 0
    %v4521 = vsel %vm4402, %v4351, 0
    %v4524 = vsel %vm4402, %v4352, 0
    %v4527 = vsel %vm4402, %v4353, 0
    %v4530 = vsel %vm4402, %v4354, 0
    %v4533 = vsel %vm4402, %v4355, 0
    %v4536 = vsel %vm4402, %v4356, 0
    %v4539 = vsel %vm4402, %v4357, 0
    %v4542 = vsel %vm4402, %v4358, 0
    %v4545 = vsel %vm4402, %v4359, 0
    %v4548 = vsel %vm4402, %v4360, 0
    %v4551 = vsel %vm4402, %v4361, 0
    %v4554 = vsel %vm4402, %v4362, 0
    %v4557 = vsel %vm4402, %v4363, 0
    %v4560 = vsel %vm4402, %v4364, 0
    %v4563 = vsel %vm4402, %v4365, 0
    %v4566 = vsel %vm4402, %v4366, 0
    %v4569 = vsel %vm4402, %v4367, 0
    %v4572 = vsel %vm4402, %v4368, 0
    %v4575 = vsel %vm4402, %v4369, 0
    %v4578 = vsel %vm4402, %v4370, 0
    %v4581 = vsel %vm4402, %v4371, 0
    %v4584 = vsel %vm4402, %v4372, 0
    %v4587 = vsel %vm4402, %v4373, 0
    %v4590 = vsel %vm4402, %v4374, 0
    %v4593 = vsel %vm4402, %v4375, 0
    %v4596 = vsel %vm4402, %v4376, 0
    %v4599 = vsel %vm4402, %v4377, 0
    %v4602 = vsel %vm4402, %v4378, 0
    %v4605 = vsel %vm4402, %v4379, 0
    %v4608 = vsel %vm4402, %v4380, 0
    %v4611 = vsel %vm4402, %v4381, 0
    %v4614 = vsel %vm4402, %v4382, 0
    %v4617 = vsel %vm4402, %v4383, 0
    %v4620 = vsel %vm4402, %v4384, 0
    %v4623 = vsel %vm4402, %v4385, 0
    %v4626 = vsel %vm4402, %v4386, 0
    %v4629 = vsel %vm4402, %v4387, 0
    %v4632 = vsel %vm4402, %v4388, 0
    %v4635 = vsel %vm4402, %v4389, 0
    %v4638 = vsel %vm4402, %v4390, 0
    %v4641 = vsel %vm4402, %v4391, 0
    %v4644 = vsel %vm4402, %v4392, 0
    %vm4646 = vcmask 1043456
    %v4648 = vsel %vm4646, %v4397, 0
    %4650 = vmatpush.msra.mxu0 0.0
    %4651 = vmatpush.msra.mxu0 0.0
    %4652 = vmatpush.msra.mxu0 0.0
    %4653 = vmatpush.msra.mxu0 0.0
    %4654 = vmatpush.msra.mxu0 0.0
    %4655 = vmatpush.msra.mxu0 0.0
    %4656 = vmatpush.msra.mxu0 0.0
    %4657 = vmatpush.msra.mxu0 0.0
    %4658 = vmatpush.msra.mxu0 0.0
    %4659 = vmatpush.msra.mxu0 0.0
    %4660 = vmatpush.msra.mxu0 0.0
    %4661 = vmatpush.msra.mxu0 %v4648
    %4662 = vmatpush.msra.mxu0 %v4396
    %4663 = vmatpush.msra.mxu0 %v4395
    %4664 = vmatpush.msra.mxu0 %v4394
    %4665 = vmatpush.msra.mxu0 %v4393
    %4666 = vmatmul.f32.gmra.mxu0 %v4404
    %v4667 = vpop.f32.mrf.mxu0
    %v4668 = vadd.f32 %v4400, %v4667
    %4669 = vmatmul.f32.gmra.mxu0 %v4407
    %v4670 = vpop.f32.mrf.mxu0
    %v4671 = vadd.f32 %v4400, %v4670
    %4672 = vmatmul.f32.gmra.mxu0 %v4410
    %v4673 = vpop.f32.mrf.mxu0
    %v4674 = vadd.f32 %v4400, %v4673
    %4675 = vmatmul.f32.gmra.mxu0 %v4413
    %v4676 = vpop.f32.mrf.mxu0
    %v4677 = vadd.f32 %v4400, %v4676
    %4678 = vmatmul.f32.gmra.mxu0 %v4416
    %v4679 = vpop.f32.mrf.mxu0
    %v4680 = vadd.f32 %v4400, %v4679
    %4681 = vmatmul.f32.gmra.mxu0 %v4419
    %v4682 = vpop.f32.mrf.mxu0
    %v4683 = vadd.f32 %v4400, %v4682
    %4684 = vmatmul.f32.gmra.mxu0 %v4422
    %v4685 = vpop.f32.mrf.mxu0
    %v4686 = vadd.f32 %v4400, %v4685
    %4687 = vmatmul.f32.gmra.mxu0 %v4425
    %v4688 = vpop.f32.mrf.mxu0
    %v4689 = vadd.f32 %v4400, %v4688
    %4690 = vmatmul.f32.gmra.mxu0 %v4428
    %v4691 = vpop.f32.mrf.mxu0
    %v4692 = vadd.f32 %v4400, %v4691
    %4693 = vmatmul.f32.gmra.mxu0 %v4431
    %v4694 = vpop.f32.mrf.mxu0
    %v4695 = vadd.f32 %v4400, %v4694
    %4696 = vmatmul.f32.gmra.mxu0 %v4434
    %v4697 = vpop.f32.mrf.mxu0
    %v4698 = vadd.f32 %v4400, %v4697
    %4699 = vmatmul.f32.gmra.mxu0 %v4437
    %v4700 = vpop.f32.mrf.mxu0
    %v4701 = vadd.f32 %v4400, %v4700
    %4702 = vmatmul.f32.gmra.mxu0 %v4440
    %v4703 = vpop.f32.mrf.mxu0
    %v4704 = vadd.f32 %v4400, %v4703
    %4705 = vmatmul.f32.gmra.mxu0 %v4443
    %v4706 = vpop.f32.mrf.mxu0
    %v4707 = vadd.f32 %v4400, %v4706
    %4708 = vmatmul.f32.gmra.mxu0 %v4446
    %v4709 = vpop.f32.mrf.mxu0
    %v4710 = vadd.f32 %v4400, %v4709
    %4711 = vmatmul.f32.gmra.mxu0 %v4449
    %v4712 = vpop.f32.mrf.mxu0
    %v4713 = vadd.f32 %v4400, %v4712
    %4714 = vmatmul.f32.gmra.mxu0 %v4452
    %v4715 = vpop.f32.mrf.mxu0
    %v4716 = vadd.f32 %v4400, %v4715
    %4717 = vmatmul.f32.gmra.mxu0 %v4455
    %v4718 = vpop.f32.mrf.mxu0
    %v4719 = vadd.f32 %v4400, %v4718
    %4720 = vmatmul.f32.gmra.mxu0 %v4458
    %v4721 = vpop.f32.mrf.mxu0
    %v4722 = vadd.f32 %v4400, %v4721
    %4723 = vmatmul.f32.gmra.mxu0 %v4461
    %v4724 = vpop.f32.mrf.mxu0
    %v4725 = vadd.f32 %v4400, %v4724
    %4726 = vmatmul.f32.gmra.mxu0 %v4464
    %v4727 = vpop.f32.mrf.mxu0
    %v4728 = vadd.f32 %v4400, %v4727
    %4729 = vmatmul.f32.gmra.mxu0 %v4467
    %v4730 = vpop.f32.mrf.mxu0
    %v4731 = vadd.f32 %v4400, %v4730
    %4732 = vmatmul.f32.gmra.mxu0 %v4470
    %v4733 = vpop.f32.mrf.mxu0
    %v4734 = vadd.f32 %v4400, %v4733
    %4735 = vmatmul.f32.gmra.mxu0 %v4473
    %v4736 = vpop.f32.mrf.mxu0
    %v4737 = vadd.f32 %v4400, %v4736
    %4738 = vmatmul.f32.gmra.mxu0 %v4476
    %v4739 = vpop.f32.mrf.mxu0
    %v4740 = vadd.f32 %v4400, %v4739
    %4741 = vmatmul.f32.gmra.mxu0 %v4479
    %v4742 = vpop.f32.mrf.mxu0
    %v4743 = vadd.f32 %v4400, %v4742
    %4744 = vmatmul.f32.gmra.mxu0 %v4482
    %v4745 = vpop.f32.mrf.mxu0
    %v4746 = vadd.f32 %v4400, %v4745
    %4747 = vmatmul.f32.gmra.mxu0 %v4485
    %v4748 = vpop.f32.mrf.mxu0
    %v4749 = vadd.f32 %v4400, %v4748
    %4750 = vmatmul.f32.gmra.mxu0 %v4488
    %v4751 = vpop.f32.mrf.mxu0
    %v4752 = vadd.f32 %v4400, %v4751
    %4753 = vmatmul.f32.gmra.mxu0 %v4491
    %v4754 = vpop.f32.mrf.mxu0
    %v4755 = vadd.f32 %v4400, %v4754
    %4756 = vmatmul.f32.gmra.mxu0 %v4494
    %v4757 = vpop.f32.mrf.mxu0
    %v4758 = vadd.f32 %v4400, %v4757
    %4759 = vmatmul.f32.gmra.mxu0 %v4497
    %v4760 = vpop.f32.mrf.mxu0
    %v4761 = vadd.f32 %v4400, %v4760
    %4762 = vmatmul.f32.gmra.mxu0 %v4500
    %v4763 = vpop.f32.mrf.mxu0
    %v4764 = vadd.f32 %v4400, %v4763
    %4765 = vmatmul.f32.gmra.mxu0 %v4503
    %v4766 = vpop.f32.mrf.mxu0
    %v4767 = vadd.f32 %v4400, %v4766
    %4768 = vmatmul.f32.gmra.mxu0 %v4506
    %v4769 = vpop.f32.mrf.mxu0
    %v4770 = vadd.f32 %v4400, %v4769
    %4771 = vmatmul.f32.gmra.mxu0 %v4509
    %v4772 = vpop.f32.mrf.mxu0
    %v4773 = vadd.f32 %v4400, %v4772
    %4774 = vmatmul.f32.gmra.mxu0 %v4512
    %v4775 = vpop.f32.mrf.mxu0
    %v4776 = vadd.f32 %v4400, %v4775
    %4777 = vmatmul.f32.gmra.mxu0 %v4515
    %v4778 = vpop.f32.mrf.mxu0
    %v4779 = vadd.f32 %v4400, %v4778
    %4780 = vmatmul.f32.gmra.mxu0 %v4518
    %v4781 = vpop.f32.mrf.mxu0
    %v4782 = vadd.f32 %v4400, %v4781
    %4783 = vmatmul.f32.gmra.mxu0 %v4521
    %v4784 = vpop.f32.mrf.mxu0
    %v4785 = vadd.f32 %v4400, %v4784
    %4786 = vmatmul.f32.gmra.mxu0 %v4524
    %v4787 = vpop.f32.mrf.mxu0
    %v4788 = vadd.f32 %v4400, %v4787
    %4789 = vmatmul.f32.gmra.mxu0 %v4527
    %v4790 = vpop.f32.mrf.mxu0
    %v4791 = vadd.f32 %v4400, %v4790
    %4792 = vmatmul.f32.gmra.mxu0 %v4530
    %v4793 = vpop.f32.mrf.mxu0
    %v4794 = vadd.f32 %v4400, %v4793
    %4795 = vmatmul.f32.gmra.mxu0 %v4533
    %v4796 = vpop.f32.mrf.mxu0
    %v4797 = vadd.f32 %v4400, %v4796
    %4798 = vmatmul.f32.gmra.mxu0 %v4536
    %v4799 = vpop.f32.mrf.mxu0
    %v4800 = vadd.f32 %v4400, %v4799
    %4801 = vmatmul.f32.gmra.mxu0 %v4539
    %v4802 = vpop.f32.mrf.mxu0
    %v4803 = vadd.f32 %v4400, %v4802
    %4804 = vmatmul.f32.gmra.mxu0 %v4542
    %v4805 = vpop.f32.mrf.mxu0
    %v4806 = vadd.f32 %v4400, %v4805
    %4807 = vmatmul.f32.gmra.mxu0 %v4545
    %v4808 = vpop.f32.mrf.mxu0
    %v4809 = vadd.f32 %v4400, %v4808
    %4810 = vmatmul.f32.gmra.mxu0 %v4548
    %v4811 = vpop.f32.mrf.mxu0
    %v4812 = vadd.f32 %v4400, %v4811
    %4813 = vmatmul.f32.gmra.mxu0 %v4551
    %v4814 = vpop.f32.mrf.mxu0
    %v4815 = vadd.f32 %v4400, %v4814
    %4816 = vmatmul.f32.gmra.mxu0 %v4554
    %v4817 = vpop.f32.mrf.mxu0
    %v4818 = vadd.f32 %v4400, %v4817
    %4819 = vmatmul.f32.gmra.mxu0 %v4557
    %v4820 = vpop.f32.mrf.mxu0
    %v4821 = vadd.f32 %v4400, %v4820
    %4822 = vmatmul.f32.gmra.mxu0 %v4560
    %v4823 = vpop.f32.mrf.mxu0
    %v4824 = vadd.f32 %v4400, %v4823
    %4825 = vmatmul.f32.gmra.mxu0 %v4563
    %v4826 = vpop.f32.mrf.mxu0
    %v4827 = vadd.f32 %v4400, %v4826
    %4828 = vmatmul.f32.gmra.mxu0 %v4566
    %v4829 = vpop.f32.mrf.mxu0
    %v4830 = vadd.f32 %v4400, %v4829
    %4831 = vmatmul.f32.gmra.mxu0 %v4569
    %v4832 = vpop.f32.mrf.mxu0
    %v4833 = vadd.f32 %v4400, %v4832
    %4834 = vmatmul.f32.gmra.mxu0 %v4572
    %v4835 = vpop.f32.mrf.mxu0
    %v4836 = vadd.f32 %v4400, %v4835
    %4837 = vmatmul.f32.gmra.mxu0 %v4575
    %v4838 = vpop.f32.mrf.mxu0
    %v4839 = vadd.f32 %v4400, %v4838
    %4840 = vmatmul.f32.gmra.mxu0 %v4578
    %v4841 = vpop.f32.mrf.mxu0
    %v4842 = vadd.f32 %v4400, %v4841
    %4843 = vmatmul.f32.gmra.mxu0 %v4581
    %v4844 = vpop.f32.mrf.mxu0
    %v4845 = vadd.f32 %v4400, %v4844
    %4846 = vmatmul.f32.gmra.mxu0 %v4584
    %v4847 = vpop.f32.mrf.mxu0
    %v4848 = vadd.f32 %v4400, %v4847
    %4849 = vmatmul.f32.gmra.mxu0 %v4587
    %v4850 = vpop.f32.mrf.mxu0
    %v4851 = vadd.f32 %v4400, %v4850
    %4852 = vmatmul.f32.gmra.mxu0 %v4590
    %v4853 = vpop.f32.mrf.mxu0
    %v4854 = vadd.f32 %v4400, %v4853
    %4855 = vmatmul.f32.gmra.mxu0 %v4593
    %v4856 = vpop.f32.mrf.mxu0
    %v4857 = vadd.f32 %v4400, %v4856
    %4858 = vmatmul.f32.gmra.mxu0 %v4596
    %v4859 = vpop.f32.mrf.mxu0
    %v4860 = vadd.f32 %v4400, %v4859
    %4861 = vmatmul.f32.gmra.mxu0 %v4599
    %v4862 = vpop.f32.mrf.mxu0
    %v4863 = vadd.f32 %v4400, %v4862
    %4864 = vmatmul.f32.gmra.mxu0 %v4602
    %v4865 = vpop.f32.mrf.mxu0
    %v4866 = vadd.f32 %v4400, %v4865
    %4867 = vmatmul.f32.gmra.mxu0 %v4605
    %v4868 = vpop.f32.mrf.mxu0
    %v4869 = vadd.f32 %v4400, %v4868
    %4870 = vmatmul.f32.gmra.mxu0 %v4608
    %v4871 = vpop.f32.mrf.mxu0
    %v4872 = vadd.f32 %v4400, %v4871
    %4873 = vmatmul.f32.gmra.mxu0 %v4611
    %v4874 = vpop.f32.mrf.mxu0
    %v4875 = vadd.f32 %v4400, %v4874
    %4876 = vmatmul.f32.gmra.mxu0 %v4614
    %v4877 = vpop.f32.mrf.mxu0
    %v4878 = vadd.f32 %v4400, %v4877
    %4879 = vmatmul.f32.gmra.mxu0 %v4617
    %v4880 = vpop.f32.mrf.mxu0
    %v4881 = vadd.f32 %v4400, %v4880
    %4882 = vmatmul.f32.gmra.mxu0 %v4620
    %v4883 = vpop.f32.mrf.mxu0
    %v4884 = vadd.f32 %v4400, %v4883
    %4885 = vmatmul.f32.gmra.mxu0 %v4623
    %v4886 = vpop.f32.mrf.mxu0
    %v4887 = vadd.f32 %v4400, %v4886
    %4888 = vmatmul.f32.gmra.mxu0 %v4626
    %v4889 = vpop.f32.mrf.mxu0
    %v4890 = vadd.f32 %v4400, %v4889
    %4891 = vmatmul.f32.gmra.mxu0 %v4629
    %v4892 = vpop.f32.mrf.mxu0
    %v4893 = vadd.f32 %v4400, %v4892
    %4894 = vmatmul.f32.gmra.mxu0 %v4632
    %v4895 = vpop.f32.mrf.mxu0
    %v4896 = vadd.f32 %v4400, %v4895
    %4897 = vmatmul.f32.gmra.mxu0 %v4635
    %v4898 = vpop.f32.mrf.mxu0
    %v4899 = vadd.f32 %v4400, %v4898
    %4900 = vmatmul.f32.gmra.mxu0 %v4638
    %v4901 = vpop.f32.mrf.mxu0
    %v4902 = vadd.f32 %v4400, %v4901
    %4903 = vmatmul.f32.gmra.mxu0 %v4641
    %v4904 = vpop.f32.mrf.mxu0
    %v4905 = vadd.f32 %v4400, %v4904
    %4906 = vmatmul.f32.gmra.mxu0 %v4644
    %v4907 = vpop.f32.mrf.mxu0
    %v4908 = vadd.f32 %v4400, %v4907
    %4909 = vdwg.mxu0
    %v4910 = vmax.f32 %v4668, 0.0
    %v4911 = vmax.f32 %v4671, 0.0
    %v4912 = vmax.f32 %v4674, 0.0
    %v4913 = vmax.f32 %v4677, 0.0
    %v4914 = vmax.f32 %v4680, 0.0
    %v4915 = vmax.f32 %v4683, 0.0
    %v4916 = vmax.f32 %v4686, 0.0
    %v4917 = vmax.f32 %v4689, 0.0
    %v4918 = vmax.f32 %v4692, 0.0
    %v4919 = vmax.f32 %v4695, 0.0
    %v4920 = vmax.f32 %v4698, 0.0
    %v4921 = vmax.f32 %v4701, 0.0
    %v4922 = vmax.f32 %v4704, 0.0
    %v4923 = vmax.f32 %v4707, 0.0
    %v4924 = vmax.f32 %v4710, 0.0
    %v4925 = vmax.f32 %v4713, 0.0
    %v4926 = vmax.f32 %v4716, 0.0
    %v4927 = vmax.f32 %v4719, 0.0
    %v4928 = vmax.f32 %v4722, 0.0
    %v4929 = vmax.f32 %v4725, 0.0
    %v4930 = vmax.f32 %v4728, 0.0
    %v4931 = vmax.f32 %v4731, 0.0
    %v4932 = vmax.f32 %v4734, 0.0
    %v4933 = vmax.f32 %v4737, 0.0
    %v4934 = vmax.f32 %v4740, 0.0
    %v4935 = vmax.f32 %v4743, 0.0
    %v4936 = vmax.f32 %v4746, 0.0
    %v4937 = vmax.f32 %v4749, 0.0
    %v4938 = vmax.f32 %v4752, 0.0
    %v4939 = vmax.f32 %v4755, 0.0
    %v4940 = vmax.f32 %v4758, 0.0
    %v4941 = vmax.f32 %v4761, 0.0
    %v4942 = vmax.f32 %v4764, 0.0
    %v4943 = vmax.f32 %v4767, 0.0
    %v4944 = vmax.f32 %v4770, 0.0
    %v4945 = vmax.f32 %v4773, 0.0
    %v4946 = vmax.f32 %v4776, 0.0
    %v4947 = vmax.f32 %v4779, 0.0
    %v4948 = vmax.f32 %v4782, 0.0
    %v4949 = vmax.f32 %v4785, 0.0
    %v4950 = vmax.f32 %v4788, 0.0
    %v4951 = vmax.f32 %v4791, 0.0
    %v4952 = vmax.f32 %v4794, 0.0
    %v4953 = vmax.f32 %v4797, 0.0
    %v4954 = vmax.f32 %v4800, 0.0
    %v4955 = vmax.f32 %v4803, 0.0
    %v4956 = vmax.f32 %v4806, 0.0
    %v4957 = vmax.f32 %v4809, 0.0
    %v4958 = vmax.f32 %v4812, 0.0
    %v4959 = vmax.f32 %v4815, 0.0
    %v4960 = vmax.f32 %v4818, 0.0
    %v4961 = vmax.f32 %v4821, 0.0
    %v4962 = vmax.f32 %v4824, 0.0
    %v4963 = vmax.f32 %v4827, 0.0
    %v4964 = vmax.f32 %v4830, 0.0
    %v4965 = vmax.f32 %v4833, 0.0
    %v4966 = vmax.f32 %v4836, 0.0
    %v4967 = vmax.f32 %v4839, 0.0
    %v4968 = vmax.f32 %v4842, 0.0
    %v4969 = vmax.f32 %v4845, 0.0
    %v4970 = vmax.f32 %v4848, 0.0
    %v4971 = vmax.f32 %v4851, 0.0
    %v4972 = vmax.f32 %v4854, 0.0
    %v4973 = vmax.f32 %v4857, 0.0
    %v4974 = vmax.f32 %v4860, 0.0
    %v4975 = vmax.f32 %v4863, 0.0
    %v4976 = vmax.f32 %v4866, 0.0
    %v4977 = vmax.f32 %v4869, 0.0
    %v4978 = vmax.f32 %v4872, 0.0
    %v4979 = vmax.f32 %v4875, 0.0
    %v4980 = vmax.f32 %v4878, 0.0
    %v4981 = vmax.f32 %v4881, 0.0
    %v4982 = vmax.f32 %v4884, 0.0
    %v4983 = vmax.f32 %v4887, 0.0
    %v4984 = vmax.f32 %v4890, 0.0
    %v4985 = vmax.f32 %v4893, 0.0
    %v4986 = vmax.f32 %v4896, 0.0
    %v4987 = vmax.f32 %v4899, 0.0
    %v4988 = vmax.f32 %v4902, 0.0
    %v4989 = vmax.f32 %v4905, 0.0
    %v4990 = vmax.f32 %v4908, 0.0
    %vm4991 = vcmask 64512
    %4992 = vst.msk [vmem:[#allocation4] sm:$0xff] %vm4991, %v4910
    %4993 = vst.msk [vmem:[#allocation4 + $0x8] sm:$0xff] %vm4991, %v4911
    %4994 = vst.msk [vmem:[#allocation4 + $0x10] sm:$0xff] %vm4991, %v4912
    %4995 = vst.msk [vmem:[#allocation4 + $0x18] sm:$0xff] %vm4991, %v4913
    %4996 = vst.msk [vmem:[#allocation4 + $0x20] sm:$0xff] %vm4991, %v4914
    %4997 = vst.msk [vmem:[#allocation4 + $0x28] sm:$0xff] %vm4991, %v4915
    %4998 = vst.msk [vmem:[#allocation4 + $0x30] sm:$0xff] %vm4991, %v4916
    %4999 = vst.msk [vmem:[#allocation4 + $0x38] sm:$0xff] %vm4991, %v4917
    %5000 = vst.msk [vmem:[#allocation4 + $0x40] sm:$0xff] %vm4991, %v4918
    %5001 = vst.msk [vmem:[#allocation4 + $0x48] sm:$0xff] %vm4991, %v4919
    %5002 = vst.msk [vmem:[#allocation4 + $0x50] sm:$0xff] %vm4991, %v4920
    %5003 = vst.msk [vmem:[#allocation4 + $0x58] sm:$0xff] %vm4991, %v4921
    %5004 = vst.msk [vmem:[#allocation4 + $0x60] sm:$0xff] %vm4991, %v4922
    %5005 = vst.msk [vmem:[#allocation4 + $0x68] sm:$0xff] %vm4991, %v4923
    %5006 = vst.msk [vmem:[#allocation4 + $0x70] sm:$0xff] %vm4991, %v4924
    %5007 = vst.msk [vmem:[#allocation4 + $0x78] sm:$0xff] %vm4991, %v4925
    %5008 = vst.msk [vmem:[#allocation4 + $0x80] sm:$0xff] %vm4991, %v4926
    %5009 = vst.msk [vmem:[#allocation4 + $0x88] sm:$0xff] %vm4991, %v4927
    %5010 = vst.msk [vmem:[#allocation4 + $0x90] sm:$0xff] %vm4991, %v4928
    %5011 = vst.msk [vmem:[#allocation4 + $0x98] sm:$0xff] %vm4991, %v4929
    %5012 = vst.msk [vmem:[#allocation4 + $0xa0] sm:$0xff] %vm4991, %v4930
    %5013 = vst.msk [vmem:[#allocation4 + $0xa8] sm:$0xff] %vm4991, %v4931
    %5014 = vst.msk [vmem:[#allocation4 + $0xb0] sm:$0xff] %vm4991, %v4932
    %5015 = vst.msk [vmem:[#allocation4 + $0xb8] sm:$0xff] %vm4991, %v4933
    %5016 = vst.msk [vmem:[#allocation4 + $0xc0] sm:$0xff] %vm4991, %v4934
    %5017 = vst.msk [vmem:[#allocation4 + $0xc8] sm:$0xff] %vm4991, %v4935
    %5018 = vst.msk [vmem:[#allocation4 + $0xd0] sm:$0xff] %vm4991, %v4936
    %5019 = vst.msk [vmem:[#allocation4 + $0xd8] sm:$0xff] %vm4991, %v4937
    %5020 = vst.msk [vmem:[#allocation4 + $0xe0] sm:$0xff] %vm4991, %v4938
    %5021 = vst.msk [vmem:[#allocation4 + $0xe8] sm:$0xff] %vm4991, %v4939
    %5022 = vst.msk [vmem:[#allocation4 + $0xf0] sm:$0xff] %vm4991, %v4940
    %5023 = vst.msk [vmem:[#allocation4 + $0xf8] sm:$0xff] %vm4991, %v4941
    %5024 = vst.msk [vmem:[#allocation4 + $0x100] sm:$0xff] %vm4991, %v4942
    %5025 = vst.msk [vmem:[#allocation4 + $0x108] sm:$0xff] %vm4991, %v4943
    %5026 = vst.msk [vmem:[#allocation4 + $0x110] sm:$0xff] %vm4991, %v4944
    %5027 = vst.msk [vmem:[#allocation4 + $0x118] sm:$0xff] %vm4991, %v4945
    %5028 = vst.msk [vmem:[#allocation4 + $0x120] sm:$0xff] %vm4991, %v4946
    %5029 = vst.msk [vmem:[#allocation4 + $0x128] sm:$0xff] %vm4991, %v4947
    %5030 = vst.msk [vmem:[#allocation4 + $0x130] sm:$0xff] %vm4991, %v4948
    %5031 = vst.msk [vmem:[#allocation4 + $0x138] sm:$0xff] %vm4991, %v4949
    %5032 = vst.msk [vmem:[#allocation4 + $0x140] sm:$0xff] %vm4991, %v4950
    %5033 = vst.msk [vmem:[#allocation4 + $0x148] sm:$0xff] %vm4991, %v4951
    %5034 = vst.msk [vmem:[#allocation4 + $0x150] sm:$0xff] %vm4991, %v4952
    %5035 = vst.msk [vmem:[#allocation4 + $0x158] sm:$0xff] %vm4991, %v4953
    %5036 = vst.msk [vmem:[#allocation4 + $0x160] sm:$0xff] %vm4991, %v4954
    %5037 = vst.msk [vmem:[#allocation4 + $0x168] sm:$0xff] %vm4991, %v4955
    %5038 = vst.msk [vmem:[#allocation4 + $0x170] sm:$0xff] %vm4991, %v4956
    %5039 = vst.msk [vmem:[#allocation4 + $0x178] sm:$0xff] %vm4991, %v4957
    %5040 = vst.msk [vmem:[#allocation4 + $0x180] sm:$0xff] %vm4991, %v4958
    %5041 = vst.msk [vmem:[#allocation4 + $0x188] sm:$0xff] %vm4991, %v4959
    %5042 = vst.msk [vmem:[#allocation4 + $0x190] sm:$0xff] %vm4991, %v4960
    %5043 = vst.msk [vmem:[#allocation4 + $0x198] sm:$0xff] %vm4991, %v4961
    %5044 = vst.msk [vmem:[#allocation4 + $0x1a0] sm:$0xff] %vm4991, %v4962
    %5045 = vst.msk [vmem:[#allocation4 + $0x1a8] sm:$0xff] %vm4991, %v4963
    %5046 = vst.msk [vmem:[#allocation4 + $0x1b0] sm:$0xff] %vm4991, %v4964
    %5047 = vst.msk [vmem:[#allocation4 + $0x1b8] sm:$0xff] %vm4991, %v4965
    %5048 = vst.msk [vmem:[#allocation4 + $0x1c0] sm:$0xff] %vm4991, %v4966
    %5049 = vst.msk [vmem:[#allocation4 + $0x1c8] sm:$0xff] %vm4991, %v4967
    %5050 = vst.msk [vmem:[#allocation4 + $0x1d0] sm:$0xff] %vm4991, %v4968
    %5051 = vst.msk [vmem:[#allocation4 + $0x1d8] sm:$0xff] %vm4991, %v4969
    %5052 = vst.msk [vmem:[#allocation4 + $0x1e0] sm:$0xff] %vm4991, %v4970
    %5053 = vst.msk [vmem:[#allocation4 + $0x1e8] sm:$0xff] %vm4991, %v4971
    %5054 = vst.msk [vmem:[#allocation4 + $0x1f0] sm:$0xff] %vm4991, %v4972
    %5055 = vst.msk [vmem:[#allocation4 + $0x1f8] sm:$0xff] %vm4991, %v4973
    %5056 = vst.msk [vmem:[#allocation4 + $0x200] sm:$0xff] %vm4991, %v4974
    %5057 = vst.msk [vmem:[#allocation4 + $0x208] sm:$0xff] %vm4991, %v4975
    %5058 = vst.msk [vmem:[#allocation4 + $0x210] sm:$0xff] %vm4991, %v4976
    %5059 = vst.msk [vmem:[#allocation4 + $0x218] sm:$0xff] %vm4991, %v4977
    %5060 = vst.msk [vmem:[#allocation4 + $0x220] sm:$0xff] %vm4991, %v4978
    %5061 = vst.msk [vmem:[#allocation4 + $0x228] sm:$0xff] %vm4991, %v4979
    %5062 = vst.msk [vmem:[#allocation4 + $0x230] sm:$0xff] %vm4991, %v4980
    %5063 = vst.msk [vmem:[#allocation4 + $0x238] sm:$0xff] %vm4991, %v4981
    %5064 = vst.msk [vmem:[#allocation4 + $0x240] sm:$0xff] %vm4991, %v4982
    %5065 = vst.msk [vmem:[#allocation4 + $0x248] sm:$0xff] %vm4991, %v4983
    %5066 = vst.msk [vmem:[#allocation4 + $0x250] sm:$0xff] %vm4991, %v4984
    %5067 = vst.msk [vmem:[#allocation4 + $0x258] sm:$0xff] %vm4991, %v4985
    %5068 = vst.msk [vmem:[#allocation4 + $0x260] sm:$0xff] %vm4991, %v4986
    %5069 = vst.msk [vmem:[#allocation4 + $0x268] sm:$0xff] %vm4991, %v4987
    %5070 = vst.msk [vmem:[#allocation4 + $0x270] sm:$0xff] %vm4991, %v4988
    %5071 = vst.msk [vmem:[#allocation4 + $0x278] sm:$0xff] %vm4991, %v4989
    %5072 = vst.msk [vmem:[#allocation4 + $0x280] sm:$0xff] %vm4991, %v4990
    %5073 = vst.msk [vmem:[#allocation5] sm:$0xff] %vm4991, 0.0
    %5074 = vst.msk [vmem:[#allocation5 + $0x8] sm:$0xff] %vm4991, 0.0
    %5075 = vst.msk [vmem:[#allocation5 + $0x10] sm:$0xff] %vm4991, 0.0
    %5076 = vst.msk [vmem:[#allocation5 + $0x18] sm:$0xff] %vm4991, 0.0
    %5077 = vst.msk [vmem:[#allocation5 + $0x20] sm:$0xff] %vm4991, 0.0
    %5078 = vst.msk [vmem:[#allocation5 + $0x28] sm:$0xff] %vm4991, 0.0
    %5079 = vst.msk [vmem:[#allocation5 + $0x30] sm:$0xff] %vm4991, 0.0
    %5080 = vst.msk [vmem:[#allocation5 + $0x38] sm:$0xff] %vm4991, 0.0
    %5081 = vst.msk [vmem:[#allocation5 + $0x40] sm:$0xff] %vm4991, 0.0
    %5082 = vst.msk [vmem:[#allocation5 + $0x48] sm:$0xff] %vm4991, 0.0
    %5083 = vst.msk [vmem:[#allocation5 + $0x50] sm:$0xff] %vm4991, 0.0
    %5084 = vst.msk [vmem:[#allocation5 + $0x58] sm:$0xff] %vm4991, 0.0
    %5085 = vst.msk [vmem:[#allocation5 + $0x60] sm:$0xff] %vm4991, 0.0
    %5086 = vst.msk [vmem:[#allocation5 + $0x68] sm:$0xff] %vm4991, 0.0
    %5087 = vst.msk [vmem:[#allocation5 + $0x70] sm:$0xff] %vm4991, 0.0
    %5088 = vst.msk [vmem:[#allocation5 + $0x78] sm:$0xff] %vm4991, 0.0
    %5089 = vst.msk [vmem:[#allocation5 + $0x80] sm:$0xff] %vm4991, 0.0
    %5090 = vst.msk [vmem:[#allocation5 + $0x88] sm:$0xff] %vm4991, 0.0
    %5091 = vst.msk [vmem:[#allocation5 + $0x90] sm:$0xff] %vm4991, 0.0
    %5092 = vst.msk [vmem:[#allocation5 + $0x98] sm:$0xff] %vm4991, 0.0
    %5093 = vst.msk [vmem:[#allocation5 + $0xa0] sm:$0xff] %vm4991, 0.0
    %5094 = vst.msk [vmem:[#allocation5 + $0xa8] sm:$0xff] %vm4991, 0.0
    %5095 = vst.msk [vmem:[#allocation5 + $0xb0] sm:$0xff] %vm4991, 0.0
    %5096 = vst.msk [vmem:[#allocation5 + $0xb8] sm:$0xff] %vm4991, 0.0
    %5097 = vst.msk [vmem:[#allocation5 + $0xc0] sm:$0xff] %vm4991, 0.0
    %5098 = vst.msk [vmem:[#allocation5 + $0xc8] sm:$0xff] %vm4991, 0.0
    %5099 = vst.msk [vmem:[#allocation5 + $0xd0] sm:$0xff] %vm4991, 0.0
    %5100 = vst.msk [vmem:[#allocation5 + $0xd8] sm:$0xff] %vm4991, 0.0
    %v5101 = vld [vmem:[#allocation4] ss:$2 sm:$0xff]
    %s5102 = scalar_lea.vmem [#allocation4], 1
    %v5103 = vld [vmem:[%s5102] ss:$2 sm:$0xff]
    %v5104 = vmax.f32 %v5101, %v5103
    %s5105 = scalar_lea.vmem [#allocation4], 18
    %v5106 = vld [vmem:[%s5105] ss:$2 sm:$0xff]
    %s5107 = scalar_lea.vmem [#allocation4], 19
    %v5108 = vld [vmem:[%s5107] ss:$2 sm:$0xff]
    %v5109 = vmax.f32 %v5106, %v5108
    %v5110 = vmax.f32 %v5104, %v5109
    %5111 = vst.msk [vmem:[#allocation5 + $0xb] sm:$0xff] %vm4991, %v5110
    %s5112 = scalar_lea.vmem [#allocation4], 36
    %v5113 = vld [vmem:[%s5112] ss:$2 sm:$0xff]
    %s5114 = scalar_lea.vmem [#allocation4], 37
    %v5115 = vld [vmem:[%s5114] ss:$2 sm:$0xff]
    %v5116 = vmax.f32 %v5113, %v5115
    %s5117 = scalar_lea.vmem [#allocation4], 54
    %v5118 = vld [vmem:[%s5117] ss:$2 sm:$0xff]
    %s5119 = scalar_lea.vmem [#allocation4], 55
    %v5120 = vld [vmem:[%s5119] ss:$2 sm:$0xff]
    %v5121 = vmax.f32 %v5118, %v5120
    %v5122 = vmax.f32 %v5116, %v5121
    %5123 = vst.msk [vmem:[#allocation5 + $0x15] sm:$0xff] %vm4991, %v5122
    %s5124 = scalar_lea.vmem [#allocation4], 72
    %v5125 = vld [vmem:[%s5124] ss:$2 sm:$0xff]
    %s5126 = scalar_lea.vmem [#allocation4], 73
    %v5127 = vld [vmem:[%s5126] ss:$2 sm:$0xff]
    %v5128 = vmax.f32 %v5125, %v5127
    %s5129 = scalar_lea.vmem [#allocation4], 90
    %v5130 = vld [vmem:[%s5129] ss:$2 sm:$0xff]
    %s5131 = scalar_lea.vmem [#allocation4], 91
    %v5132 = vld [vmem:[%s5131] ss:$2 sm:$0xff]
    %v5133 = vmax.f32 %v5130, %v5132
    %v5134 = vmax.f32 %v5128, %v5133
    %5135 = vst.msk [vmem:[#allocation5 + $0x1f] sm:$0xff] %vm4991, %v5134
    %s5136 = scalar_lea.vmem [#allocation4], 108
    %v5137 = vld [vmem:[%s5136] ss:$2 sm:$0xff]
    %s5138 = scalar_lea.vmem [#allocation4], 109
    %v5139 = vld [vmem:[%s5138] ss:$2 sm:$0xff]
    %v5140 = vmax.f32 %v5137, %v5139
    %s5141 = scalar_lea.vmem [#allocation4], 126
    %v5142 = vld [vmem:[%s5141] ss:$2 sm:$0xff]
    %s5143 = scalar_lea.vmem [#allocation4], 127
    %v5144 = vld [vmem:[%s5143] ss:$2 sm:$0xff]
    %v5145 = vmax.f32 %v5142, %v5144
    %v5146 = vmax.f32 %v5140, %v5145
    %5147 = vst.msk [vmem:[#allocation5 + $0x29] sm:$0xff] %vm4991, %v5146
    %s5148 = scalar_lea.vmem [#allocation4], 144
    %v5149 = vld [vmem:[%s5148] ss:$2 sm:$0xff]
    %s5150 = scalar_lea.vmem [#allocation4], 145
    %v5151 = vld [vmem:[%s5150] ss:$2 sm:$0xff]
    %v5152 = vmax.f32 %v5149, %v5151
    %s5153 = scalar_lea.vmem [#allocation4], 162
    %v5154 = vld [vmem:[%s5153] ss:$2 sm:$0xff]
    %s5155 = scalar_lea.vmem [#allocation4], 163
    %v5156 = vld [vmem:[%s5155] ss:$2 sm:$0xff]
    %v5157 = vmax.f32 %v5154, %v5156
    %v5158 = vmax.f32 %v5152, %v5157
    %5159 = vst.msk [vmem:[#allocation5 + $0x33] sm:$0xff] %vm4991, %v5158
    %s5160 = scalar_lea.vmem [#allocation4], 180
    %v5161 = vld [vmem:[%s5160] ss:$2 sm:$0xff]
    %s5162 = scalar_lea.vmem [#allocation4], 181
    %v5163 = vld [vmem:[%s5162] ss:$2 sm:$0xff]
    %v5164 = vmax.f32 %v5161, %v5163
    %s5165 = scalar_lea.vmem [#allocation4], 198
    %v5166 = vld [vmem:[%s5165] ss:$2 sm:$0xff]
    %s5167 = scalar_lea.vmem [#allocation4], 199
    %v5168 = vld [vmem:[%s5167] ss:$2 sm:$0xff]
    %v5169 = vmax.f32 %v5166, %v5168
    %v5170 = vmax.f32 %v5164, %v5169
    %5171 = vst.msk [vmem:[#allocation5 + $0x3d] sm:$0xff] %vm4991, %v5170
    %s5172 = scalar_lea.vmem [#allocation4], 216
    %v5173 = vld [vmem:[%s5172] ss:$2 sm:$0xff]
    %s5174 = scalar_lea.vmem [#allocation4], 217
    %v5175 = vld [vmem:[%s5174] ss:$2 sm:$0xff]
    %v5176 = vmax.f32 %v5173, %v5175
    %s5177 = scalar_lea.vmem [#allocation4], 234
    %v5178 = vld [vmem:[%s5177] ss:$2 sm:$0xff]
    %s5179 = scalar_lea.vmem [#allocation4], 235
    %v5180 = vld [vmem:[%s5179] ss:$2 sm:$0xff]
    %v5181 = vmax.f32 %v5178, %v5180
    %v5182 = vmax.f32 %v5176, %v5181
    %5183 = vst.msk [vmem:[#allocation5 + $0x47] sm:$0xff] %vm4991, %v5182
    %s5184 = scalar_lea.vmem [#allocation4], 252
    %v5185 = vld [vmem:[%s5184] ss:$2 sm:$0xff]
    %s5186 = scalar_lea.vmem [#allocation4], 253
    %v5187 = vld [vmem:[%s5186] ss:$2 sm:$0xff]
    %v5188 = vmax.f32 %v5185, %v5187
    %s5189 = scalar_lea.vmem [#allocation4], 270
    %v5190 = vld [vmem:[%s5189] ss:$2 sm:$0xff]
    %s5191 = scalar_lea.vmem [#allocation4], 271
    %v5192 = vld [vmem:[%s5191] ss:$2 sm:$0xff]
    %v5193 = vmax.f32 %v5190, %v5192
    %v5194 = vmax.f32 %v5188, %v5193
    %5195 = vst.msk [vmem:[#allocation5 + $0x51] sm:$0xff] %vm4991, %v5194
    %s5196 = scalar_lea.vmem [#allocation4], 324
    %v5197 = vld [vmem:[%s5196] ss:$2 sm:$0xff]
    %s5198 = scalar_lea.vmem [#allocation4], 325
    %v5199 = vld [vmem:[%s5198] ss:$2 sm:$0xff]
    %v5200 = vmax.f32 %v5197, %v5199
    %s5201 = scalar_lea.vmem [#allocation4], 342
    %v5202 = vld [vmem:[%s5201] ss:$2 sm:$0xff]
    %s5203 = scalar_lea.vmem [#allocation4], 343
    %v5204 = vld [vmem:[%s5203] ss:$2 sm:$0xff]
    %v5205 = vmax.f32 %v5202, %v5204
    %v5206 = vmax.f32 %v5200, %v5205
    %5207 = vst.msk [vmem:[#allocation5 + $0x6f] sm:$0xff] %vm4991, %v5206
    %s5208 = scalar_lea.vmem [#allocation4], 360
    %v5209 = vld [vmem:[%s5208] ss:$2 sm:$0xff]
    %s5210 = scalar_lea.vmem [#allocation4], 361
    %v5211 = vld [vmem:[%s5210] ss:$2 sm:$0xff]
    %v5212 = vmax.f32 %v5209, %v5211
    %s5213 = scalar_lea.vmem [#allocation4], 378
    %v5214 = vld [vmem:[%s5213] ss:$2 sm:$0xff]
    %s5215 = scalar_lea.vmem [#allocation4], 379
    %v5216 = vld [vmem:[%s5215] ss:$2 sm:$0xff]
    %v5217 = vmax.f32 %v5214, %v5216
    %v5218 = vmax.f32 %v5212, %v5217
    %5219 = vst.msk [vmem:[#allocation5 + $0x79] sm:$0xff] %vm4991, %v5218
    %s5220 = scalar_lea.vmem [#allocation4], 396
    %v5221 = vld [vmem:[%s5220] ss:$2 sm:$0xff]
    %s5222 = scalar_lea.vmem [#allocation4], 397
    %v5223 = vld [vmem:[%s5222] ss:$2 sm:$0xff]
    %v5224 = vmax.f32 %v5221, %v5223
    %s5225 = scalar_lea.vmem [#allocation4], 414
    %v5226 = vld [vmem:[%s5225] ss:$2 sm:$0xff]
    %s5227 = scalar_lea.vmem [#allocation4], 415
    %v5228 = vld [vmem:[%s5227] ss:$2 sm:$0xff]
    %v5229 = vmax.f32 %v5226, %v5228
    %v5230 = vmax.f32 %v5224, %v5229
    %5231 = vst.msk [vmem:[#allocation5 + $0x83] sm:$0xff] %vm4991, %v5230
    %s5232 = scalar_lea.vmem [#allocation4], 432
    %v5233 = vld [vmem:[%s5232] ss:$2 sm:$0xff]
    %s5234 = scalar_lea.vmem [#allocation4], 433
    %v5235 = vld [vmem:[%s5234] ss:$2 sm:$0xff]
    %v5236 = vmax.f32 %v5233, %v5235
    %s5237 = scalar_lea.vmem [#allocation4], 450
    %v5238 = vld [vmem:[%s5237] ss:$2 sm:$0xff]
    %s5239 = scalar_lea.vmem [#allocation4], 451
    %v5240 = vld [vmem:[%s5239] ss:$2 sm:$0xff]
    %v5241 = vmax.f32 %v5238, %v5240
    %v5242 = vmax.f32 %v5236, %v5241
    %5243 = vst.msk [vmem:[#allocation5 + $0x8d] sm:$0xff] %vm4991, %v5242
    %s5244 = scalar_lea.vmem [#allocation4], 468
    %v5245 = vld [vmem:[%s5244] ss:$2 sm:$0xff]
    %s5246 = scalar_lea.vmem [#allocation4], 469
    %v5247 = vld [vmem:[%s5246] ss:$2 sm:$0xff]
    %v5248 = vmax.f32 %v5245, %v5247
    %s5249 = scalar_lea.vmem [#allocation4], 486
    %v5250 = vld [vmem:[%s5249] ss:$2 sm:$0xff]
    %s5251 = scalar_lea.vmem [#allocation4], 487
    %v5252 = vld [vmem:[%s5251] ss:$2 sm:$0xff]
    %v5253 = vmax.f32 %v5250, %v5252
    %v5254 = vmax.f32 %v5248, %v5253
    %5255 = vst.msk [vmem:[#allocation5 + $0x97] sm:$0xff] %vm4991, %v5254
    %s5256 = scalar_lea.vmem [#allocation4], 504
    %v5257 = vld [vmem:[%s5256] ss:$2 sm:$0xff]
    %s5258 = scalar_lea.vmem [#allocation4], 505
    %v5259 = vld [vmem:[%s5258] ss:$2 sm:$0xff]
    %v5260 = vmax.f32 %v5257, %v5259
    %s5261 = scalar_lea.vmem [#allocation4], 522
    %v5262 = vld [vmem:[%s5261] ss:$2 sm:$0xff]
    %s5263 = scalar_lea.vmem [#allocation4], 523
    %v5264 = vld [vmem:[%s5263] ss:$2 sm:$0xff]
    %v5265 = vmax.f32 %v5262, %v5264
    %v5266 = vmax.f32 %v5260, %v5265
    %5267 = vst.msk [vmem:[#allocation5 + $0xa1] sm:$0xff] %vm4991, %v5266
    %s5268 = scalar_lea.vmem [#allocation4], 540
    %v5269 = vld [vmem:[%s5268] ss:$2 sm:$0xff]
    %s5270 = scalar_lea.vmem [#allocation4], 541
    %v5271 = vld [vmem:[%s5270] ss:$2 sm:$0xff]
    %v5272 = vmax.f32 %v5269, %v5271
    %s5273 = scalar_lea.vmem [#allocation4], 558
    %v5274 = vld [vmem:[%s5273] ss:$2 sm:$0xff]
    %s5275 = scalar_lea.vmem [#allocation4], 559
    %v5276 = vld [vmem:[%s5275] ss:$2 sm:$0xff]
    %v5277 = vmax.f32 %v5274, %v5276
    %v5278 = vmax.f32 %v5272, %v5277
    %5279 = vst.msk [vmem:[#allocation5 + $0xab] sm:$0xff] %vm4991, %v5278
    %s5280 = scalar_lea.vmem [#allocation4], 576
    %v5281 = vld [vmem:[%s5280] ss:$2 sm:$0xff]
    %s5282 = scalar_lea.vmem [#allocation4], 577
    %v5283 = vld [vmem:[%s5282] ss:$2 sm:$0xff]
    %v5284 = vmax.f32 %v5281, %v5283
    %s5285 = scalar_lea.vmem [#allocation4], 594
    %v5286 = vld [vmem:[%s5285] ss:$2 sm:$0xff]
    %s5287 = scalar_lea.vmem [#allocation4], 595
    %v5288 = vld [vmem:[%s5287] ss:$2 sm:$0xff]
    %v5289 = vmax.f32 %v5286, %v5288
    %v5290 = vmax.f32 %v5284, %v5289
    %5291 = vst.msk [vmem:[#allocation5 + $0xb5] sm:$0xff] %vm4991, %v5290
    %v5292 = vld [vmem:[#allocation5] sm:$0xff]
    %v5293 = vld [vmem:[#allocation5 + $0x8] sm:$0xff]
    %v5294 = vld [vmem:[#allocation5 + $0x10] sm:$0xff]
    %v5295 = vld [vmem:[#allocation5 + $0x18] sm:$0xff]
    %v5296 = vld [vmem:[#allocation5 + $0x20] sm:$0xff]
    %v5297 = vld [vmem:[#allocation5 + $0x28] sm:$0xff]
    %v5298 = vld [vmem:[#allocation5 + $0x30] sm:$0xff]
    %v5299 = vld [vmem:[#allocation5 + $0x38] sm:$0xff]
    %v5300 = vld [vmem:[#allocation5 + $0x40] sm:$0xff]
    %v5301 = vld [vmem:[#allocation5 + $0x48] sm:$0xff]
    %v5302 = vld [vmem:[#allocation5 + $0x50] sm:$0xff]
    %v5303 = vld [vmem:[#allocation5 + $0x58] sm:$0xff]
    %v5304 = vld [vmem:[#allocation5 + $0x60] sm:$0xff]
    %v5305 = vld [vmem:[#allocation5 + $0x68] sm:$0xff]
    %v5306 = vld [vmem:[#allocation5 + $0x70] sm:$0xff]
    %v5307 = vld [vmem:[#allocation5 + $0x78] sm:$0xff]
    %v5308 = vld [vmem:[#allocation5 + $0x80] sm:$0xff]
    %v5309 = vld [vmem:[#allocation5 + $0x88] sm:$0xff]
    %v5310 = vld [vmem:[#allocation5 + $0x90] sm:$0xff]
    %v5311 = vld [vmem:[#allocation5 + $0x98] sm:$0xff]
    %v5312 = vld [vmem:[#allocation5 + $0xa0] sm:$0xff]
    %v5313 = vld [vmem:[#allocation5 + $0xa8] sm:$0xff]
    %v5314 = vld [vmem:[#allocation5 + $0xb0] sm:$0xff]
    %v5315 = vld [vmem:[#allocation5 + $0xb8] sm:$0xff]
    %v5316 = vld [vmem:[#allocation5 + $0xc0] sm:$0xff]
    %5317 = vst.msk [vmem:[#allocation6] sm:$0xff] %vm4991, %v5292
    %5318 = vst.msk [vmem:[#allocation6 + $0x8] sm:$0xff] %vm4991, %v5293
    %5319 = vst.msk [vmem:[#allocation6 + $0x10] sm:$0xff] %vm4991, %v5294
    %5320 = vst.msk [vmem:[#allocation6 + $0x18] sm:$0xff] %vm4991, %v5295
    %5321 = vst.msk [vmem:[#allocation6 + $0x20] sm:$0xff] %vm4991, %v5296
    %5322 = vst.msk [vmem:[#allocation6 + $0x28] sm:$0xff] %vm4991, %v5297
    %5323 = vst.msk [vmem:[#allocation6 + $0x30] sm:$0xff] %vm4991, %v5298
    %5324 = vst.msk [vmem:[#allocation6 + $0x38] sm:$0xff] %vm4991, %v5299
    %5325 = vst.msk [vmem:[#allocation6 + $0x40] sm:$0xff] %vm4991, %v5300
    %5326 = vst.msk [vmem:[#allocation6 + $0x48] sm:$0xff] %vm4991, %v5301
    %5327 = vst.msk [vmem:[#allocation6 + $0x50] sm:$0xff] %vm4991, %v5302
    %5328 = vst.msk [vmem:[#allocation6 + $0x58] sm:$0xff] %vm4991, %v5303
    %5329 = vst.msk [vmem:[#allocation6 + $0x60] sm:$0xff] %vm4991, %v5304
    %5330 = vst.msk [vmem:[#allocation6 + $0x68] sm:$0xff] %vm4991, %v5305
    %5331 = vst.msk [vmem:[#allocation6 + $0x70] sm:$0xff] %vm4991, %v5306
    %5332 = vst.msk [vmem:[#allocation6 + $0x78] sm:$0xff] %vm4991, %v5307
    %5333 = vst.msk [vmem:[#allocation6 + $0x80] sm:$0xff] %vm4991, %v5308
    %5334 = vst.msk [vmem:[#allocation6 + $0x88] sm:$0xff] %vm4991, %v5309
    %5335 = vst.msk [vmem:[#allocation6 + $0x90] sm:$0xff] %vm4991, %v5310
    %5336 = vst.msk [vmem:[#allocation6 + $0x98] sm:$0xff] %vm4991, %v5311
    %5337 = vst.msk [vmem:[#allocation6 + $0xa0] sm:$0xff] %vm4991, %v5312
    %5338 = vst.msk [vmem:[#allocation6 + $0xa8] sm:$0xff] %vm4991, %v5313
    %5339 = vst.msk [vmem:[#allocation6 + $0xb0] sm:$0xff] %vm4991, %v5314
    %5340 = vst.msk [vmem:[#allocation6 + $0xb8] sm:$0xff] %vm4991, %v5315
    %5341 = vst.msk [vmem:[#allocation6 + $0xc0] sm:$0xff] %vm4991, %v5316
    %v5342 = vld [vmem:[#allocation5 + $0x1] sm:$0xff]
    %v5343 = vld [vmem:[#allocation5 + $0x9] sm:$0xff]
    %v5344 = vld [vmem:[#allocation5 + $0x11] sm:$0xff]
    %v5345 = vld [vmem:[#allocation5 + $0x19] sm:$0xff]
    %v5346 = vld [vmem:[#allocation5 + $0x21] sm:$0xff]
    %v5347 = vld [vmem:[#allocation5 + $0x29] sm:$0xff]
    %v5348 = vld [vmem:[#allocation5 + $0x31] sm:$0xff]
    %v5349 = vld [vmem:[#allocation5 + $0x39] sm:$0xff]
    %v5350 = vld [vmem:[#allocation5 + $0x41] sm:$0xff]
    %v5351 = vld [vmem:[#allocation5 + $0x49] sm:$0xff]
    %v5352 = vld [vmem:[#allocation5 + $0x51] sm:$0xff]
    %v5353 = vld [vmem:[#allocation5 + $0x59] sm:$0xff]
    %v5354 = vld [vmem:[#allocation5 + $0x61] sm:$0xff]
    %v5355 = vld [vmem:[#allocation5 + $0x69] sm:$0xff]
    %v5356 = vld [vmem:[#allocation5 + $0x71] sm:$0xff]
    %v5357 = vld [vmem:[#allocation5 + $0x79] sm:$0xff]
    %v5358 = vld [vmem:[#allocation5 + $0x81] sm:$0xff]
    %v5359 = vld [vmem:[#allocation5 + $0x89] sm:$0xff]
    %v5360 = vld [vmem:[#allocation5 + $0x91] sm:$0xff]
    %v5361 = vld [vmem:[#allocation5 + $0x99] sm:$0xff]
    %v5362 = vld [vmem:[#allocation5 + $0xa1] sm:$0xff]
    %v5363 = vld [vmem:[#allocation5 + $0xa9] sm:$0xff]
    %v5364 = vld [vmem:[#allocation5 + $0xb1] sm:$0xff]
    %v5365 = vld [vmem:[#allocation5 + $0xb9] sm:$0xff]
    %v5366 = vld [vmem:[#allocation5 + $0xc1] sm:$0xff]
    %5392 = vrot.lane.b32.xlu0 %v5342, 8
    %v5393 = vpop.permute.xlu0 %5392
    %5394 = vrot.lane.b32.xlu0 %v5343, 8
    %v5395 = vpop.permute.xlu0 %5394
    %5396 = vrot.lane.b32.xlu0 %v5344, 8
    %v5397 = vpop.permute.xlu0 %5396
    %5398 = vrot.lane.b32.xlu0 %v5345, 8
    %v5399 = vpop.permute.xlu0 %5398
    %5400 = vrot.lane.b32.xlu0 %v5346, 8
    %v5401 = vpop.permute.xlu0 %5400
    %5402 = vrot.lane.b32.xlu0 %v5347, 8
    %v5403 = vpop.permute.xlu0 %5402
    %5404 = vrot.lane.b32.xlu0 %v5348, 8
    %v5405 = vpop.permute.xlu0 %5404
    %5406 = vrot.lane.b32.xlu0 %v5349, 8
    %v5407 = vpop.permute.xlu0 %5406
    %5408 = vrot.lane.b32.xlu0 %v5350, 8
    %v5409 = vpop.permute.xlu0 %5408
    %5410 = vrot.lane.b32.xlu0 %v5351, 8
    %v5411 = vpop.permute.xlu0 %5410
    %5412 = vrot.lane.b32.xlu0 %v5352, 8
    %v5413 = vpop.permute.xlu0 %5412
    %5414 = vrot.lane.b32.xlu0 %v5353, 8
    %v5415 = vpop.permute.xlu0 %5414
    %5416 = vrot.lane.b32.xlu0 %v5354, 8
    %v5417 = vpop.permute.xlu0 %5416
    %5418 = vrot.lane.b32.xlu0 %v5355, 8
    %v5419 = vpop.permute.xlu0 %5418
    %5420 = vrot.lane.b32.xlu0 %v5356, 8
    %v5421 = vpop.permute.xlu0 %5420
    %5422 = vrot.lane.b32.xlu0 %v5357, 8
    %v5423 = vpop.permute.xlu0 %5422
    %5424 = vrot.lane.b32.xlu0 %v5358, 8
    %v5425 = vpop.permute.xlu0 %5424
    %5426 = vrot.lane.b32.xlu0 %v5359, 8
    %v5427 = vpop.permute.xlu0 %5426
    %5428 = vrot.lane.b32.xlu0 %v5360, 8
    %v5429 = vpop.permute.xlu0 %5428
    %5430 = vrot.lane.b32.xlu0 %v5361, 8
    %v5431 = vpop.permute.xlu0 %5430
    %5432 = vrot.lane.b32.xlu0 %v5362, 8
    %v5433 = vpop.permute.xlu0 %5432
    %5434 = vrot.lane.b32.xlu0 %v5363, 8
    %v5435 = vpop.permute.xlu0 %5434
    %5436 = vrot.lane.b32.xlu0 %v5364, 8
    %v5437 = vpop.permute.xlu0 %5436
    %5438 = vrot.lane.b32.xlu0 %v5365, 8
    %v5439 = vpop.permute.xlu0 %5438
    %5440 = vrot.lane.b32.xlu0 %v5366, 8
    %v5441 = vpop.permute.xlu0 %5440
    %vm5467 = vcmask 130112
    %5468 = vst.msk [vmem:[#allocation6] sm:$0xff] %vm5467, %v5393
    %5469 = vst.msk [vmem:[#allocation6 + $0x8] sm:$0xff] %vm5467, %v5395
    %5470 = vst.msk [vmem:[#allocation6 + $0x10] sm:$0xff] %vm5467, %v5397
    %5471 = vst.msk [vmem:[#allocation6 + $0x18] sm:$0xff] %vm5467, %v5399
    %5472 = vst.msk [vmem:[#allocation6 + $0x20] sm:$0xff] %vm5467, %v5401
    %5473 = vst.msk [vmem:[#allocation6 + $0x28] sm:$0xff] %vm5467, %v5403
    %5474 = vst.msk [vmem:[#allocation6 + $0x30] sm:$0xff] %vm5467, %v5405
    %5475 = vst.msk [vmem:[#allocation6 + $0x38] sm:$0xff] %vm5467, %v5407
    %5476 = vst.msk [vmem:[#allocation6 + $0x40] sm:$0xff] %vm5467, %v5409
    %5477 = vst.msk [vmem:[#allocation6 + $0x48] sm:$0xff] %vm5467, %v5411
    %5478 = vst.msk [vmem:[#allocation6 + $0x50] sm:$0xff] %vm5467, %v5413
    %5479 = vst.msk [vmem:[#allocation6 + $0x58] sm:$0xff] %vm5467, %v5415
    %5480 = vst.msk [vmem:[#allocation6 + $0x60] sm:$0xff] %vm5467, %v5417
    %5481 = vst.msk [vmem:[#allocation6 + $0x68] sm:$0xff] %vm5467, %v5419
    %5482 = vst.msk [vmem:[#allocation6 + $0x70] sm:$0xff] %vm5467, %v5421
    %5483 = vst.msk [vmem:[#allocation6 + $0x78] sm:$0xff] %vm5467, %v5423
    %5484 = vst.msk [vmem:[#allocation6 + $0x80] sm:$0xff] %vm5467, %v5425
    %5485 = vst.msk [vmem:[#allocation6 + $0x88] sm:$0xff] %vm5467, %v5427
    %5486 = vst.msk [vmem:[#allocation6 + $0x90] sm:$0xff] %vm5467, %v5429
    %5487 = vst.msk [vmem:[#allocation6 + $0x98] sm:$0xff] %vm5467, %v5431
    %5488 = vst.msk [vmem:[#allocation6 + $0xa0] sm:$0xff] %vm5467, %v5433
    %5489 = vst.msk [vmem:[#allocation6 + $0xa8] sm:$0xff] %vm5467, %v5435
    %5490 = vst.msk [vmem:[#allocation6 + $0xb0] sm:$0xff] %vm5467, %v5437
    %5491 = vst.msk [vmem:[#allocation6 + $0xb8] sm:$0xff] %vm5467, %v5439
    %5492 = vst.msk [vmem:[#allocation6 + $0xc0] sm:$0xff] %vm5467, %v5441
    %v5493 = vld [vmem:[#allocation5 + $0x2] sm:$0xff]
    %v5494 = vld [vmem:[#allocation5 + $0xa] sm:$0xff]
    %v5495 = vld [vmem:[#allocation5 + $0x12] sm:$0xff]
    %v5496 = vld [vmem:[#allocation5 + $0x1a] sm:$0xff]
    %v5497 = vld [vmem:[#allocation5 + $0x22] sm:$0xff]
    %v5498 = vld [vmem:[#allocation5 + $0x2a] sm:$0xff]
    %v5499 = vld [vmem:[#allocation5 + $0x32] sm:$0xff]
    %v5500 = vld [vmem:[#allocation5 + $0x3a] sm:$0xff]
    %v5501 = vld [vmem:[#allocation5 + $0x42] sm:$0xff]
    %v5502 = vld [vmem:[#allocation5 + $0x4a] sm:$0xff]
    %v5503 = vld [vmem:[#allocation5 + $0x52] sm:$0xff]
    %v5504 = vld [vmem:[#allocation5 + $0x5a] sm:$0xff]
    %v5505 = vld [vmem:[#allocation5 + $0x62] sm:$0xff]
    %v5506 = vld [vmem:[#allocation5 + $0x6a] sm:$0xff]
    %v5507 = vld [vmem:[#allocation5 + $0x72] sm:$0xff]
    %v5508 = vld [vmem:[#allocation5 + $0x7a] sm:$0xff]
    %v5509 = vld [vmem:[#allocation5 + $0x82] sm:$0xff]
    %v5510 = vld [vmem:[#allocation5 + $0x8a] sm:$0xff]
    %v5511 = vld [vmem:[#allocation5 + $0x92] sm:$0xff]
    %v5512 = vld [vmem:[#allocation5 + $0x9a] sm:$0xff]
    %v5513 = vld [vmem:[#allocation5 + $0xa2] sm:$0xff]
    %v5514 = vld [vmem:[#allocation5 + $0xaa] sm:$0xff]
    %v5515 = vld [vmem:[#allocation5 + $0xb2] sm:$0xff]
    %v5516 = vld [vmem:[#allocation5 + $0xba] sm:$0xff]
    %v5517 = vld [vmem:[#allocation5 + $0xc2] sm:$0xff]
    %5543 = vrot.lane.b32.xlu0 %v5493, 16
    %v5544 = vpop.permute.xlu0 %5543
    %5545 = vrot.lane.b32.xlu0 %v5494, 16
    %v5546 = vpop.permute.xlu0 %5545
    %5547 = vrot.lane.b32.xlu0 %v5495, 16
    %v5548 = vpop.permute.xlu0 %5547
    %5549 = vrot.lane.b32.xlu0 %v5496, 16
    %v5550 = vpop.permute.xlu0 %5549
    %5551 = vrot.lane.b32.xlu0 %v5497, 16
    %v5552 = vpop.permute.xlu0 %5551
    %5553 = vrot.lane.b32.xlu0 %v5498, 16
    %v5554 = vpop.permute.xlu0 %5553
    %5555 = vrot.lane.b32.xlu0 %v5499, 16
    %v5556 = vpop.permute.xlu0 %5555
    %5557 = vrot.lane.b32.xlu0 %v5500, 16
    %v5558 = vpop.permute.xlu0 %5557
    %5559 = vrot.lane.b32.xlu0 %v5501, 16
    %v5560 = vpop.permute.xlu0 %5559
    %5561 = vrot.lane.b32.xlu0 %v5502, 16
    %v5562 = vpop.permute.xlu0 %5561
    %5563 = vrot.lane.b32.xlu0 %v5503, 16
    %v5564 = vpop.permute.xlu0 %5563
    %5565 = vrot.lane.b32.xlu0 %v5504, 16
    %v5566 = vpop.permute.xlu0 %5565
    %5567 = vrot.lane.b32.xlu0 %v5505, 16
    %v5568 = vpop.permute.xlu0 %5567
    %5569 = vrot.lane.b32.xlu0 %v5506, 16
    %v5570 = vpop.permute.xlu0 %5569
    %5571 = vrot.lane.b32.xlu0 %v5507, 16
    %v5572 = vpop.permute.xlu0 %5571
    %5573 = vrot.lane.b32.xlu0 %v5508, 16
    %v5574 = vpop.permute.xlu0 %5573
    %5575 = vrot.lane.b32.xlu0 %v5509, 16
    %v5576 = vpop.permute.xlu0 %5575
    %5577 = vrot.lane.b32.xlu0 %v5510, 16
    %v5578 = vpop.permute.xlu0 %5577
    %5579 = vrot.lane.b32.xlu0 %v5511, 16
    %v5580 = vpop.permute.xlu0 %5579
    %5581 = vrot.lane.b32.xlu0 %v5512, 16
    %v5582 = vpop.permute.xlu0 %5581
    %5583 = vrot.lane.b32.xlu0 %v5513, 16
    %v5584 = vpop.permute.xlu0 %5583
    %5585 = vrot.lane.b32.xlu0 %v5514, 16
    %v5586 = vpop.permute.xlu0 %5585
    %5587 = vrot.lane.b32.xlu0 %v5515, 16
    %v5588 = vpop.permute.xlu0 %5587
    %5589 = vrot.lane.b32.xlu0 %v5516, 16
    %v5590 = vpop.permute.xlu0 %5589
    %5591 = vrot.lane.b32.xlu0 %v5517, 16
    %v5592 = vpop.permute.xlu0 %5591
    %vm5618 = vcmask 195712
    %5619 = vst.msk [vmem:[#allocation6] sm:$0xff] %vm5618, %v5544
    %5620 = vst.msk [vmem:[#allocation6 + $0x8] sm:$0xff] %vm5618, %v5546
    %5621 = vst.msk [vmem:[#allocation6 + $0x10] sm:$0xff] %vm5618, %v5548
    %5622 = vst.msk [vmem:[#allocation6 + $0x18] sm:$0xff] %vm5618, %v5550
    %5623 = vst.msk [vmem:[#allocation6 + $0x20] sm:$0xff] %vm5618, %v5552
    %5624 = vst.msk [vmem:[#allocation6 + $0x28] sm:$0xff] %vm5618, %v5554
    %5625 = vst.msk [vmem:[#allocation6 + $0x30] sm:$0xff] %vm5618, %v5556
    %5626 = vst.msk [vmem:[#allocation6 + $0x38] sm:$0xff] %vm5618, %v5558
    %5627 = vst.msk [vmem:[#allocation6 + $0x40] sm:$0xff] %vm5618, %v5560
    %5628 = vst.msk [vmem:[#allocation6 + $0x48] sm:$0xff] %vm5618, %v5562
    %5629 = vst.msk [vmem:[#allocation6 + $0x50] sm:$0xff] %vm5618, %v5564
    %5630 = vst.msk [vmem:[#allocation6 + $0x58] sm:$0xff] %vm5618, %v5566
    %5631 = vst.msk [vmem:[#allocation6 + $0x60] sm:$0xff] %vm5618, %v5568
    %5632 = vst.msk [vmem:[#allocation6 + $0x68] sm:$0xff] %vm5618, %v5570
    %5633 = vst.msk [vmem:[#allocation6 + $0x70] sm:$0xff] %vm5618, %v5572
    %5634 = vst.msk [vmem:[#allocation6 + $0x78] sm:$0xff] %vm5618, %v5574
    %5635 = vst.msk [vmem:[#allocation6 + $0x80] sm:$0xff] %vm5618, %v5576
    %5636 = vst.msk [vmem:[#allocation6 + $0x88] sm:$0xff] %vm5618, %v5578
    %5637 = vst.msk [vmem:[#allocation6 + $0x90] sm:$0xff] %vm5618, %v5580
    %5638 = vst.msk [vmem:[#allocation6 + $0x98] sm:$0xff] %vm5618, %v5582
    %5639 = vst.msk [vmem:[#allocation6 + $0xa0] sm:$0xff] %vm5618, %v5584
    %5640 = vst.msk [vmem:[#allocation6 + $0xa8] sm:$0xff] %vm5618, %v5586
    %5641 = vst.msk [vmem:[#allocation6 + $0xb0] sm:$0xff] %vm5618, %v5588
    %5642 = vst.msk [vmem:[#allocation6 + $0xb8] sm:$0xff] %vm5618, %v5590
    %5643 = vst.msk [vmem:[#allocation6 + $0xc0] sm:$0xff] %vm5618, %v5592
    %v5644 = vld [vmem:[#allocation5 + $0xa] sm:$0xff]
    %v5645 = vld [vmem:[#allocation5 + $0x12] sm:$0xff]
    %v5646 = vld [vmem:[#allocation5 + $0x1a] sm:$0xff]
    %v5647 = vld [vmem:[#allocation5 + $0x22] sm:$0xff]
    %v5648 = vld [vmem:[#allocation5 + $0x2a] sm:$0xff]
    %v5649 = vld [vmem:[#allocation5 + $0x32] sm:$0xff]
    %v5650 = vld [vmem:[#allocation5 + $0x3a] sm:$0xff]
    %v5651 = vld [vmem:[#allocation5 + $0x42] sm:$0xff]
    %v5652 = vld [vmem:[#allocation5 + $0x4a] sm:$0xff]
    %v5653 = vld [vmem:[#allocation5 + $0x52] sm:$0xff]
    %v5654 = vld [vmem:[#allocation5 + $0x5a] sm:$0xff]
    %v5655 = vld [vmem:[#allocation5 + $0x62] sm:$0xff]
    %v5656 = vld [vmem:[#allocation5 + $0x6a] sm:$0xff]
    %v5657 = vld [vmem:[#allocation5 + $0x72] sm:$0xff]
    %v5658 = vld [vmem:[#allocation5 + $0x7a] sm:$0xff]
    %v5659 = vld [vmem:[#allocation5 + $0x82] sm:$0xff]
    %v5660 = vld [vmem:[#allocation5 + $0x8a] sm:$0xff]
    %v5661 = vld [vmem:[#allocation5 + $0x92] sm:$0xff]
    %v5662 = vld [vmem:[#allocation5 + $0x9a] sm:$0xff]
    %v5663 = vld [vmem:[#allocation5 + $0xa2] sm:$0xff]
    %v5664 = vld [vmem:[#allocation5 + $0xaa] sm:$0xff]
    %v5665 = vld [vmem:[#allocation5 + $0xb2] sm:$0xff]
    %v5666 = vld [vmem:[#allocation5 + $0xba] sm:$0xff]
    %v5667 = vld [vmem:[#allocation5 + $0xc2] sm:$0xff]
    %v5668 = vld [vmem:[#allocation5 + $0xca] sm:$0xff]
    %5694 = vrot.lane.b32.xlu0 %v5644, 24
    %v5695 = vpop.permute.xlu0 %5694
    %5696 = vrot.lane.b32.xlu0 %v5645, 24
    %v5697 = vpop.permute.xlu0 %5696
    %5698 = vrot.lane.b32.xlu0 %v5646, 24
    %v5699 = vpop.permute.xlu0 %5698
    %5700 = vrot.lane.b32.xlu0 %v5647, 24
    %v5701 = vpop.permute.xlu0 %5700
    %5702 = vrot.lane.b32.xlu0 %v5648, 24
    %v5703 = vpop.permute.xlu0 %5702
    %5704 = vrot.lane.b32.xlu0 %v5649, 24
    %v5705 = vpop.permute.xlu0 %5704
    %5706 = vrot.lane.b32.xlu0 %v5650, 24
    %v5707 = vpop.permute.xlu0 %5706
    %5708 = vrot.lane.b32.xlu0 %v5651, 24
    %v5709 = vpop.permute.xlu0 %5708
    %5710 = vrot.lane.b32.xlu0 %v5652, 24
    %v5711 = vpop.permute.xlu0 %5710
    %5712 = vrot.lane.b32.xlu0 %v5653, 24
    %v5713 = vpop.permute.xlu0 %5712
    %5714 = vrot.lane.b32.xlu0 %v5654, 24
    %v5715 = vpop.permute.xlu0 %5714
    %5716 = vrot.lane.b32.xlu0 %v5655, 24
    %v5717 = vpop.permute.xlu0 %5716
    %5718 = vrot.lane.b32.xlu0 %v5656, 24
    %v5719 = vpop.permute.xlu0 %5718
    %5720 = vrot.lane.b32.xlu0 %v5657, 24
    %v5721 = vpop.permute.xlu0 %5720
    %5722 = vrot.lane.b32.xlu0 %v5658, 24
    %v5723 = vpop.permute.xlu0 %5722
    %5724 = vrot.lane.b32.xlu0 %v5659, 24
    %v5725 = vpop.permute.xlu0 %5724
    %5726 = vrot.lane.b32.xlu0 %v5660, 24
    %v5727 = vpop.permute.xlu0 %5726
    %5728 = vrot.lane.b32.xlu0 %v5661, 24
    %v5729 = vpop.permute.xlu0 %5728
    %5730 = vrot.lane.b32.xlu0 %v5662, 24
    %v5731 = vpop.permute.xlu0 %5730
    %5732 = vrot.lane.b32.xlu0 %v5663, 24
    %v5733 = vpop.permute.xlu0 %5732
    %5734 = vrot.lane.b32.xlu0 %v5664, 24
    %v5735 = vpop.permute.xlu0 %5734
    %5736 = vrot.lane.b32.xlu0 %v5665, 24
    %v5737 = vpop.permute.xlu0 %5736
    %5738 = vrot.lane.b32.xlu0 %v5666, 24
    %v5739 = vpop.permute.xlu0 %5738
    %5740 = vrot.lane.b32.xlu0 %v5667, 24
    %v5741 = vpop.permute.xlu0 %5740
    %5742 = vrot.lane.b32.xlu0 %v5668, 24
    %v5743 = vpop.permute.xlu0 %5742
    %vm5769 = vcmask 261312
    %5770 = vst.msk [vmem:[#allocation6] sm:$0xff] %vm5769, %v5695
    %5771 = vst.msk [vmem:[#allocation6 + $0x8] sm:$0xff] %vm5769, %v5697
    %5772 = vst.msk [vmem:[#allocation6 + $0x10] sm:$0xff] %vm5769, %v5699
    %5773 = vst.msk [vmem:[#allocation6 + $0x18] sm:$0xff] %vm5769, %v5701
    %5774 = vst.msk [vmem:[#allocation6 + $0x20] sm:$0xff] %vm5769, %v5703
    %5775 = vst.msk [vmem:[#allocation6 + $0x28] sm:$0xff] %vm5769, %v5705
    %5776 = vst.msk [vmem:[#allocation6 + $0x30] sm:$0xff] %vm5769, %v5707
    %5777 = vst.msk [vmem:[#allocation6 + $0x38] sm:$0xff] %vm5769, %v5709
    %5778 = vst.msk [vmem:[#allocation6 + $0x40] sm:$0xff] %vm5769, %v5711
    %5779 = vst.msk [vmem:[#allocation6 + $0x48] sm:$0xff] %vm5769, %v5713
    %5780 = vst.msk [vmem:[#allocation6 + $0x50] sm:$0xff] %vm5769, %v5715
    %5781 = vst.msk [vmem:[#allocation6 + $0x58] sm:$0xff] %vm5769, %v5717
    %5782 = vst.msk [vmem:[#allocation6 + $0x60] sm:$0xff] %vm5769, %v5719
    %5783 = vst.msk [vmem:[#allocation6 + $0x68] sm:$0xff] %vm5769, %v5721
    %5784 = vst.msk [vmem:[#allocation6 + $0x70] sm:$0xff] %vm5769, %v5723
    %5785 = vst.msk [vmem:[#allocation6 + $0x78] sm:$0xff] %vm5769, %v5725
    %5786 = vst.msk [vmem:[#allocation6 + $0x80] sm:$0xff] %vm5769, %v5727
    %5787 = vst.msk [vmem:[#allocation6 + $0x88] sm:$0xff] %vm5769, %v5729
    %5788 = vst.msk [vmem:[#allocation6 + $0x90] sm:$0xff] %vm5769, %v5731
    %5789 = vst.msk [vmem:[#allocation6 + $0x98] sm:$0xff] %vm5769, %v5733
    %5790 = vst.msk [vmem:[#allocation6 + $0xa0] sm:$0xff] %vm5769, %v5735
    %5791 = vst.msk [vmem:[#allocation6 + $0xa8] sm:$0xff] %vm5769, %v5737
    %5792 = vst.msk [vmem:[#allocation6 + $0xb0] sm:$0xff] %vm5769, %v5739
    %5793 = vst.msk [vmem:[#allocation6 + $0xb8] sm:$0xff] %vm5769, %v5741
    %5794 = vst.msk [vmem:[#allocation6 + $0xc0] sm:$0xff] %vm5769, %v5743
    %v5795 = vld [vmem:[#allocation5 + $0xb] sm:$0xff]
    %v5796 = vld [vmem:[#allocation5 + $0x13] sm:$0xff]
    %v5797 = vld [vmem:[#allocation5 + $0x1b] sm:$0xff]
    %v5798 = vld [vmem:[#allocation5 + $0x23] sm:$0xff]
    %v5799 = vld [vmem:[#allocation5 + $0x2b] sm:$0xff]
    %v5800 = vld [vmem:[#allocation5 + $0x33] sm:$0xff]
    %v5801 = vld [vmem:[#allocation5 + $0x3b] sm:$0xff]
    %v5802 = vld [vmem:[#allocation5 + $0x43] sm:$0xff]
    %v5803 = vld [vmem:[#allocation5 + $0x4b] sm:$0xff]
    %v5804 = vld [vmem:[#allocation5 + $0x53] sm:$0xff]
    %v5805 = vld [vmem:[#allocation5 + $0x5b] sm:$0xff]
    %v5806 = vld [vmem:[#allocation5 + $0x63] sm:$0xff]
    %v5807 = vld [vmem:[#allocation5 + $0x6b] sm:$0xff]
    %v5808 = vld [vmem:[#allocation5 + $0x73] sm:$0xff]
    %v5809 = vld [vmem:[#allocation5 + $0x7b] sm:$0xff]
    %v5810 = vld [vmem:[#allocation5 + $0x83] sm:$0xff]
    %v5811 = vld [vmem:[#allocation5 + $0x8b] sm:$0xff]
    %v5812 = vld [vmem:[#allocation5 + $0x93] sm:$0xff]
    %v5813 = vld [vmem:[#allocation5 + $0x9b] sm:$0xff]
    %v5814 = vld [vmem:[#allocation5 + $0xa3] sm:$0xff]
    %v5815 = vld [vmem:[#allocation5 + $0xab] sm:$0xff]
    %v5816 = vld [vmem:[#allocation5 + $0xb3] sm:$0xff]
    %v5817 = vld [vmem:[#allocation5 + $0xbb] sm:$0xff]
    %v5818 = vld [vmem:[#allocation5 + $0xc3] sm:$0xff]
    %v5819 = vld [vmem:[#allocation5 + $0xcb] sm:$0xff]
    %5845 = vrot.lane.b32.xlu0 %v5795, 32
    %v5846 = vpop.permute.xlu0 %5845
    %5847 = vrot.lane.b32.xlu0 %v5796, 32
    %v5848 = vpop.permute.xlu0 %5847
    %5849 = vrot.lane.b32.xlu0 %v5797, 32
    %v5850 = vpop.permute.xlu0 %5849
    %5851 = vrot.lane.b32.xlu0 %v5798, 32
    %v5852 = vpop.permute.xlu0 %5851
    %5853 = vrot.lane.b32.xlu0 %v5799, 32
    %v5854 = vpop.permute.xlu0 %5853
    %5855 = vrot.lane.b32.xlu0 %v5800, 32
    %v5856 = vpop.permute.xlu0 %5855
    %5857 = vrot.lane.b32.xlu0 %v5801, 32
    %v5858 = vpop.permute.xlu0 %5857
    %5859 = vrot.lane.b32.xlu0 %v5802, 32
    %v5860 = vpop.permute.xlu0 %5859
    %5861 = vrot.lane.b32.xlu0 %v5803, 32
    %v5862 = vpop.permute.xlu0 %5861
    %5863 = vrot.lane.b32.xlu0 %v5804, 32
    %v5864 = vpop.permute.xlu0 %5863
    %5865 = vrot.lane.b32.xlu0 %v5805, 32
    %v5866 = vpop.permute.xlu0 %5865
    %5867 = vrot.lane.b32.xlu0 %v5806, 32
    %v5868 = vpop.permute.xlu0 %5867
    %5869 = vrot.lane.b32.xlu0 %v5807, 32
    %v5870 = vpop.permute.xlu0 %5869
    %5871 = vrot.lane.b32.xlu0 %v5808, 32
    %v5872 = vpop.permute.xlu0 %5871
    %5873 = vrot.lane.b32.xlu0 %v5809, 32
    %v5874 = vpop.permute.xlu0 %5873
    %5875 = vrot.lane.b32.xlu0 %v5810, 32
    %v5876 = vpop.permute.xlu0 %5875
    %5877 = vrot.lane.b32.xlu0 %v5811, 32
    %v5878 = vpop.permute.xlu0 %5877
    %5879 = vrot.lane.b32.xlu0 %v5812, 32
    %v5880 = vpop.permute.xlu0 %5879
    %5881 = vrot.lane.b32.xlu0 %v5813, 32
    %v5882 = vpop.permute.xlu0 %5881
    %5883 = vrot.lane.b32.xlu0 %v5814, 32
    %v5884 = vpop.permute.xlu0 %5883
    %5885 = vrot.lane.b32.xlu0 %v5815, 32
    %v5886 = vpop.permute.xlu0 %5885
    %5887 = vrot.lane.b32.xlu0 %v5816, 32
    %v5888 = vpop.permute.xlu0 %5887
    %5889 = vrot.lane.b32.xlu0 %v5817, 32
    %v5890 = vpop.permute.xlu0 %5889
    %5891 = vrot.lane.b32.xlu0 %v5818, 32
    %v5892 = vpop.permute.xlu0 %5891
    %5893 = vrot.lane.b32.xlu0 %v5819, 32
    %v5894 = vpop.permute.xlu0 %5893
    %vm5920 = vcmask 326912
    %5921 = vst.msk [vmem:[#allocation6] sm:$0xff] %vm5920, %v5846
    %5922 = vst.msk [vmem:[#allocation6 + $0x8] sm:$0xff] %vm5920, %v5848
    %5923 = vst.msk [vmem:[#allocation6 + $0x10] sm:$0xff] %vm5920, %v5850
    %5924 = vst.msk [vmem:[#allocation6 + $0x18] sm:$0xff] %vm5920, %v5852
    %5925 = vst.msk [vmem:[#allocation6 + $0x20] sm:$0xff] %vm5920, %v5854
    %5926 = vst.msk [vmem:[#allocation6 + $0x28] sm:$0xff] %vm5920, %v5856
    %5927 = vst.msk [vmem:[#allocation6 + $0x30] sm:$0xff] %vm5920, %v5858
    %5928 = vst.msk [vmem:[#allocation6 + $0x38] sm:$0xff] %vm5920, %v5860
    %5929 = vst.msk [vmem:[#allocation6 + $0x40] sm:$0xff] %vm5920, %v5862
    %5930 = vst.msk [vmem:[#allocation6 + $0x48] sm:$0xff] %vm5920, %v5864
    %5931 = vst.msk [vmem:[#allocation6 + $0x50] sm:$0xff] %vm5920, %v5866
    %5932 = vst.msk [vmem:[#allocation6 + $0x58] sm:$0xff] %vm5920, %v5868
    %5933 = vst.msk [vmem:[#allocation6 + $0x60] sm:$0xff] %vm5920, %v5870
    %5934 = vst.msk [vmem:[#allocation6 + $0x68] sm:$0xff] %vm5920, %v5872
    %5935 = vst.msk [vmem:[#allocation6 + $0x70] sm:$0xff] %vm5920, %v5874
    %5936 = vst.msk [vmem:[#allocation6 + $0x78] sm:$0xff] %vm5920, %v5876
    %5937 = vst.msk [vmem:[#allocation6 + $0x80] sm:$0xff] %vm5920, %v5878
    %5938 = vst.msk [vmem:[#allocation6 + $0x88] sm:$0xff] %vm5920, %v5880
    %5939 = vst.msk [vmem:[#allocation6 + $0x90] sm:$0xff] %vm5920, %v5882
    %5940 = vst.msk [vmem:[#allocation6 + $0x98] sm:$0xff] %vm5920, %v5884
    %5941 = vst.msk [vmem:[#allocation6 + $0xa0] sm:$0xff] %vm5920, %v5886
    %5942 = vst.msk [vmem:[#allocation6 + $0xa8] sm:$0xff] %vm5920, %v5888
    %5943 = vst.msk [vmem:[#allocation6 + $0xb0] sm:$0xff] %vm5920, %v5890
    %5944 = vst.msk [vmem:[#allocation6 + $0xb8] sm:$0xff] %vm5920, %v5892
    %5945 = vst.msk [vmem:[#allocation6 + $0xc0] sm:$0xff] %vm5920, %v5894
    %v5946 = vld [vmem:[#allocation5 + $0xc] sm:$0xff]
    %v5947 = vld [vmem:[#allocation5 + $0x14] sm:$0xff]
    %v5948 = vld [vmem:[#allocation5 + $0x1c] sm:$0xff]
    %v5949 = vld [vmem:[#allocation5 + $0x24] sm:$0xff]
    %v5950 = vld [vmem:[#allocation5 + $0x2c] sm:$0xff]
    %v5951 = vld [vmem:[#allocation5 + $0x34] sm:$0xff]
    %v5952 = vld [vmem:[#allocation5 + $0x3c] sm:$0xff]
    %v5953 = vld [vmem:[#allocation5 + $0x44] sm:$0xff]
    %v5954 = vld [vmem:[#allocation5 + $0x4c] sm:$0xff]
    %v5955 = vld [vmem:[#allocation5 + $0x54] sm:$0xff]
    %v5956 = vld [vmem:[#allocation5 + $0x5c] sm:$0xff]
    %v5957 = vld [vmem:[#allocation5 + $0x64] sm:$0xff]
    %v5958 = vld [vmem:[#allocation5 + $0x6c] sm:$0xff]
    %v5959 = vld [vmem:[#allocation5 + $0x74] sm:$0xff]
    %v5960 = vld [vmem:[#allocation5 + $0x7c] sm:$0xff]
    %v5961 = vld [vmem:[#allocation5 + $0x84] sm:$0xff]
    %v5962 = vld [vmem:[#allocation5 + $0x8c] sm:$0xff]
    %v5963 = vld [vmem:[#allocation5 + $0x94] sm:$0xff]
    %v5964 = vld [vmem:[#allocation5 + $0x9c] sm:$0xff]
    %v5965 = vld [vmem:[#allocation5 + $0xa4] sm:$0xff]
    %v5966 = vld [vmem:[#allocation5 + $0xac] sm:$0xff]
    %v5967 = vld [vmem:[#allocation5 + $0xb4] sm:$0xff]
    %v5968 = vld [vmem:[#allocation5 + $0xbc] sm:$0xff]
    %v5969 = vld [vmem:[#allocation5 + $0xc4] sm:$0xff]
    %v5970 = vld [vmem:[#allocation5 + $0xcc] sm:$0xff]
    %5996 = vrot.lane.b32.xlu0 %v5946, 40
    %v5997 = vpop.permute.xlu0 %5996
    %5998 = vrot.lane.b32.xlu0 %v5947, 40
    %v5999 = vpop.permute.xlu0 %5998
    %6000 = vrot.lane.b32.xlu0 %v5948, 40
    %v6001 = vpop.permute.xlu0 %6000
    %6002 = vrot.lane.b32.xlu0 %v5949, 40
    %v6003 = vpop.permute.xlu0 %6002
    %6004 = vrot.lane.b32.xlu0 %v5950, 40
    %v6005 = vpop.permute.xlu0 %6004
    %6006 = vrot.lane.b32.xlu0 %v5951, 40
    %v6007 = vpop.permute.xlu0 %6006
    %6008 = vrot.lane.b32.xlu0 %v5952, 40
    %v6009 = vpop.permute.xlu0 %6008
    %6010 = vrot.lane.b32.xlu0 %v5953, 40
    %v6011 = vpop.permute.xlu0 %6010
    %6012 = vrot.lane.b32.xlu0 %v5954, 40
    %v6013 = vpop.permute.xlu0 %6012
    %6014 = vrot.lane.b32.xlu0 %v5955, 40
    %v6015 = vpop.permute.xlu0 %6014
    %6016 = vrot.lane.b32.xlu0 %v5956, 40
    %v6017 = vpop.permute.xlu0 %6016
    %6018 = vrot.lane.b32.xlu0 %v5957, 40
    %v6019 = vpop.permute.xlu0 %6018
    %6020 = vrot.lane.b32.xlu0 %v5958, 40
    %v6021 = vpop.permute.xlu0 %6020
    %6022 = vrot.lane.b32.xlu0 %v5959, 40
    %v6023 = vpop.permute.xlu0 %6022
    %6024 = vrot.lane.b32.xlu0 %v5960, 40
    %v6025 = vpop.permute.xlu0 %6024
    %6026 = vrot.lane.b32.xlu0 %v5961, 40
    %v6027 = vpop.permute.xlu0 %6026
    %6028 = vrot.lane.b32.xlu0 %v5962, 40
    %v6029 = vpop.permute.xlu0 %6028
    %6030 = vrot.lane.b32.xlu0 %v5963, 40
    %v6031 = vpop.permute.xlu0 %6030
    %6032 = vrot.lane.b32.xlu0 %v5964, 40
    %v6033 = vpop.permute.xlu0 %6032
    %6034 = vrot.lane.b32.xlu0 %v5965, 40
    %v6035 = vpop.permute.xlu0 %6034
    %6036 = vrot.lane.b32.xlu0 %v5966, 40
    %v6037 = vpop.permute.xlu0 %6036
    %6038 = vrot.lane.b32.xlu0 %v5967, 40
    %v6039 = vpop.permute.xlu0 %6038
    %6040 = vrot.lane.b32.xlu0 %v5968, 40
    %v6041 = vpop.permute.xlu0 %6040
    %6042 = vrot.lane.b32.xlu0 %v5969, 40
    %v6043 = vpop.permute.xlu0 %6042
    %6044 = vrot.lane.b32.xlu0 %v5970, 40
    %v6045 = vpop.permute.xlu0 %6044
    %vm6071 = vcmask 392512
    %6072 = vst.msk [vmem:[#allocation6] sm:$0xff] %vm6071, %v5997
    %6073 = vst.msk [vmem:[#allocation6 + $0x8] sm:$0xff] %vm6071, %v5999
    %6074 = vst.msk [vmem:[#allocation6 + $0x10] sm:$0xff] %vm6071, %v6001
    %6075 = vst.msk [vmem:[#allocation6 + $0x18] sm:$0xff] %vm6071, %v6003
    %6076 = vst.msk [vmem:[#allocation6 + $0x20] sm:$0xff] %vm6071, %v6005
    %6077 = vst.msk [vmem:[#allocation6 + $0x28] sm:$0xff] %vm6071, %v6007
    %6078 = vst.msk [vmem:[#allocation6 + $0x30] sm:$0xff] %vm6071, %v6009
    %6079 = vst.msk [vmem:[#allocation6 + $0x38] sm:$0xff] %vm6071, %v6011
    %6080 = vst.msk [vmem:[#allocation6 + $0x40] sm:$0xff] %vm6071, %v6013
    %6081 = vst.msk [vmem:[#allocation6 + $0x48] sm:$0xff] %vm6071, %v6015
    %6082 = vst.msk [vmem:[#allocation6 + $0x50] sm:$0xff] %vm6071, %v6017
    %6083 = vst.msk [vmem:[#allocation6 + $0x58] sm:$0xff] %vm6071, %v6019
    %6084 = vst.msk [vmem:[#allocation6 + $0x60] sm:$0xff] %vm6071, %v6021
    %6085 = vst.msk [vmem:[#allocation6 + $0x68] sm:$0xff] %vm6071, %v6023
    %6086 = vst.msk [vmem:[#allocation6 + $0x70] sm:$0xff] %vm6071, %v6025
    %6087 = vst.msk [vmem:[#allocation6 + $0x78] sm:$0xff] %vm6071, %v6027
    %6088 = vst.msk [vmem:[#allocation6 + $0x80] sm:$0xff] %vm6071, %v6029
    %6089 = vst.msk [vmem:[#allocation6 + $0x88] sm:$0xff] %vm6071, %v6031
    %6090 = vst.msk [vmem:[#allocation6 + $0x90] sm:$0xff] %vm6071, %v6033
    %6091 = vst.msk [vmem:[#allocation6 + $0x98] sm:$0xff] %vm6071, %v6035
    %6092 = vst.msk [vmem:[#allocation6 + $0xa0] sm:$0xff] %vm6071, %v6037
    %6093 = vst.msk [vmem:[#allocation6 + $0xa8] sm:$0xff] %vm6071, %v6039
    %6094 = vst.msk [vmem:[#allocation6 + $0xb0] sm:$0xff] %vm6071, %v6041
    %6095 = vst.msk [vmem:[#allocation6 + $0xb8] sm:$0xff] %vm6071, %v6043
    %6096 = vst.msk [vmem:[#allocation6 + $0xc0] sm:$0xff] %vm6071, %v6045
    %v6097 = vld [vmem:[#allocation5 + $0x14] sm:$0xff]
    %v6098 = vld [vmem:[#allocation5 + $0x1c] sm:$0xff]
    %v6099 = vld [vmem:[#allocation5 + $0x24] sm:$0xff]
    %v6100 = vld [vmem:[#allocation5 + $0x2c] sm:$0xff]
    %v6101 = vld [vmem:[#allocation5 + $0x34] sm:$0xff]
    %v6102 = vld [vmem:[#allocation5 + $0x3c] sm:$0xff]
    %v6103 = vld [vmem:[#allocation5 + $0x44] sm:$0xff]
    %v6104 = vld [vmem:[#allocation5 + $0x4c] sm:$0xff]
    %v6105 = vld [vmem:[#allocation5 + $0x54] sm:$0xff]
    %v6106 = vld [vmem:[#allocation5 + $0x5c] sm:$0xff]
    %v6107 = vld [vmem:[#allocation5 + $0x64] sm:$0xff]
    %v6108 = vld [vmem:[#allocation5 + $0x6c] sm:$0xff]
    %v6109 = vld [vmem:[#allocation5 + $0x74] sm:$0xff]
    %v6110 = vld [vmem:[#allocation5 + $0x7c] sm:$0xff]
    %v6111 = vld [vmem:[#allocation5 + $0x84] sm:$0xff]
    %v6112 = vld [vmem:[#allocation5 + $0x8c] sm:$0xff]
    %v6113 = vld [vmem:[#allocation5 + $0x94] sm:$0xff]
    %v6114 = vld [vmem:[#allocation5 + $0x9c] sm:$0xff]
    %v6115 = vld [vmem:[#allocation5 + $0xa4] sm:$0xff]
    %v6116 = vld [vmem:[#allocation5 + $0xac] sm:$0xff]
    %v6117 = vld [vmem:[#allocation5 + $0xb4] sm:$0xff]
    %v6118 = vld [vmem:[#allocation5 + $0xbc] sm:$0xff]
    %v6119 = vld [vmem:[#allocation5 + $0xc4] sm:$0xff]
    %v6120 = vld [vmem:[#allocation5 + $0xcc] sm:$0xff]
    %v6121 = vld [vmem:[#allocation5 + $0xd4] sm:$0xff]
    %6147 = vrot.lane.b32.xlu0 %v6097, 48
    %v6148 = vpop.permute.xlu0 %6147
    %6149 = vrot.lane.b32.xlu0 %v6098, 48
    %v6150 = vpop.permute.xlu0 %6149
    %6151 = vrot.lane.b32.xlu0 %v6099, 48
    %v6152 = vpop.permute.xlu0 %6151
    %6153 = vrot.lane.b32.xlu0 %v6100, 48
    %v6154 = vpop.permute.xlu0 %6153
    %6155 = vrot.lane.b32.xlu0 %v6101, 48
    %v6156 = vpop.permute.xlu0 %6155
    %6157 = vrot.lane.b32.xlu0 %v6102, 48
    %v6158 = vpop.permute.xlu0 %6157
    %6159 = vrot.lane.b32.xlu0 %v6103, 48
    %v6160 = vpop.permute.xlu0 %6159
    %6161 = vrot.lane.b32.xlu0 %v6104, 48
    %v6162 = vpop.permute.xlu0 %6161
    %6163 = vrot.lane.b32.xlu0 %v6105, 48
    %v6164 = vpop.permute.xlu0 %6163
    %6165 = vrot.lane.b32.xlu0 %v6106, 48
    %v6166 = vpop.permute.xlu0 %6165
    %6167 = vrot.lane.b32.xlu0 %v6107, 48
    %v6168 = vpop.permute.xlu0 %6167
    %6169 = vrot.lane.b32.xlu0 %v6108, 48
    %v6170 = vpop.permute.xlu0 %6169
    %6171 = vrot.lane.b32.xlu0 %v6109, 48
    %v6172 = vpop.permute.xlu0 %6171
    %6173 = vrot.lane.b32.xlu0 %v6110, 48
    %v6174 = vpop.permute.xlu0 %6173
    %6175 = vrot.lane.b32.xlu0 %v6111, 48
    %v6176 = vpop.permute.xlu0 %6175
    %6177 = vrot.lane.b32.xlu0 %v6112, 48
    %v6178 = vpop.permute.xlu0 %6177
    %6179 = vrot.lane.b32.xlu0 %v6113, 48
    %v6180 = vpop.permute.xlu0 %6179
    %6181 = vrot.lane.b32.xlu0 %v6114, 48
    %v6182 = vpop.permute.xlu0 %6181
    %6183 = vrot.lane.b32.xlu0 %v6115, 48
    %v6184 = vpop.permute.xlu0 %6183
    %6185 = vrot.lane.b32.xlu0 %v6116, 48
    %v6186 = vpop.permute.xlu0 %6185
    %6187 = vrot.lane.b32.xlu0 %v6117, 48
    %v6188 = vpop.permute.xlu0 %6187
    %6189 = vrot.lane.b32.xlu0 %v6118, 48
    %v6190 = vpop.permute.xlu0 %6189
    %6191 = vrot.lane.b32.xlu0 %v6119, 48
    %v6192 = vpop.permute.xlu0 %6191
    %6193 = vrot.lane.b32.xlu0 %v6120, 48
    %v6194 = vpop.permute.xlu0 %6193
    %6195 = vrot.lane.b32.xlu0 %v6121, 48
    %v6196 = vpop.permute.xlu0 %6195
    %vm6222 = vcmask 458112
    %6223 = vst.msk [vmem:[#allocation6] sm:$0xff] %vm6222, %v6148
    %6224 = vst.msk [vmem:[#allocation6 + $0x8] sm:$0xff] %vm6222, %v6150
    %6225 = vst.msk [vmem:[#allocation6 + $0x10] sm:$0xff] %vm6222, %v6152
    %6226 = vst.msk [vmem:[#allocation6 + $0x18] sm:$0xff] %vm6222, %v6154
    %6227 = vst.msk [vmem:[#allocation6 + $0x20] sm:$0xff] %vm6222, %v6156
    %6228 = vst.msk [vmem:[#allocation6 + $0x28] sm:$0xff] %vm6222, %v6158
    %6229 = vst.msk [vmem:[#allocation6 + $0x30] sm:$0xff] %vm6222, %v6160
    %6230 = vst.msk [vmem:[#allocation6 + $0x38] sm:$0xff] %vm6222, %v6162
    %6231 = vst.msk [vmem:[#allocation6 + $0x40] sm:$0xff] %vm6222, %v6164
    %6232 = vst.msk [vmem:[#allocation6 + $0x48] sm:$0xff] %vm6222, %v6166
    %6233 = vst.msk [vmem:[#allocation6 + $0x50] sm:$0xff] %vm6222, %v6168
    %6234 = vst.msk [vmem:[#allocation6 + $0x58] sm:$0xff] %vm6222, %v6170
    %6235 = vst.msk [vmem:[#allocation6 + $0x60] sm:$0xff] %vm6222, %v6172
    %6236 = vst.msk [vmem:[#allocation6 + $0x68] sm:$0xff] %vm6222, %v6174
    %6237 = vst.msk [vmem:[#allocation6 + $0x70] sm:$0xff] %vm6222, %v6176
    %6238 = vst.msk [vmem:[#allocation6 + $0x78] sm:$0xff] %vm6222, %v6178
    %6239 = vst.msk [vmem:[#allocation6 + $0x80] sm:$0xff] %vm6222, %v6180
    %6240 = vst.msk [vmem:[#allocation6 + $0x88] sm:$0xff] %vm6222, %v6182
    %6241 = vst.msk [vmem:[#allocation6 + $0x90] sm:$0xff] %vm6222, %v6184
    %6242 = vst.msk [vmem:[#allocation6 + $0x98] sm:$0xff] %vm6222, %v6186
    %6243 = vst.msk [vmem:[#allocation6 + $0xa0] sm:$0xff] %vm6222, %v6188
    %6244 = vst.msk [vmem:[#allocation6 + $0xa8] sm:$0xff] %vm6222, %v6190
    %6245 = vst.msk [vmem:[#allocation6 + $0xb0] sm:$0xff] %vm6222, %v6192
    %6246 = vst.msk [vmem:[#allocation6 + $0xb8] sm:$0xff] %vm6222, %v6194
    %6247 = vst.msk [vmem:[#allocation6 + $0xc0] sm:$0xff] %vm6222, %v6196
    %v6248 = vld [vmem:[#allocation5 + $0x15] sm:$0xff]
    %v6249 = vld [vmem:[#allocation5 + $0x1d] sm:$0xff]
    %v6250 = vld [vmem:[#allocation5 + $0x25] sm:$0xff]
    %v6251 = vld [vmem:[#allocation5 + $0x2d] sm:$0xff]
    %v6252 = vld [vmem:[#allocation5 + $0x35] sm:$0xff]
    %v6253 = vld [vmem:[#allocation5 + $0x3d] sm:$0xff]
    %v6254 = vld [vmem:[#allocation5 + $0x45] sm:$0xff]
    %v6255 = vld [vmem:[#allocation5 + $0x4d] sm:$0xff]
    %v6256 = vld [vmem:[#allocation5 + $0x55] sm:$0xff]
    %v6257 = vld [vmem:[#allocation5 + $0x5d] sm:$0xff]
    %v6258 = vld [vmem:[#allocation5 + $0x65] sm:$0xff]
    %v6259 = vld [vmem:[#allocation5 + $0x6d] sm:$0xff]
    %v6260 = vld [vmem:[#allocation5 + $0x75] sm:$0xff]
    %v6261 = vld [vmem:[#allocation5 + $0x7d] sm:$0xff]
    %v6262 = vld [vmem:[#allocation5 + $0x85] sm:$0xff]
    %v6263 = vld [vmem:[#allocation5 + $0x8d] sm:$0xff]
    %v6264 = vld [vmem:[#allocation5 + $0x95] sm:$0xff]
    %v6265 = vld [vmem:[#allocation5 + $0x9d] sm:$0xff]
    %v6266 = vld [vmem:[#allocation5 + $0xa5] sm:$0xff]
    %v6267 = vld [vmem:[#allocation5 + $0xad] sm:$0xff]
    %v6268 = vld [vmem:[#allocation5 + $0xb5] sm:$0xff]
    %v6269 = vld [vmem:[#allocation5 + $0xbd] sm:$0xff]
    %v6270 = vld [vmem:[#allocation5 + $0xc5] sm:$0xff]
    %v6271 = vld [vmem:[#allocation5 + $0xcd] sm:$0xff]
    %v6272 = vld [vmem:[#allocation5 + $0xd5] sm:$0xff]
    %6298 = vrot.lane.b32.xlu0 %v6248, 56
    %v6299 = vpop.permute.xlu0 %6298
    %6300 = vrot.lane.b32.xlu0 %v6249, 56
    %v6301 = vpop.permute.xlu0 %6300
    %6302 = vrot.lane.b32.xlu0 %v6250, 56
    %v6303 = vpop.permute.xlu0 %6302
    %6304 = vrot.lane.b32.xlu0 %v6251, 56
    %v6305 = vpop.permute.xlu0 %6304
    %6306 = vrot.lane.b32.xlu0 %v6252, 56
    %v6307 = vpop.permute.xlu0 %6306
    %6308 = vrot.lane.b32.xlu0 %v6253, 56
    %v6309 = vpop.permute.xlu0 %6308
    %6310 = vrot.lane.b32.xlu0 %v6254, 56
    %v6311 = vpop.permute.xlu0 %6310
    %6312 = vrot.lane.b32.xlu0 %v6255, 56
    %v6313 = vpop.permute.xlu0 %6312
    %6314 = vrot.lane.b32.xlu0 %v6256, 56
    %v6315 = vpop.permute.xlu0 %6314
    %6316 = vrot.lane.b32.xlu0 %v6257, 56
    %v6317 = vpop.permute.xlu0 %6316
    %6318 = vrot.lane.b32.xlu0 %v6258, 56
    %v6319 = vpop.permute.xlu0 %6318
    %6320 = vrot.lane.b32.xlu0 %v6259, 56
    %v6321 = vpop.permute.xlu0 %6320
    %6322 = vrot.lane.b32.xlu0 %v6260, 56
    %v6323 = vpop.permute.xlu0 %6322
    %6324 = vrot.lane.b32.xlu0 %v6261, 56
    %v6325 = vpop.permute.xlu0 %6324
    %6326 = vrot.lane.b32.xlu0 %v6262, 56
    %v6327 = vpop.permute.xlu0 %6326
    %6328 = vrot.lane.b32.xlu0 %v6263, 56
    %v6329 = vpop.permute.xlu0 %6328
    %6330 = vrot.lane.b32.xlu0 %v6264, 56
    %v6331 = vpop.permute.xlu0 %6330
    %6332 = vrot.lane.b32.xlu0 %v6265, 56
    %v6333 = vpop.permute.xlu0 %6332
    %6334 = vrot.lane.b32.xlu0 %v6266, 56
    %v6335 = vpop.permute.xlu0 %6334
    %6336 = vrot.lane.b32.xlu0 %v6267, 56
    %v6337 = vpop.permute.xlu0 %6336
    %6338 = vrot.lane.b32.xlu0 %v6268, 56
    %v6339 = vpop.permute.xlu0 %6338
    %6340 = vrot.lane.b32.xlu0 %v6269, 56
    %v6341 = vpop.permute.xlu0 %6340
    %6342 = vrot.lane.b32.xlu0 %v6270, 56
    %v6343 = vpop.permute.xlu0 %6342
    %6344 = vrot.lane.b32.xlu0 %v6271, 56
    %v6345 = vpop.permute.xlu0 %6344
    %6346 = vrot.lane.b32.xlu0 %v6272, 56
    %v6347 = vpop.permute.xlu0 %6346
    %vm6373 = vcmask 523712
    %6374 = vst.msk [vmem:[#allocation6] sm:$0xff] %vm6373, %v6299
    %6375 = vst.msk [vmem:[#allocation6 + $0x8] sm:$0xff] %vm6373, %v6301
    %6376 = vst.msk [vmem:[#allocation6 + $0x10] sm:$0xff] %vm6373, %v6303
    %6377 = vst.msk [vmem:[#allocation6 + $0x18] sm:$0xff] %vm6373, %v6305
    %6378 = vst.msk [vmem:[#allocation6 + $0x20] sm:$0xff] %vm6373, %v6307
    %6379 = vst.msk [vmem:[#allocation6 + $0x28] sm:$0xff] %vm6373, %v6309
    %6380 = vst.msk [vmem:[#allocation6 + $0x30] sm:$0xff] %vm6373, %v6311
    %6381 = vst.msk [vmem:[#allocation6 + $0x38] sm:$0xff] %vm6373, %v6313
    %6382 = vst.msk [vmem:[#allocation6 + $0x40] sm:$0xff] %vm6373, %v6315
    %6383 = vst.msk [vmem:[#allocation6 + $0x48] sm:$0xff] %vm6373, %v6317
    %6384 = vst.msk [vmem:[#allocation6 + $0x50] sm:$0xff] %vm6373, %v6319
    %6385 = vst.msk [vmem:[#allocation6 + $0x58] sm:$0xff] %vm6373, %v6321
    %6386 = vst.msk [vmem:[#allocation6 + $0x60] sm:$0xff] %vm6373, %v6323
    %6387 = vst.msk [vmem:[#allocation6 + $0x68] sm:$0xff] %vm6373, %v6325
    %6388 = vst.msk [vmem:[#allocation6 + $0x70] sm:$0xff] %vm6373, %v6327
    %6389 = vst.msk [vmem:[#allocation6 + $0x78] sm:$0xff] %vm6373, %v6329
    %6390 = vst.msk [vmem:[#allocation6 + $0x80] sm:$0xff] %vm6373, %v6331
    %6391 = vst.msk [vmem:[#allocation6 + $0x88] sm:$0xff] %vm6373, %v6333
    %6392 = vst.msk [vmem:[#allocation6 + $0x90] sm:$0xff] %vm6373, %v6335
    %6393 = vst.msk [vmem:[#allocation6 + $0x98] sm:$0xff] %vm6373, %v6337
    %6394 = vst.msk [vmem:[#allocation6 + $0xa0] sm:$0xff] %vm6373, %v6339
    %6395 = vst.msk [vmem:[#allocation6 + $0xa8] sm:$0xff] %vm6373, %v6341
    %6396 = vst.msk [vmem:[#allocation6 + $0xb0] sm:$0xff] %vm6373, %v6343
    %6397 = vst.msk [vmem:[#allocation6 + $0xb8] sm:$0xff] %vm6373, %v6345
    %6398 = vst.msk [vmem:[#allocation6 + $0xc0] sm:$0xff] %vm6373, %v6347
    %v6399 = vld [vmem:[#allocation5 + $0x16] sm:$0xff]
    %v6400 = vld [vmem:[#allocation5 + $0x1e] sm:$0xff]
    %v6401 = vld [vmem:[#allocation5 + $0x26] sm:$0xff]
    %v6402 = vld [vmem:[#allocation5 + $0x2e] sm:$0xff]
    %v6403 = vld [vmem:[#allocation5 + $0x36] sm:$0xff]
    %v6404 = vld [vmem:[#allocation5 + $0x3e] sm:$0xff]
    %v6405 = vld [vmem:[#allocation5 + $0x46] sm:$0xff]
    %v6406 = vld [vmem:[#allocation5 + $0x4e] sm:$0xff]
    %v6407 = vld [vmem:[#allocation5 + $0x56] sm:$0xff]
    %v6408 = vld [vmem:[#allocation5 + $0x5e] sm:$0xff]
    %v6409 = vld [vmem:[#allocation5 + $0x66] sm:$0xff]
    %v6410 = vld [vmem:[#allocation5 + $0x6e] sm:$0xff]
    %v6411 = vld [vmem:[#allocation5 + $0x76] sm:$0xff]
    %v6412 = vld [vmem:[#allocation5 + $0x7e] sm:$0xff]
    %v6413 = vld [vmem:[#allocation5 + $0x86] sm:$0xff]
    %v6414 = vld [vmem:[#allocation5 + $0x8e] sm:$0xff]
    %v6415 = vld [vmem:[#allocation5 + $0x96] sm:$0xff]
    %v6416 = vld [vmem:[#allocation5 + $0x9e] sm:$0xff]
    %v6417 = vld [vmem:[#allocation5 + $0xa6] sm:$0xff]
    %v6418 = vld [vmem:[#allocation5 + $0xae] sm:$0xff]
    %v6419 = vld [vmem:[#allocation5 + $0xb6] sm:$0xff]
    %v6420 = vld [vmem:[#allocation5 + $0xbe] sm:$0xff]
    %v6421 = vld [vmem:[#allocation5 + $0xc6] sm:$0xff]
    %v6422 = vld [vmem:[#allocation5 + $0xce] sm:$0xff]
    %v6423 = vld [vmem:[#allocation5 + $0xd6] sm:$0xff]
    %6449 = vrot.lane.b32.xlu0 %v6399, 64
    %v6450 = vpop.permute.xlu0 %6449
    %6451 = vrot.lane.b32.xlu0 %v6400, 64
    %v6452 = vpop.permute.xlu0 %6451
    %6453 = vrot.lane.b32.xlu0 %v6401, 64
    %v6454 = vpop.permute.xlu0 %6453
    %6455 = vrot.lane.b32.xlu0 %v6402, 64
    %v6456 = vpop.permute.xlu0 %6455
    %6457 = vrot.lane.b32.xlu0 %v6403, 64
    %v6458 = vpop.permute.xlu0 %6457
    %6459 = vrot.lane.b32.xlu0 %v6404, 64
    %v6460 = vpop.permute.xlu0 %6459
    %6461 = vrot.lane.b32.xlu0 %v6405, 64
    %v6462 = vpop.permute.xlu0 %6461
    %6463 = vrot.lane.b32.xlu0 %v6406, 64
    %v6464 = vpop.permute.xlu0 %6463
    %6465 = vrot.lane.b32.xlu0 %v6407, 64
    %v6466 = vpop.permute.xlu0 %6465
    %6467 = vrot.lane.b32.xlu0 %v6408, 64
    %v6468 = vpop.permute.xlu0 %6467
    %6469 = vrot.lane.b32.xlu0 %v6409, 64
    %v6470 = vpop.permute.xlu0 %6469
    %6471 = vrot.lane.b32.xlu0 %v6410, 64
    %v6472 = vpop.permute.xlu0 %6471
    %6473 = vrot.lane.b32.xlu0 %v6411, 64
    %v6474 = vpop.permute.xlu0 %6473
    %6475 = vrot.lane.b32.xlu0 %v6412, 64
    %v6476 = vpop.permute.xlu0 %6475
    %6477 = vrot.lane.b32.xlu0 %v6413, 64
    %v6478 = vpop.permute.xlu0 %6477
    %6479 = vrot.lane.b32.xlu0 %v6414, 64
    %v6480 = vpop.permute.xlu0 %6479
    %6481 = vrot.lane.b32.xlu0 %v6415, 64
    %v6482 = vpop.permute.xlu0 %6481
    %6483 = vrot.lane.b32.xlu0 %v6416, 64
    %v6484 = vpop.permute.xlu0 %6483
    %6485 = vrot.lane.b32.xlu0 %v6417, 64
    %v6486 = vpop.permute.xlu0 %6485
    %6487 = vrot.lane.b32.xlu0 %v6418, 64
    %v6488 = vpop.permute.xlu0 %6487
    %6489 = vrot.lane.b32.xlu0 %v6419, 64
    %v6490 = vpop.permute.xlu0 %6489
    %6491 = vrot.lane.b32.xlu0 %v6420, 64
    %v6492 = vpop.permute.xlu0 %6491
    %6493 = vrot.lane.b32.xlu0 %v6421, 64
    %v6494 = vpop.permute.xlu0 %6493
    %6495 = vrot.lane.b32.xlu0 %v6422, 64
    %v6496 = vpop.permute.xlu0 %6495
    %6497 = vrot.lane.b32.xlu0 %v6423, 64
    %v6498 = vpop.permute.xlu0 %6497
    %vm6524 = vcmask 589312
    %6525 = vst.msk [vmem:[#allocation6] sm:$0xff] %vm6524, %v6450
    %6526 = vst.msk [vmem:[#allocation6 + $0x8] sm:$0xff] %vm6524, %v6452
    %6527 = vst.msk [vmem:[#allocation6 + $0x10] sm:$0xff] %vm6524, %v6454
    %6528 = vst.msk [vmem:[#allocation6 + $0x18] sm:$0xff] %vm6524, %v6456
    %6529 = vst.msk [vmem:[#allocation6 + $0x20] sm:$0xff] %vm6524, %v6458
    %6530 = vst.msk [vmem:[#allocation6 + $0x28] sm:$0xff] %vm6524, %v6460
    %6531 = vst.msk [vmem:[#allocation6 + $0x30] sm:$0xff] %vm6524, %v6462
    %6532 = vst.msk [vmem:[#allocation6 + $0x38] sm:$0xff] %vm6524, %v6464
    %6533 = vst.msk [vmem:[#allocation6 + $0x40] sm:$0xff] %vm6524, %v6466
    %6534 = vst.msk [vmem:[#allocation6 + $0x48] sm:$0xff] %vm6524, %v6468
    %6535 = vst.msk [vmem:[#allocation6 + $0x50] sm:$0xff] %vm6524, %v6470
    %6536 = vst.msk [vmem:[#allocation6 + $0x58] sm:$0xff] %vm6524, %v6472
    %6537 = vst.msk [vmem:[#allocation6 + $0x60] sm:$0xff] %vm6524, %v6474
    %6538 = vst.msk [vmem:[#allocation6 + $0x68] sm:$0xff] %vm6524, %v6476
    %6539 = vst.msk [vmem:[#allocation6 + $0x70] sm:$0xff] %vm6524, %v6478
    %6540 = vst.msk [vmem:[#allocation6 + $0x78] sm:$0xff] %vm6524, %v6480
    %6541 = vst.msk [vmem:[#allocation6 + $0x80] sm:$0xff] %vm6524, %v6482
    %6542 = vst.msk [vmem:[#allocation6 + $0x88] sm:$0xff] %vm6524, %v6484
    %6543 = vst.msk [vmem:[#allocation6 + $0x90] sm:$0xff] %vm6524, %v6486
    %6544 = vst.msk [vmem:[#allocation6 + $0x98] sm:$0xff] %vm6524, %v6488
    %6545 = vst.msk [vmem:[#allocation6 + $0xa0] sm:$0xff] %vm6524, %v6490
    %6546 = vst.msk [vmem:[#allocation6 + $0xa8] sm:$0xff] %vm6524, %v6492
    %6547 = vst.msk [vmem:[#allocation6 + $0xb0] sm:$0xff] %vm6524, %v6494
    %6548 = vst.msk [vmem:[#allocation6 + $0xb8] sm:$0xff] %vm6524, %v6496
    %6549 = vst.msk [vmem:[#allocation6 + $0xc0] sm:$0xff] %vm6524, %v6498
    %v6550 = vld [vmem:[#allocation6] sm:$0xff]
    %v6551 = vld [vmem:[#allocation6 + $0x8] sm:$0xff]
    %v6552 = vld [vmem:[#allocation6 + $0x10] sm:$0xff]
    %v6553 = vld [vmem:[#allocation6 + $0x18] sm:$0xff]
    %v6554 = vld [vmem:[#allocation6 + $0x20] sm:$0xff]
    %v6555 = vld [vmem:[#allocation6 + $0x28] sm:$0xff]
    %v6556 = vld [vmem:[#allocation6 + $0x30] sm:$0xff]
    %v6557 = vld [vmem:[#allocation6 + $0x38] sm:$0xff]
    %v6558 = vld [vmem:[#allocation6 + $0x40] sm:$0xff]
    %v6559 = vld [vmem:[#allocation6 + $0x48] sm:$0xff]
    %v6560 = vld [vmem:[#allocation6 + $0x50] sm:$0xff]
    %v6561 = vld [vmem:[#allocation6 + $0x58] sm:$0xff]
    %v6562 = vld [vmem:[#allocation6 + $0x60] sm:$0xff]
    %v6563 = vld [vmem:[#allocation6 + $0x68] sm:$0xff]
    %v6564 = vld [vmem:[#allocation6 + $0x70] sm:$0xff]
    %v6565 = vld [vmem:[#allocation6 + $0x78] sm:$0xff]
    %v6566 = vld [vmem:[#allocation6 + $0x80] sm:$0xff]
    %v6567 = vld [vmem:[#allocation6 + $0x88] sm:$0xff]
    %v6568 = vld [vmem:[#allocation6 + $0x90] sm:$0xff]
    %v6569 = vld [vmem:[#allocation6 + $0x98] sm:$0xff]
    %v6570 = vld [vmem:[#allocation6 + $0xa0] sm:$0xff]
    %v6571 = vld [vmem:[#allocation6 + $0xa8] sm:$0xff]
    %v6572 = vld [vmem:[#allocation6 + $0xb0] sm:$0xff]
    %v6573 = vld [vmem:[#allocation6 + $0xb8] sm:$0xff]
    %v6574 = vld [vmem:[#allocation6 + $0xc0] sm:$0xff]
    %v6575 = vld [vmem:[%s3] sm:$0xff]
    %v6576 = vld [vmem:[%s3 + $0x8] sm:$0xff]
    %v6577 = vld [vmem:[%s3 + $0x10] sm:$0xff]
    %v6578 = vld [vmem:[%s3 + $0x18] sm:$0xff]
    %v6579 = vld [vmem:[%s3 + $0x20] sm:$0xff]
    %v6580 = vld [vmem:[%s3 + $0x28] sm:$0xff]
    %v6581 = vld [vmem:[%s3 + $0x30] sm:$0xff]
    %v6582 = vld [vmem:[%s3 + $0x38] sm:$0xff]
    %v6583 = vld [vmem:[%s3 + $0x40] sm:$0xff]
    %v6584 = vld [vmem:[%s4] sm:$0x1]
    %v6586 = vperm.slane %v6584, 0
    %vm6588 = vcmask 588800
    %v6590 = vsel %vm6588, %v6550, 0
    %v6593 = vsel %vm6588, %v6551, 0
    %v6596 = vsel %vm6588, %v6552, 0
    %v6599 = vsel %vm6588, %v6553, 0
    %v6602 = vsel %vm6588, %v6554, 0
    %v6605 = vsel %vm6588, %v6555, 0
    %v6608 = vsel %vm6588, %v6556, 0
    %v6611 = vsel %vm6588, %v6557, 0
    %v6614 = vsel %vm6588, %v6558, 0
    %v6617 = vsel %vm6588, %v6559, 0
    %v6620 = vsel %vm6588, %v6560, 0
    %v6623 = vsel %vm6588, %v6561, 0
    %v6626 = vsel %vm6588, %v6562, 0
    %v6629 = vsel %vm6588, %v6563, 0
    %v6632 = vsel %vm6588, %v6564, 0
    %v6635 = vsel %vm6588, %v6565, 0
    %v6638 = vsel %vm6588, %v6566, 0
    %v6641 = vsel %vm6588, %v6567, 0
    %v6644 = vsel %vm6588, %v6568, 0
    %v6647 = vsel %vm6588, %v6569, 0
    %v6650 = vsel %vm6588, %v6570, 0
    %v6653 = vsel %vm6588, %v6571, 0
    %v6656 = vsel %vm6588, %v6572, 0
    %v6659 = vsel %vm6588, %v6573, 0
    %v6662 = vsel %vm6588, %v6574, 0
    %6664 = vmatpush.msra.mxu0 0.0
    %6665 = vmatpush.msra.mxu0 0.0
    %6666 = vmatpush.msra.mxu0 0.0
    %6667 = vmatpush.msra.mxu0 0.0
    %6668 = vmatpush.msra.mxu0 0.0
    %6669 = vmatpush.msra.mxu0 0.0
    %6670 = vmatpush.msra.mxu0 0.0
    %6671 = vmatpush.msra.mxu0 %v6583
    %6672 = vmatpush.msra.mxu0 %v6582
    %6673 = vmatpush.msra.mxu0 %v6581
    %6674 = vmatpush.msra.mxu0 %v6580
    %6675 = vmatpush.msra.mxu0 %v6579
    %6676 = vmatpush.msra.mxu0 %v6578
    %6677 = vmatpush.msra.mxu0 %v6577
    %6678 = vmatpush.msra.mxu0 %v6576
    %6679 = vmatpush.msra.mxu0 %v6575
    %6680 = vmatmul.f32.gmra.mxu0 %v6590
    %v6681 = vpop.f32.mrf.mxu0
    %v6682 = vadd.f32 %v6586, %v6681
    %6683 = vmatmul.f32.gmra.mxu0 %v6593
    %v6684 = vpop.f32.mrf.mxu0
    %v6685 = vadd.f32 %v6586, %v6684
    %6686 = vmatmul.f32.gmra.mxu0 %v6596
    %v6687 = vpop.f32.mrf.mxu0
    %v6688 = vadd.f32 %v6586, %v6687
    %6689 = vmatmul.f32.gmra.mxu0 %v6599
    %v6690 = vpop.f32.mrf.mxu0
    %v6691 = vadd.f32 %v6586, %v6690
    %6692 = vmatmul.f32.gmra.mxu0 %v6602
    %v6693 = vpop.f32.mrf.mxu0
    %v6694 = vadd.f32 %v6586, %v6693
    %6695 = vmatmul.f32.gmra.mxu0 %v6605
    %v6696 = vpop.f32.mrf.mxu0
    %v6697 = vadd.f32 %v6586, %v6696
    %6698 = vmatmul.f32.gmra.mxu0 %v6608
    %v6699 = vpop.f32.mrf.mxu0
    %v6700 = vadd.f32 %v6586, %v6699
    %6701 = vmatmul.f32.gmra.mxu0 %v6611
    %v6702 = vpop.f32.mrf.mxu0
    %v6703 = vadd.f32 %v6586, %v6702
    %6704 = vmatmul.f32.gmra.mxu0 %v6614
    %v6705 = vpop.f32.mrf.mxu0
    %v6706 = vadd.f32 %v6586, %v6705
    %6707 = vmatmul.f32.gmra.mxu0 %v6617
    %v6708 = vpop.f32.mrf.mxu0
    %v6709 = vadd.f32 %v6586, %v6708
    %6710 = vmatmul.f32.gmra.mxu0 %v6620
    %v6711 = vpop.f32.mrf.mxu0
    %v6712 = vadd.f32 %v6586, %v6711
    %6713 = vmatmul.f32.gmra.mxu0 %v6623
    %v6714 = vpop.f32.mrf.mxu0
    %v6715 = vadd.f32 %v6586, %v6714
    %6716 = vmatmul.f32.gmra.mxu0 %v6626
    %v6717 = vpop.f32.mrf.mxu0
    %v6718 = vadd.f32 %v6586, %v6717
    %6719 = vmatmul.f32.gmra.mxu0 %v6629
    %v6720 = vpop.f32.mrf.mxu0
    %v6721 = vadd.f32 %v6586, %v6720
    %6722 = vmatmul.f32.gmra.mxu0 %v6632
    %v6723 = vpop.f32.mrf.mxu0
    %v6724 = vadd.f32 %v6586, %v6723
    %6725 = vmatmul.f32.gmra.mxu0 %v6635
    %v6726 = vpop.f32.mrf.mxu0
    %v6727 = vadd.f32 %v6586, %v6726
    %6728 = vmatmul.f32.gmra.mxu0 %v6638
    %v6729 = vpop.f32.mrf.mxu0
    %v6730 = vadd.f32 %v6586, %v6729
    %6731 = vmatmul.f32.gmra.mxu0 %v6641
    %v6732 = vpop.f32.mrf.mxu0
    %v6733 = vadd.f32 %v6586, %v6732
    %6734 = vmatmul.f32.gmra.mxu0 %v6644
    %v6735 = vpop.f32.mrf.mxu0
    %v6736 = vadd.f32 %v6586, %v6735
    %6737 = vmatmul.f32.gmra.mxu0 %v6647
    %v6738 = vpop.f32.mrf.mxu0
    %v6739 = vadd.f32 %v6586, %v6738
    %6740 = vmatmul.f32.gmra.mxu0 %v6650
    %v6741 = vpop.f32.mrf.mxu0
    %v6742 = vadd.f32 %v6586, %v6741
    %6743 = vmatmul.f32.gmra.mxu0 %v6653
    %v6744 = vpop.f32.mrf.mxu0
    %v6745 = vadd.f32 %v6586, %v6744
    %6746 = vmatmul.f32.gmra.mxu0 %v6656
    %v6747 = vpop.f32.mrf.mxu0
    %v6748 = vadd.f32 %v6586, %v6747
    %6749 = vmatmul.f32.gmra.mxu0 %v6659
    %v6750 = vpop.f32.mrf.mxu0
    %v6751 = vadd.f32 %v6586, %v6750
    %6752 = vmatmul.f32.gmra.mxu0 %v6662
    %v6753 = vpop.f32.mrf.mxu0
    %v6754 = vadd.f32 %v6586, %v6753
    %6755 = vdwg.mxu0
    %v6756 = vmax.f32 %v6682, 0.0
    %v6757 = vmax.f32 %v6685, 0.0
    %v6758 = vmax.f32 %v6688, 0.0
    %v6759 = vmax.f32 %v6691, 0.0
    %v6760 = vmax.f32 %v6694, 0.0
    %v6761 = vmax.f32 %v6697, 0.0
    %v6762 = vmax.f32 %v6700, 0.0
    %v6763 = vmax.f32 %v6703, 0.0
    %v6764 = vmax.f32 %v6706, 0.0
    %v6765 = vmax.f32 %v6709, 0.0
    %v6766 = vmax.f32 %v6712, 0.0
    %v6767 = vmax.f32 %v6715, 0.0
    %v6768 = vmax.f32 %v6718, 0.0
    %v6769 = vmax.f32 %v6721, 0.0
    %v6770 = vmax.f32 %v6724, 0.0
    %v6771 = vmax.f32 %v6727, 0.0
    %v6772 = vmax.f32 %v6730, 0.0
    %v6773 = vmax.f32 %v6733, 0.0
    %v6774 = vmax.f32 %v6736, 0.0
    %v6775 = vmax.f32 %v6739, 0.0
    %v6776 = vmax.f32 %v6742, 0.0
    %v6777 = vmax.f32 %v6745, 0.0
    %v6778 = vmax.f32 %v6748, 0.0
    %v6779 = vmax.f32 %v6751, 0.0
    %v6780 = vmax.f32 %v6754, 0.0
    %vm6781 = vcmask 130048
    %6782 = vst.msk [vmem:[#allocation7] sm:$0xff] %vm6781, %v6756
    %6783 = vst.msk [vmem:[#allocation7 + $0x8] sm:$0xff] %vm6781, %v6757
    %6784 = vst.msk [vmem:[#allocation7 + $0x10] sm:$0xff] %vm6781, %v6758
    %6785 = vst.msk [vmem:[#allocation7 + $0x18] sm:$0xff] %vm6781, %v6759
    %6786 = vst.msk [vmem:[#allocation7 + $0x20] sm:$0xff] %vm6781, %v6760
    %6787 = vst.msk [vmem:[#allocation7 + $0x28] sm:$0xff] %vm6781, %v6761
    %6788 = vst.msk [vmem:[#allocation7 + $0x30] sm:$0xff] %vm6781, %v6762
    %6789 = vst.msk [vmem:[#allocation7 + $0x38] sm:$0xff] %vm6781, %v6763
    %6790 = vst.msk [vmem:[#allocation7 + $0x40] sm:$0xff] %vm6781, %v6764
    %6791 = vst.msk [vmem:[#allocation7 + $0x48] sm:$0xff] %vm6781, %v6765
    %6792 = vst.msk [vmem:[#allocation7 + $0x50] sm:$0xff] %vm6781, %v6766
    %6793 = vst.msk [vmem:[#allocation7 + $0x58] sm:$0xff] %vm6781, %v6767
    %6794 = vst.msk [vmem:[#allocation7 + $0x60] sm:$0xff] %vm6781, %v6768
    %6795 = vst.msk [vmem:[#allocation7 + $0x68] sm:$0xff] %vm6781, %v6769
    %6796 = vst.msk [vmem:[#allocation7 + $0x70] sm:$0xff] %vm6781, %v6770
    %6797 = vst.msk [vmem:[#allocation7 + $0x78] sm:$0xff] %vm6781, %v6771
    %6798 = vst.msk [vmem:[#allocation7 + $0x80] sm:$0xff] %vm6781, %v6772
    %6799 = vst.msk [vmem:[#allocation7 + $0x88] sm:$0xff] %vm6781, %v6773
    %6800 = vst.msk [vmem:[#allocation7 + $0x90] sm:$0xff] %vm6781, %v6774
    %6801 = vst.msk [vmem:[#allocation7 + $0x98] sm:$0xff] %vm6781, %v6775
    %6802 = vst.msk [vmem:[#allocation7 + $0xa0] sm:$0xff] %vm6781, %v6776
    %6803 = vst.msk [vmem:[#allocation7 + $0xa8] sm:$0xff] %vm6781, %v6777
    %6804 = vst.msk [vmem:[#allocation7 + $0xb0] sm:$0xff] %vm6781, %v6778
    %6805 = vst.msk [vmem:[#allocation7 + $0xb8] sm:$0xff] %vm6781, %v6779
    %6806 = vst.msk [vmem:[#allocation7 + $0xc0] sm:$0xff] %vm6781, %v6780
    %v6807 = vld [vmem:[#allocation7] sm:$0xff]
    %v6808 = vld [vmem:[#allocation7 + $0xa] sm:$0xff]
    %v6809 = vmax.f32 %v6807, %v6808
    %v6811 = vrot.slane %v6809, 1
    %v6813 = vmax.f32 %v6809, %v6811
    %vm6814 = vcmask 122880
    %6815 = vst.msk [vmem:[#allocation8] sm:$0x1] %vm6814, %v6813
    %6817 = vst.sshfl [vmem:[#allocation1] sm:$0xff pattern:$0x73625140] %v6813
    %s6818 = scalar_lea.vmem [#allocation1], 1
    %v6819 = vld [vmem:[%s6818] ss:$4 sm:$0xff]
    %6820 = vrot.lane.b32.xlu0 %v6819, 16
    %v6821 = vpop.permute.xlu0 %6820
    %vm6823 = vcmask 254080
    %6824 = vst.msk [vmem:[#allocation8] sm:$0x1] %vm6823, %v6821
    %6825 = vst.sshfl [vmem:[#allocation1] sm:$0xff pattern:$0x73625140] %v6813
    %s6826 = scalar_lea.vmem [#allocation1], 2
    %v6827 = vld [vmem:[%s6826] ss:$4 sm:$0xff]
    %6828 = vrot.lane.b32.xlu0 %v6827, 32
    %v6829 = vpop.permute.xlu0 %6828
    %vm6831 = vcmask 385280
    %6832 = vst.msk [vmem:[#allocation8] sm:$0x1] %vm6831, %v6829
    %6833 = vst.sshfl [vmem:[#allocation1] sm:$0xff pattern:$0x73625140] %v6813
    %s6834 = scalar_lea.vmem [#allocation1], 3
    %v6835 = vld [vmem:[%s6834] ss:$4 sm:$0xff]
    %6836 = vrot.lane.b32.xlu0 %v6835, 48
    %v6837 = vpop.permute.xlu0 %6836
    %vm6839 = vcmask 516480
    %6840 = vst.msk [vmem:[#allocation8] sm:$0x1] %vm6839, %v6837
    %v6841 = vld [vmem:[#allocation7 + $0x14] sm:$0xff]
    %v6842 = vld [vmem:[#allocation7 + $0x1e] sm:$0xff]
    %v6843 = vmax.f32 %v6841, %v6842
    %v6845 = vrot.slane %v6843, 1
    %v6847 = vmax.f32 %v6843, %v6845
    %6849 = vrot.lane.b32.xlu0 %v6847, 64
    %v6850 = vpop.permute.xlu0 %6849
    %vm6852 = vcmask 647680
    %6853 = vst.msk [vmem:[#allocation8] sm:$0x1] %vm6852, %v6850
    %6854 = vst.sshfl [vmem:[#allocation1] sm:$0xff pattern:$0x73625140] %v6847
    %s6855 = scalar_lea.vmem [#allocation1], 1
    %v6856 = vld [vmem:[%s6855] ss:$4 sm:$0xff]
    %6857 = vrot.lane.b32.xlu0 %v6856, 80
    %v6858 = vpop.permute.xlu0 %6857
    %vm6860 = vcmask 778880
    %6861 = vst.msk [vmem:[#allocation8] sm:$0x1] %vm6860, %v6858
    %6862 = vst.sshfl [vmem:[#allocation1] sm:$0xff pattern:$0x73625140] %v6847
    %s6863 = scalar_lea.vmem [#allocation1], 2
    %v6864 = vld [vmem:[%s6863] ss:$4 sm:$0xff]
    %6865 = vrot.lane.b32.xlu0 %v6864, 96
    %v6866 = vpop.permute.xlu0 %6865
    %vm6868 = vcmask 910080
    %6869 = vst.msk [vmem:[#allocation8] sm:$0x1] %vm6868, %v6866
    %6870 = vst.sshfl [vmem:[#allocation1] sm:$0xff pattern:$0x73625140] %v6847
    %s6871 = scalar_lea.vmem [#allocation1], 3
    %v6872 = vld [vmem:[%s6871] ss:$4 sm:$0xff]
    %6873 = vrot.lane.b32.xlu0 %v6872, 112
    %v6874 = vpop.permute.xlu0 %6873
    %vm6876 = vcmask 1041280
    %6877 = vst.msk [vmem:[#allocation8] sm:$0x1] %vm6876, %v6874
    %v6878 = vld [vmem:[#allocation7 + $0x28] sm:$0xff]
    %v6879 = vld [vmem:[#allocation7 + $0x32] sm:$0xff]
    %v6880 = vmax.f32 %v6878, %v6879
    %v6882 = vrot.slane %v6880, 1
    %v6884 = vmax.f32 %v6880, %v6882
    %6885 = vst.msk [vmem:[#allocation8 + $0x2] sm:$0x1] %vm6814, %v6884
    %6887 = vst.sshfl [vmem:[#allocation1] sm:$0xff pattern:$0x73625140] %v6884
    %s6888 = scalar_lea.vmem [#allocation1], 1
    %v6889 = vld [vmem:[%s6888] ss:$4 sm:$0xff]
    %6890 = vrot.lane.b32.xlu0 %v6889, 16
    %v6891 = vpop.permute.xlu0 %6890
    %6893 = vst.msk [vmem:[#allocation8 + $0x2] sm:$0x1] %vm6823, %v6891
    %6894 = vst.sshfl [vmem:[#allocation1] sm:$0xff pattern:$0x73625140] %v6884
    %s6895 = scalar_lea.vmem [#allocation1], 2
    %v6896 = vld [vmem:[%s6895] ss:$4 sm:$0xff]
    %6897 = vrot.lane.b32.xlu0 %v6896, 32
    %v6898 = vpop.permute.xlu0 %6897
    %6900 = vst.msk [vmem:[#allocation8 + $0x2] sm:$0x1] %vm6831, %v6898
    %6901 = vst.sshfl [vmem:[#allocation1] sm:$0xff pattern:$0x73625140] %v6884
    %s6902 = scalar_lea.vmem [#allocation1], 3
    %v6903 = vld [vmem:[%s6902] ss:$4 sm:$0xff]
    %6904 = vrot.lane.b32.xlu0 %v6903, 48
    %v6905 = vpop.permute.xlu0 %6904
    %6907 = vst.msk [vmem:[#allocation8 + $0x2] sm:$0x1] %vm6839, %v6905
    %v6908 = vld [vmem:[#allocation7 + $0x3c] sm:$0xff]
    %v6909 = vld [vmem:[#allocation7 + $0x46] sm:$0xff]
    %v6910 = vmax.f32 %v6908, %v6909
    %v6912 = vrot.slane %v6910, 1
    %v6914 = vmax.f32 %v6910, %v6912
    %6916 = vrot.lane.b32.xlu0 %v6914, 64
    %v6917 = vpop.permute.xlu0 %6916
    %6919 = vst.msk [vmem:[#allocation8 + $0x2] sm:$0x1] %vm6852, %v6917
    %6920 = vst.sshfl [vmem:[#allocation1] sm:$0xff pattern:$0x73625140] %v6914
    %s6921 = scalar_lea.vmem [#allocation1], 1
    %v6922 = vld [vmem:[%s6921] ss:$4 sm:$0xff]
    %6923 = vrot.lane.b32.xlu0 %v6922, 80
    %v6924 = vpop.permute.xlu0 %6923
    %6926 = vst.msk [vmem:[#allocation8 + $0x2] sm:$0x1] %vm6860, %v6924
    %6927 = vst.sshfl [vmem:[#allocation1] sm:$0xff pattern:$0x73625140] %v6914
    %s6928 = scalar_lea.vmem [#allocation1], 2
    %v6929 = vld [vmem:[%s6928] ss:$4 sm:$0xff]
    %6930 = vrot.lane.b32.xlu0 %v6929, 96
    %v6931 = vpop.permute.xlu0 %6930
    %6933 = vst.msk [vmem:[#allocation8 + $0x2] sm:$0x1] %vm6868, %v6931
    %6934 = vst.sshfl [vmem:[#allocation1] sm:$0xff pattern:$0x73625140] %v6914
    %s6935 = scalar_lea.vmem [#allocation1], 3
    %v6936 = vld [vmem:[%s6935] ss:$4 sm:$0xff]
    %6937 = vrot.lane.b32.xlu0 %v6936, 112
    %v6938 = vpop.permute.xlu0 %6937
    %6940 = vst.msk [vmem:[#allocation8 + $0x2] sm:$0x1] %vm6876, %v6938
    %v6941 = vld [vmem:[#allocation7 + $0x64] sm:$0xff]
    %v6942 = vld [vmem:[#allocation7 + $0x6e] sm:$0xff]
    %v6943 = vmax.f32 %v6941, %v6942
    %v6945 = vrot.slane %v6943, 1
    %v6947 = vmax.f32 %v6943, %v6945
    %6948 = vst.msk [vmem:[#allocation8 + $0x1] sm:$0x1] %vm6814, %v6947
    %6950 = vst.sshfl [vmem:[#allocation1] sm:$0xff pattern:$0x73625140] %v6947
    %s6951 = scalar_lea.vmem [#allocation1], 1
    %v6952 = vld [vmem:[%s6951] ss:$4 sm:$0xff]
    %6953 = vrot.lane.b32.xlu0 %v6952, 16
    %v6954 = vpop.permute.xlu0 %6953
    %6956 = vst.msk [vmem:[#allocation8 + $0x1] sm:$0x1] %vm6823, %v6954
    %6957 = vst.sshfl [vmem:[#allocation1] sm:$0xff pattern:$0x73625140] %v6947
    %s6958 = scalar_lea.vmem [#allocation1], 2
    %v6959 = vld [vmem:[%s6958] ss:$4 sm:$0xff]
    %6960 = vrot.lane.b32.xlu0 %v6959, 32
    %v6961 = vpop.permute.xlu0 %6960
    %6963 = vst.msk [vmem:[#allocation8 + $0x1] sm:$0x1] %vm6831, %v6961
    %6964 = vst.sshfl [vmem:[#allocation1] sm:$0xff pattern:$0x73625140] %v6947
    %s6965 = scalar_lea.vmem [#allocation1], 3
    %v6966 = vld [vmem:[%s6965] ss:$4 sm:$0xff]
    %6967 = vrot.lane.b32.xlu0 %v6966, 48
    %v6968 = vpop.permute.xlu0 %6967
    %6970 = vst.msk [vmem:[#allocation8 + $0x1] sm:$0x1] %vm6839, %v6968
    %v6971 = vld [vmem:[#allocation7 + $0x78] sm:$0xff]
    %v6972 = vld [vmem:[#allocation7 + $0x82] sm:$0xff]
    %v6973 = vmax.f32 %v6971, %v6972
    %v6975 = vrot.slane %v6973, 1
    %v6977 = vmax.f32 %v6973, %v6975
    %6979 = vrot.lane.b32.xlu0 %v6977, 64
    %v6980 = vpop.permute.xlu0 %6979
    %6982 = vst.msk [vmem:[#allocation8 + $0x1] sm:$0x1] %vm6852, %v6980
    %6983 = vst.sshfl [vmem:[#allocation1] sm:$0xff pattern:$0x73625140] %v6977
    %s6984 = scalar_lea.vmem [#allocation1], 1
    %v6985 = vld [vmem:[%s6984] ss:$4 sm:$0xff]
    %6986 = vrot.lane.b32.xlu0 %v6985, 80
    %v6987 = vpop.permute.xlu0 %6986
    %6989 = vst.msk [vmem:[#allocation8 + $0x1] sm:$0x1] %vm6860, %v6987
    %6990 = vst.sshfl [vmem:[#allocation1] sm:$0xff pattern:$0x73625140] %v6977
    %s6991 = scalar_lea.vmem [#allocation1], 2
    %v6992 = vld [vmem:[%s6991] ss:$4 sm:$0xff]
    %6993 = vrot.lane.b32.xlu0 %v6992, 96
    %v6994 = vpop.permute.xlu0 %6993
    %6996 = vst.msk [vmem:[#allocation8 + $0x1] sm:$0x1] %vm6868, %v6994
    %6997 = vst.sshfl [vmem:[#allocation1] sm:$0xff pattern:$0x73625140] %v6977
    %s6998 = scalar_lea.vmem [#allocation1], 3
    %v6999 = vld [vmem:[%s6998] ss:$4 sm:$0xff]
    %7000 = vrot.lane.b32.xlu0 %v6999, 112
    %v7001 = vpop.permute.xlu0 %7000
    %7003 = vst.msk [vmem:[#allocation8 + $0x1] sm:$0x1] %vm6876, %v7001
    %v7004 = vld [vmem:[#allocation7 + $0x8c] sm:$0xff]
    %v7005 = vld [vmem:[#allocation7 + $0x96] sm:$0xff]
    %v7006 = vmax.f32 %v7004, %v7005
    %v7008 = vrot.slane %v7006, 1
    %v7010 = vmax.f32 %v7006, %v7008
    %7011 = vst.msk [vmem:[#allocation8 + $0x3] sm:$0x1] %vm6814, %v7010
    %7013 = vst.sshfl [vmem:[#allocation1] sm:$0xff pattern:$0x73625140] %v7010
    %s7014 = scalar_lea.vmem [#allocation1], 1
    %v7015 = vld [vmem:[%s7014] ss:$4 sm:$0xff]
    %7016 = vrot.lane.b32.xlu0 %v7015, 16
    %v7017 = vpop.permute.xlu0 %7016
    %7019 = vst.msk [vmem:[#allocation8 + $0x3] sm:$0x1] %vm6823, %v7017
    %7020 = vst.sshfl [vmem:[#allocation1] sm:$0xff pattern:$0x73625140] %v7010
    %s7021 = scalar_lea.vmem [#allocation1], 2
    %v7022 = vld [vmem:[%s7021] ss:$4 sm:$0xff]
    %7023 = vrot.lane.b32.xlu0 %v7022, 32
    %v7024 = vpop.permute.xlu0 %7023
    %7026 = vst.msk [vmem:[#allocation8 + $0x3] sm:$0x1] %vm6831, %v7024
    %7027 = vst.sshfl [vmem:[#allocation1] sm:$0xff pattern:$0x73625140] %v7010
    %s7028 = scalar_lea.vmem [#allocation1], 3
    %v7029 = vld [vmem:[%s7028] ss:$4 sm:$0xff]
    %7030 = vrot.lane.b32.xlu0 %v7029, 48
    %v7031 = vpop.permute.xlu0 %7030
    %7033 = vst.msk [vmem:[#allocation8 + $0x3] sm:$0x1] %vm6839, %v7031
    %v7034 = vld [vmem:[#allocation7 + $0xa0] sm:$0xff]
    %v7035 = vld [vmem:[#allocation7 + $0xaa] sm:$0xff]
    %v7036 = vmax.f32 %v7034, %v7035
    %v7038 = vrot.slane %v7036, 1
    %v7040 = vmax.f32 %v7036, %v7038
    %7042 = vrot.lane.b32.xlu0 %v7040, 64
    %v7043 = vpop.permute.xlu0 %7042
    %7045 = vst.msk [vmem:[#allocation8 + $0x3] sm:$0x1] %vm6852, %v7043
    %7046 = vst.sshfl [vmem:[#allocation1] sm:$0xff pattern:$0x73625140] %v7040
    %s7047 = scalar_lea.vmem [#allocation1], 1
    %v7048 = vld [vmem:[%s7047] ss:$4 sm:$0xff]
    %7049 = vrot.lane.b32.xlu0 %v7048, 80
    %v7050 = vpop.permute.xlu0 %7049
    %7052 = vst.msk [vmem:[#allocation8 + $0x3] sm:$0x1] %vm6860, %v7050
    %7053 = vst.sshfl [vmem:[#allocation1] sm:$0xff pattern:$0x73625140] %v7040
    %s7054 = scalar_lea.vmem [#allocation1], 2
    %v7055 = vld [vmem:[%s7054] ss:$4 sm:$0xff]
    %7056 = vrot.lane.b32.xlu0 %v7055, 96
    %v7057 = vpop.permute.xlu0 %7056
    %7059 = vst.msk [vmem:[#allocation8 + $0x3] sm:$0x1] %vm6868, %v7057
    %7060 = vst.sshfl [vmem:[#allocation1] sm:$0xff pattern:$0x73625140] %v7040
    %s7061 = scalar_lea.vmem [#allocation1], 3
    %v7062 = vld [vmem:[%s7061] ss:$4 sm:$0xff]
    %7063 = vrot.lane.b32.xlu0 %v7062, 112
    %v7064 = vpop.permute.xlu0 %7063
    %7066 = vst.msk [vmem:[#allocation8 + $0x3] sm:$0x1] %vm6876, %v7064
    %v7067 = vld [vmem:[#allocation8] sm:$0xf]
    %v7068 = vld [vmem:[%s5] sm:$0xff]
    %v7069 = vld [vmem:[%s5 + $0x8] sm:$0xff]
    %v7070 = vld [vmem:[%s5 + $0x10] sm:$0xff]
    %v7071 = vld [vmem:[%s5 + $0x18] sm:$0xff]
    %v7072 = vld [vmem:[%s5 + $0x20] sm:$0xff]
    %v7073 = vld [vmem:[%s5 + $0x28] sm:$0xff]
    %v7074 = vld [vmem:[%s5 + $0x30] sm:$0xff]
    %v7075 = vld [vmem:[%s5 + $0x38] sm:$0xff]
    %v7076 = vld [vmem:[%s5 + $0x40] sm:$0xff]
    %v7077 = vld [vmem:[%s5 + $0x48] sm:$0xff]
    %v7078 = vld [vmem:[%s5 + $0x50] sm:$0xff]
    %v7079 = vld [vmem:[%s5 + $0x58] sm:$0xff]
    %v7080 = vld [vmem:[%s5 + $0x60] sm:$0xff]
    %v7081 = vld [vmem:[%s5 + $0x68] sm:$0xff]
    %v7082 = vld [vmem:[%s5 + $0x70] sm:$0xff]
    %v7083 = vld [vmem:[%s5 + $0x78] sm:$0xff]
    %v7084 = vld [vmem:[%s5 + $0x80] sm:$0xff]
    %v7085 = vld [vmem:[%s5 + $0x88] sm:$0xff]
    %v7086 = vld [vmem:[%s5 + $0x90] sm:$0xff]
    %v7087 = vld [vmem:[%s5 + $0x98] sm:$0xff]
    %v7088 = vld [vmem:[%s5 + $0xa0] sm:$0xff]
    %v7089 = vld [vmem:[%s5 + $0xa8] sm:$0xff]
    %v7090 = vld [vmem:[%s5 + $0xb0] sm:$0xff]
    %v7091 = vld [vmem:[%s5 + $0xb8] sm:$0xff]
    %v7092 = vld [vmem:[%s5 + $0xc0] sm:$0xff]
    %v7093 = vld [vmem:[%s5 + $0xc8] sm:$0xff]
    %v7094 = vld [vmem:[%s5 + $0xd0] sm:$0xff]
    %v7095 = vld [vmem:[%s5 + $0xd8] sm:$0xff]
    %v7096 = vld [vmem:[%s5 + $0xe0] sm:$0xff]
    %v7097 = vld [vmem:[%s5 + $0xe8] sm:$0xff]
    %v7098 = vld [vmem:[%s5 + $0xf0] sm:$0xff]
    %v7099 = vld [vmem:[%s5 + $0xf8] sm:$0xff]
    %v7100 = vld [vmem:[%s6] sm:$0x1]
    %v7102 = vperm.slane %v7100, 0
    %7105 = vst [vmem:[#allocation1] ss:$4 sm:$0xff] %v7067
    %v7106 = vld.sshfl [vmem:[#allocation1] sm:$0xff pattern:$0x73625140]
    %v7107 = vld.sshfl [vmem:[#allocation1 + $0x8] sm:$0xff pattern:$0x73625140]
    %7110 = vmatpush.msra.mxu0 %v7083
    %7111 = vmatpush.msra.mxu0 %v7082
    %7112 = vmatpush.msra.mxu0 %v7081
    %7113 = vmatpush.msra.mxu0 %v7080
    %7114 = vmatpush.msra.mxu0 %v7079
    %7115 = vmatpush.msra.mxu0 %v7078
    %7116 = vmatpush.msra.mxu0 %v7077
    %7117 = vmatpush.msra.mxu0 %v7076
    %7118 = vmatpush.msra.mxu0 %v7075
    %7119 = vmatpush.msra.mxu0 %v7074
    %7120 = vmatpush.msra.mxu0 %v7073
    %7121 = vmatpush.msra.mxu0 %v7072
    %7122 = vmatpush.msra.mxu0 %v7071
    %7123 = vmatpush.msra.mxu0 %v7070
    %7124 = vmatpush.msra.mxu0 %v7069
    %7125 = vmatpush.msra.mxu0 %v7068
    %7126 = vmatmul.f32.gmra.mxu0 %v7106
    %v7127 = vpop.f32.mrf.mxu0
    %v7128 = vadd.f32 %v7102, %v7127
    %7129 = vdwg.mxu0
    %7130 = vmatpush.msra.mxu0 %v7099
    %7131 = vmatpush.msra.mxu0 %v7098
    %7132 = vmatpush.msra.mxu0 %v7097
    %7133 = vmatpush.msra.mxu0 %v7096
    %7134 = vmatpush.msra.mxu0 %v7095
    %7135 = vmatpush.msra.mxu0 %v7094
    %7136 = vmatpush.msra.mxu0 %v7093
    %7137 = vmatpush.msra.mxu0 %v7092
    %7138 = vmatpush.msra.mxu0 %v7091
    %7139 = vmatpush.msra.mxu0 %v7090
    %7140 = vmatpush.msra.mxu0 %v7089
    %7141 = vmatpush.msra.mxu0 %v7088
    %7142 = vmatpush.msra.mxu0 %v7087
    %7143 = vmatpush.msra.mxu0 %v7086
    %7144 = vmatpush.msra.mxu0 %v7085
    %7145 = vmatpush.msra.mxu0 %v7084
    %7146 = vmatmul.f32.gmra.mxu0 %v7107
    %v7147 = vpop.f32.mrf.mxu0
    %v7148 = vadd.f32 %v7128, %v7147
    %7149 = vdwg.mxu0
    %v7150 = vmax.f32 %v7148, 0.0
    %v7151 = vld [vmem:[%s7] sm:$0xff]
    %v7152 = vld [vmem:[%s7 + $0x8] sm:$0xff]
    %v7153 = vld [vmem:[%s7 + $0x10] sm:$0xff]
    %v7154 = vld [vmem:[%s7 + $0x18] sm:$0xff]
    %v7155 = vld [vmem:[%s7 + $0x20] sm:$0xff]
    %v7156 = vld [vmem:[%s7 + $0x28] sm:$0xff]
    %v7157 = vld [vmem:[%s7 + $0x30] sm:$0xff]
    %v7158 = vld [vmem:[%s7 + $0x38] sm:$0xff]
    %v7159 = vld [vmem:[%s8] sm:$0x1]
    %v7161 = vperm.slane %v7159, 0
    %vm7163 = vcmask 523264
    %v7165 = vsel %vm7163, %v7150, 0
    %7167 = vmatpush.msra.mxu0 0.0
    %7168 = vmatpush.msra.mxu0 0.0
    %7169 = vmatpush.msra.mxu0 0.0
    %7170 = vmatpush.msra.mxu0 0.0
    %7171 = vmatpush.msra.mxu0 0.0
    %7172 = vmatpush.msra.mxu0 0.0
    %7173 = vmatpush.msra.mxu0 0.0
    %7174 = vmatpush.msra.mxu0 0.0
    %7175 = vmatpush.msra.mxu0 %v7158
    %7176 = vmatpush.msra.mxu0 %v7157
    %7177 = vmatpush.msra.mxu0 %v7156
    %7178 = vmatpush.msra.mxu0 %v7155
    %7179 = vmatpush.msra.mxu0 %v7154
    %7180 = vmatpush.msra.mxu0 %v7153
    %7181 = vmatpush.msra.mxu0 %v7152
    %7182 = vmatpush.msra.mxu0 %v7151
    %7183 = vmatmul.f32.gmra.mxu0 %v7165
    %v7184 = vpop.f32.mrf.mxu0
    %v7185 = vadd.f32 %v7161, %v7184
    %7186 = vdwg.mxu0
    %v7187 = vmax.f32 %v7185, 0.0
    %v7188 = vmul.f32 %v7187, %v7187
    %vm7189 = vcmask 517120
    %v7190 = vsel %vm7189, %v7188, 0.0
    %7191 = vadd.xlane.f32.xlu0 %v7190
    %v7192 = vpop.xlane.xlu0 %7191
    %v7193 = vrsqrt.pop %v7192
    %v7194 = vmul.f32 %v7193, %v7192
    %v7195 = vmul.f32 %v7194, %v7193
    %v7196 = vmul.f32 0.5, %v7195
    %v7197 = vsub.f32 1.5, %v7196
    %v7198 = vmul.f32 %v7193, %v7197
    %vm7199 = vweird.f32 %v7192
    %vm7200 = vweird.f32 %v7193
    %vm7201 = vmor %vm7199, %vm7200
    %v7202 = vsel %vm7201, %v7193, %v7198
    %v7203 = vmul.f32 %v7187, %v7202
    %v7204 = vld [vmem:[%s9] sm:$0xff]
    %v7205 = vld [vmem:[%s9 + $0x8] sm:$0xff]
    %v7206 = vld [vmem:[%s9 + $0x10] sm:$0xff]
    %v7207 = vld [vmem:[%s9 + $0x18] sm:$0xff]
    %v7208 = vld [vmem:[%s9 + $0x20] sm:$0xff]
    %v7209 = vld [vmem:[%s9 + $0x28] sm:$0xff]
    %v7210 = vld [vmem:[%s9 + $0x30] sm:$0xff]
    %v7211 = vld [vmem:[%s9 + $0x38] sm:$0xff]
    %v7212 = vld [vmem:[%s10] sm:$0x1]
    %v7214 = vperm.slane %v7212, 0
    %v7217 = vsel %vm7163, %v7203, 0
    %7219 = vmatpush.msra.mxu0 0.0
    %7220 = vmatpush.msra.mxu0 0.0
    %7221 = vmatpush.msra.mxu0 0.0
    %7222 = vmatpush.msra.mxu0 0.0
    %7223 = vmatpush.msra.mxu0 0.0
    %7224 = vmatpush.msra.mxu0 0.0
    %7225 = vmatpush.msra.mxu0 0.0
    %7226 = vmatpush.msra.mxu0 0.0
    %7227 = vmatpush.msra.mxu0 %v7211
    %7228 = vmatpush.msra.mxu0 %v7210
    %7229 = vmatpush.msra.mxu0 %v7209
    %7230 = vmatpush.msra.mxu0 %v7208
    %7231 = vmatpush.msra.mxu0 %v7207
    %7232 = vmatpush.msra.mxu0 %v7206
    %7233 = vmatpush.msra.mxu0 %v7205
    %7234 = vmatpush.msra.mxu0 %v7204
    %7235 = vmatmul.f32.gmra.mxu0 %v7217
    %v7236 = vpop.f32.mrf.mxu0
    %v7237 = vadd.f32 %v7214, %v7236
    %7238 = vdwg.mxu0
    %v7239 = vmul.f32 %v7237, %v7237
    %vm7240 = vcmask 254976
    %v7241 = vsel %vm7240, %v7239, 0.0
    %7242 = vadd.xlane.f32.xlu0 %v7241
    %v7243 = vpop.xlane.xlu0 %7242
    %v7244 = vrsqrt.pop %v7243
    %v7245 = vmul.f32 %v7244, %v7243
    %v7246 = vmul.f32 %v7245, %v7244
    %v7247 = vmul.f32 0.5, %v7246
    %v7248 = vsub.f32 1.5, %v7247
    %v7249 = vmul.f32 %v7244, %v7248
    %vm7250 = vweird.f32 %v7243
    %vm7251 = vweird.f32 %v7244
    %vm7252 = vmor %vm7250, %vm7251
    %v7253 = vsel %vm7252, %v7244, %v7249
    %v7254 = vmul.f32 %v7237, %v7253
    %7255 = vst.msk [vmem:[#allocation9] sm:$0x3] %vm7240, %v7254
    // Predicated region
    $region46: #{_lambda_.1} parent=1 // pred_check
      _
    $region47: #{_lambda_.1} parent=1 // pred_check_branch
      %7257 = sbr.rel (0) target = $region49
    $region48: #{_lambda_.1} parent=1 // pred_region
      %7259 = vsyncadd [#allocation10], 0
      %s7261 = sshll.u32 [#allocation9], 4
      %s7262 = int_to_ptr.vmem [resolvable:$true] %s7261
      %s7263 = sshll.u32 %s11, 4
      %s7264 = int_to_ptr.hbm [resolvable:$true] %s7263
      %7266 = dma.vmem_to_hbm [thread:$0]  %s7262, 32, %s7264, [#allocation10]
    $region49: #{_lambda_.1} parent=1 // pred_fallthru
      _
    // Predicated region
    $region50: #{_lambda_.1} parent=1 // pred_check
      _
    $region51: #{_lambda_.1} parent=1 // pred_check_branch
      %7268 = sbr.rel (0) target = $region53
    $region52: #{_lambda_.1} parent=1 // pred_region
      %7270 = dma.done [#allocation10], 32
    $region53: #{_lambda_.1} parent=1 // pred_fallthru
      _
    %7271 = vsyncpa [#allocation10], 1

</llo_original>
